<compile_context>
chip_gen: v5e
topology: v5e:2x2
jax: 0.10.0
libtpu: 0.0.40
codegen_flags: <defaults>
</compile_context>

<pallas_src>
import jax
import jax.numpy as jnp
from jax.experimental import pallas as pl
from jax.experimental.pallas import tpu as pltpu


def _dqn_fused_kernel(pt_ref, wc_ref, bc_ref, w1_ref, b1_ref,
                      w2_ref, b2_ref, w3_ref, b3_ref, o_ref,
                      cb_ref, h2_ref):
    """Fused forward, pipelined over fc1-N / fc2-K chunks (grid axis 0).

    pt_ref : (B, 75, S)       bf16  im2col patches (K-major rows), resident
    wc_ref : (8, 75)          bf16  conv weight (cout, cin*kh*kw), resident
    bc_ref : (8, 1)           f32
    w1_ref : (8, S, NC)       bf16  fc1 weight chunk, rows regrouped per conv channel
    b1_ref : (1, NC)          f32   fc1 bias chunk
    w2_ref : (NC, 1024)       bf16  fc2 weight K-chunk
    b2_ref : (1, 1024)        f32
    w3_ref : (1024, 8)        bf16  resident
    b3_ref : (1, 8)           f32
    o_ref  : (B, 8)           f32
    cb_ref : (8, B, S)        bf16  VMEM scratch: per-channel (B,S) conv activations
    h2_ref : (B, 1024)        f32   VMEM scratch: fc2 accumulator
    """
    f32 = jnp.float32
    bf16 = jnp.bfloat16

    j = pl.program_id(0)
    last = pl.num_programs(0) - 1

    B = pt_ref.shape[0]
    C = w1_ref.shape[0]          # conv output channels (8)
    NC = w1_ref.shape[2]         # fc1-N / fc2-K chunk width

    @pl.when(j == 0)
    def _conv_and_init():
        wc = wc_ref[...]                                              # (8, 75) bf16
        bc = bc_ref[...]                                              # (8, 1)  f32
        cbs = []
        for b in range(B):       # B is tiny and static -> unrolled
            # conv1 + bias + ReLU, lane-dense (C, S); row order == PyTorch flatten order.
            cb = jnp.dot(wc, pt_ref[b], preferred_element_type=f32)   # (8, S)
            cbs.append(jnp.maximum(cb + bc, 0.0).astype(bf16))        # cast once (review)
        # Regroup to per-channel (B, S) LHS blocks so each fc1 weight slice is pushed
        # through the MXU exactly once (M=B matmuls instead of B separate M=1 matmuls).
        for c in range(C):
            cb_ref[c] = jnp.concatenate(
                [cbs[b][c:c + 1, :] for b in range(B)], axis=0)       # (B, S) bf16
        h2_ref[...] = jnp.zeros_like(h2_ref)

    # --- fc1 chunk j: h1[:, j*NC:(j+1)*NC], contracted per conv channel ---------------
    acc1 = jnp.zeros((B, NC), f32)
    for c in range(C):
        acc1 = acc1 + jnp.dot(cb_ref[c], w1_ref[c],
                              preferred_element_type=f32)             # (B, NC)
    h1c = jnp.maximum(acc1 + b1_ref[...], 0.0).astype(bf16)           # fc1 ReLU chunk

    # --- fc2 partial product for this K-chunk, accumulated in f32 ----------------------
    h2_ref[...] += jnp.dot(h1c, w2_ref[...], preferred_element_type=f32)

    @pl.when(j == last)
    def _fc3_and_store():
        h2 = jnp.maximum(h2_ref[...] + b2_ref[...], 0.0).astype(bf16)
        q = jnp.dot(h2, w3_ref[...], preferred_element_type=f32) + b3_ref[...]
        # ReLU on the Q head matches the PyTorch forward (F.relu(self.fc3(x))).
        o_ref[...] = jnp.maximum(q, 0.0)


def _im2col_T(x, kh, kw):
    """x: (B, C, H, W) -> (B, C*kh*kw, Ho*Wo); rows in PyTorch (c, kh, kw) order."""
    B, C, H, W = x.shape
    Ho, Wo = H - kh + 1, W - kw + 1
    cols = jnp.stack(
        [x[:, :, i:i + Ho, j:j + Wo] for i in range(kh) for j in range(kw)],
        axis=2,
    )                                                   # (B, C, kh*kw, Ho, Wo)
    return cols.reshape(B, C * kh * kw, Ho * Wo), Ho, Wo


def deep_q_network_forward(params, x, *, n_chunk=256):
    """Forward pass matching DeepQNetwork.forward. x: (B, 3, H, W) NCHW float32."""
    B, Cin, H, W = x.shape
    kh = kw = 5

    # --- im2col glue (plain JAX; tiny) ---
    pT, Ho, Wo = _im2col_T(x, kh, kw)                   # (B, 75, S)
    S = Ho * Wo
    pT = pT.astype(jnp.bfloat16)

    # --- parameter layout for the fused kernel (bf16 weights, f32 biases) ---
    Cout = params["conv_w"].shape[0]
    wc = params["conv_w"].reshape(Cout, Cin * kh * kw).astype(jnp.bfloat16)   # (8, 75)
    bc = params["conv_b"].reshape(Cout, 1).astype(jnp.float32)                # (8, 1)
    N1 = params["fc1_w"].shape[1]                                             # 1024
    w1r = params["fc1_w"].reshape(Cout, S, N1).astype(jnp.bfloat16)           # (8, S, 1024)
    b1 = params["fc1_b"].reshape(1, N1).astype(jnp.float32)
    w2 = params["fc2_w"].astype(jnp.bfloat16)                                 # (1024, 1024)
    b2 = params["fc2_b"].reshape(1, -1).astype(jnp.float32)
    w3 = params["fc3_w"].astype(jnp.bfloat16)                                 # (1024, 8)
    b3 = params["fc3_b"].reshape(1, -1).astype(jnp.float32)
    n_out = w3.shape[1]

    assert N1 % n_chunk == 0 and w2.shape[0] == N1
    n_steps = N1 // n_chunk

    grid_spec = pltpu.PrefetchScalarGridSpec(
        num_scalar_prefetch=0,
        grid=(n_steps,),
        in_specs=[
            pl.BlockSpec((B, Cin * kh * kw, S), lambda j: (0, 0, 0)),   # patches (resident)
            pl.BlockSpec((Cout, Cin * kh * kw), lambda j: (0, 0)),      # conv w  (resident)
            pl.BlockSpec((Cout, 1), lambda j: (0, 0)),                  # conv b
            pl.BlockSpec((Cout, S, n_chunk), lambda j: (0, 0, j)),      # fc1 w   (N-chunk)
            pl.BlockSpec((1, n_chunk), lambda j: (0, j)),               # fc1 b   (N-chunk)
            pl.BlockSpec((n_chunk, N1), lambda j: (j, 0)),              # fc2 w   (K-chunk)
            pl.BlockSpec((1, N1), lambda j: (0, 0)),                    # fc2 b
            pl.BlockSpec((N1, n_out), lambda j: (0, 0)),                # fc3 w   (resident)
            pl.BlockSpec((1, n_out), lambda j: (0, 0)),                 # fc3 b
        ],
        out_specs=pl.BlockSpec((B, n_out), lambda j: (0, 0)),
        scratch_shapes=[
            pltpu.VMEM((Cout, B, S), jnp.bfloat16),    # per-channel conv activations
            pltpu.VMEM((B, N1), jnp.float32),          # fc2 accumulator
        ],
    )

    return pl.pallas_call(
        _dqn_fused_kernel,
        out_shape=jax.ShapeDtypeStruct((B, n_out), jnp.float32),
        grid_spec=grid_spec,
        compiler_params=pltpu.CompilerParams(
            dimension_semantics=("arbitrary",),        # sequential reduction over chunks
            vmem_limit_bytes=16 * 1024 * 1024,         # ~5 MB live worst-case; safe everywhere
        ),
    )(pT, wc, bc, w1r, b1, w2, b2, w3, b3)


def init_params(key):
    """Deterministic parameter init (shapes from DeepQNetwork.__init__), stored f32."""
    ks = jax.random.split(key, 8)
    scale = 0.05
    return {
        "conv_w": scale * jax.random.normal(ks[0], (8, 3, 5, 5), jnp.float32),
        "conv_b": scale * jax.random.normal(ks[1], (8,), jnp.float32),
        "fc1_w": scale * jax.random.normal(ks[2], (2520, 1024), jnp.float32),
        "fc1_b": scale * jax.random.normal(ks[3], (1024,), jnp.float32),
        "fc2_w": scale * jax.random.normal(ks[4], (1024, 1024), jnp.float32),
        "fc2_b": scale * jax.random.normal(ks[5], (1024,), jnp.float32),
        "fc3_w": scale * jax.random.normal(ks[6], (1024, 8), jnp.float32),
        "fc3_b": scale * jax.random.normal(ks[7], (8,), jnp.float32),
    }


def reference_forward(params, x):
    """Plain-JAX reference at matching precision (bf16-rounded matmul operands, f32 accum)."""
    f32 = jnp.float32

    def q(a):  # round to bf16, compute in f32 (same operand numerics as the kernel)
        return a.astype(jnp.bfloat16).astype(f32)

    conv = jax.lax.conv_general_dilated(
        q(x), q(params["conv_w"]), window_strides=(1, 1), padding="VALID",
        dimension_numbers=("NCHW", "OIHW", "NCHW"),
    ) + params["conv_b"][None, :, None, None]
    conv = jnp.maximum(conv, 0.0)
    h = conv.reshape(x.shape[0], -1)                                   # PyTorch flatten order
    h = jnp.maximum(jnp.dot(q(h), q(params["fc1_w"])) + params["fc1_b"], 0.0)
    h = jnp.maximum(jnp.dot(q(h), q(params["fc2_w"])) + params["fc2_b"], 0.0)
    h = jnp.maximum(jnp.dot(q(h), q(params["fc3_w"])) + params["fc3_b"], 0.0)
    return h


if __name__ == "__main__":
    key = jax.random.PRNGKey(0)
    k_x, k_p = jax.random.split(key)

    # Input consistent with fc1's 2520 = 8 * 15 * 21: H=19, W=25, kernel 5x5 (VALID).
    B, C, H, W = 2, 3, 19, 25
    x = jax.random.normal(k_x, (B, C, H, W), jnp.float32)
    params = init_params(k_p)

    fwd = jax.jit(deep_q_network_forward)
    out = jax.block_until_ready(fwd(params, x))
    assert out.shape == (B, 8), out.shape

    ref = jax.block_until_ready(reference_forward(params, x))
    max_err = float(jnp.max(jnp.abs(out - ref)))
    assert jnp.allclose(out, ref, atol=2e-2, rtol=2e-2), max_err

    print("KERNEL_OK")
</pallas_src>

<mosaic_0001>
module attributes {stable_mosaic.version = 11 : i64} {
  func.func @_dqn_fused_kernel(%arg0: i32, %arg1: memref<2x75x315xbf16, #tpu.memory_space<vmem>>, %arg2: memref<8x75xbf16, #tpu.memory_space<vmem>>, %arg3: memref<8x1xf32, #tpu.memory_space<vmem>>, %arg4: memref<8x315x256xbf16, #tpu.memory_space<vmem>>, %arg5: memref<1x256xf32, #tpu.memory_space<vmem>>, %arg6: memref<256x1024xbf16, #tpu.memory_space<vmem>>, %arg7: memref<1x1024xf32, #tpu.memory_space<vmem>>, %arg8: memref<1024x8xbf16, #tpu.memory_space<vmem>>, %arg9: memref<1x8xf32, #tpu.memory_space<vmem>>, %arg10: memref<2x8xf32, #tpu.memory_space<vmem>>, %arg11: memref<8x2x315xbf16, #tpu.memory_space<vmem>>, %arg12: memref<2x1024xf32, #tpu.memory_space<vmem>>) attributes {dimension_semantics = [#tpu.dimension_semantics<arbitrary>], iteration_bounds = array<i64: 4>, scalar_prefetch = 0 : i64, scratch_operands = 2 : i64, tpu.core_type = #tpu.core_type<tc>, window_params = [{pipeline_mode = #tpu.pipeline_mode<synchronous>, transform_indices = @transform_0, window_bounds = array<i64: 2, 75, 315>}, {pipeline_mode = #tpu.pipeline_mode<synchronous>, transform_indices = @transform_1, window_bounds = array<i64: 8, 75>}, {pipeline_mode = #tpu.pipeline_mode<synchronous>, transform_indices = @transform_2, window_bounds = array<i64: 8, 1>}, {transform_indices = @transform_3, window_bounds = array<i64: 8, 315, 256>}, {transform_indices = @transform_4, window_bounds = array<i64: 1, 256>}, {transform_indices = @transform_5, window_bounds = array<i64: 256, 1024>}, {pipeline_mode = #tpu.pipeline_mode<synchronous>, transform_indices = @transform_6, window_bounds = array<i64: 1, 1024>}, {pipeline_mode = #tpu.pipeline_mode<synchronous>, transform_indices = @transform_7, window_bounds = array<i64: 1024, 8>}, {pipeline_mode = #tpu.pipeline_mode<synchronous>, transform_indices = @transform_8, window_bounds = array<i64: 1, 8>}, {pipeline_mode = #tpu.pipeline_mode<synchronous>, transform_indices = @transform_9, window_bounds = array<i64: 2, 8>}]} {
    %c0_i32 = arith.constant 0 : i32
    %0 = arith.cmpi eq, %arg0, %c0_i32 : i32
    %1 = arith.extui %0 : i1 to i32
    %c0_i32_0 = arith.constant 0 : i32
    %2 = arith.cmpi ne, %1, %c0_i32_0 : i32
    scf.if %2 {
      %c0_60 = arith.constant 0 : index
      %c0_61 = arith.constant 0 : index
      %66 = vector.load %arg2[%c0_60, %c0_61] : memref<8x75xbf16, #tpu.memory_space<vmem>>, vector<8x75xbf16>
      %c0_62 = arith.constant 0 : index
      %c0_63 = arith.constant 0 : index
      %67 = vector.load %arg3[%c0_62, %c0_63] : memref<8x1xf32, #tpu.memory_space<vmem>>, vector<8x1xf32>
      %c0_64 = arith.constant 0 : index
      %c0_65 = arith.constant 0 : index
      %c0_66 = arith.constant 0 : index
      %68 = vector.load %arg1[%c0_64, %c0_65, %c0_66] : memref<2x75x315xbf16, #tpu.memory_space<vmem>>, vector<1x75x315xbf16>
      %69 = vector.shape_cast %68 : vector<1x75x315xbf16> to vector<75x315xbf16>
      %cst_67 = arith.constant dense<0.000000e+00> : vector<8x315xf32>
      %70 = tpu.matmul %66, %69, %cst_67 {dimension_numbers = #tpu.dot_dimension_numbers<[1], [0], [0], [1], [0, 0, 1, 1], [], []>} : vector<8x75xbf16>, vector<75x315xbf16>, vector<8x315xf32> -> vector<8x315xf32>
      %71 = vector.broadcast %67 : vector<8x1xf32> to vector<8x315xf32>
      %72 = arith.addf %70, %71 : vector<8x315xf32>
      %cst_68 = arith.constant 0.000000e+00 : f32
      %73 = vector.broadcast %cst_68 : f32 to vector<8x315xf32>
      %74 = arith.maximumf %72, %73 : vector<8x315xf32>
      %75 = arith.truncf %74 : vector<8x315xf32> to vector<8x315xbf16>
      %c1_69 = arith.constant 1 : index
      %c0_70 = arith.constant 0 : index
      %c0_71 = arith.constant 0 : index
      %76 = vector.load %arg1[%c1_69, %c0_70, %c0_71] : memref<2x75x315xbf16, #tpu.memory_space<vmem>>, vector<1x75x315xbf16>
      %77 = vector.shape_cast %76 : vector<1x75x315xbf16> to vector<75x315xbf16>
      %cst_72 = arith.constant dense<0.000000e+00> : vector<8x315xf32>
      %78 = tpu.matmul %66, %77, %cst_72 {dimension_numbers = #tpu.dot_dimension_numbers<[1], [0], [0], [1], [0, 0, 1, 1], [], []>} : vector<8x75xbf16>, vector<75x315xbf16>, vector<8x315xf32> -> vector<8x315xf32>
      %79 = vector.broadcast %67 : vector<8x1xf32> to vector<8x315xf32>
      %80 = arith.addf %78, %79 : vector<8x315xf32>
      %cst_73 = arith.constant 0.000000e+00 : f32
      %81 = vector.broadcast %cst_73 : f32 to vector<8x315xf32>
      %82 = arith.maximumf %80, %81 : vector<8x315xf32>
      %83 = arith.truncf %82 : vector<8x315xf32> to vector<8x315xbf16>
      %84 = vector.extract_strided_slice %75 {offsets = [0, 0], sizes = [1, 315], strides = [1, 1]} : vector<8x315xbf16> to vector<1x315xbf16>
      %85 = vector.extract_strided_slice %83 {offsets = [0, 0], sizes = [1, 315], strides = [1, 1]} : vector<8x315xbf16> to vector<1x315xbf16>
      %86 = tpu.concatenate %84, %85 in 0 : vector<1x315xbf16>, vector<1x315xbf16> -> vector<2x315xbf16>
      %c0_74 = arith.constant 0 : index
      %c0_75 = arith.constant 0 : index
      %c0_76 = arith.constant 0 : index
      %87 = vector.load %arg11[%c0_74, %c0_75, %c0_76] : memref<8x2x315xbf16, #tpu.memory_space<vmem>>, vector<1x2x315xbf16>
      %88 = vector.shape_cast %87 : vector<1x2x315xbf16> to vector<2x315xbf16>
      %89 = vector.shape_cast %86 : vector<2x315xbf16> to vector<1x2x315xbf16>
      tpu.vector_store %arg11[%c0_74, %c0_75, %c0_76], %89 {strides = array<i32>} : memref<8x2x315xbf16, #tpu.memory_space<vmem>>, vector<1x2x315xbf16>,
      %90 = vector.extract_strided_slice %75 {offsets = [1, 0], sizes = [1, 315], strides = [1, 1]} : vector<8x315xbf16> to vector<1x315xbf16>
      %91 = vector.extract_strided_slice %83 {offsets = [1, 0], sizes = [1, 315], strides = [1, 1]} : vector<8x315xbf16> to vector<1x315xbf16>
      %92 = tpu.concatenate %90, %91 in 0 : vector<1x315xbf16>, vector<1x315xbf16> -> vector<2x315xbf16>
      %c1_77 = arith.constant 1 : index
      %c0_78 = arith.constant 0 : index
      %c0_79 = arith.constant 0 : index
      %93 = vector.load %arg11[%c1_77, %c0_78, %c0_79] : memref<8x2x315xbf16, #tpu.memory_space<vmem>>, vector<1x2x315xbf16>
      %94 = vector.shape_cast %93 : vector<1x2x315xbf16> to vector<2x315xbf16>
      %95 = vector.shape_cast %92 : vector<2x315xbf16> to vector<1x2x315xbf16>
      tpu.vector_store %arg11[%c1_77, %c0_78, %c0_79], %95 {strides = array<i32>} : memref<8x2x315xbf16, #tpu.memory_space<vmem>>, vector<1x2x315xbf16>,
      %96 = vector.extract_strided_slice %75 {offsets = [2, 0], sizes = [1, 315], strides = [1, 1]} : vector<8x315xbf16> to vector<1x315xbf16>
      %97 = vector.extract_strided_slice %83 {offsets = [2, 0], sizes = [1, 315], strides = [1, 1]} : vector<8x315xbf16> to vector<1x315xbf16>
      %98 = tpu.concatenate %96, %97 in 0 : vector<1x315xbf16>, vector<1x315xbf16> -> vector<2x315xbf16>
      %c2_80 = arith.constant 2 : index
      %c0_81 = arith.constant 0 : index
      %c0_82 = arith.constant 0 : index
      %99 = vector.load %arg11[%c2_80, %c0_81, %c0_82] : memref<8x2x315xbf16, #tpu.memory_space<vmem>>, vector<1x2x315xbf16>
      %100 = vector.shape_cast %99 : vector<1x2x315xbf16> to vector<2x315xbf16>
      %101 = vector.shape_cast %98 : vector<2x315xbf16> to vector<1x2x315xbf16>
      tpu.vector_store %arg11[%c2_80, %c0_81, %c0_82], %101 {strides = array<i32>} : memref<8x2x315xbf16, #tpu.memory_space<vmem>>, vector<1x2x315xbf16>,
      %102 = vector.extract_strided_slice %75 {offsets = [3, 0], sizes = [1, 315], strides = [1, 1]} : vector<8x315xbf16> to vector<1x315xbf16>
      %103 = vector.extract_strided_slice %83 {offsets = [3, 0], sizes = [1, 315], strides = [1, 1]} : vector<8x315xbf16> to vector<1x315xbf16>
      %104 = tpu.concatenate %102, %103 in 0 : vector<1x315xbf16>, vector<1x315xbf16> -> vector<2x315xbf16>
      %c3_83 = arith.constant 3 : index
      %c0_84 = arith.constant 0 : index
      %c0_85 = arith.constant 0 : index
      %105 = vector.load %arg11[%c3_83, %c0_84, %c0_85] : memref<8x2x315xbf16, #tpu.memory_space<vmem>>, vector<1x2x315xbf16>
      %106 = vector.shape_cast %105 : vector<1x2x315xbf16> to vector<2x315xbf16>
      %107 = vector.shape_cast %104 : vector<2x315xbf16> to vector<1x2x315xbf16>
      tpu.vector_store %arg11[%c3_83, %c0_84, %c0_85], %107 {strides = array<i32>} : memref<8x2x315xbf16, #tpu.memory_space<vmem>>, vector<1x2x315xbf16>,
      %108 = vector.extract_strided_slice %75 {offsets = [4, 0], sizes = [1, 315], strides = [1, 1]} : vector<8x315xbf16> to vector<1x315xbf16>
      %109 = vector.extract_strided_slice %83 {offsets = [4, 0], sizes = [1, 315], strides = [1, 1]} : vector<8x315xbf16> to vector<1x315xbf16>
      %110 = tpu.concatenate %108, %109 in 0 : vector<1x315xbf16>, vector<1x315xbf16> -> vector<2x315xbf16>
      %c4_86 = arith.constant 4 : index
      %c0_87 = arith.constant 0 : index
      %c0_88 = arith.constant 0 : index
      %111 = vector.load %arg11[%c4_86, %c0_87, %c0_88] : memref<8x2x315xbf16, #tpu.memory_space<vmem>>, vector<1x2x315xbf16>
      %112 = vector.shape_cast %111 : vector<1x2x315xbf16> to vector<2x315xbf16>
      %113 = vector.shape_cast %110 : vector<2x315xbf16> to vector<1x2x315xbf16>
      tpu.vector_store %arg11[%c4_86, %c0_87, %c0_88], %113 {strides = array<i32>} : memref<8x2x315xbf16, #tpu.memory_space<vmem>>, vector<1x2x315xbf16>,
      %114 = vector.extract_strided_slice %75 {offsets = [5, 0], sizes = [1, 315], strides = [1, 1]} : vector<8x315xbf16> to vector<1x315xbf16>
      %115 = vector.extract_strided_slice %83 {offsets = [5, 0], sizes = [1, 315], strides = [1, 1]} : vector<8x315xbf16> to vector<1x315xbf16>
      %116 = tpu.concatenate %114, %115 in 0 : vector<1x315xbf16>, vector<1x315xbf16> -> vector<2x315xbf16>
      %c5_89 = arith.constant 5 : index
      %c0_90 = arith.constant 0 : index
      %c0_91 = arith.constant 0 : index
      %117 = vector.load %arg11[%c5_89, %c0_90, %c0_91] : memref<8x2x315xbf16, #tpu.memory_space<vmem>>, vector<1x2x315xbf16>
      %118 = vector.shape_cast %117 : vector<1x2x315xbf16> to vector<2x315xbf16>
      %119 = vector.shape_cast %116 : vector<2x315xbf16> to vector<1x2x315xbf16>
      tpu.vector_store %arg11[%c5_89, %c0_90, %c0_91], %119 {strides = array<i32>} : memref<8x2x315xbf16, #tpu.memory_space<vmem>>, vector<1x2x315xbf16>,
      %120 = vector.extract_strided_slice %75 {offsets = [6, 0], sizes = [1, 315], strides = [1, 1]} : vector<8x315xbf16> to vector<1x315xbf16>
      %121 = vector.extract_strided_slice %83 {offsets = [6, 0], sizes = [1, 315], strides = [1, 1]} : vector<8x315xbf16> to vector<1x315xbf16>
      %122 = tpu.concatenate %120, %121 in 0 : vector<1x315xbf16>, vector<1x315xbf16> -> vector<2x315xbf16>
      %c6_92 = arith.constant 6 : index
      %c0_93 = arith.constant 0 : index
      %c0_94 = arith.constant 0 : index
      %123 = vector.load %arg11[%c6_92, %c0_93, %c0_94] : memref<8x2x315xbf16, #tpu.memory_space<vmem>>, vector<1x2x315xbf16>
      %124 = vector.shape_cast %123 : vector<1x2x315xbf16> to vector<2x315xbf16>
      %125 = vector.shape_cast %122 : vector<2x315xbf16> to vector<1x2x315xbf16>
      tpu.vector_store %arg11[%c6_92, %c0_93, %c0_94], %125 {strides = array<i32>} : memref<8x2x315xbf16, #tpu.memory_space<vmem>>, vector<1x2x315xbf16>,
      %126 = vector.extract_strided_slice %75 {offsets = [7, 0], sizes = [1, 315], strides = [1, 1]} : vector<8x315xbf16> to vector<1x315xbf16>
      %127 = vector.extract_strided_slice %83 {offsets = [7, 0], sizes = [1, 315], strides = [1, 1]} : vector<8x315xbf16> to vector<1x315xbf16>
      %128 = tpu.concatenate %126, %127 in 0 : vector<1x315xbf16>, vector<1x315xbf16> -> vector<2x315xbf16>
      %c7_95 = arith.constant 7 : index
      %c0_96 = arith.constant 0 : index
      %c0_97 = arith.constant 0 : index
      %129 = vector.load %arg11[%c7_95, %c0_96, %c0_97] : memref<8x2x315xbf16, #tpu.memory_space<vmem>>, vector<1x2x315xbf16>
      %130 = vector.shape_cast %129 : vector<1x2x315xbf16> to vector<2x315xbf16>
      %131 = vector.shape_cast %128 : vector<2x315xbf16> to vector<1x2x315xbf16>
      tpu.vector_store %arg11[%c7_95, %c0_96, %c0_97], %131 {strides = array<i32>} : memref<8x2x315xbf16, #tpu.memory_space<vmem>>, vector<1x2x315xbf16>,
      %cst_98 = arith.constant 0.000000e+00 : f32
      %132 = vector.broadcast %cst_98 : f32 to vector<2x1024xf32>
      %c0_99 = arith.constant 0 : index
      %c0_100 = arith.constant 0 : index
      %133 = vector.load %arg12[%c0_99, %c0_100] : memref<2x1024xf32, #tpu.memory_space<vmem>>, vector<2x1024xf32>
      tpu.vector_store %arg12[%c0_99, %c0_100], %132 {strides = array<i32>} : memref<2x1024xf32, #tpu.memory_space<vmem>>, vector<2x1024xf32>,
    } else {
    }
    %cst = arith.constant 0.000000e+00 : f32
    %3 = vector.broadcast %cst : f32 to vector<2x256xf32>
    %c0 = arith.constant 0 : index
    %c0_1 = arith.constant 0 : index
    %c0_2 = arith.constant 0 : index
    %4 = vector.load %arg11[%c0, %c0_1, %c0_2] : memref<8x2x315xbf16, #tpu.memory_space<vmem>>, vector<1x2x315xbf16>
    %5 = vector.shape_cast %4 : vector<1x2x315xbf16> to vector<2x315xbf16>
    %c0_3 = arith.constant 0 : index
    %c0_4 = arith.constant 0 : index
    %c0_5 = arith.constant 0 : index
    %6 = vector.load %arg4[%c0_3, %c0_4, %c0_5] : memref<8x315x256xbf16, #tpu.memory_space<vmem>>, vector<1x315x256xbf16>
    %7 = vector.shape_cast %6 : vector<1x315x256xbf16> to vector<315x256xbf16>
    %cst_6 = arith.constant dense<0.000000e+00> : vector<2x256xf32>
    %8 = tpu.matmul %5, %7, %cst_6 {dimension_numbers = #tpu.dot_dimension_numbers<[1], [0], [0], [1], [0, 0, 1, 1], [], []>} : vector<2x315xbf16>, vector<315x256xbf16>, vector<2x256xf32> -> vector<2x256xf32>
    %9 = arith.addf %3, %8 : vector<2x256xf32>
    %c1 = arith.constant 1 : index
    %c0_7 = arith.constant 0 : index
    %c0_8 = arith.constant 0 : index
    %10 = vector.load %arg11[%c1, %c0_7, %c0_8] : memref<8x2x315xbf16, #tpu.memory_space<vmem>>, vector<1x2x315xbf16>
    %11 = vector.shape_cast %10 : vector<1x2x315xbf16> to vector<2x315xbf16>
    %c1_9 = arith.constant 1 : index
    %c0_10 = arith.constant 0 : index
    %c0_11 = arith.constant 0 : index
    %12 = vector.load %arg4[%c1_9, %c0_10, %c0_11] : memref<8x315x256xbf16, #tpu.memory_space<vmem>>, vector<1x315x256xbf16>
    %13 = vector.shape_cast %12 : vector<1x315x256xbf16> to vector<315x256xbf16>
    %cst_12 = arith.constant dense<0.000000e+00> : vector<2x256xf32>
    %14 = tpu.matmul %11, %13, %cst_12 {dimension_numbers = #tpu.dot_dimension_numbers<[1], [0], [0], [1], [0, 0, 1, 1], [], []>} : vector<2x315xbf16>, vector<315x256xbf16>, vector<2x256xf32> -> vector<2x256xf32>
    %15 = arith.addf %9, %14 : vector<2x256xf32>
    %c2 = arith.constant 2 : index
    %c0_13 = arith.constant 0 : index
    %c0_14 = arith.constant 0 : index
    %16 = vector.load %arg11[%c2, %c0_13, %c0_14] : memref<8x2x315xbf16, #tpu.memory_space<vmem>>, vector<1x2x315xbf16>
    %17 = vector.shape_cast %16 : vector<1x2x315xbf16> to vector<2x315xbf16>
    %c2_15 = arith.constant 2 : index
    %c0_16 = arith.constant 0 : index
    %c0_17 = arith.constant 0 : index
    %18 = vector.load %arg4[%c2_15, %c0_16, %c0_17] : memref<8x315x256xbf16, #tpu.memory_space<vmem>>, vector<1x315x256xbf16>
    %19 = vector.shape_cast %18 : vector<1x315x256xbf16> to vector<315x256xbf16>
    %cst_18 = arith.constant dense<0.000000e+00> : vector<2x256xf32>
    %20 = tpu.matmul %17, %19, %cst_18 {dimension_numbers = #tpu.dot_dimension_numbers<[1], [0], [0], [1], [0, 0, 1, 1], [], []>} : vector<2x315xbf16>, vector<315x256xbf16>, vector<2x256xf32> -> vector<2x256xf32>
    %21 = arith.addf %15, %20 : vector<2x256xf32>
    %c3 = arith.constant 3 : index
    %c0_19 = arith.constant 0 : index
    %c0_20 = arith.constant 0 : index
    %22 = vector.load %arg11[%c3, %c0_19, %c0_20] : memref<8x2x315xbf16, #tpu.memory_space<vmem>>, vector<1x2x315xbf16>
    %23 = vector.shape_cast %22 : vector<1x2x315xbf16> to vector<2x315xbf16>
    %c3_21 = arith.constant 3 : index
    %c0_22 = arith.constant 0 : index
    %c0_23 = arith.constant 0 : index
    %24 = vector.load %arg4[%c3_21, %c0_22, %c0_23] : memref<8x315x256xbf16, #tpu.memory_space<vmem>>, vector<1x315x256xbf16>
    %25 = vector.shape_cast %24 : vector<1x315x256xbf16> to vector<315x256xbf16>
    %cst_24 = arith.constant dense<0.000000e+00> : vector<2x256xf32>
    %26 = tpu.matmul %23, %25, %cst_24 {dimension_numbers = #tpu.dot_dimension_numbers<[1], [0], [0], [1], [0, 0, 1, 1], [], []>} : vector<2x315xbf16>, vector<315x256xbf16>, vector<2x256xf32> -> vector<2x256xf32>
    %27 = arith.addf %21, %26 : vector<2x256xf32>
    %c4 = arith.constant 4 : index
    %c0_25 = arith.constant 0 : index
    %c0_26 = arith.constant 0 : index
    %28 = vector.load %arg11[%c4, %c0_25, %c0_26] : memref<8x2x315xbf16, #tpu.memory_space<vmem>>, vector<1x2x315xbf16>
    %29 = vector.shape_cast %28 : vector<1x2x315xbf16> to vector<2x315xbf16>
    %c4_27 = arith.constant 4 : index
    %c0_28 = arith.constant 0 : index
    %c0_29 = arith.constant 0 : index
    %30 = vector.load %arg4[%c4_27, %c0_28, %c0_29] : memref<8x315x256xbf16, #tpu.memory_space<vmem>>, vector<1x315x256xbf16>
    %31 = vector.shape_cast %30 : vector<1x315x256xbf16> to vector<315x256xbf16>
    %cst_30 = arith.constant dense<0.000000e+00> : vector<2x256xf32>
    %32 = tpu.matmul %29, %31, %cst_30 {dimension_numbers = #tpu.dot_dimension_numbers<[1], [0], [0], [1], [0, 0, 1, 1], [], []>} : vector<2x315xbf16>, vector<315x256xbf16>, vector<2x256xf32> -> vector<2x256xf32>
    %33 = arith.addf %27, %32 : vector<2x256xf32>
    %c5 = arith.constant 5 : index
    %c0_31 = arith.constant 0 : index
    %c0_32 = arith.constant 0 : index
    %34 = vector.load %arg11[%c5, %c0_31, %c0_32] : memref<8x2x315xbf16, #tpu.memory_space<vmem>>, vector<1x2x315xbf16>
    %35 = vector.shape_cast %34 : vector<1x2x315xbf16> to vector<2x315xbf16>
    %c5_33 = arith.constant 5 : index
    %c0_34 = arith.constant 0 : index
    %c0_35 = arith.constant 0 : index
    %36 = vector.load %arg4[%c5_33, %c0_34, %c0_35] : memref<8x315x256xbf16, #tpu.memory_space<vmem>>, vector<1x315x256xbf16>
    %37 = vector.shape_cast %36 : vector<1x315x256xbf16> to vector<315x256xbf16>
    %cst_36 = arith.constant dense<0.000000e+00> : vector<2x256xf32>
    %38 = tpu.matmul %35, %37, %cst_36 {dimension_numbers = #tpu.dot_dimension_numbers<[1], [0], [0], [1], [0, 0, 1, 1], [], []>} : vector<2x315xbf16>, vector<315x256xbf16>, vector<2x256xf32> -> vector<2x256xf32>
    %39 = arith.addf %33, %38 : vector<2x256xf32>
    %c6 = arith.constant 6 : index
    %c0_37 = arith.constant 0 : index
    %c0_38 = arith.constant 0 : index
    %40 = vector.load %arg11[%c6, %c0_37, %c0_38] : memref<8x2x315xbf16, #tpu.memory_space<vmem>>, vector<1x2x315xbf16>
    %41 = vector.shape_cast %40 : vector<1x2x315xbf16> to vector<2x315xbf16>
    %c6_39 = arith.constant 6 : index
    %c0_40 = arith.constant 0 : index
    %c0_41 = arith.constant 0 : index
    %42 = vector.load %arg4[%c6_39, %c0_40, %c0_41] : memref<8x315x256xbf16, #tpu.memory_space<vmem>>, vector<1x315x256xbf16>
    %43 = vector.shape_cast %42 : vector<1x315x256xbf16> to vector<315x256xbf16>
    %cst_42 = arith.constant dense<0.000000e+00> : vector<2x256xf32>
    %44 = tpu.matmul %41, %43, %cst_42 {dimension_numbers = #tpu.dot_dimension_numbers<[1], [0], [0], [1], [0, 0, 1, 1], [], []>} : vector<2x315xbf16>, vector<315x256xbf16>, vector<2x256xf32> -> vector<2x256xf32>
    %45 = arith.addf %39, %44 : vector<2x256xf32>
    %c7 = arith.constant 7 : index
    %c0_43 = arith.constant 0 : index
    %c0_44 = arith.constant 0 : index
    %46 = vector.load %arg11[%c7, %c0_43, %c0_44] : memref<8x2x315xbf16, #tpu.memory_space<vmem>>, vector<1x2x315xbf16>
    %47 = vector.shape_cast %46 : vector<1x2x315xbf16> to vector<2x315xbf16>
    %c7_45 = arith.constant 7 : index
    %c0_46 = arith.constant 0 : index
    %c0_47 = arith.constant 0 : index
    %48 = vector.load %arg4[%c7_45, %c0_46, %c0_47] : memref<8x315x256xbf16, #tpu.memory_space<vmem>>, vector<1x315x256xbf16>
    %49 = vector.shape_cast %48 : vector<1x315x256xbf16> to vector<315x256xbf16>
    %cst_48 = arith.constant dense<0.000000e+00> : vector<2x256xf32>
    %50 = tpu.matmul %47, %49, %cst_48 {dimension_numbers = #tpu.dot_dimension_numbers<[1], [0], [0], [1], [0, 0, 1, 1], [], []>} : vector<2x315xbf16>, vector<315x256xbf16>, vector<2x256xf32> -> vector<2x256xf32>
    %51 = arith.addf %45, %50 : vector<2x256xf32>
    %c0_49 = arith.constant 0 : index
    %c0_50 = arith.constant 0 : index
    %52 = vector.load %arg5[%c0_49, %c0_50] : memref<1x256xf32, #tpu.memory_space<vmem>>, vector<1x256xf32>
    %53 = vector.broadcast %52 : vector<1x256xf32> to vector<2x256xf32>
    %54 = arith.addf %51, %53 : vector<2x256xf32>
    %cst_51 = arith.constant 0.000000e+00 : f32
    %55 = vector.broadcast %cst_51 : f32 to vector<2x256xf32>
    %56 = arith.maximumf %54, %55 : vector<2x256xf32>
    %57 = arith.truncf %56 : vector<2x256xf32> to vector<2x256xbf16>
    %c0_52 = arith.constant 0 : index
    %c0_53 = arith.constant 0 : index
    %58 = vector.load %arg12[%c0_52, %c0_53] : memref<2x1024xf32, #tpu.memory_space<vmem>>, vector<2x1024xf32>
    %c0_54 = arith.constant 0 : index
    %c0_55 = arith.constant 0 : index
    %59 = vector.load %arg6[%c0_54, %c0_55] : memref<256x1024xbf16, #tpu.memory_space<vmem>>, vector<256x1024xbf16>
    %cst_56 = arith.constant dense<0.000000e+00> : vector<2x1024xf32>
    %60 = tpu.matmul %57, %59, %cst_56 {dimension_numbers = #tpu.dot_dimension_numbers<[1], [0], [0], [1], [0, 0, 1, 1], [], []>} : vector<2x256xbf16>, vector<256x1024xbf16>, vector<2x1024xf32> -> vector<2x1024xf32>
    %61 = arith.addf %58, %60 : vector<2x1024xf32>
    %c0_57 = arith.constant 0 : index
    %c0_58 = arith.constant 0 : index
    %62 = vector.load %arg12[%c0_57, %c0_58] : memref<2x1024xf32, #tpu.memory_space<vmem>>, vector<2x1024xf32>
    tpu.vector_store %arg12[%c0_57, %c0_58], %61 {strides = array<i32>} : memref<2x1024xf32, #tpu.memory_space<vmem>>, vector<2x1024xf32>,
    %c3_i32 = arith.constant 3 : i32
    %63 = arith.cmpi eq, %arg0, %c3_i32 : i32
    %64 = arith.extui %63 : i1 to i32
    %c0_i32_59 = arith.constant 0 : i32
    %65 = arith.cmpi ne, %64, %c0_i32_59 : i32
    scf.if %65 {
      %c0_60 = arith.constant 0 : index
      %c0_61 = arith.constant 0 : index
      %66 = vector.load %arg12[%c0_60, %c0_61] : memref<2x1024xf32, #tpu.memory_space<vmem>>, vector<2x1024xf32>
      %c0_62 = arith.constant 0 : index
      %c0_63 = arith.constant 0 : index
      %67 = vector.load %arg7[%c0_62, %c0_63] : memref<1x1024xf32, #tpu.memory_space<vmem>>, vector<1x1024xf32>
      %68 = vector.broadcast %67 : vector<1x1024xf32> to vector<2x1024xf32>
      %69 = arith.addf %66, %68 : vector<2x1024xf32>
      %cst_64 = arith.constant 0.000000e+00 : f32
      %70 = vector.broadcast %cst_64 : f32 to vector<2x1024xf32>
      %71 = arith.maximumf %69, %70 : vector<2x1024xf32>
      %72 = arith.truncf %71 : vector<2x1024xf32> to vector<2x1024xbf16>
      %c0_65 = arith.constant 0 : index
      %c0_66 = arith.constant 0 : index
      %73 = vector.load %arg8[%c0_65, %c0_66] : memref<1024x8xbf16, #tpu.memory_space<vmem>>, vector<1024x8xbf16>
      %cst_67 = arith.constant dense<0.000000e+00> : vector<2x8xf32>
      %74 = tpu.matmul %72, %73, %cst_67 {dimension_numbers = #tpu.dot_dimension_numbers<[1], [0], [0], [1], [0, 0, 1, 1], [], []>} : vector<2x1024xbf16>, vector<1024x8xbf16>, vector<2x8xf32> -> vector<2x8xf32>
      %c0_68 = arith.constant 0 : index
      %c0_69 = arith.constant 0 : index
      %75 = vector.load %arg9[%c0_68, %c0_69] : memref<1x8xf32, #tpu.memory_space<vmem>>, vector<1x8xf32>
      %76 = vector.broadcast %75 : vector<1x8xf32> to vector<2x8xf32>
      %77 = arith.addf %74, %76 : vector<2x8xf32>
      %cst_70 = arith.constant 0.000000e+00 : f32
      %78 = vector.broadcast %cst_70 : f32 to vector<2x8xf32>
      %79 = arith.maximumf %77, %78 : vector<2x8xf32>
      %c0_71 = arith.constant 0 : index
      %c0_72 = arith.constant 0 : index
      %80 = vector.load %arg10[%c0_71, %c0_72] : memref<2x8xf32, #tpu.memory_space<vmem>>, vector<2x8xf32>
      tpu.vector_store %arg10[%c0_71, %c0_72], %79 {strides = array<i32>} : memref<2x8xf32, #tpu.memory_space<vmem>>, vector<2x8xf32>,
    } else {
    }
    return
  }
  func.func @transform_0(%arg0: i32) -> (i32, i32, i32) {
    %c0_i32 = arith.constant 0 : i32
    %c0_i32_0 = arith.constant 0 : i32
    %c0_i32_1 = arith.constant 0 : i32
    %c0_i32_2 = arith.constant 0 : i32
    return %c0_i32, %c0_i32_0, %c0_i32_1 : i32, i32, i32
  }
  func.func @transform_1(%arg0: i32) -> (i32, i32) {
    %c0_i32 = arith.constant 0 : i32
    %c0_i32_0 = arith.constant 0 : i32
    %c0_i32_1 = arith.constant 0 : i32
    return %c0_i32, %c0_i32_0 : i32, i32
  }
  func.func @transform_2(%arg0: i32) -> (i32, i32) {
    %c0_i32 = arith.constant 0 : i32
    %c0_i32_0 = arith.constant 0 : i32
    %c0_i32_1 = arith.constant 0 : i32
    return %c0_i32, %c0_i32_0 : i32, i32
  }
  func.func @transform_3(%arg0: i32) -> (i32, i32, i32) {
    %c0_i32 = arith.constant 0 : i32
    %c0_i32_0 = arith.constant 0 : i32
    %c0_i32_1 = arith.constant 0 : i32
    return %c0_i32, %c0_i32_0, %arg0 : i32, i32, i32
  }
  func.func @transform_4(%arg0: i32) -> (i32, i32) {
    %c0_i32 = arith.constant 0 : i32
    %c0_i32_0 = arith.constant 0 : i32
    return %c0_i32, %arg0 : i32, i32
  }
  func.func @transform_5(%arg0: i32) -> (i32, i32) {
    %c0_i32 = arith.constant 0 : i32
    %c0_i32_0 = arith.constant 0 : i32
    return %arg0, %c0_i32 : i32, i32
  }
  func.func @transform_6(%arg0: i32) -> (i32, i32) {
    %c0_i32 = arith.constant 0 : i32
    %c0_i32_0 = arith.constant 0 : i32
    %c0_i32_1 = arith.constant 0 : i32
    return %c0_i32, %c0_i32_0 : i32, i32
  }
  func.func @transform_7(%arg0: i32) -> (i32, i32) {
    %c0_i32 = arith.constant 0 : i32
    %c0_i32_0 = arith.constant 0 : i32
    %c0_i32_1 = arith.constant 0 : i32
    return %c0_i32, %c0_i32_0 : i32, i32
  }
  func.func @transform_8(%arg0: i32) -> (i32, i32) {
    %c0_i32 = arith.constant 0 : i32
    %c0_i32_0 = arith.constant 0 : i32
    %c0_i32_1 = arith.constant 0 : i32
    return %c0_i32, %c0_i32_0 : i32, i32
  }
  func.func @transform_9(%arg0: i32) -> (i32, i32) {
    %c0_i32 = arith.constant 0 : i32
    %c0_i32_0 = arith.constant 0 : i32
    %c0_i32_1 = arith.constant 0 : i32
    return %c0_i32, %c0_i32_0 : i32, i32
  }
}

</mosaic_0001>

<llo_original>
// kernel: deep_q_network_forward.1
$region0: #{deep_q_network_forward.1}
  #allocation0 [shape = 'u32[]', space=smem, size = 0x4, offset = 0x4, fixed_abs, tag = 'smem constant byte address 0x4 - core index']
  #allocation1 [shape = 'u32[72,128]{1,0:T(1,128)}', space=vmem, size = 0x9000, scoped, tag = 'internal scratch']
  #allocation2 [shape = 'bf16[8,2,315]{2,1,0:T(2,128)(2,1)}', space=vmem, size = 0x3000, scoped, tag = 'scratch operand']
  #allocation3 [shape = 'f32[2,1024]{1,0:T(2,128)}', space=vmem, size = 0x2000, scoped, tag = 'scratch operand']
  %s0 = inlined_call_operand.vmem [shape: bf16[2,75,315], index: 0, kind: input, shape index: {}]
  %s1 = inlined_call_operand.vmem [shape: bf16[8,75], index: 1, kind: input, shape index: {}]
  %s2 = inlined_call_operand.vmem [shape: f32[8,1], index: 2, kind: input, shape index: {}]
  %s3 = inlined_call_operand.vmem [shape: bf16[8,315,1024], index: 3, kind: input, shape index: {}]
  %s4 = inlined_call_operand.vmem [shape: f32[1,1024], index: 4, kind: input, shape index: {}]
  %s5 = inlined_call_operand.vmem [shape: bf16[1024,1024], index: 5, kind: input, shape index: {}]
  %s6 = inlined_call_operand.vmem [shape: f32[1,1024], index: 6, kind: input, shape index: {}]
  %s7 = inlined_call_operand.vmem [shape: bf16[1024,8], index: 7, kind: input, shape index: {}]
  %s8 = inlined_call_operand.vmem [shape: f32[1,8], index: 8, kind: input, shape index: {}]
  %s9 = inlined_call_operand.hbm [shape: f32[2,8], index: 9, kind: output, shape index: {}]
  %s10 = sld [smem:[#allocation0]]
  $region129: #{deep_q_network_forward.1} parent=0
    _
  %s12 = ssub.s32 1, %s10
  %s13 = scalar_select 0, %s12, %s10
  $region1: #{deep_q_network_forward.1} parent=0
    #allocation4 [shape = 'u8[2621440]{0}', space=vmem, size = 0x280000, scoped, tag = 'input window, operand 3']
    #allocation5 [shape = 'u8[1024]{0}', space=vmem, size = 0x400, scoped, tag = 'output window, operand 0, single buffered']
    #allocation6 [shape = 's32[2]{0}', space=sflag, size = 0x8, scoped, tag = 'scoped memory for deep_q_network_forward.1']
    %14 = vsyncpa [#allocation6], 0
    loop: start=0, step=1, limit=6
    $region2: #{deep_q_network_forward.1} parent=1 // loop_pre_header
      _
    $region3: #{deep_q_network_forward.1} parent=1 // loop_header
      %s16 = sphi 0, %s20
      %p17 = scmp.ge.s32.totalorder %s16, 6
      %s24 = sphi 0, %s24
      %s26 = sphi 0, %s24
      %s27 = sphi 0, %s26
      %s41 = sphi 0, %s27
      %s45 = sphi 0, %s45
      %s47 = sphi 0, %s45
      %s48 = sphi 0, %s47
      %s62 = sphi 0, %s48
      %s66 = sphi 0, %s66
      %s68 = sphi 0, %s66
      %s69 = sphi 0, %s68
      %s83 = sphi 0, %s69
      %s89 = sphi 0, %s91
      %s92 = sphi 0, %s89
      %s93 = sphi 0, %s92
      %s109 = sphi 0, %s93
      %s115 = sphi 0, %s117
      %s118 = sphi 0, %s115
      %s119 = sphi 0, %s118
      %s135 = sphi 0, %s119
      %s141 = sphi 0, %s143
      %s144 = sphi 0, %s141
      %s145 = sphi 0, %s144
      %s161 = sphi 0, %s145
      %s165 = sphi 0, %s165
      %s167 = sphi 0, %s165
      %s168 = sphi 0, %s167
      %s182 = sphi 0, %s168
      %s186 = sphi 0, %s186
      %s188 = sphi 0, %s186
      %s189 = sphi 0, %s188
      %s203 = sphi 0, %s189
      %s207 = sphi 0, %s207
      %s209 = sphi 0, %s207
      %s210 = sphi 0, %s209
      %s224 = sphi 0, %s210
      %s228 = sphi 0, %s228
      %s230 = sphi 0, %s228
      %s231 = sphi 0, %s230
      %s245 = sphi 0, %s231
    $region4: #{deep_q_network_forward.1} parent=1 // loop_header_branch
      %19 = sbr.rel (%p17) target = $region8
    $region5: #{deep_q_network_forward.1} parent=1 // loop_body
      %s21 = ssub.s32 %s16, 1
      %s22 = ssub.s32 %s16, 2
      %s23 = sadd.s32 %s16, 1
      %s25 = sadd.s32 %s24, 1
      %p28 = scmp.eq.s32.totalorder %s16, 3
      %p29 = scmp.ne.s32.totalorder %s24, %s26
      %p30 = scmp.eq.s32.totalorder %s16, 0
      %p31 = por %p29, %p30
      %p32 = scmp.ne.s32.totalorder %s24, %s26
      %p33 = scmp.eq.s32.totalorder %s21, 3
      %p34 = por %p32, %p33
      %p35 = scmp.ne.s32.totalorder %s26, %s27
      %p36 = scmp.eq.s32.totalorder %s21, 0
      %p37 = por %p35, %p36
      %p38 = scmp.ne.s32.totalorder %s26, %s27
      %p39 = scmp.eq.s32.totalorder %s22, 3
      %p40 = por %p38, %p39
      %p42 = scmp.ne.s32.totalorder %s27, %s41
      %p43 = scmp.eq.s32.totalorder %s22, 0
      %p44 = por %p42, %p43
      %s46 = sadd.s32 %s45, 1
      %p49 = scmp.eq.s32.totalorder %s16, 3
      %p50 = scmp.ne.s32.totalorder %s45, %s47
      %p51 = scmp.eq.s32.totalorder %s16, 0
      %p52 = por %p50, %p51
      %p53 = scmp.ne.s32.totalorder %s45, %s47
      %p54 = scmp.eq.s32.totalorder %s21, 3
      %p55 = por %p53, %p54
      %p56 = scmp.ne.s32.totalorder %s47, %s48
      %p57 = scmp.eq.s32.totalorder %s21, 0
      %p58 = por %p56, %p57
      %p59 = scmp.ne.s32.totalorder %s47, %s48
      %p60 = scmp.eq.s32.totalorder %s22, 3
      %p61 = por %p59, %p60
      %p63 = scmp.ne.s32.totalorder %s48, %s62
      %p64 = scmp.eq.s32.totalorder %s22, 0
      %p65 = por %p63, %p64
      %s67 = sadd.s32 %s66, 1
      %p70 = scmp.eq.s32.totalorder %s16, 3
      %p71 = scmp.ne.s32.totalorder %s66, %s68
      %p72 = scmp.eq.s32.totalorder %s16, 0
      %p73 = por %p71, %p72
      %p74 = scmp.ne.s32.totalorder %s66, %s68
      %p75 = scmp.eq.s32.totalorder %s21, 3
      %p76 = por %p74, %p75
      %p77 = scmp.ne.s32.totalorder %s68, %s69
      %p78 = scmp.eq.s32.totalorder %s21, 0
      %p79 = por %p77, %p78
      %p80 = scmp.ne.s32.totalorder %s68, %s69
      %p81 = scmp.eq.s32.totalorder %s22, 3
      %p82 = por %p80, %p81
      %p84 = scmp.ne.s32.totalorder %s69, %s83
      %p85 = scmp.eq.s32.totalorder %s22, 0
      %p86 = por %p84, %p85
      %s87 = ssub.s32 %s16, %s23
      %p88 = scmp.eq.s32.totalorder %s87, 0
      %s90 = sadd.s32 %s89, 1
      %s91 = scalar_select %p88, %s89, %s90
      %p94 = pneg %p88
      %p95 = scmp.eq.s32.totalorder %s16, 3
      %p96 = por %p94, %p95
      %p97 = scmp.ne.s32.totalorder %s89, %s92
      %p98 = scmp.eq.s32.totalorder %s16, 0
      %p99 = por %p97, %p98
      %p100 = scmp.ne.s32.totalorder %s89, %s92
      %p101 = scmp.eq.s32.totalorder %s21, 3
      %p102 = por %p100, %p101
      %p103 = scmp.ne.s32.totalorder %s92, %s93
      %p104 = scmp.eq.s32.totalorder %s21, 0
      %p105 = por %p103, %p104
      %p106 = scmp.ne.s32.totalorder %s92, %s93
      %p107 = scmp.eq.s32.totalorder %s22, 3
      %p108 = por %p106, %p107
      %p110 = scmp.ne.s32.totalorder %s93, %s109
      %p111 = scmp.eq.s32.totalorder %s22, 0
      %p112 = por %p110, %p111
      %s113 = ssub.s32 %s16, %s23
      %p114 = scmp.eq.s32.totalorder %s113, 0
      %s116 = sadd.s32 %s115, 1
      %s117 = scalar_select %p114, %s115, %s116
      %p120 = pneg %p114
      %p121 = scmp.eq.s32.totalorder %s16, 3
      %p122 = por %p120, %p121
      %p123 = scmp.ne.s32.totalorder %s115, %s118
      %p124 = scmp.eq.s32.totalorder %s16, 0
      %p125 = por %p123, %p124
      %p126 = scmp.ne.s32.totalorder %s115, %s118
      %p127 = scmp.eq.s32.totalorder %s21, 3
      %p128 = por %p126, %p127
      %p129 = scmp.ne.s32.totalorder %s118, %s119
      %p130 = scmp.eq.s32.totalorder %s21, 0
      %p131 = por %p129, %p130
      %p132 = scmp.ne.s32.totalorder %s118, %s119
      %p133 = scmp.eq.s32.totalorder %s22, 3
      %p134 = por %p132, %p133
      %p136 = scmp.ne.s32.totalorder %s119, %s135
      %p137 = scmp.eq.s32.totalorder %s22, 0
      %p138 = por %p136, %p137
      %s139 = ssub.s32 %s16, %s23
      %p140 = scmp.eq.s32.totalorder %s139, 0
      %s142 = sadd.s32 %s141, 1
      %s143 = scalar_select %p140, %s141, %s142
      %p146 = pneg %p140
      %p147 = scmp.eq.s32.totalorder %s16, 3
      %p148 = por %p146, %p147
      %p149 = scmp.ne.s32.totalorder %s141, %s144
      %p150 = scmp.eq.s32.totalorder %s16, 0
      %p151 = por %p149, %p150
      %p152 = scmp.ne.s32.totalorder %s141, %s144
      %p153 = scmp.eq.s32.totalorder %s21, 3
      %p154 = por %p152, %p153
      %p155 = scmp.ne.s32.totalorder %s144, %s145
      %p156 = scmp.eq.s32.totalorder %s21, 0
      %p157 = por %p155, %p156
      %p158 = scmp.ne.s32.totalorder %s144, %s145
      %p159 = scmp.eq.s32.totalorder %s22, 3
      %p160 = por %p158, %p159
      %p162 = scmp.ne.s32.totalorder %s145, %s161
      %p163 = scmp.eq.s32.totalorder %s22, 0
      %p164 = por %p162, %p163
      %s166 = sadd.s32 %s165, 1
      %p169 = scmp.eq.s32.totalorder %s16, 3
      %p170 = scmp.ne.s32.totalorder %s165, %s167
      %p171 = scmp.eq.s32.totalorder %s16, 0
      %p172 = por %p170, %p171
      %p173 = scmp.ne.s32.totalorder %s165, %s167
      %p174 = scmp.eq.s32.totalorder %s21, 3
      %p175 = por %p173, %p174
      %p176 = scmp.ne.s32.totalorder %s167, %s168
      %p177 = scmp.eq.s32.totalorder %s21, 0
      %p178 = por %p176, %p177
      %p179 = scmp.ne.s32.totalorder %s167, %s168
      %p180 = scmp.eq.s32.totalorder %s22, 3
      %p181 = por %p179, %p180
      %p183 = scmp.ne.s32.totalorder %s168, %s182
      %p184 = scmp.eq.s32.totalorder %s22, 0
      %p185 = por %p183, %p184
      %s187 = sadd.s32 %s186, 1
      %p190 = scmp.eq.s32.totalorder %s16, 3
      %p191 = scmp.ne.s32.totalorder %s186, %s188
      %p192 = scmp.eq.s32.totalorder %s16, 0
      %p193 = por %p191, %p192
      %p194 = scmp.ne.s32.totalorder %s186, %s188
      %p195 = scmp.eq.s32.totalorder %s21, 3
      %p196 = por %p194, %p195
      %p197 = scmp.ne.s32.totalorder %s188, %s189
      %p198 = scmp.eq.s32.totalorder %s21, 0
      %p199 = por %p197, %p198
      %p200 = scmp.ne.s32.totalorder %s188, %s189
      %p201 = scmp.eq.s32.totalorder %s22, 3
      %p202 = por %p200, %p201
      %p204 = scmp.ne.s32.totalorder %s189, %s203
      %p205 = scmp.eq.s32.totalorder %s22, 0
      %p206 = por %p204, %p205
      %s208 = sadd.s32 %s207, 1
      %p211 = scmp.eq.s32.totalorder %s16, 3
      %p212 = scmp.ne.s32.totalorder %s207, %s209
      %p213 = scmp.eq.s32.totalorder %s16, 0
      %p214 = por %p212, %p213
      %p215 = scmp.ne.s32.totalorder %s207, %s209
      %p216 = scmp.eq.s32.totalorder %s21, 3
      %p217 = por %p215, %p216
      %p218 = scmp.ne.s32.totalorder %s209, %s210
      %p219 = scmp.eq.s32.totalorder %s21, 0
      %p220 = por %p218, %p219
      %p221 = scmp.ne.s32.totalorder %s209, %s210
      %p222 = scmp.eq.s32.totalorder %s22, 3
      %p223 = por %p221, %p222
      %p225 = scmp.ne.s32.totalorder %s210, %s224
      %p226 = scmp.eq.s32.totalorder %s22, 0
      %p227 = por %p225, %p226
      %s229 = sadd.s32 %s228, 1
      %p232 = scmp.eq.s32.totalorder %s16, 3
      %p233 = scmp.ne.s32.totalorder %s228, %s230
      %p234 = scmp.eq.s32.totalorder %s16, 0
      %p235 = por %p233, %p234
      %p236 = scmp.ne.s32.totalorder %s228, %s230
      %p237 = scmp.eq.s32.totalorder %s21, 3
      %p238 = por %p236, %p237
      %p239 = scmp.ne.s32.totalorder %s230, %s231
      %p240 = scmp.eq.s32.totalorder %s21, 0
      %p241 = por %p239, %p240
      %p242 = scmp.ne.s32.totalorder %s230, %s231
      %p243 = scmp.eq.s32.totalorder %s22, 3
      %p244 = por %p242, %p243
      %p246 = scmp.ne.s32.totalorder %s231, %s245
      %p247 = scmp.eq.s32.totalorder %s22, 0
      %p248 = por %p246, %p247
      %p249 = scmp.le.s32.totalorder 1, %s16
      %p250 = scmp.lt.s32.totalorder %s16, 5
      %p251 = pnand %p249, %p250
      %p252 = pneg %p251
      // Predicated region
      $region9: #{deep_q_network_forward.1} parent=5 // pred_check
        _
      $region10: #{deep_q_network_forward.1} parent=5 // pred_check_branch
        %254 = sbr.rel (%p251) target = $region12
      $region11: #{deep_q_network_forward.1} parent=5 // pred_region
        %s255 = ssub.s32 %s16, 1
        // Predicated region
        $region13: #{deep_q_network_forward.1} parent=11 // pred_check
          %p256 = pneg %p37
        $region14: #{deep_q_network_forward.1} parent=11 // pred_check_branch
          %258 = sbr.rel (%p256) target = $region16
        $region15: #{deep_q_network_forward.1} parent=11 // pred_region
          _
        $region16: #{deep_q_network_forward.1} parent=11 // pred_fallthru
          _
        // Predicated region
        $region17: #{deep_q_network_forward.1} parent=11 // pred_check
          %p259 = pneg %p58
        $region18: #{deep_q_network_forward.1} parent=11 // pred_check_branch
          %261 = sbr.rel (%p259) target = $region20
        $region19: #{deep_q_network_forward.1} parent=11 // pred_region
          _
        $region20: #{deep_q_network_forward.1} parent=11 // pred_fallthru
          _
        // Predicated region
        $region21: #{deep_q_network_forward.1} parent=11 // pred_check
          %p262 = pneg %p79
        $region22: #{deep_q_network_forward.1} parent=11 // pred_check_branch
          %264 = sbr.rel (%p262) target = $region24
        $region23: #{deep_q_network_forward.1} parent=11 // pred_region
          _
        $region24: #{deep_q_network_forward.1} parent=11 // pred_fallthru
          _
        // Predicated region
        $region25: #{deep_q_network_forward.1} parent=11 // pred_check
          %p265 = pneg %p178
        $region26: #{deep_q_network_forward.1} parent=11 // pred_check_branch
          %267 = sbr.rel (%p265) target = $region28
        $region27: #{deep_q_network_forward.1} parent=11 // pred_region
          _
        $region28: #{deep_q_network_forward.1} parent=11 // pred_fallthru
          _
        // Predicated region
        $region29: #{deep_q_network_forward.1} parent=11 // pred_check
          %p268 = pneg %p199
        $region30: #{deep_q_network_forward.1} parent=11 // pred_check_branch
          %270 = sbr.rel (%p268) target = $region32
        $region31: #{deep_q_network_forward.1} parent=11 // pred_region
          _
        $region32: #{deep_q_network_forward.1} parent=11 // pred_fallthru
          _
        // Predicated region
        $region33: #{deep_q_network_forward.1} parent=11 // pred_check
          %p271 = pneg %p220
        $region34: #{deep_q_network_forward.1} parent=11 // pred_check_branch
          %273 = sbr.rel (%p271) target = $region36
        $region35: #{deep_q_network_forward.1} parent=11 // pred_region
          _
        $region36: #{deep_q_network_forward.1} parent=11 // pred_fallthru
          _
      $region12: #{deep_q_network_forward.1} parent=5 // pred_fallthru
        _
      %p274 = scmp.lt.s32.totalorder %s16, 4
      // Predicated region
      $region37: #{deep_q_network_forward.1} parent=5 // pred_check
        %p275 = pneg %p274
      $region38: #{deep_q_network_forward.1} parent=5 // pred_check_branch
        %277 = sbr.rel (%p275) target = $region40
      $region39: #{deep_q_network_forward.1} parent=5 // pred_region
        // Predicated region
        $region41: #{deep_q_network_forward.1} parent=39 // pred_check
          %p278 = pneg %p99
        $region42: #{deep_q_network_forward.1} parent=39 // pred_check_branch
          %280 = sbr.rel (%p278) target = $region44
        $region43: #{deep_q_network_forward.1} parent=39 // pred_region
          %s281 = sand.u32 %s89, 1
          %s282 = sand.u32 %s89, 1
          %s283 = smul.addr %s282, 2560
          %s284 = scalar_lea.vmem [#allocation4], %s283
          %s285 = smul.u32 2, %s16
          %s286 = smul.addr %s285, 4
          %s287 = scalar_lea.vmem %s3, %s286
          // Predicated region
          $region45: #{deep_q_network_forward.1} parent=43 // pred_check
            _
          $region46: #{deep_q_network_forward.1} parent=43 // pred_check_branch
            %289 = sbr.rel (0) target = $region48
          $region47: #{deep_q_network_forward.1} parent=43 // pred_region
            // Predicated region
            $region49: #{deep_q_network_forward.1} parent=47 // pred_check
              _
            $region50: #{deep_q_network_forward.1} parent=47 // pred_check_branch
              %291 = sbr.rel (0) target = $region52
            $region51: #{deep_q_network_forward.1} parent=47 // pred_region
              // Predicated region
              $region64: #{deep_q_network_forward.1} parent=51 // pred_check
                _
              $region65: #{deep_q_network_forward.1} parent=51 // pred_check_branch
                %945 = sbr.rel (0) target = $region67
              $region66: #{deep_q_network_forward.1} parent=51 // pred_region
                loop: start=0, step=1, limit=1
                $region68: #{deep_q_network_forward.1} parent=66 // loop_pre_header
                  _
                $region69: #{deep_q_network_forward.1} parent=66 // loop_header
                  %s947 = sphi 0, %s951
                  %p948 = scmp.ge.s32.totalorder %s947, 1
                  %s952 = sphi 0, %s1597
                  %s953 = sphi %s287, %s1600
                  %s954 = sphi %s284, %s1601
                $region70: #{deep_q_network_forward.1} parent=66 // loop_header_branch
                  %950 = sbr.rel (%p948) target = $region74
                $region71: #{deep_q_network_forward.1} parent=66 // loop_body
                  %v955 = vld [vmem:[%s953] sm:$0xff]
                  %956 = vst [vmem:[%s954] sm:$0xff] %v955
                  %v957 = vld [vmem:[%s953 + $0x20] sm:$0xff]
                  %958 = vst [vmem:[%s954 + $0x8] sm:$0xff] %v957
                  %v959 = vld [vmem:[%s953 + $0x40] sm:$0xff]
                  %960 = vst [vmem:[%s954 + $0x10] sm:$0xff] %v959
                  %v961 = vld [vmem:[%s953 + $0x60] sm:$0xff]
                  %962 = vst [vmem:[%s954 + $0x18] sm:$0xff] %v961
                  %v963 = vld [vmem:[%s953 + $0x80] sm:$0xff]
                  %964 = vst [vmem:[%s954 + $0x20] sm:$0xff] %v963
                  %v965 = vld [vmem:[%s953 + $0xa0] sm:$0xff]
                  %966 = vst [vmem:[%s954 + $0x28] sm:$0xff] %v965
                  %v967 = vld [vmem:[%s953 + $0xc0] sm:$0xff]
                  %968 = vst [vmem:[%s954 + $0x30] sm:$0xff] %v967
                  %v969 = vld [vmem:[%s953 + $0xe0] sm:$0xff]
                  %970 = vst [vmem:[%s954 + $0x38] sm:$0xff] %v969
                  %v971 = vld [vmem:[%s953 + $0x100] sm:$0xff]
                  %972 = vst [vmem:[%s954 + $0x40] sm:$0xff] %v971
                  %v973 = vld [vmem:[%s953 + $0x120] sm:$0xff]
                  %974 = vst [vmem:[%s954 + $0x48] sm:$0xff] %v973
                  %v975 = vld [vmem:[%s953 + $0x140] sm:$0xff]
                  %976 = vst [vmem:[%s954 + $0x50] sm:$0xff] %v975
                  %v977 = vld [vmem:[%s953 + $0x160] sm:$0xff]
                  %978 = vst [vmem:[%s954 + $0x58] sm:$0xff] %v977
                  %v979 = vld [vmem:[%s953 + $0x180] sm:$0xff]
                  %980 = vst [vmem:[%s954 + $0x60] sm:$0xff] %v979
                  %v981 = vld [vmem:[%s953 + $0x1a0] sm:$0xff]
                  %982 = vst [vmem:[%s954 + $0x68] sm:$0xff] %v981
                  %v983 = vld [vmem:[%s953 + $0x1c0] sm:$0xff]
                  %984 = vst [vmem:[%s954 + $0x70] sm:$0xff] %v983
                  %v985 = vld [vmem:[%s953 + $0x1e0] sm:$0xff]
                  %986 = vst [vmem:[%s954 + $0x78] sm:$0xff] %v985
                  %v987 = vld [vmem:[%s953 + $0x200] sm:$0xff]
                  %988 = vst [vmem:[%s954 + $0x80] sm:$0xff] %v987
                  %v989 = vld [vmem:[%s953 + $0x220] sm:$0xff]
                  %990 = vst [vmem:[%s954 + $0x88] sm:$0xff] %v989
                  %v991 = vld [vmem:[%s953 + $0x240] sm:$0xff]
                  %992 = vst [vmem:[%s954 + $0x90] sm:$0xff] %v991
                  %v993 = vld [vmem:[%s953 + $0x260] sm:$0xff]
                  %994 = vst [vmem:[%s954 + $0x98] sm:$0xff] %v993
                  %v995 = vld [vmem:[%s953 + $0x280] sm:$0xff]
                  %996 = vst [vmem:[%s954 + $0xa0] sm:$0xff] %v995
                  %v997 = vld [vmem:[%s953 + $0x2a0] sm:$0xff]
                  %998 = vst [vmem:[%s954 + $0xa8] sm:$0xff] %v997
                  %v999 = vld [vmem:[%s953 + $0x2c0] sm:$0xff]
                  %1000 = vst [vmem:[%s954 + $0xb0] sm:$0xff] %v999
                  %v1001 = vld [vmem:[%s953 + $0x2e0] sm:$0xff]
                  %1002 = vst [vmem:[%s954 + $0xb8] sm:$0xff] %v1001
                  %v1003 = vld [vmem:[%s953 + $0x300] sm:$0xff]
                  %1004 = vst [vmem:[%s954 + $0xc0] sm:$0xff] %v1003
                  %v1005 = vld [vmem:[%s953 + $0x320] sm:$0xff]
                  %1006 = vst [vmem:[%s954 + $0xc8] sm:$0xff] %v1005
                  %v1007 = vld [vmem:[%s953 + $0x340] sm:$0xff]
                  %1008 = vst [vmem:[%s954 + $0xd0] sm:$0xff] %v1007
                  %v1009 = vld [vmem:[%s953 + $0x360] sm:$0xff]
                  %1010 = vst [vmem:[%s954 + $0xd8] sm:$0xff] %v1009
                  %v1011 = vld [vmem:[%s953 + $0x380] sm:$0xff]
                  %1012 = vst [vmem:[%s954 + $0xe0] sm:$0xff] %v1011
                  %v1013 = vld [vmem:[%s953 + $0x3a0] sm:$0xff]
                  %1014 = vst [vmem:[%s954 + $0xe8] sm:$0xff] %v1013
                  %v1015 = vld [vmem:[%s953 + $0x3c0] sm:$0xff]
                  %1016 = vst [vmem:[%s954 + $0xf0] sm:$0xff] %v1015
                  %v1017 = vld [vmem:[%s953 + $0x3e0] sm:$0xff]
                  %1018 = vst [vmem:[%s954 + $0xf8] sm:$0xff] %v1017
                  %v1019 = vld [vmem:[%s953 + $0x400] sm:$0xff]
                  %1020 = vst [vmem:[%s954 + $0x100] sm:$0xff] %v1019
                  %v1021 = vld [vmem:[%s953 + $0x420] sm:$0xff]
                  %1022 = vst [vmem:[%s954 + $0x108] sm:$0xff] %v1021
                  %v1023 = vld [vmem:[%s953 + $0x440] sm:$0xff]
                  %1024 = vst [vmem:[%s954 + $0x110] sm:$0xff] %v1023
                  %v1025 = vld [vmem:[%s953 + $0x460] sm:$0xff]
                  %1026 = vst [vmem:[%s954 + $0x118] sm:$0xff] %v1025
                  %v1027 = vld [vmem:[%s953 + $0x480] sm:$0xff]
                  %1028 = vst [vmem:[%s954 + $0x120] sm:$0xff] %v1027
                  %v1029 = vld [vmem:[%s953 + $0x4a0] sm:$0xff]
                  %1030 = vst [vmem:[%s954 + $0x128] sm:$0xff] %v1029
                  %v1031 = vld [vmem:[%s953 + $0x4c0] sm:$0xff]
                  %1032 = vst [vmem:[%s954 + $0x130] sm:$0xff] %v1031
                  %v1033 = vld [vmem:[%s953 + $0x4e0] sm:$0xff]
                  %1034 = vst [vmem:[%s954 + $0x138] sm:$0xff] %v1033
                  %v1035 = vld [vmem:[%s953 + $0x500] sm:$0xff]
                  %1036 = vst [vmem:[%s954 + $0x140] sm:$0xff] %v1035
                  %v1037 = vld [vmem:[%s953 + $0x520] sm:$0xff]
                  %1038 = vst [vmem:[%s954 + $0x148] sm:$0xff] %v1037
                  %v1039 = vld [vmem:[%s953 + $0x540] sm:$0xff]
                  %1040 = vst [vmem:[%s954 + $0x150] sm:$0xff] %v1039
                  %v1041 = vld [vmem:[%s953 + $0x560] sm:$0xff]
                  %1042 = vst [vmem:[%s954 + $0x158] sm:$0xff] %v1041
                  %v1043 = vld [vmem:[%s953 + $0x580] sm:$0xff]
                  %1044 = vst [vmem:[%s954 + $0x160] sm:$0xff] %v1043
                  %v1045 = vld [vmem:[%s953 + $0x5a0] sm:$0xff]
                  %1046 = vst [vmem:[%s954 + $0x168] sm:$0xff] %v1045
                  %v1047 = vld [vmem:[%s953 + $0x5c0] sm:$0xff]
                  %1048 = vst [vmem:[%s954 + $0x170] sm:$0xff] %v1047
                  %v1049 = vld [vmem:[%s953 + $0x5e0] sm:$0xff]
                  %1050 = vst [vmem:[%s954 + $0x178] sm:$0xff] %v1049
                  %v1051 = vld [vmem:[%s953 + $0x600] sm:$0xff]
                  %1052 = vst [vmem:[%s954 + $0x180] sm:$0xff] %v1051
                  %v1053 = vld [vmem:[%s953 + $0x620] sm:$0xff]
                  %1054 = vst [vmem:[%s954 + $0x188] sm:$0xff] %v1053
                  %v1055 = vld [vmem:[%s953 + $0x640] sm:$0xff]
                  %1056 = vst [vmem:[%s954 + $0x190] sm:$0xff] %v1055
                  %v1057 = vld [vmem:[%s953 + $0x660] sm:$0xff]
                  %1058 = vst [vmem:[%s954 + $0x198] sm:$0xff] %v1057
                  %v1059 = vld [vmem:[%s953 + $0x680] sm:$0xff]
                  %1060 = vst [vmem:[%s954 + $0x1a0] sm:$0xff] %v1059
                  %v1061 = vld [vmem:[%s953 + $0x6a0] sm:$0xff]
                  %1062 = vst [vmem:[%s954 + $0x1a8] sm:$0xff] %v1061
                  %v1063 = vld [vmem:[%s953 + $0x6c0] sm:$0xff]
                  %1064 = vst [vmem:[%s954 + $0x1b0] sm:$0xff] %v1063
                  %v1065 = vld [vmem:[%s953 + $0x6e0] sm:$0xff]
                  %1066 = vst [vmem:[%s954 + $0x1b8] sm:$0xff] %v1065
                  %v1067 = vld [vmem:[%s953 + $0x700] sm:$0xff]
                  %1068 = vst [vmem:[%s954 + $0x1c0] sm:$0xff] %v1067
                  %v1069 = vld [vmem:[%s953 + $0x720] sm:$0xff]
                  %1070 = vst [vmem:[%s954 + $0x1c8] sm:$0xff] %v1069
                  %v1071 = vld [vmem:[%s953 + $0x740] sm:$0xff]
                  %1072 = vst [vmem:[%s954 + $0x1d0] sm:$0xff] %v1071
                  %v1073 = vld [vmem:[%s953 + $0x760] sm:$0xff]
                  %1074 = vst [vmem:[%s954 + $0x1d8] sm:$0xff] %v1073
                  %v1075 = vld [vmem:[%s953 + $0x780] sm:$0xff]
                  %1076 = vst [vmem:[%s954 + $0x1e0] sm:$0xff] %v1075
                  %v1077 = vld [vmem:[%s953 + $0x7a0] sm:$0xff]
                  %1078 = vst [vmem:[%s954 + $0x1e8] sm:$0xff] %v1077
                  %v1079 = vld [vmem:[%s953 + $0x7c0] sm:$0xff]
                  %1080 = vst [vmem:[%s954 + $0x1f0] sm:$0xff] %v1079
                  %v1081 = vld [vmem:[%s953 + $0x7e0] sm:$0xff]
                  %1082 = vst [vmem:[%s954 + $0x1f8] sm:$0xff] %v1081
                  %v1083 = vld [vmem:[%s953 + $0x800] sm:$0xff]
                  %1084 = vst [vmem:[%s954 + $0x200] sm:$0xff] %v1083
                  %v1085 = vld [vmem:[%s953 + $0x820] sm:$0xff]
                  %1086 = vst [vmem:[%s954 + $0x208] sm:$0xff] %v1085
                  %v1087 = vld [vmem:[%s953 + $0x840] sm:$0xff]
                  %1088 = vst [vmem:[%s954 + $0x210] sm:$0xff] %v1087
                  %v1089 = vld [vmem:[%s953 + $0x860] sm:$0xff]
                  %1090 = vst [vmem:[%s954 + $0x218] sm:$0xff] %v1089
                  %v1091 = vld [vmem:[%s953 + $0x880] sm:$0xff]
                  %1092 = vst [vmem:[%s954 + $0x220] sm:$0xff] %v1091
                  %v1093 = vld [vmem:[%s953 + $0x8a0] sm:$0xff]
                  %1094 = vst [vmem:[%s954 + $0x228] sm:$0xff] %v1093
                  %v1095 = vld [vmem:[%s953 + $0x8c0] sm:$0xff]
                  %1096 = vst [vmem:[%s954 + $0x230] sm:$0xff] %v1095
                  %v1097 = vld [vmem:[%s953 + $0x8e0] sm:$0xff]
                  %1098 = vst [vmem:[%s954 + $0x238] sm:$0xff] %v1097
                  %v1099 = vld [vmem:[%s953 + $0x900] sm:$0xff]
                  %1100 = vst [vmem:[%s954 + $0x240] sm:$0xff] %v1099
                  %v1101 = vld [vmem:[%s953 + $0x920] sm:$0xff]
                  %1102 = vst [vmem:[%s954 + $0x248] sm:$0xff] %v1101
                  %v1103 = vld [vmem:[%s953 + $0x940] sm:$0xff]
                  %1104 = vst [vmem:[%s954 + $0x250] sm:$0xff] %v1103
                  %v1105 = vld [vmem:[%s953 + $0x960] sm:$0xff]
                  %1106 = vst [vmem:[%s954 + $0x258] sm:$0xff] %v1105
                  %v1107 = vld [vmem:[%s953 + $0x980] sm:$0xff]
                  %1108 = vst [vmem:[%s954 + $0x260] sm:$0xff] %v1107
                  %v1109 = vld [vmem:[%s953 + $0x9a0] sm:$0xff]
                  %1110 = vst [vmem:[%s954 + $0x268] sm:$0xff] %v1109
                  %v1111 = vld [vmem:[%s953 + $0x9c0] sm:$0xff]
                  %1112 = vst [vmem:[%s954 + $0x270] sm:$0xff] %v1111
                  %v1113 = vld [vmem:[%s953 + $0x9e0] sm:$0xff]
                  %1114 = vst [vmem:[%s954 + $0x278] sm:$0xff] %v1113
                  %v1115 = vld [vmem:[%s953 + $0xa00] sm:$0xff]
                  %1116 = vst [vmem:[%s954 + $0x280] sm:$0xff] %v1115
                  %v1117 = vld [vmem:[%s953 + $0xa20] sm:$0xff]
                  %1118 = vst [vmem:[%s954 + $0x288] sm:$0xff] %v1117
                  %v1119 = vld [vmem:[%s953 + $0xa40] sm:$0xff]
                  %1120 = vst [vmem:[%s954 + $0x290] sm:$0xff] %v1119
                  %v1121 = vld [vmem:[%s953 + $0xa60] sm:$0xff]
                  %1122 = vst [vmem:[%s954 + $0x298] sm:$0xff] %v1121
                  %v1123 = vld [vmem:[%s953 + $0xa80] sm:$0xff]
                  %1124 = vst [vmem:[%s954 + $0x2a0] sm:$0xff] %v1123
                  %v1125 = vld [vmem:[%s953 + $0xaa0] sm:$0xff]
                  %1126 = vst [vmem:[%s954 + $0x2a8] sm:$0xff] %v1125
                  %v1127 = vld [vmem:[%s953 + $0xac0] sm:$0xff]
                  %1128 = vst [vmem:[%s954 + $0x2b0] sm:$0xff] %v1127
                  %v1129 = vld [vmem:[%s953 + $0xae0] sm:$0xff]
                  %1130 = vst [vmem:[%s954 + $0x2b8] sm:$0xff] %v1129
                  %v1131 = vld [vmem:[%s953 + $0xb00] sm:$0xff]
                  %1132 = vst [vmem:[%s954 + $0x2c0] sm:$0xff] %v1131
                  %v1133 = vld [vmem:[%s953 + $0xb20] sm:$0xff]
                  %1134 = vst [vmem:[%s954 + $0x2c8] sm:$0xff] %v1133
                  %v1135 = vld [vmem:[%s953 + $0xb40] sm:$0xff]
                  %1136 = vst [vmem:[%s954 + $0x2d0] sm:$0xff] %v1135
                  %v1137 = vld [vmem:[%s953 + $0xb60] sm:$0xff]
                  %1138 = vst [vmem:[%s954 + $0x2d8] sm:$0xff] %v1137
                  %v1139 = vld [vmem:[%s953 + $0xb80] sm:$0xff]
                  %1140 = vst [vmem:[%s954 + $0x2e0] sm:$0xff] %v1139
                  %v1141 = vld [vmem:[%s953 + $0xba0] sm:$0xff]
                  %1142 = vst [vmem:[%s954 + $0x2e8] sm:$0xff] %v1141
                  %v1143 = vld [vmem:[%s953 + $0xbc0] sm:$0xff]
                  %1144 = vst [vmem:[%s954 + $0x2f0] sm:$0xff] %v1143
                  %v1145 = vld [vmem:[%s953 + $0xbe0] sm:$0xff]
                  %1146 = vst [vmem:[%s954 + $0x2f8] sm:$0xff] %v1145
                  %v1147 = vld [vmem:[%s953 + $0xc00] sm:$0xff]
                  %1148 = vst [vmem:[%s954 + $0x300] sm:$0xff] %v1147
                  %v1149 = vld [vmem:[%s953 + $0xc20] sm:$0xff]
                  %1150 = vst [vmem:[%s954 + $0x308] sm:$0xff] %v1149
                  %v1151 = vld [vmem:[%s953 + $0xc40] sm:$0xff]
                  %1152 = vst [vmem:[%s954 + $0x310] sm:$0xff] %v1151
                  %v1153 = vld [vmem:[%s953 + $0xc60] sm:$0xff]
                  %1154 = vst [vmem:[%s954 + $0x318] sm:$0xff] %v1153
                  %v1155 = vld [vmem:[%s953 + $0xc80] sm:$0xff]
                  %1156 = vst [vmem:[%s954 + $0x320] sm:$0xff] %v1155
                  %v1157 = vld [vmem:[%s953 + $0xca0] sm:$0xff]
                  %1158 = vst [vmem:[%s954 + $0x328] sm:$0xff] %v1157
                  %v1159 = vld [vmem:[%s953 + $0xcc0] sm:$0xff]
                  %1160 = vst [vmem:[%s954 + $0x330] sm:$0xff] %v1159
                  %v1161 = vld [vmem:[%s953 + $0xce0] sm:$0xff]
                  %1162 = vst [vmem:[%s954 + $0x338] sm:$0xff] %v1161
                  %v1163 = vld [vmem:[%s953 + $0xd00] sm:$0xff]
                  %1164 = vst [vmem:[%s954 + $0x340] sm:$0xff] %v1163
                  %v1165 = vld [vmem:[%s953 + $0xd20] sm:$0xff]
                  %1166 = vst [vmem:[%s954 + $0x348] sm:$0xff] %v1165
                  %v1167 = vld [vmem:[%s953 + $0xd40] sm:$0xff]
                  %1168 = vst [vmem:[%s954 + $0x350] sm:$0xff] %v1167
                  %v1169 = vld [vmem:[%s953 + $0xd60] sm:$0xff]
                  %1170 = vst [vmem:[%s954 + $0x358] sm:$0xff] %v1169
                  %v1171 = vld [vmem:[%s953 + $0xd80] sm:$0xff]
                  %1172 = vst [vmem:[%s954 + $0x360] sm:$0xff] %v1171
                  %v1173 = vld [vmem:[%s953 + $0xda0] sm:$0xff]
                  %1174 = vst [vmem:[%s954 + $0x368] sm:$0xff] %v1173
                  %v1175 = vld [vmem:[%s953 + $0xdc0] sm:$0xff]
                  %1176 = vst [vmem:[%s954 + $0x370] sm:$0xff] %v1175
                  %v1177 = vld [vmem:[%s953 + $0xde0] sm:$0xff]
                  %1178 = vst [vmem:[%s954 + $0x378] sm:$0xff] %v1177
                  %v1179 = vld [vmem:[%s953 + $0xe00] sm:$0xff]
                  %1180 = vst [vmem:[%s954 + $0x380] sm:$0xff] %v1179
                  %v1181 = vld [vmem:[%s953 + $0xe20] sm:$0xff]
                  %1182 = vst [vmem:[%s954 + $0x388] sm:$0xff] %v1181
                  %v1183 = vld [vmem:[%s953 + $0xe40] sm:$0xff]
                  %1184 = vst [vmem:[%s954 + $0x390] sm:$0xff] %v1183
                  %v1185 = vld [vmem:[%s953 + $0xe60] sm:$0xff]
                  %1186 = vst [vmem:[%s954 + $0x398] sm:$0xff] %v1185
                  %v1187 = vld [vmem:[%s953 + $0xe80] sm:$0xff]
                  %1188 = vst [vmem:[%s954 + $0x3a0] sm:$0xff] %v1187
                  %v1189 = vld [vmem:[%s953 + $0xea0] sm:$0xff]
                  %1190 = vst [vmem:[%s954 + $0x3a8] sm:$0xff] %v1189
                  %v1191 = vld [vmem:[%s953 + $0xec0] sm:$0xff]
                  %1192 = vst [vmem:[%s954 + $0x3b0] sm:$0xff] %v1191
                  %v1193 = vld [vmem:[%s953 + $0xee0] sm:$0xff]
                  %1194 = vst [vmem:[%s954 + $0x3b8] sm:$0xff] %v1193
                  %v1195 = vld [vmem:[%s953 + $0xf00] sm:$0xff]
                  %1196 = vst [vmem:[%s954 + $0x3c0] sm:$0xff] %v1195
                  %v1197 = vld [vmem:[%s953 + $0xf20] sm:$0xff]
                  %1198 = vst [vmem:[%s954 + $0x3c8] sm:$0xff] %v1197
                  %v1199 = vld [vmem:[%s953 + $0xf40] sm:$0xff]
                  %1200 = vst [vmem:[%s954 + $0x3d0] sm:$0xff] %v1199
                  %v1201 = vld [vmem:[%s953 + $0xf60] sm:$0xff]
                  %1202 = vst [vmem:[%s954 + $0x3d8] sm:$0xff] %v1201
                  %v1203 = vld [vmem:[%s953 + $0xf80] sm:$0xff]
                  %1204 = vst [vmem:[%s954 + $0x3e0] sm:$0xff] %v1203
                  %v1205 = vld [vmem:[%s953 + $0xfa0] sm:$0xff]
                  %1206 = vst [vmem:[%s954 + $0x3e8] sm:$0xff] %v1205
                  %v1207 = vld [vmem:[%s953 + $0xfc0] sm:$0xff]
                  %1208 = vst [vmem:[%s954 + $0x3f0] sm:$0xff] %v1207
                  %v1209 = vld [vmem:[%s953 + $0xfe0] sm:$0xff]
                  %1210 = vst [vmem:[%s954 + $0x3f8] sm:$0xff] %v1209
                  %v1211 = vld [vmem:[%s953 + $0x1000] sm:$0xff]
                  %1212 = vst [vmem:[%s954 + $0x400] sm:$0xff] %v1211
                  %v1213 = vld [vmem:[%s953 + $0x1020] sm:$0xff]
                  %1214 = vst [vmem:[%s954 + $0x408] sm:$0xff] %v1213
                  %v1215 = vld [vmem:[%s953 + $0x1040] sm:$0xff]
                  %1216 = vst [vmem:[%s954 + $0x410] sm:$0xff] %v1215
                  %v1217 = vld [vmem:[%s953 + $0x1060] sm:$0xff]
                  %1218 = vst [vmem:[%s954 + $0x418] sm:$0xff] %v1217
                  %v1219 = vld [vmem:[%s953 + $0x1080] sm:$0xff]
                  %1220 = vst [vmem:[%s954 + $0x420] sm:$0xff] %v1219
                  %v1221 = vld [vmem:[%s953 + $0x10a0] sm:$0xff]
                  %1222 = vst [vmem:[%s954 + $0x428] sm:$0xff] %v1221
                  %v1223 = vld [vmem:[%s953 + $0x10c0] sm:$0xff]
                  %1224 = vst [vmem:[%s954 + $0x430] sm:$0xff] %v1223
                  %v1225 = vld [vmem:[%s953 + $0x10e0] sm:$0xff]
                  %1226 = vst [vmem:[%s954 + $0x438] sm:$0xff] %v1225
                  %v1227 = vld [vmem:[%s953 + $0x1100] sm:$0xff]
                  %1228 = vst [vmem:[%s954 + $0x440] sm:$0xff] %v1227
                  %v1229 = vld [vmem:[%s953 + $0x1120] sm:$0xff]
                  %1230 = vst [vmem:[%s954 + $0x448] sm:$0xff] %v1229
                  %v1231 = vld [vmem:[%s953 + $0x1140] sm:$0xff]
                  %1232 = vst [vmem:[%s954 + $0x450] sm:$0xff] %v1231
                  %v1233 = vld [vmem:[%s953 + $0x1160] sm:$0xff]
                  %1234 = vst [vmem:[%s954 + $0x458] sm:$0xff] %v1233
                  %v1235 = vld [vmem:[%s953 + $0x1180] sm:$0xff]
                  %1236 = vst [vmem:[%s954 + $0x460] sm:$0xff] %v1235
                  %v1237 = vld [vmem:[%s953 + $0x11a0] sm:$0xff]
                  %1238 = vst [vmem:[%s954 + $0x468] sm:$0xff] %v1237
                  %v1239 = vld [vmem:[%s953 + $0x11c0] sm:$0xff]
                  %1240 = vst [vmem:[%s954 + $0x470] sm:$0xff] %v1239
                  %v1241 = vld [vmem:[%s953 + $0x11e0] sm:$0xff]
                  %1242 = vst [vmem:[%s954 + $0x478] sm:$0xff] %v1241
                  %v1243 = vld [vmem:[%s953 + $0x1200] sm:$0xff]
                  %1244 = vst [vmem:[%s954 + $0x480] sm:$0xff] %v1243
                  %v1245 = vld [vmem:[%s953 + $0x1220] sm:$0xff]
                  %1246 = vst [vmem:[%s954 + $0x488] sm:$0xff] %v1245
                  %v1247 = vld [vmem:[%s953 + $0x1240] sm:$0xff]
                  %1248 = vst [vmem:[%s954 + $0x490] sm:$0xff] %v1247
                  %v1249 = vld [vmem:[%s953 + $0x1260] sm:$0xff]
                  %1250 = vst [vmem:[%s954 + $0x498] sm:$0xff] %v1249
                  %v1251 = vld [vmem:[%s953 + $0x1280] sm:$0xff]
                  %1252 = vst [vmem:[%s954 + $0x4a0] sm:$0xff] %v1251
                  %v1253 = vld [vmem:[%s953 + $0x12a0] sm:$0xff]
                  %1254 = vst [vmem:[%s954 + $0x4a8] sm:$0xff] %v1253
                  %v1255 = vld [vmem:[%s953 + $0x12c0] sm:$0xff]
                  %1256 = vst [vmem:[%s954 + $0x4b0] sm:$0xff] %v1255
                  %v1257 = vld [vmem:[%s953 + $0x12e0] sm:$0xff]
                  %1258 = vst [vmem:[%s954 + $0x4b8] sm:$0xff] %v1257
                  %v1259 = vld [vmem:[%s953 + $0x1300] sm:$0xff]
                  %1260 = vst [vmem:[%s954 + $0x4c0] sm:$0xff] %v1259
                  %v1261 = vld [vmem:[%s953 + $0x1320] sm:$0xff]
                  %1262 = vst [vmem:[%s954 + $0x4c8] sm:$0xff] %v1261
                  %v1263 = vld [vmem:[%s953 + $0x1340] sm:$0xff]
                  %1264 = vst [vmem:[%s954 + $0x4d0] sm:$0xff] %v1263
                  %v1265 = vld [vmem:[%s953 + $0x1360] sm:$0xff]
                  %1266 = vst [vmem:[%s954 + $0x4d8] sm:$0xff] %v1265
                  %v1267 = vld [vmem:[%s953 + $0x1380] sm:$0xff]
                  %1268 = vst [vmem:[%s954 + $0x4e0] sm:$0xff] %v1267
                  %v1269 = vld [vmem:[%s953 + $0x13a0] sm:$0xff]
                  %1270 = vst [vmem:[%s954 + $0x4e8] sm:$0xff] %v1269
                  %v1271 = vld [vmem:[%s953 + $0x13c0] sm:$0xff]
                  %1272 = vst [vmem:[%s954 + $0x4f0] sm:$0xff] %v1271
                  %v1273 = vld [vmem:[%s953 + $0x13e0] sm:$0xff]
                  %1274 = vst [vmem:[%s954 + $0x4f8] sm:$0xff] %v1273
                  %v1275 = vld [vmem:[%s953 + $0x1400] sm:$0xff]
                  %1276 = vst [vmem:[%s954 + $0x500] sm:$0xff] %v1275
                  %v1277 = vld [vmem:[%s953 + $0x1420] sm:$0xff]
                  %1278 = vst [vmem:[%s954 + $0x508] sm:$0xff] %v1277
                  %v1279 = vld [vmem:[%s953 + $0x1440] sm:$0xff]
                  %1280 = vst [vmem:[%s954 + $0x510] sm:$0xff] %v1279
                  %v1281 = vld [vmem:[%s953 + $0x1460] sm:$0xff]
                  %1282 = vst [vmem:[%s954 + $0x518] sm:$0xff] %v1281
                  %v1283 = vld [vmem:[%s953 + $0x1480] sm:$0xff]
                  %1284 = vst [vmem:[%s954 + $0x520] sm:$0xff] %v1283
                  %v1285 = vld [vmem:[%s953 + $0x14a0] sm:$0xff]
                  %1286 = vst [vmem:[%s954 + $0x528] sm:$0xff] %v1285
                  %v1287 = vld [vmem:[%s953 + $0x14c0] sm:$0xff]
                  %1288 = vst [vmem:[%s954 + $0x530] sm:$0xff] %v1287
                  %v1289 = vld [vmem:[%s953 + $0x14e0] sm:$0xff]
                  %1290 = vst [vmem:[%s954 + $0x538] sm:$0xff] %v1289
                  %v1291 = vld [vmem:[%s953 + $0x1500] sm:$0xff]
                  %1292 = vst [vmem:[%s954 + $0x540] sm:$0xff] %v1291
                  %v1293 = vld [vmem:[%s953 + $0x1520] sm:$0xff]
                  %1294 = vst [vmem:[%s954 + $0x548] sm:$0xff] %v1293
                  %v1295 = vld [vmem:[%s953 + $0x1540] sm:$0xff]
                  %1296 = vst [vmem:[%s954 + $0x550] sm:$0xff] %v1295
                  %v1297 = vld [vmem:[%s953 + $0x1560] sm:$0xff]
                  %1298 = vst [vmem:[%s954 + $0x558] sm:$0xff] %v1297
                  %v1299 = vld [vmem:[%s953 + $0x1580] sm:$0xff]
                  %1300 = vst [vmem:[%s954 + $0x560] sm:$0xff] %v1299
                  %v1301 = vld [vmem:[%s953 + $0x15a0] sm:$0xff]
                  %1302 = vst [vmem:[%s954 + $0x568] sm:$0xff] %v1301
                  %v1303 = vld [vmem:[%s953 + $0x15c0] sm:$0xff]
                  %1304 = vst [vmem:[%s954 + $0x570] sm:$0xff] %v1303
                  %v1305 = vld [vmem:[%s953 + $0x15e0] sm:$0xff]
                  %1306 = vst [vmem:[%s954 + $0x578] sm:$0xff] %v1305
                  %v1307 = vld [vmem:[%s953 + $0x1600] sm:$0xff]
                  %1308 = vst [vmem:[%s954 + $0x580] sm:$0xff] %v1307
                  %v1309 = vld [vmem:[%s953 + $0x1620] sm:$0xff]
                  %1310 = vst [vmem:[%s954 + $0x588] sm:$0xff] %v1309
                  %v1311 = vld [vmem:[%s953 + $0x1640] sm:$0xff]
                  %1312 = vst [vmem:[%s954 + $0x590] sm:$0xff] %v1311
                  %v1313 = vld [vmem:[%s953 + $0x1660] sm:$0xff]
                  %1314 = vst [vmem:[%s954 + $0x598] sm:$0xff] %v1313
                  %v1315 = vld [vmem:[%s953 + $0x1680] sm:$0xff]
                  %1316 = vst [vmem:[%s954 + $0x5a0] sm:$0xff] %v1315
                  %v1317 = vld [vmem:[%s953 + $0x16a0] sm:$0xff]
                  %1318 = vst [vmem:[%s954 + $0x5a8] sm:$0xff] %v1317
                  %v1319 = vld [vmem:[%s953 + $0x16c0] sm:$0xff]
                  %1320 = vst [vmem:[%s954 + $0x5b0] sm:$0xff] %v1319
                  %v1321 = vld [vmem:[%s953 + $0x16e0] sm:$0xff]
                  %1322 = vst [vmem:[%s954 + $0x5b8] sm:$0xff] %v1321
                  %v1323 = vld [vmem:[%s953 + $0x1700] sm:$0xff]
                  %1324 = vst [vmem:[%s954 + $0x5c0] sm:$0xff] %v1323
                  %v1325 = vld [vmem:[%s953 + $0x1720] sm:$0xff]
                  %1326 = vst [vmem:[%s954 + $0x5c8] sm:$0xff] %v1325
                  %v1327 = vld [vmem:[%s953 + $0x1740] sm:$0xff]
                  %1328 = vst [vmem:[%s954 + $0x5d0] sm:$0xff] %v1327
                  %v1329 = vld [vmem:[%s953 + $0x1760] sm:$0xff]
                  %1330 = vst [vmem:[%s954 + $0x5d8] sm:$0xff] %v1329
                  %v1331 = vld [vmem:[%s953 + $0x1780] sm:$0xff]
                  %1332 = vst [vmem:[%s954 + $0x5e0] sm:$0xff] %v1331
                  %v1333 = vld [vmem:[%s953 + $0x17a0] sm:$0xff]
                  %1334 = vst [vmem:[%s954 + $0x5e8] sm:$0xff] %v1333
                  %v1335 = vld [vmem:[%s953 + $0x17c0] sm:$0xff]
                  %1336 = vst [vmem:[%s954 + $0x5f0] sm:$0xff] %v1335
                  %v1337 = vld [vmem:[%s953 + $0x17e0] sm:$0xff]
                  %1338 = vst [vmem:[%s954 + $0x5f8] sm:$0xff] %v1337
                  %v1339 = vld [vmem:[%s953 + $0x1800] sm:$0xff]
                  %1340 = vst [vmem:[%s954 + $0x600] sm:$0xff] %v1339
                  %v1341 = vld [vmem:[%s953 + $0x1820] sm:$0xff]
                  %1342 = vst [vmem:[%s954 + $0x608] sm:$0xff] %v1341
                  %v1343 = vld [vmem:[%s953 + $0x1840] sm:$0xff]
                  %1344 = vst [vmem:[%s954 + $0x610] sm:$0xff] %v1343
                  %v1345 = vld [vmem:[%s953 + $0x1860] sm:$0xff]
                  %1346 = vst [vmem:[%s954 + $0x618] sm:$0xff] %v1345
                  %v1347 = vld [vmem:[%s953 + $0x1880] sm:$0xff]
                  %1348 = vst [vmem:[%s954 + $0x620] sm:$0xff] %v1347
                  %v1349 = vld [vmem:[%s953 + $0x18a0] sm:$0xff]
                  %1350 = vst [vmem:[%s954 + $0x628] sm:$0xff] %v1349
                  %v1351 = vld [vmem:[%s953 + $0x18c0] sm:$0xff]
                  %1352 = vst [vmem:[%s954 + $0x630] sm:$0xff] %v1351
                  %v1353 = vld [vmem:[%s953 + $0x18e0] sm:$0xff]
                  %1354 = vst [vmem:[%s954 + $0x638] sm:$0xff] %v1353
                  %v1355 = vld [vmem:[%s953 + $0x1900] sm:$0xff]
                  %1356 = vst [vmem:[%s954 + $0x640] sm:$0xff] %v1355
                  %v1357 = vld [vmem:[%s953 + $0x1920] sm:$0xff]
                  %1358 = vst [vmem:[%s954 + $0x648] sm:$0xff] %v1357
                  %v1359 = vld [vmem:[%s953 + $0x1940] sm:$0xff]
                  %1360 = vst [vmem:[%s954 + $0x650] sm:$0xff] %v1359
                  %v1361 = vld [vmem:[%s953 + $0x1960] sm:$0xff]
                  %1362 = vst [vmem:[%s954 + $0x658] sm:$0xff] %v1361
                  %v1363 = vld [vmem:[%s953 + $0x1980] sm:$0xff]
                  %1364 = vst [vmem:[%s954 + $0x660] sm:$0xff] %v1363
                  %v1365 = vld [vmem:[%s953 + $0x19a0] sm:$0xff]
                  %1366 = vst [vmem:[%s954 + $0x668] sm:$0xff] %v1365
                  %v1367 = vld [vmem:[%s953 + $0x19c0] sm:$0xff]
                  %1368 = vst [vmem:[%s954 + $0x670] sm:$0xff] %v1367
                  %v1369 = vld [vmem:[%s953 + $0x19e0] sm:$0xff]
                  %1370 = vst [vmem:[%s954 + $0x678] sm:$0xff] %v1369
                  %v1371 = vld [vmem:[%s953 + $0x1a00] sm:$0xff]
                  %1372 = vst [vmem:[%s954 + $0x680] sm:$0xff] %v1371
                  %v1373 = vld [vmem:[%s953 + $0x1a20] sm:$0xff]
                  %1374 = vst [vmem:[%s954 + $0x688] sm:$0xff] %v1373
                  %v1375 = vld [vmem:[%s953 + $0x1a40] sm:$0xff]
                  %1376 = vst [vmem:[%s954 + $0x690] sm:$0xff] %v1375
                  %v1377 = vld [vmem:[%s953 + $0x1a60] sm:$0xff]
                  %1378 = vst [vmem:[%s954 + $0x698] sm:$0xff] %v1377
                  %v1379 = vld [vmem:[%s953 + $0x1a80] sm:$0xff]
                  %1380 = vst [vmem:[%s954 + $0x6a0] sm:$0xff] %v1379
                  %v1381 = vld [vmem:[%s953 + $0x1aa0] sm:$0xff]
                  %1382 = vst [vmem:[%s954 + $0x6a8] sm:$0xff] %v1381
                  %v1383 = vld [vmem:[%s953 + $0x1ac0] sm:$0xff]
                  %1384 = vst [vmem:[%s954 + $0x6b0] sm:$0xff] %v1383
                  %v1385 = vld [vmem:[%s953 + $0x1ae0] sm:$0xff]
                  %1386 = vst [vmem:[%s954 + $0x6b8] sm:$0xff] %v1385
                  %v1387 = vld [vmem:[%s953 + $0x1b00] sm:$0xff]
                  %1388 = vst [vmem:[%s954 + $0x6c0] sm:$0xff] %v1387
                  %v1389 = vld [vmem:[%s953 + $0x1b20] sm:$0xff]
                  %1390 = vst [vmem:[%s954 + $0x6c8] sm:$0xff] %v1389
                  %v1391 = vld [vmem:[%s953 + $0x1b40] sm:$0xff]
                  %1392 = vst [vmem:[%s954 + $0x6d0] sm:$0xff] %v1391
                  %v1393 = vld [vmem:[%s953 + $0x1b60] sm:$0xff]
                  %1394 = vst [vmem:[%s954 + $0x6d8] sm:$0xff] %v1393
                  %v1395 = vld [vmem:[%s953 + $0x1b80] sm:$0xff]
                  %1396 = vst [vmem:[%s954 + $0x6e0] sm:$0xff] %v1395
                  %v1397 = vld [vmem:[%s953 + $0x1ba0] sm:$0xff]
                  %1398 = vst [vmem:[%s954 + $0x6e8] sm:$0xff] %v1397
                  %v1399 = vld [vmem:[%s953 + $0x1bc0] sm:$0xff]
                  %1400 = vst [vmem:[%s954 + $0x6f0] sm:$0xff] %v1399
                  %v1401 = vld [vmem:[%s953 + $0x1be0] sm:$0xff]
                  %1402 = vst [vmem:[%s954 + $0x6f8] sm:$0xff] %v1401
                  %v1403 = vld [vmem:[%s953 + $0x1c00] sm:$0xff]
                  %1404 = vst [vmem:[%s954 + $0x700] sm:$0xff] %v1403
                  %v1405 = vld [vmem:[%s953 + $0x1c20] sm:$0xff]
                  %1406 = vst [vmem:[%s954 + $0x708] sm:$0xff] %v1405
                  %v1407 = vld [vmem:[%s953 + $0x1c40] sm:$0xff]
                  %1408 = vst [vmem:[%s954 + $0x710] sm:$0xff] %v1407
                  %v1409 = vld [vmem:[%s953 + $0x1c60] sm:$0xff]
                  %1410 = vst [vmem:[%s954 + $0x718] sm:$0xff] %v1409
                  %v1411 = vld [vmem:[%s953 + $0x1c80] sm:$0xff]
                  %1412 = vst [vmem:[%s954 + $0x720] sm:$0xff] %v1411
                  %v1413 = vld [vmem:[%s953 + $0x1ca0] sm:$0xff]
                  %1414 = vst [vmem:[%s954 + $0x728] sm:$0xff] %v1413
                  %v1415 = vld [vmem:[%s953 + $0x1cc0] sm:$0xff]
                  %1416 = vst [vmem:[%s954 + $0x730] sm:$0xff] %v1415
                  %v1417 = vld [vmem:[%s953 + $0x1ce0] sm:$0xff]
                  %1418 = vst [vmem:[%s954 + $0x738] sm:$0xff] %v1417
                  %v1419 = vld [vmem:[%s953 + $0x1d00] sm:$0xff]
                  %1420 = vst [vmem:[%s954 + $0x740] sm:$0xff] %v1419
                  %v1421 = vld [vmem:[%s953 + $0x1d20] sm:$0xff]
                  %1422 = vst [vmem:[%s954 + $0x748] sm:$0xff] %v1421
                  %v1423 = vld [vmem:[%s953 + $0x1d40] sm:$0xff]
                  %1424 = vst [vmem:[%s954 + $0x750] sm:$0xff] %v1423
                  %v1425 = vld [vmem:[%s953 + $0x1d60] sm:$0xff]
                  %1426 = vst [vmem:[%s954 + $0x758] sm:$0xff] %v1425
                  %v1427 = vld [vmem:[%s953 + $0x1d80] sm:$0xff]
                  %1428 = vst [vmem:[%s954 + $0x760] sm:$0xff] %v1427
                  %v1429 = vld [vmem:[%s953 + $0x1da0] sm:$0xff]
                  %1430 = vst [vmem:[%s954 + $0x768] sm:$0xff] %v1429
                  %v1431 = vld [vmem:[%s953 + $0x1dc0] sm:$0xff]
                  %1432 = vst [vmem:[%s954 + $0x770] sm:$0xff] %v1431
                  %v1433 = vld [vmem:[%s953 + $0x1de0] sm:$0xff]
                  %1434 = vst [vmem:[%s954 + $0x778] sm:$0xff] %v1433
                  %v1435 = vld [vmem:[%s953 + $0x1e00] sm:$0xff]
                  %1436 = vst [vmem:[%s954 + $0x780] sm:$0xff] %v1435
                  %v1437 = vld [vmem:[%s953 + $0x1e20] sm:$0xff]
                  %1438 = vst [vmem:[%s954 + $0x788] sm:$0xff] %v1437
                  %v1439 = vld [vmem:[%s953 + $0x1e40] sm:$0xff]
                  %1440 = vst [vmem:[%s954 + $0x790] sm:$0xff] %v1439
                  %v1441 = vld [vmem:[%s953 + $0x1e60] sm:$0xff]
                  %1442 = vst [vmem:[%s954 + $0x798] sm:$0xff] %v1441
                  %v1443 = vld [vmem:[%s953 + $0x1e80] sm:$0xff]
                  %1444 = vst [vmem:[%s954 + $0x7a0] sm:$0xff] %v1443
                  %v1445 = vld [vmem:[%s953 + $0x1ea0] sm:$0xff]
                  %1446 = vst [vmem:[%s954 + $0x7a8] sm:$0xff] %v1445
                  %v1447 = vld [vmem:[%s953 + $0x1ec0] sm:$0xff]
                  %1448 = vst [vmem:[%s954 + $0x7b0] sm:$0xff] %v1447
                  %v1449 = vld [vmem:[%s953 + $0x1ee0] sm:$0xff]
                  %1450 = vst [vmem:[%s954 + $0x7b8] sm:$0xff] %v1449
                  %v1451 = vld [vmem:[%s953 + $0x1f00] sm:$0xff]
                  %1452 = vst [vmem:[%s954 + $0x7c0] sm:$0xff] %v1451
                  %v1453 = vld [vmem:[%s953 + $0x1f20] sm:$0xff]
                  %1454 = vst [vmem:[%s954 + $0x7c8] sm:$0xff] %v1453
                  %v1455 = vld [vmem:[%s953 + $0x1f40] sm:$0xff]
                  %1456 = vst [vmem:[%s954 + $0x7d0] sm:$0xff] %v1455
                  %v1457 = vld [vmem:[%s953 + $0x1f60] sm:$0xff]
                  %1458 = vst [vmem:[%s954 + $0x7d8] sm:$0xff] %v1457
                  %v1459 = vld [vmem:[%s953 + $0x1f80] sm:$0xff]
                  %1460 = vst [vmem:[%s954 + $0x7e0] sm:$0xff] %v1459
                  %v1461 = vld [vmem:[%s953 + $0x1fa0] sm:$0xff]
                  %1462 = vst [vmem:[%s954 + $0x7e8] sm:$0xff] %v1461
                  %v1463 = vld [vmem:[%s953 + $0x1fc0] sm:$0xff]
                  %1464 = vst [vmem:[%s954 + $0x7f0] sm:$0xff] %v1463
                  %v1465 = vld [vmem:[%s953 + $0x1fe0] sm:$0xff]
                  %1466 = vst [vmem:[%s954 + $0x7f8] sm:$0xff] %v1465
                  %v1467 = vld [vmem:[%s953 + $0x2000] sm:$0xff]
                  %1468 = vst [vmem:[%s954 + $0x800] sm:$0xff] %v1467
                  %v1469 = vld [vmem:[%s953 + $0x2020] sm:$0xff]
                  %1470 = vst [vmem:[%s954 + $0x808] sm:$0xff] %v1469
                  %v1471 = vld [vmem:[%s953 + $0x2040] sm:$0xff]
                  %1472 = vst [vmem:[%s954 + $0x810] sm:$0xff] %v1471
                  %v1473 = vld [vmem:[%s953 + $0x2060] sm:$0xff]
                  %1474 = vst [vmem:[%s954 + $0x818] sm:$0xff] %v1473
                  %v1475 = vld [vmem:[%s953 + $0x2080] sm:$0xff]
                  %1476 = vst [vmem:[%s954 + $0x820] sm:$0xff] %v1475
                  %v1477 = vld [vmem:[%s953 + $0x20a0] sm:$0xff]
                  %1478 = vst [vmem:[%s954 + $0x828] sm:$0xff] %v1477
                  %v1479 = vld [vmem:[%s953 + $0x20c0] sm:$0xff]
                  %1480 = vst [vmem:[%s954 + $0x830] sm:$0xff] %v1479
                  %v1481 = vld [vmem:[%s953 + $0x20e0] sm:$0xff]
                  %1482 = vst [vmem:[%s954 + $0x838] sm:$0xff] %v1481
                  %v1483 = vld [vmem:[%s953 + $0x2100] sm:$0xff]
                  %1484 = vst [vmem:[%s954 + $0x840] sm:$0xff] %v1483
                  %v1485 = vld [vmem:[%s953 + $0x2120] sm:$0xff]
                  %1486 = vst [vmem:[%s954 + $0x848] sm:$0xff] %v1485
                  %v1487 = vld [vmem:[%s953 + $0x2140] sm:$0xff]
                  %1488 = vst [vmem:[%s954 + $0x850] sm:$0xff] %v1487
                  %v1489 = vld [vmem:[%s953 + $0x2160] sm:$0xff]
                  %1490 = vst [vmem:[%s954 + $0x858] sm:$0xff] %v1489
                  %v1491 = vld [vmem:[%s953 + $0x2180] sm:$0xff]
                  %1492 = vst [vmem:[%s954 + $0x860] sm:$0xff] %v1491
                  %v1493 = vld [vmem:[%s953 + $0x21a0] sm:$0xff]
                  %1494 = vst [vmem:[%s954 + $0x868] sm:$0xff] %v1493
                  %v1495 = vld [vmem:[%s953 + $0x21c0] sm:$0xff]
                  %1496 = vst [vmem:[%s954 + $0x870] sm:$0xff] %v1495
                  %v1497 = vld [vmem:[%s953 + $0x21e0] sm:$0xff]
                  %1498 = vst [vmem:[%s954 + $0x878] sm:$0xff] %v1497
                  %v1499 = vld [vmem:[%s953 + $0x2200] sm:$0xff]
                  %1500 = vst [vmem:[%s954 + $0x880] sm:$0xff] %v1499
                  %v1501 = vld [vmem:[%s953 + $0x2220] sm:$0xff]
                  %1502 = vst [vmem:[%s954 + $0x888] sm:$0xff] %v1501
                  %v1503 = vld [vmem:[%s953 + $0x2240] sm:$0xff]
                  %1504 = vst [vmem:[%s954 + $0x890] sm:$0xff] %v1503
                  %v1505 = vld [vmem:[%s953 + $0x2260] sm:$0xff]
                  %1506 = vst [vmem:[%s954 + $0x898] sm:$0xff] %v1505
                  %v1507 = vld [vmem:[%s953 + $0x2280] sm:$0xff]
                  %1508 = vst [vmem:[%s954 + $0x8a0] sm:$0xff] %v1507
                  %v1509 = vld [vmem:[%s953 + $0x22a0] sm:$0xff]
                  %1510 = vst [vmem:[%s954 + $0x8a8] sm:$0xff] %v1509
                  %v1511 = vld [vmem:[%s953 + $0x22c0] sm:$0xff]
                  %1512 = vst [vmem:[%s954 + $0x8b0] sm:$0xff] %v1511
                  %v1513 = vld [vmem:[%s953 + $0x22e0] sm:$0xff]
                  %1514 = vst [vmem:[%s954 + $0x8b8] sm:$0xff] %v1513
                  %v1515 = vld [vmem:[%s953 + $0x2300] sm:$0xff]
                  %1516 = vst [vmem:[%s954 + $0x8c0] sm:$0xff] %v1515
                  %v1517 = vld [vmem:[%s953 + $0x2320] sm:$0xff]
                  %1518 = vst [vmem:[%s954 + $0x8c8] sm:$0xff] %v1517
                  %v1519 = vld [vmem:[%s953 + $0x2340] sm:$0xff]
                  %1520 = vst [vmem:[%s954 + $0x8d0] sm:$0xff] %v1519
                  %v1521 = vld [vmem:[%s953 + $0x2360] sm:$0xff]
                  %1522 = vst [vmem:[%s954 + $0x8d8] sm:$0xff] %v1521
                  %v1523 = vld [vmem:[%s953 + $0x2380] sm:$0xff]
                  %1524 = vst [vmem:[%s954 + $0x8e0] sm:$0xff] %v1523
                  %v1525 = vld [vmem:[%s953 + $0x23a0] sm:$0xff]
                  %1526 = vst [vmem:[%s954 + $0x8e8] sm:$0xff] %v1525
                  %v1527 = vld [vmem:[%s953 + $0x23c0] sm:$0xff]
                  %1528 = vst [vmem:[%s954 + $0x8f0] sm:$0xff] %v1527
                  %v1529 = vld [vmem:[%s953 + $0x23e0] sm:$0xff]
                  %1530 = vst [vmem:[%s954 + $0x8f8] sm:$0xff] %v1529
                  %v1531 = vld [vmem:[%s953 + $0x2400] sm:$0xff]
                  %1532 = vst [vmem:[%s954 + $0x900] sm:$0xff] %v1531
                  %v1533 = vld [vmem:[%s953 + $0x2420] sm:$0xff]
                  %1534 = vst [vmem:[%s954 + $0x908] sm:$0xff] %v1533
                  %v1535 = vld [vmem:[%s953 + $0x2440] sm:$0xff]
                  %1536 = vst [vmem:[%s954 + $0x910] sm:$0xff] %v1535
                  %v1537 = vld [vmem:[%s953 + $0x2460] sm:$0xff]
                  %1538 = vst [vmem:[%s954 + $0x918] sm:$0xff] %v1537
                  %v1539 = vld [vmem:[%s953 + $0x2480] sm:$0xff]
                  %1540 = vst [vmem:[%s954 + $0x920] sm:$0xff] %v1539
                  %v1541 = vld [vmem:[%s953 + $0x24a0] sm:$0xff]
                  %1542 = vst [vmem:[%s954 + $0x928] sm:$0xff] %v1541
                  %v1543 = vld [vmem:[%s953 + $0x24c0] sm:$0xff]
                  %1544 = vst [vmem:[%s954 + $0x930] sm:$0xff] %v1543
                  %v1545 = vld [vmem:[%s953 + $0x24e0] sm:$0xff]
                  %1546 = vst [vmem:[%s954 + $0x938] sm:$0xff] %v1545
                  %v1547 = vld [vmem:[%s953 + $0x2500] sm:$0xff]
                  %1548 = vst [vmem:[%s954 + $0x940] sm:$0xff] %v1547
                  %v1549 = vld [vmem:[%s953 + $0x2520] sm:$0xff]
                  %1550 = vst [vmem:[%s954 + $0x948] sm:$0xff] %v1549
                  %v1551 = vld [vmem:[%s953 + $0x2540] sm:$0xff]
                  %1552 = vst [vmem:[%s954 + $0x950] sm:$0xff] %v1551
                  %v1553 = vld [vmem:[%s953 + $0x2560] sm:$0xff]
                  %1554 = vst [vmem:[%s954 + $0x958] sm:$0xff] %v1553
                  %v1555 = vld [vmem:[%s953 + $0x2580] sm:$0xff]
                  %1556 = vst [vmem:[%s954 + $0x960] sm:$0xff] %v1555
                  %v1557 = vld [vmem:[%s953 + $0x25a0] sm:$0xff]
                  %1558 = vst [vmem:[%s954 + $0x968] sm:$0xff] %v1557
                  %v1559 = vld [vmem:[%s953 + $0x25c0] sm:$0xff]
                  %1560 = vst [vmem:[%s954 + $0x970] sm:$0xff] %v1559
                  %v1561 = vld [vmem:[%s953 + $0x25e0] sm:$0xff]
                  %1562 = vst [vmem:[%s954 + $0x978] sm:$0xff] %v1561
                  %v1563 = vld [vmem:[%s953 + $0x2600] sm:$0xff]
                  %1564 = vst [vmem:[%s954 + $0x980] sm:$0xff] %v1563
                  %v1565 = vld [vmem:[%s953 + $0x2620] sm:$0xff]
                  %1566 = vst [vmem:[%s954 + $0x988] sm:$0xff] %v1565
                  %v1567 = vld [vmem:[%s953 + $0x2640] sm:$0xff]
                  %1568 = vst [vmem:[%s954 + $0x990] sm:$0xff] %v1567
                  %v1569 = vld [vmem:[%s953 + $0x2660] sm:$0xff]
                  %1570 = vst [vmem:[%s954 + $0x998] sm:$0xff] %v1569
                  %v1571 = vld [vmem:[%s953 + $0x2680] sm:$0xff]
                  %1572 = vst [vmem:[%s954 + $0x9a0] sm:$0xff] %v1571
                  %v1573 = vld [vmem:[%s953 + $0x26a0] sm:$0xff]
                  %1574 = vst [vmem:[%s954 + $0x9a8] sm:$0xff] %v1573
                  %v1575 = vld [vmem:[%s953 + $0x26c0] sm:$0xff]
                  %1576 = vst [vmem:[%s954 + $0x9b0] sm:$0xff] %v1575
                  %v1577 = vld [vmem:[%s953 + $0x26e0] sm:$0xff]
                  %1578 = vst [vmem:[%s954 + $0x9b8] sm:$0xff] %v1577
                  %v1579 = vld [vmem:[%s953 + $0x2700] sm:$0xff]
                  %1580 = vst [vmem:[%s954 + $0x9c0] sm:$0xff] %v1579
                  %v1581 = vld [vmem:[%s953 + $0x2720] sm:$0xff]
                  %1582 = vst [vmem:[%s954 + $0x9c8] sm:$0xff] %v1581
                  %v1583 = vld [vmem:[%s953 + $0x2740] sm:$0xff]
                  %1584 = vst [vmem:[%s954 + $0x9d0] sm:$0xff] %v1583
                  %v1585 = vld [vmem:[%s953 + $0x2760] sm:$0xff]
                  %1586 = vst [vmem:[%s954 + $0x9d8] sm:$0xff] %v1585
                  %v1587 = vld [vmem:[%s953 + $0x2780] sm:$0xff]
                  %1588 = vst [vmem:[%s954 + $0x9e0] sm:$0xff] %v1587
                  %v1589 = vld [vmem:[%s953 + $0x27a0] sm:$0xff]
                  %1590 = vst [vmem:[%s954 + $0x9e8] sm:$0xff] %v1589
                  %v1591 = vld [vmem:[%s953 + $0x27c0] sm:$0xff]
                  %1592 = vst [vmem:[%s954 + $0x9f0] sm:$0xff] %v1591
                  %v1593 = vld [vmem:[%s953 + $0x27e0] sm:$0xff]
                  %1594 = vst [vmem:[%s954 + $0x9f8] sm:$0xff] %v1593
                  %s1595 = sadd.s32 1, %s952
                  %p1596 = scmp.ge.s32.totalorder %s1595, 1
                  %s1597 = scalar_select %p1596, 0, %s1595
                  %s1598 = smul.u32 %s1597, 8
                  %s1599 = smul.u32 %s1597, 8
                  %s1600 = scalar_lea.vmem %s287, %s1598
                  %s1601 = scalar_lea.vmem %s284, %s1599 [#allocation4]
                $region72: #{deep_q_network_forward.1} parent=66 // loop_footer
                  %s951 = sadd.s32 1, %s947
                $region73: #{deep_q_network_forward.1} parent=66 // loop_footer_branch
                  %946 = sbr.rel target = $region69
                $region74: #{deep_q_network_forward.1} parent=66 // loop_exit
                  _
              $region67: #{deep_q_network_forward.1} parent=51 // pred_fallthru
                _
              // Predicated region
              $region75: #{deep_q_network_forward.1} parent=51 // pred_check
                _
              $region76: #{deep_q_network_forward.1} parent=51 // pred_check_branch
                %1603 = sbr.rel target = $region78
              $region77: #{deep_q_network_forward.1} parent=51 // pred_region
                %s1604 = scalar_lea.vmem %s287, 8
                %s1605 = scalar_lea.vmem %s284, 8 [#allocation4]
                loop: start=0, step=1, limit=1
                $region79: #{deep_q_network_forward.1} parent=77 // loop_pre_header
                  _
                $region80: #{deep_q_network_forward.1} parent=77 // loop_header
                  %s1607 = sphi 0, %s1611
                  %p1608 = scmp.ge.s32.totalorder %s1607, 1
                  %s1612 = sphi 0, %s2257
                  %s1613 = sphi %s287, %s2260
                  %s1614 = sphi %s284, %s2261
                $region81: #{deep_q_network_forward.1} parent=77 // loop_header_branch
                  %1610 = sbr.rel (%p1608) target = $region85
                $region82: #{deep_q_network_forward.1} parent=77 // loop_body
                  %v1615 = vld [vmem:[%s1613] sm:$0xff]
                  %1616 = vst [vmem:[%s1614] sm:$0xff] %v1615
                  %v1617 = vld [vmem:[%s1613 + $0x20] sm:$0xff]
                  %1618 = vst [vmem:[%s1614 + $0x8] sm:$0xff] %v1617
                  %v1619 = vld [vmem:[%s1613 + $0x40] sm:$0xff]
                  %1620 = vst [vmem:[%s1614 + $0x10] sm:$0xff] %v1619
                  %v1621 = vld [vmem:[%s1613 + $0x60] sm:$0xff]
                  %1622 = vst [vmem:[%s1614 + $0x18] sm:$0xff] %v1621
                  %v1623 = vld [vmem:[%s1613 + $0x80] sm:$0xff]
                  %1624 = vst [vmem:[%s1614 + $0x20] sm:$0xff] %v1623
                  %v1625 = vld [vmem:[%s1613 + $0xa0] sm:$0xff]
                  %1626 = vst [vmem:[%s1614 + $0x28] sm:$0xff] %v1625
                  %v1627 = vld [vmem:[%s1613 + $0xc0] sm:$0xff]
                  %1628 = vst [vmem:[%s1614 + $0x30] sm:$0xff] %v1627
                  %v1629 = vld [vmem:[%s1613 + $0xe0] sm:$0xff]
                  %1630 = vst [vmem:[%s1614 + $0x38] sm:$0xff] %v1629
                  %v1631 = vld [vmem:[%s1613 + $0x100] sm:$0xff]
                  %1632 = vst [vmem:[%s1614 + $0x40] sm:$0xff] %v1631
                  %v1633 = vld [vmem:[%s1613 + $0x120] sm:$0xff]
                  %1634 = vst [vmem:[%s1614 + $0x48] sm:$0xff] %v1633
                  %v1635 = vld [vmem:[%s1613 + $0x140] sm:$0xff]
                  %1636 = vst [vmem:[%s1614 + $0x50] sm:$0xff] %v1635
                  %v1637 = vld [vmem:[%s1613 + $0x160] sm:$0xff]
                  %1638 = vst [vmem:[%s1614 + $0x58] sm:$0xff] %v1637
                  %v1639 = vld [vmem:[%s1613 + $0x180] sm:$0xff]
                  %1640 = vst [vmem:[%s1614 + $0x60] sm:$0xff] %v1639
                  %v1641 = vld [vmem:[%s1613 + $0x1a0] sm:$0xff]
                  %1642 = vst [vmem:[%s1614 + $0x68] sm:$0xff] %v1641
                  %v1643 = vld [vmem:[%s1613 + $0x1c0] sm:$0xff]
                  %1644 = vst [vmem:[%s1614 + $0x70] sm:$0xff] %v1643
                  %v1645 = vld [vmem:[%s1613 + $0x1e0] sm:$0xff]
                  %1646 = vst [vmem:[%s1614 + $0x78] sm:$0xff] %v1645
                  %v1647 = vld [vmem:[%s1613 + $0x200] sm:$0xff]
                  %1648 = vst [vmem:[%s1614 + $0x80] sm:$0xff] %v1647
                  %v1649 = vld [vmem:[%s1613 + $0x220] sm:$0xff]
                  %1650 = vst [vmem:[%s1614 + $0x88] sm:$0xff] %v1649
                  %v1651 = vld [vmem:[%s1613 + $0x240] sm:$0xff]
                  %1652 = vst [vmem:[%s1614 + $0x90] sm:$0xff] %v1651
                  %v1653 = vld [vmem:[%s1613 + $0x260] sm:$0xff]
                  %1654 = vst [vmem:[%s1614 + $0x98] sm:$0xff] %v1653
                  %v1655 = vld [vmem:[%s1613 + $0x280] sm:$0xff]
                  %1656 = vst [vmem:[%s1614 + $0xa0] sm:$0xff] %v1655
                  %v1657 = vld [vmem:[%s1613 + $0x2a0] sm:$0xff]
                  %1658 = vst [vmem:[%s1614 + $0xa8] sm:$0xff] %v1657
                  %v1659 = vld [vmem:[%s1613 + $0x2c0] sm:$0xff]
                  %1660 = vst [vmem:[%s1614 + $0xb0] sm:$0xff] %v1659
                  %v1661 = vld [vmem:[%s1613 + $0x2e0] sm:$0xff]
                  %1662 = vst [vmem:[%s1614 + $0xb8] sm:$0xff] %v1661
                  %v1663 = vld [vmem:[%s1613 + $0x300] sm:$0xff]
                  %1664 = vst [vmem:[%s1614 + $0xc0] sm:$0xff] %v1663
                  %v1665 = vld [vmem:[%s1613 + $0x320] sm:$0xff]
                  %1666 = vst [vmem:[%s1614 + $0xc8] sm:$0xff] %v1665
                  %v1667 = vld [vmem:[%s1613 + $0x340] sm:$0xff]
                  %1668 = vst [vmem:[%s1614 + $0xd0] sm:$0xff] %v1667
                  %v1669 = vld [vmem:[%s1613 + $0x360] sm:$0xff]
                  %1670 = vst [vmem:[%s1614 + $0xd8] sm:$0xff] %v1669
                  %v1671 = vld [vmem:[%s1613 + $0x380] sm:$0xff]
                  %1672 = vst [vmem:[%s1614 + $0xe0] sm:$0xff] %v1671
                  %v1673 = vld [vmem:[%s1613 + $0x3a0] sm:$0xff]
                  %1674 = vst [vmem:[%s1614 + $0xe8] sm:$0xff] %v1673
                  %v1675 = vld [vmem:[%s1613 + $0x3c0] sm:$0xff]
                  %1676 = vst [vmem:[%s1614 + $0xf0] sm:$0xff] %v1675
                  %v1677 = vld [vmem:[%s1613 + $0x3e0] sm:$0xff]
                  %1678 = vst [vmem:[%s1614 + $0xf8] sm:$0xff] %v1677
                  %v1679 = vld [vmem:[%s1613 + $0x400] sm:$0xff]
                  %1680 = vst [vmem:[%s1614 + $0x100] sm:$0xff] %v1679
                  %v1681 = vld [vmem:[%s1613 + $0x420] sm:$0xff]
                  %1682 = vst [vmem:[%s1614 + $0x108] sm:$0xff] %v1681
                  %v1683 = vld [vmem:[%s1613 + $0x440] sm:$0xff]
                  %1684 = vst [vmem:[%s1614 + $0x110] sm:$0xff] %v1683
                  %v1685 = vld [vmem:[%s1613 + $0x460] sm:$0xff]
                  %1686 = vst [vmem:[%s1614 + $0x118] sm:$0xff] %v1685
                  %v1687 = vld [vmem:[%s1613 + $0x480] sm:$0xff]
                  %1688 = vst [vmem:[%s1614 + $0x120] sm:$0xff] %v1687
                  %v1689 = vld [vmem:[%s1613 + $0x4a0] sm:$0xff]
                  %1690 = vst [vmem:[%s1614 + $0x128] sm:$0xff] %v1689
                  %v1691 = vld [vmem:[%s1613 + $0x4c0] sm:$0xff]
                  %1692 = vst [vmem:[%s1614 + $0x130] sm:$0xff] %v1691
                  %v1693 = vld [vmem:[%s1613 + $0x4e0] sm:$0xff]
                  %1694 = vst [vmem:[%s1614 + $0x138] sm:$0xff] %v1693
                  %v1695 = vld [vmem:[%s1613 + $0x500] sm:$0xff]
                  %1696 = vst [vmem:[%s1614 + $0x140] sm:$0xff] %v1695
                  %v1697 = vld [vmem:[%s1613 + $0x520] sm:$0xff]
                  %1698 = vst [vmem:[%s1614 + $0x148] sm:$0xff] %v1697
                  %v1699 = vld [vmem:[%s1613 + $0x540] sm:$0xff]
                  %1700 = vst [vmem:[%s1614 + $0x150] sm:$0xff] %v1699
                  %v1701 = vld [vmem:[%s1613 + $0x560] sm:$0xff]
                  %1702 = vst [vmem:[%s1614 + $0x158] sm:$0xff] %v1701
                  %v1703 = vld [vmem:[%s1613 + $0x580] sm:$0xff]
                  %1704 = vst [vmem:[%s1614 + $0x160] sm:$0xff] %v1703
                  %v1705 = vld [vmem:[%s1613 + $0x5a0] sm:$0xff]
                  %1706 = vst [vmem:[%s1614 + $0x168] sm:$0xff] %v1705
                  %v1707 = vld [vmem:[%s1613 + $0x5c0] sm:$0xff]
                  %1708 = vst [vmem:[%s1614 + $0x170] sm:$0xff] %v1707
                  %v1709 = vld [vmem:[%s1613 + $0x5e0] sm:$0xff]
                  %1710 = vst [vmem:[%s1614 + $0x178] sm:$0xff] %v1709
                  %v1711 = vld [vmem:[%s1613 + $0x600] sm:$0xff]
                  %1712 = vst [vmem:[%s1614 + $0x180] sm:$0xff] %v1711
                  %v1713 = vld [vmem:[%s1613 + $0x620] sm:$0xff]
                  %1714 = vst [vmem:[%s1614 + $0x188] sm:$0xff] %v1713
                  %v1715 = vld [vmem:[%s1613 + $0x640] sm:$0xff]
                  %1716 = vst [vmem:[%s1614 + $0x190] sm:$0xff] %v1715
                  %v1717 = vld [vmem:[%s1613 + $0x660] sm:$0xff]
                  %1718 = vst [vmem:[%s1614 + $0x198] sm:$0xff] %v1717
                  %v1719 = vld [vmem:[%s1613 + $0x680] sm:$0xff]
                  %1720 = vst [vmem:[%s1614 + $0x1a0] sm:$0xff] %v1719
                  %v1721 = vld [vmem:[%s1613 + $0x6a0] sm:$0xff]
                  %1722 = vst [vmem:[%s1614 + $0x1a8] sm:$0xff] %v1721
                  %v1723 = vld [vmem:[%s1613 + $0x6c0] sm:$0xff]
                  %1724 = vst [vmem:[%s1614 + $0x1b0] sm:$0xff] %v1723
                  %v1725 = vld [vmem:[%s1613 + $0x6e0] sm:$0xff]
                  %1726 = vst [vmem:[%s1614 + $0x1b8] sm:$0xff] %v1725
                  %v1727 = vld [vmem:[%s1613 + $0x700] sm:$0xff]
                  %1728 = vst [vmem:[%s1614 + $0x1c0] sm:$0xff] %v1727
                  %v1729 = vld [vmem:[%s1613 + $0x720] sm:$0xff]
                  %1730 = vst [vmem:[%s1614 + $0x1c8] sm:$0xff] %v1729
                  %v1731 = vld [vmem:[%s1613 + $0x740] sm:$0xff]
                  %1732 = vst [vmem:[%s1614 + $0x1d0] sm:$0xff] %v1731
                  %v1733 = vld [vmem:[%s1613 + $0x760] sm:$0xff]
                  %1734 = vst [vmem:[%s1614 + $0x1d8] sm:$0xff] %v1733
                  %v1735 = vld [vmem:[%s1613 + $0x780] sm:$0xff]
                  %1736 = vst [vmem:[%s1614 + $0x1e0] sm:$0xff] %v1735
                  %v1737 = vld [vmem:[%s1613 + $0x7a0] sm:$0xff]
                  %1738 = vst [vmem:[%s1614 + $0x1e8] sm:$0xff] %v1737
                  %v1739 = vld [vmem:[%s1613 + $0x7c0] sm:$0xff]
                  %1740 = vst [vmem:[%s1614 + $0x1f0] sm:$0xff] %v1739
                  %v1741 = vld [vmem:[%s1613 + $0x7e0] sm:$0xff]
                  %1742 = vst [vmem:[%s1614 + $0x1f8] sm:$0xff] %v1741
                  %v1743 = vld [vmem:[%s1613 + $0x800] sm:$0xff]
                  %1744 = vst [vmem:[%s1614 + $0x200] sm:$0xff] %v1743
                  %v1745 = vld [vmem:[%s1613 + $0x820] sm:$0xff]
                  %1746 = vst [vmem:[%s1614 + $0x208] sm:$0xff] %v1745
                  %v1747 = vld [vmem:[%s1613 + $0x840] sm:$0xff]
                  %1748 = vst [vmem:[%s1614 + $0x210] sm:$0xff] %v1747
                  %v1749 = vld [vmem:[%s1613 + $0x860] sm:$0xff]
                  %1750 = vst [vmem:[%s1614 + $0x218] sm:$0xff] %v1749
                  %v1751 = vld [vmem:[%s1613 + $0x880] sm:$0xff]
                  %1752 = vst [vmem:[%s1614 + $0x220] sm:$0xff] %v1751
                  %v1753 = vld [vmem:[%s1613 + $0x8a0] sm:$0xff]
                  %1754 = vst [vmem:[%s1614 + $0x228] sm:$0xff] %v1753
                  %v1755 = vld [vmem:[%s1613 + $0x8c0] sm:$0xff]
                  %1756 = vst [vmem:[%s1614 + $0x230] sm:$0xff] %v1755
                  %v1757 = vld [vmem:[%s1613 + $0x8e0] sm:$0xff]
                  %1758 = vst [vmem:[%s1614 + $0x238] sm:$0xff] %v1757
                  %v1759 = vld [vmem:[%s1613 + $0x900] sm:$0xff]
                  %1760 = vst [vmem:[%s1614 + $0x240] sm:$0xff] %v1759
                  %v1761 = vld [vmem:[%s1613 + $0x920] sm:$0xff]
                  %1762 = vst [vmem:[%s1614 + $0x248] sm:$0xff] %v1761
                  %v1763 = vld [vmem:[%s1613 + $0x940] sm:$0xff]
                  %1764 = vst [vmem:[%s1614 + $0x250] sm:$0xff] %v1763
                  %v1765 = vld [vmem:[%s1613 + $0x960] sm:$0xff]
                  %1766 = vst [vmem:[%s1614 + $0x258] sm:$0xff] %v1765
                  %v1767 = vld [vmem:[%s1613 + $0x980] sm:$0xff]
                  %1768 = vst [vmem:[%s1614 + $0x260] sm:$0xff] %v1767
                  %v1769 = vld [vmem:[%s1613 + $0x9a0] sm:$0xff]
                  %1770 = vst [vmem:[%s1614 + $0x268] sm:$0xff] %v1769
                  %v1771 = vld [vmem:[%s1613 + $0x9c0] sm:$0xff]
                  %1772 = vst [vmem:[%s1614 + $0x270] sm:$0xff] %v1771
                  %v1773 = vld [vmem:[%s1613 + $0x9e0] sm:$0xff]
                  %1774 = vst [vmem:[%s1614 + $0x278] sm:$0xff] %v1773
                  %v1775 = vld [vmem:[%s1613 + $0xa00] sm:$0xff]
                  %1776 = vst [vmem:[%s1614 + $0x280] sm:$0xff] %v1775
                  %v1777 = vld [vmem:[%s1613 + $0xa20] sm:$0xff]
                  %1778 = vst [vmem:[%s1614 + $0x288] sm:$0xff] %v1777
                  %v1779 = vld [vmem:[%s1613 + $0xa40] sm:$0xff]
                  %1780 = vst [vmem:[%s1614 + $0x290] sm:$0xff] %v1779
                  %v1781 = vld [vmem:[%s1613 + $0xa60] sm:$0xff]
                  %1782 = vst [vmem:[%s1614 + $0x298] sm:$0xff] %v1781
                  %v1783 = vld [vmem:[%s1613 + $0xa80] sm:$0xff]
                  %1784 = vst [vmem:[%s1614 + $0x2a0] sm:$0xff] %v1783
                  %v1785 = vld [vmem:[%s1613 + $0xaa0] sm:$0xff]
                  %1786 = vst [vmem:[%s1614 + $0x2a8] sm:$0xff] %v1785
                  %v1787 = vld [vmem:[%s1613 + $0xac0] sm:$0xff]
                  %1788 = vst [vmem:[%s1614 + $0x2b0] sm:$0xff] %v1787
                  %v1789 = vld [vmem:[%s1613 + $0xae0] sm:$0xff]
                  %1790 = vst [vmem:[%s1614 + $0x2b8] sm:$0xff] %v1789
                  %v1791 = vld [vmem:[%s1613 + $0xb00] sm:$0xff]
                  %1792 = vst [vmem:[%s1614 + $0x2c0] sm:$0xff] %v1791
                  %v1793 = vld [vmem:[%s1613 + $0xb20] sm:$0xff]
                  %1794 = vst [vmem:[%s1614 + $0x2c8] sm:$0xff] %v1793
                  %v1795 = vld [vmem:[%s1613 + $0xb40] sm:$0xff]
                  %1796 = vst [vmem:[%s1614 + $0x2d0] sm:$0xff] %v1795
                  %v1797 = vld [vmem:[%s1613 + $0xb60] sm:$0xff]
                  %1798 = vst [vmem:[%s1614 + $0x2d8] sm:$0xff] %v1797
                  %v1799 = vld [vmem:[%s1613 + $0xb80] sm:$0xff]
                  %1800 = vst [vmem:[%s1614 + $0x2e0] sm:$0xff] %v1799
                  %v1801 = vld [vmem:[%s1613 + $0xba0] sm:$0xff]
                  %1802 = vst [vmem:[%s1614 + $0x2e8] sm:$0xff] %v1801
                  %v1803 = vld [vmem:[%s1613 + $0xbc0] sm:$0xff]
                  %1804 = vst [vmem:[%s1614 + $0x2f0] sm:$0xff] %v1803
                  %v1805 = vld [vmem:[%s1613 + $0xbe0] sm:$0xff]
                  %1806 = vst [vmem:[%s1614 + $0x2f8] sm:$0xff] %v1805
                  %v1807 = vld [vmem:[%s1613 + $0xc00] sm:$0xff]
                  %1808 = vst [vmem:[%s1614 + $0x300] sm:$0xff] %v1807
                  %v1809 = vld [vmem:[%s1613 + $0xc20] sm:$0xff]
                  %1810 = vst [vmem:[%s1614 + $0x308] sm:$0xff] %v1809
                  %v1811 = vld [vmem:[%s1613 + $0xc40] sm:$0xff]
                  %1812 = vst [vmem:[%s1614 + $0x310] sm:$0xff] %v1811
                  %v1813 = vld [vmem:[%s1613 + $0xc60] sm:$0xff]
                  %1814 = vst [vmem:[%s1614 + $0x318] sm:$0xff] %v1813
                  %v1815 = vld [vmem:[%s1613 + $0xc80] sm:$0xff]
                  %1816 = vst [vmem:[%s1614 + $0x320] sm:$0xff] %v1815
                  %v1817 = vld [vmem:[%s1613 + $0xca0] sm:$0xff]
                  %1818 = vst [vmem:[%s1614 + $0x328] sm:$0xff] %v1817
                  %v1819 = vld [vmem:[%s1613 + $0xcc0] sm:$0xff]
                  %1820 = vst [vmem:[%s1614 + $0x330] sm:$0xff] %v1819
                  %v1821 = vld [vmem:[%s1613 + $0xce0] sm:$0xff]
                  %1822 = vst [vmem:[%s1614 + $0x338] sm:$0xff] %v1821
                  %v1823 = vld [vmem:[%s1613 + $0xd00] sm:$0xff]
                  %1824 = vst [vmem:[%s1614 + $0x340] sm:$0xff] %v1823
                  %v1825 = vld [vmem:[%s1613 + $0xd20] sm:$0xff]
                  %1826 = vst [vmem:[%s1614 + $0x348] sm:$0xff] %v1825
                  %v1827 = vld [vmem:[%s1613 + $0xd40] sm:$0xff]
                  %1828 = vst [vmem:[%s1614 + $0x350] sm:$0xff] %v1827
                  %v1829 = vld [vmem:[%s1613 + $0xd60] sm:$0xff]
                  %1830 = vst [vmem:[%s1614 + $0x358] sm:$0xff] %v1829
                  %v1831 = vld [vmem:[%s1613 + $0xd80] sm:$0xff]
                  %1832 = vst [vmem:[%s1614 + $0x360] sm:$0xff] %v1831
                  %v1833 = vld [vmem:[%s1613 + $0xda0] sm:$0xff]
                  %1834 = vst [vmem:[%s1614 + $0x368] sm:$0xff] %v1833
                  %v1835 = vld [vmem:[%s1613 + $0xdc0] sm:$0xff]
                  %1836 = vst [vmem:[%s1614 + $0x370] sm:$0xff] %v1835
                  %v1837 = vld [vmem:[%s1613 + $0xde0] sm:$0xff]
                  %1838 = vst [vmem:[%s1614 + $0x378] sm:$0xff] %v1837
                  %v1839 = vld [vmem:[%s1613 + $0xe00] sm:$0xff]
                  %1840 = vst [vmem:[%s1614 + $0x380] sm:$0xff] %v1839
                  %v1841 = vld [vmem:[%s1613 + $0xe20] sm:$0xff]
                  %1842 = vst [vmem:[%s1614 + $0x388] sm:$0xff] %v1841
                  %v1843 = vld [vmem:[%s1613 + $0xe40] sm:$0xff]
                  %1844 = vst [vmem:[%s1614 + $0x390] sm:$0xff] %v1843
                  %v1845 = vld [vmem:[%s1613 + $0xe60] sm:$0xff]
                  %1846 = vst [vmem:[%s1614 + $0x398] sm:$0xff] %v1845
                  %v1847 = vld [vmem:[%s1613 + $0xe80] sm:$0xff]
                  %1848 = vst [vmem:[%s1614 + $0x3a0] sm:$0xff] %v1847
                  %v1849 = vld [vmem:[%s1613 + $0xea0] sm:$0xff]
                  %1850 = vst [vmem:[%s1614 + $0x3a8] sm:$0xff] %v1849
                  %v1851 = vld [vmem:[%s1613 + $0xec0] sm:$0xff]
                  %1852 = vst [vmem:[%s1614 + $0x3b0] sm:$0xff] %v1851
                  %v1853 = vld [vmem:[%s1613 + $0xee0] sm:$0xff]
                  %1854 = vst [vmem:[%s1614 + $0x3b8] sm:$0xff] %v1853
                  %v1855 = vld [vmem:[%s1613 + $0xf00] sm:$0xff]
                  %1856 = vst [vmem:[%s1614 + $0x3c0] sm:$0xff] %v1855
                  %v1857 = vld [vmem:[%s1613 + $0xf20] sm:$0xff]
                  %1858 = vst [vmem:[%s1614 + $0x3c8] sm:$0xff] %v1857
                  %v1859 = vld [vmem:[%s1613 + $0xf40] sm:$0xff]
                  %1860 = vst [vmem:[%s1614 + $0x3d0] sm:$0xff] %v1859
                  %v1861 = vld [vmem:[%s1613 + $0xf60] sm:$0xff]
                  %1862 = vst [vmem:[%s1614 + $0x3d8] sm:$0xff] %v1861
                  %v1863 = vld [vmem:[%s1613 + $0xf80] sm:$0xff]
                  %1864 = vst [vmem:[%s1614 + $0x3e0] sm:$0xff] %v1863
                  %v1865 = vld [vmem:[%s1613 + $0xfa0] sm:$0xff]
                  %1866 = vst [vmem:[%s1614 + $0x3e8] sm:$0xff] %v1865
                  %v1867 = vld [vmem:[%s1613 + $0xfc0] sm:$0xff]
                  %1868 = vst [vmem:[%s1614 + $0x3f0] sm:$0xff] %v1867
                  %v1869 = vld [vmem:[%s1613 + $0xfe0] sm:$0xff]
                  %1870 = vst [vmem:[%s1614 + $0x3f8] sm:$0xff] %v1869
                  %v1871 = vld [vmem:[%s1613 + $0x1000] sm:$0xff]
                  %1872 = vst [vmem:[%s1614 + $0x400] sm:$0xff] %v1871
                  %v1873 = vld [vmem:[%s1613 + $0x1020] sm:$0xff]
                  %1874 = vst [vmem:[%s1614 + $0x408] sm:$0xff] %v1873
                  %v1875 = vld [vmem:[%s1613 + $0x1040] sm:$0xff]
                  %1876 = vst [vmem:[%s1614 + $0x410] sm:$0xff] %v1875
                  %v1877 = vld [vmem:[%s1613 + $0x1060] sm:$0xff]
                  %1878 = vst [vmem:[%s1614 + $0x418] sm:$0xff] %v1877
                  %v1879 = vld [vmem:[%s1613 + $0x1080] sm:$0xff]
                  %1880 = vst [vmem:[%s1614 + $0x420] sm:$0xff] %v1879
                  %v1881 = vld [vmem:[%s1613 + $0x10a0] sm:$0xff]
                  %1882 = vst [vmem:[%s1614 + $0x428] sm:$0xff] %v1881
                  %v1883 = vld [vmem:[%s1613 + $0x10c0] sm:$0xff]
                  %1884 = vst [vmem:[%s1614 + $0x430] sm:$0xff] %v1883
                  %v1885 = vld [vmem:[%s1613 + $0x10e0] sm:$0xff]
                  %1886 = vst [vmem:[%s1614 + $0x438] sm:$0xff] %v1885
                  %v1887 = vld [vmem:[%s1613 + $0x1100] sm:$0xff]
                  %1888 = vst [vmem:[%s1614 + $0x440] sm:$0xff] %v1887
                  %v1889 = vld [vmem:[%s1613 + $0x1120] sm:$0xff]
                  %1890 = vst [vmem:[%s1614 + $0x448] sm:$0xff] %v1889
                  %v1891 = vld [vmem:[%s1613 + $0x1140] sm:$0xff]
                  %1892 = vst [vmem:[%s1614 + $0x450] sm:$0xff] %v1891
                  %v1893 = vld [vmem:[%s1613 + $0x1160] sm:$0xff]
                  %1894 = vst [vmem:[%s1614 + $0x458] sm:$0xff] %v1893
                  %v1895 = vld [vmem:[%s1613 + $0x1180] sm:$0xff]
                  %1896 = vst [vmem:[%s1614 + $0x460] sm:$0xff] %v1895
                  %v1897 = vld [vmem:[%s1613 + $0x11a0] sm:$0xff]
                  %1898 = vst [vmem:[%s1614 + $0x468] sm:$0xff] %v1897
                  %v1899 = vld [vmem:[%s1613 + $0x11c0] sm:$0xff]
                  %1900 = vst [vmem:[%s1614 + $0x470] sm:$0xff] %v1899
                  %v1901 = vld [vmem:[%s1613 + $0x11e0] sm:$0xff]
                  %1902 = vst [vmem:[%s1614 + $0x478] sm:$0xff] %v1901
                  %v1903 = vld [vmem:[%s1613 + $0x1200] sm:$0xff]
                  %1904 = vst [vmem:[%s1614 + $0x480] sm:$0xff] %v1903
                  %v1905 = vld [vmem:[%s1613 + $0x1220] sm:$0xff]
                  %1906 = vst [vmem:[%s1614 + $0x488] sm:$0xff] %v1905
                  %v1907 = vld [vmem:[%s1613 + $0x1240] sm:$0xff]
                  %1908 = vst [vmem:[%s1614 + $0x490] sm:$0xff] %v1907
                  %v1909 = vld [vmem:[%s1613 + $0x1260] sm:$0xff]
                  %1910 = vst [vmem:[%s1614 + $0x498] sm:$0xff] %v1909
                  %v1911 = vld [vmem:[%s1613 + $0x1280] sm:$0xff]
                  %1912 = vst [vmem:[%s1614 + $0x4a0] sm:$0xff] %v1911
                  %v1913 = vld [vmem:[%s1613 + $0x12a0] sm:$0xff]
                  %1914 = vst [vmem:[%s1614 + $0x4a8] sm:$0xff] %v1913
                  %v1915 = vld [vmem:[%s1613 + $0x12c0] sm:$0xff]
                  %1916 = vst [vmem:[%s1614 + $0x4b0] sm:$0xff] %v1915
                  %v1917 = vld [vmem:[%s1613 + $0x12e0] sm:$0xff]
                  %1918 = vst [vmem:[%s1614 + $0x4b8] sm:$0xff] %v1917
                  %v1919 = vld [vmem:[%s1613 + $0x1300] sm:$0xff]
                  %1920 = vst [vmem:[%s1614 + $0x4c0] sm:$0xff] %v1919
                  %v1921 = vld [vmem:[%s1613 + $0x1320] sm:$0xff]
                  %1922 = vst [vmem:[%s1614 + $0x4c8] sm:$0xff] %v1921
                  %v1923 = vld [vmem:[%s1613 + $0x1340] sm:$0xff]
                  %1924 = vst [vmem:[%s1614 + $0x4d0] sm:$0xff] %v1923
                  %v1925 = vld [vmem:[%s1613 + $0x1360] sm:$0xff]
                  %1926 = vst [vmem:[%s1614 + $0x4d8] sm:$0xff] %v1925
                  %v1927 = vld [vmem:[%s1613 + $0x1380] sm:$0xff]
                  %1928 = vst [vmem:[%s1614 + $0x4e0] sm:$0xff] %v1927
                  %v1929 = vld [vmem:[%s1613 + $0x13a0] sm:$0xff]
                  %1930 = vst [vmem:[%s1614 + $0x4e8] sm:$0xff] %v1929
                  %v1931 = vld [vmem:[%s1613 + $0x13c0] sm:$0xff]
                  %1932 = vst [vmem:[%s1614 + $0x4f0] sm:$0xff] %v1931
                  %v1933 = vld [vmem:[%s1613 + $0x13e0] sm:$0xff]
                  %1934 = vst [vmem:[%s1614 + $0x4f8] sm:$0xff] %v1933
                  %v1935 = vld [vmem:[%s1613 + $0x1400] sm:$0xff]
                  %1936 = vst [vmem:[%s1614 + $0x500] sm:$0xff] %v1935
                  %v1937 = vld [vmem:[%s1613 + $0x1420] sm:$0xff]
                  %1938 = vst [vmem:[%s1614 + $0x508] sm:$0xff] %v1937
                  %v1939 = vld [vmem:[%s1613 + $0x1440] sm:$0xff]
                  %1940 = vst [vmem:[%s1614 + $0x510] sm:$0xff] %v1939
                  %v1941 = vld [vmem:[%s1613 + $0x1460] sm:$0xff]
                  %1942 = vst [vmem:[%s1614 + $0x518] sm:$0xff] %v1941
                  %v1943 = vld [vmem:[%s1613 + $0x1480] sm:$0xff]
                  %1944 = vst [vmem:[%s1614 + $0x520] sm:$0xff] %v1943
                  %v1945 = vld [vmem:[%s1613 + $0x14a0] sm:$0xff]
                  %1946 = vst [vmem:[%s1614 + $0x528] sm:$0xff] %v1945
                  %v1947 = vld [vmem:[%s1613 + $0x14c0] sm:$0xff]
                  %1948 = vst [vmem:[%s1614 + $0x530] sm:$0xff] %v1947
                  %v1949 = vld [vmem:[%s1613 + $0x14e0] sm:$0xff]
                  %1950 = vst [vmem:[%s1614 + $0x538] sm:$0xff] %v1949
                  %v1951 = vld [vmem:[%s1613 + $0x1500] sm:$0xff]
                  %1952 = vst [vmem:[%s1614 + $0x540] sm:$0xff] %v1951
                  %v1953 = vld [vmem:[%s1613 + $0x1520] sm:$0xff]
                  %1954 = vst [vmem:[%s1614 + $0x548] sm:$0xff] %v1953
                  %v1955 = vld [vmem:[%s1613 + $0x1540] sm:$0xff]
                  %1956 = vst [vmem:[%s1614 + $0x550] sm:$0xff] %v1955
                  %v1957 = vld [vmem:[%s1613 + $0x1560] sm:$0xff]
                  %1958 = vst [vmem:[%s1614 + $0x558] sm:$0xff] %v1957
                  %v1959 = vld [vmem:[%s1613 + $0x1580] sm:$0xff]
                  %1960 = vst [vmem:[%s1614 + $0x560] sm:$0xff] %v1959
                  %v1961 = vld [vmem:[%s1613 + $0x15a0] sm:$0xff]
                  %1962 = vst [vmem:[%s1614 + $0x568] sm:$0xff] %v1961
                  %v1963 = vld [vmem:[%s1613 + $0x15c0] sm:$0xff]
                  %1964 = vst [vmem:[%s1614 + $0x570] sm:$0xff] %v1963
                  %v1965 = vld [vmem:[%s1613 + $0x15e0] sm:$0xff]
                  %1966 = vst [vmem:[%s1614 + $0x578] sm:$0xff] %v1965
                  %v1967 = vld [vmem:[%s1613 + $0x1600] sm:$0xff]
                  %1968 = vst [vmem:[%s1614 + $0x580] sm:$0xff] %v1967
                  %v1969 = vld [vmem:[%s1613 + $0x1620] sm:$0xff]
                  %1970 = vst [vmem:[%s1614 + $0x588] sm:$0xff] %v1969
                  %v1971 = vld [vmem:[%s1613 + $0x1640] sm:$0xff]
                  %1972 = vst [vmem:[%s1614 + $0x590] sm:$0xff] %v1971
                  %v1973 = vld [vmem:[%s1613 + $0x1660] sm:$0xff]
                  %1974 = vst [vmem:[%s1614 + $0x598] sm:$0xff] %v1973
                  %v1975 = vld [vmem:[%s1613 + $0x1680] sm:$0xff]
                  %1976 = vst [vmem:[%s1614 + $0x5a0] sm:$0xff] %v1975
                  %v1977 = vld [vmem:[%s1613 + $0x16a0] sm:$0xff]
                  %1978 = vst [vmem:[%s1614 + $0x5a8] sm:$0xff] %v1977
                  %v1979 = vld [vmem:[%s1613 + $0x16c0] sm:$0xff]
                  %1980 = vst [vmem:[%s1614 + $0x5b0] sm:$0xff] %v1979
                  %v1981 = vld [vmem:[%s1613 + $0x16e0] sm:$0xff]
                  %1982 = vst [vmem:[%s1614 + $0x5b8] sm:$0xff] %v1981
                  %v1983 = vld [vmem:[%s1613 + $0x1700] sm:$0xff]
                  %1984 = vst [vmem:[%s1614 + $0x5c0] sm:$0xff] %v1983
                  %v1985 = vld [vmem:[%s1613 + $0x1720] sm:$0xff]
                  %1986 = vst [vmem:[%s1614 + $0x5c8] sm:$0xff] %v1985
                  %v1987 = vld [vmem:[%s1613 + $0x1740] sm:$0xff]
                  %1988 = vst [vmem:[%s1614 + $0x5d0] sm:$0xff] %v1987
                  %v1989 = vld [vmem:[%s1613 + $0x1760] sm:$0xff]
                  %1990 = vst [vmem:[%s1614 + $0x5d8] sm:$0xff] %v1989
                  %v1991 = vld [vmem:[%s1613 + $0x1780] sm:$0xff]
                  %1992 = vst [vmem:[%s1614 + $0x5e0] sm:$0xff] %v1991
                  %v1993 = vld [vmem:[%s1613 + $0x17a0] sm:$0xff]
                  %1994 = vst [vmem:[%s1614 + $0x5e8] sm:$0xff] %v1993
                  %v1995 = vld [vmem:[%s1613 + $0x17c0] sm:$0xff]
                  %1996 = vst [vmem:[%s1614 + $0x5f0] sm:$0xff] %v1995
                  %v1997 = vld [vmem:[%s1613 + $0x17e0] sm:$0xff]
                  %1998 = vst [vmem:[%s1614 + $0x5f8] sm:$0xff] %v1997
                  %v1999 = vld [vmem:[%s1613 + $0x1800] sm:$0xff]
                  %2000 = vst [vmem:[%s1614 + $0x600] sm:$0xff] %v1999
                  %v2001 = vld [vmem:[%s1613 + $0x1820] sm:$0xff]
                  %2002 = vst [vmem:[%s1614 + $0x608] sm:$0xff] %v2001
                  %v2003 = vld [vmem:[%s1613 + $0x1840] sm:$0xff]
                  %2004 = vst [vmem:[%s1614 + $0x610] sm:$0xff] %v2003
                  %v2005 = vld [vmem:[%s1613 + $0x1860] sm:$0xff]
                  %2006 = vst [vmem:[%s1614 + $0x618] sm:$0xff] %v2005
                  %v2007 = vld [vmem:[%s1613 + $0x1880] sm:$0xff]
                  %2008 = vst [vmem:[%s1614 + $0x620] sm:$0xff] %v2007
                  %v2009 = vld [vmem:[%s1613 + $0x18a0] sm:$0xff]
                  %2010 = vst [vmem:[%s1614 + $0x628] sm:$0xff] %v2009
                  %v2011 = vld [vmem:[%s1613 + $0x18c0] sm:$0xff]
                  %2012 = vst [vmem:[%s1614 + $0x630] sm:$0xff] %v2011
                  %v2013 = vld [vmem:[%s1613 + $0x18e0] sm:$0xff]
                  %2014 = vst [vmem:[%s1614 + $0x638] sm:$0xff] %v2013
                  %v2015 = vld [vmem:[%s1613 + $0x1900] sm:$0xff]
                  %2016 = vst [vmem:[%s1614 + $0x640] sm:$0xff] %v2015
                  %v2017 = vld [vmem:[%s1613 + $0x1920] sm:$0xff]
                  %2018 = vst [vmem:[%s1614 + $0x648] sm:$0xff] %v2017
                  %v2019 = vld [vmem:[%s1613 + $0x1940] sm:$0xff]
                  %2020 = vst [vmem:[%s1614 + $0x650] sm:$0xff] %v2019
                  %v2021 = vld [vmem:[%s1613 + $0x1960] sm:$0xff]
                  %2022 = vst [vmem:[%s1614 + $0x658] sm:$0xff] %v2021
                  %v2023 = vld [vmem:[%s1613 + $0x1980] sm:$0xff]
                  %2024 = vst [vmem:[%s1614 + $0x660] sm:$0xff] %v2023
                  %v2025 = vld [vmem:[%s1613 + $0x19a0] sm:$0xff]
                  %2026 = vst [vmem:[%s1614 + $0x668] sm:$0xff] %v2025
                  %v2027 = vld [vmem:[%s1613 + $0x19c0] sm:$0xff]
                  %2028 = vst [vmem:[%s1614 + $0x670] sm:$0xff] %v2027
                  %v2029 = vld [vmem:[%s1613 + $0x19e0] sm:$0xff]
                  %2030 = vst [vmem:[%s1614 + $0x678] sm:$0xff] %v2029
                  %v2031 = vld [vmem:[%s1613 + $0x1a00] sm:$0xff]
                  %2032 = vst [vmem:[%s1614 + $0x680] sm:$0xff] %v2031
                  %v2033 = vld [vmem:[%s1613 + $0x1a20] sm:$0xff]
                  %2034 = vst [vmem:[%s1614 + $0x688] sm:$0xff] %v2033
                  %v2035 = vld [vmem:[%s1613 + $0x1a40] sm:$0xff]
                  %2036 = vst [vmem:[%s1614 + $0x690] sm:$0xff] %v2035
                  %v2037 = vld [vmem:[%s1613 + $0x1a60] sm:$0xff]
                  %2038 = vst [vmem:[%s1614 + $0x698] sm:$0xff] %v2037
                  %v2039 = vld [vmem:[%s1613 + $0x1a80] sm:$0xff]
                  %2040 = vst [vmem:[%s1614 + $0x6a0] sm:$0xff] %v2039
                  %v2041 = vld [vmem:[%s1613 + $0x1aa0] sm:$0xff]
                  %2042 = vst [vmem:[%s1614 + $0x6a8] sm:$0xff] %v2041
                  %v2043 = vld [vmem:[%s1613 + $0x1ac0] sm:$0xff]
                  %2044 = vst [vmem:[%s1614 + $0x6b0] sm:$0xff] %v2043
                  %v2045 = vld [vmem:[%s1613 + $0x1ae0] sm:$0xff]
                  %2046 = vst [vmem:[%s1614 + $0x6b8] sm:$0xff] %v2045
                  %v2047 = vld [vmem:[%s1613 + $0x1b00] sm:$0xff]
                  %2048 = vst [vmem:[%s1614 + $0x6c0] sm:$0xff] %v2047
                  %v2049 = vld [vmem:[%s1613 + $0x1b20] sm:$0xff]
                  %2050 = vst [vmem:[%s1614 + $0x6c8] sm:$0xff] %v2049
                  %v2051 = vld [vmem:[%s1613 + $0x1b40] sm:$0xff]
                  %2052 = vst [vmem:[%s1614 + $0x6d0] sm:$0xff] %v2051
                  %v2053 = vld [vmem:[%s1613 + $0x1b60] sm:$0xff]
                  %2054 = vst [vmem:[%s1614 + $0x6d8] sm:$0xff] %v2053
                  %v2055 = vld [vmem:[%s1613 + $0x1b80] sm:$0xff]
                  %2056 = vst [vmem:[%s1614 + $0x6e0] sm:$0xff] %v2055
                  %v2057 = vld [vmem:[%s1613 + $0x1ba0] sm:$0xff]
                  %2058 = vst [vmem:[%s1614 + $0x6e8] sm:$0xff] %v2057
                  %v2059 = vld [vmem:[%s1613 + $0x1bc0] sm:$0xff]
                  %2060 = vst [vmem:[%s1614 + $0x6f0] sm:$0xff] %v2059
                  %v2061 = vld [vmem:[%s1613 + $0x1be0] sm:$0xff]
                  %2062 = vst [vmem:[%s1614 + $0x6f8] sm:$0xff] %v2061
                  %v2063 = vld [vmem:[%s1613 + $0x1c00] sm:$0xff]
                  %2064 = vst [vmem:[%s1614 + $0x700] sm:$0xff] %v2063
                  %v2065 = vld [vmem:[%s1613 + $0x1c20] sm:$0xff]
                  %2066 = vst [vmem:[%s1614 + $0x708] sm:$0xff] %v2065
                  %v2067 = vld [vmem:[%s1613 + $0x1c40] sm:$0xff]
                  %2068 = vst [vmem:[%s1614 + $0x710] sm:$0xff] %v2067
                  %v2069 = vld [vmem:[%s1613 + $0x1c60] sm:$0xff]
                  %2070 = vst [vmem:[%s1614 + $0x718] sm:$0xff] %v2069
                  %v2071 = vld [vmem:[%s1613 + $0x1c80] sm:$0xff]
                  %2072 = vst [vmem:[%s1614 + $0x720] sm:$0xff] %v2071
                  %v2073 = vld [vmem:[%s1613 + $0x1ca0] sm:$0xff]
                  %2074 = vst [vmem:[%s1614 + $0x728] sm:$0xff] %v2073
                  %v2075 = vld [vmem:[%s1613 + $0x1cc0] sm:$0xff]
                  %2076 = vst [vmem:[%s1614 + $0x730] sm:$0xff] %v2075
                  %v2077 = vld [vmem:[%s1613 + $0x1ce0] sm:$0xff]
                  %2078 = vst [vmem:[%s1614 + $0x738] sm:$0xff] %v2077
                  %v2079 = vld [vmem:[%s1613 + $0x1d00] sm:$0xff]
                  %2080 = vst [vmem:[%s1614 + $0x740] sm:$0xff] %v2079
                  %v2081 = vld [vmem:[%s1613 + $0x1d20] sm:$0xff]
                  %2082 = vst [vmem:[%s1614 + $0x748] sm:$0xff] %v2081
                  %v2083 = vld [vmem:[%s1613 + $0x1d40] sm:$0xff]
                  %2084 = vst [vmem:[%s1614 + $0x750] sm:$0xff] %v2083
                  %v2085 = vld [vmem:[%s1613 + $0x1d60] sm:$0xff]
                  %2086 = vst [vmem:[%s1614 + $0x758] sm:$0xff] %v2085
                  %v2087 = vld [vmem:[%s1613 + $0x1d80] sm:$0xff]
                  %2088 = vst [vmem:[%s1614 + $0x760] sm:$0xff] %v2087
                  %v2089 = vld [vmem:[%s1613 + $0x1da0] sm:$0xff]
                  %2090 = vst [vmem:[%s1614 + $0x768] sm:$0xff] %v2089
                  %v2091 = vld [vmem:[%s1613 + $0x1dc0] sm:$0xff]
                  %2092 = vst [vmem:[%s1614 + $0x770] sm:$0xff] %v2091
                  %v2093 = vld [vmem:[%s1613 + $0x1de0] sm:$0xff]
                  %2094 = vst [vmem:[%s1614 + $0x778] sm:$0xff] %v2093
                  %v2095 = vld [vmem:[%s1613 + $0x1e00] sm:$0xff]
                  %2096 = vst [vmem:[%s1614 + $0x780] sm:$0xff] %v2095
                  %v2097 = vld [vmem:[%s1613 + $0x1e20] sm:$0xff]
                  %2098 = vst [vmem:[%s1614 + $0x788] sm:$0xff] %v2097
                  %v2099 = vld [vmem:[%s1613 + $0x1e40] sm:$0xff]
                  %2100 = vst [vmem:[%s1614 + $0x790] sm:$0xff] %v2099
                  %v2101 = vld [vmem:[%s1613 + $0x1e60] sm:$0xff]
                  %2102 = vst [vmem:[%s1614 + $0x798] sm:$0xff] %v2101
                  %v2103 = vld [vmem:[%s1613 + $0x1e80] sm:$0xff]
                  %2104 = vst [vmem:[%s1614 + $0x7a0] sm:$0xff] %v2103
                  %v2105 = vld [vmem:[%s1613 + $0x1ea0] sm:$0xff]
                  %2106 = vst [vmem:[%s1614 + $0x7a8] sm:$0xff] %v2105
                  %v2107 = vld [vmem:[%s1613 + $0x1ec0] sm:$0xff]
                  %2108 = vst [vmem:[%s1614 + $0x7b0] sm:$0xff] %v2107
                  %v2109 = vld [vmem:[%s1613 + $0x1ee0] sm:$0xff]
                  %2110 = vst [vmem:[%s1614 + $0x7b8] sm:$0xff] %v2109
                  %v2111 = vld [vmem:[%s1613 + $0x1f00] sm:$0xff]
                  %2112 = vst [vmem:[%s1614 + $0x7c0] sm:$0xff] %v2111
                  %v2113 = vld [vmem:[%s1613 + $0x1f20] sm:$0xff]
                  %2114 = vst [vmem:[%s1614 + $0x7c8] sm:$0xff] %v2113
                  %v2115 = vld [vmem:[%s1613 + $0x1f40] sm:$0xff]
                  %2116 = vst [vmem:[%s1614 + $0x7d0] sm:$0xff] %v2115
                  %v2117 = vld [vmem:[%s1613 + $0x1f60] sm:$0xff]
                  %2118 = vst [vmem:[%s1614 + $0x7d8] sm:$0xff] %v2117
                  %v2119 = vld [vmem:[%s1613 + $0x1f80] sm:$0xff]
                  %2120 = vst [vmem:[%s1614 + $0x7e0] sm:$0xff] %v2119
                  %v2121 = vld [vmem:[%s1613 + $0x1fa0] sm:$0xff]
                  %2122 = vst [vmem:[%s1614 + $0x7e8] sm:$0xff] %v2121
                  %v2123 = vld [vmem:[%s1613 + $0x1fc0] sm:$0xff]
                  %2124 = vst [vmem:[%s1614 + $0x7f0] sm:$0xff] %v2123
                  %v2125 = vld [vmem:[%s1613 + $0x1fe0] sm:$0xff]
                  %2126 = vst [vmem:[%s1614 + $0x7f8] sm:$0xff] %v2125
                  %v2127 = vld [vmem:[%s1613 + $0x2000] sm:$0xff]
                  %2128 = vst [vmem:[%s1614 + $0x800] sm:$0xff] %v2127
                  %v2129 = vld [vmem:[%s1613 + $0x2020] sm:$0xff]
                  %2130 = vst [vmem:[%s1614 + $0x808] sm:$0xff] %v2129
                  %v2131 = vld [vmem:[%s1613 + $0x2040] sm:$0xff]
                  %2132 = vst [vmem:[%s1614 + $0x810] sm:$0xff] %v2131
                  %v2133 = vld [vmem:[%s1613 + $0x2060] sm:$0xff]
                  %2134 = vst [vmem:[%s1614 + $0x818] sm:$0xff] %v2133
                  %v2135 = vld [vmem:[%s1613 + $0x2080] sm:$0xff]
                  %2136 = vst [vmem:[%s1614 + $0x820] sm:$0xff] %v2135
                  %v2137 = vld [vmem:[%s1613 + $0x20a0] sm:$0xff]
                  %2138 = vst [vmem:[%s1614 + $0x828] sm:$0xff] %v2137
                  %v2139 = vld [vmem:[%s1613 + $0x20c0] sm:$0xff]
                  %2140 = vst [vmem:[%s1614 + $0x830] sm:$0xff] %v2139
                  %v2141 = vld [vmem:[%s1613 + $0x20e0] sm:$0xff]
                  %2142 = vst [vmem:[%s1614 + $0x838] sm:$0xff] %v2141
                  %v2143 = vld [vmem:[%s1613 + $0x2100] sm:$0xff]
                  %2144 = vst [vmem:[%s1614 + $0x840] sm:$0xff] %v2143
                  %v2145 = vld [vmem:[%s1613 + $0x2120] sm:$0xff]
                  %2146 = vst [vmem:[%s1614 + $0x848] sm:$0xff] %v2145
                  %v2147 = vld [vmem:[%s1613 + $0x2140] sm:$0xff]
                  %2148 = vst [vmem:[%s1614 + $0x850] sm:$0xff] %v2147
                  %v2149 = vld [vmem:[%s1613 + $0x2160] sm:$0xff]
                  %2150 = vst [vmem:[%s1614 + $0x858] sm:$0xff] %v2149
                  %v2151 = vld [vmem:[%s1613 + $0x2180] sm:$0xff]
                  %2152 = vst [vmem:[%s1614 + $0x860] sm:$0xff] %v2151
                  %v2153 = vld [vmem:[%s1613 + $0x21a0] sm:$0xff]
                  %2154 = vst [vmem:[%s1614 + $0x868] sm:$0xff] %v2153
                  %v2155 = vld [vmem:[%s1613 + $0x21c0] sm:$0xff]
                  %2156 = vst [vmem:[%s1614 + $0x870] sm:$0xff] %v2155
                  %v2157 = vld [vmem:[%s1613 + $0x21e0] sm:$0xff]
                  %2158 = vst [vmem:[%s1614 + $0x878] sm:$0xff] %v2157
                  %v2159 = vld [vmem:[%s1613 + $0x2200] sm:$0xff]
                  %2160 = vst [vmem:[%s1614 + $0x880] sm:$0xff] %v2159
                  %v2161 = vld [vmem:[%s1613 + $0x2220] sm:$0xff]
                  %2162 = vst [vmem:[%s1614 + $0x888] sm:$0xff] %v2161
                  %v2163 = vld [vmem:[%s1613 + $0x2240] sm:$0xff]
                  %2164 = vst [vmem:[%s1614 + $0x890] sm:$0xff] %v2163
                  %v2165 = vld [vmem:[%s1613 + $0x2260] sm:$0xff]
                  %2166 = vst [vmem:[%s1614 + $0x898] sm:$0xff] %v2165
                  %v2167 = vld [vmem:[%s1613 + $0x2280] sm:$0xff]
                  %2168 = vst [vmem:[%s1614 + $0x8a0] sm:$0xff] %v2167
                  %v2169 = vld [vmem:[%s1613 + $0x22a0] sm:$0xff]
                  %2170 = vst [vmem:[%s1614 + $0x8a8] sm:$0xff] %v2169
                  %v2171 = vld [vmem:[%s1613 + $0x22c0] sm:$0xff]
                  %2172 = vst [vmem:[%s1614 + $0x8b0] sm:$0xff] %v2171
                  %v2173 = vld [vmem:[%s1613 + $0x22e0] sm:$0xff]
                  %2174 = vst [vmem:[%s1614 + $0x8b8] sm:$0xff] %v2173
                  %v2175 = vld [vmem:[%s1613 + $0x2300] sm:$0xff]
                  %2176 = vst [vmem:[%s1614 + $0x8c0] sm:$0xff] %v2175
                  %v2177 = vld [vmem:[%s1613 + $0x2320] sm:$0xff]
                  %2178 = vst [vmem:[%s1614 + $0x8c8] sm:$0xff] %v2177
                  %v2179 = vld [vmem:[%s1613 + $0x2340] sm:$0xff]
                  %2180 = vst [vmem:[%s1614 + $0x8d0] sm:$0xff] %v2179
                  %v2181 = vld [vmem:[%s1613 + $0x2360] sm:$0xff]
                  %2182 = vst [vmem:[%s1614 + $0x8d8] sm:$0xff] %v2181
                  %v2183 = vld [vmem:[%s1613 + $0x2380] sm:$0xff]
                  %2184 = vst [vmem:[%s1614 + $0x8e0] sm:$0xff] %v2183
                  %v2185 = vld [vmem:[%s1613 + $0x23a0] sm:$0xff]
                  %2186 = vst [vmem:[%s1614 + $0x8e8] sm:$0xff] %v2185
                  %v2187 = vld [vmem:[%s1613 + $0x23c0] sm:$0xff]
                  %2188 = vst [vmem:[%s1614 + $0x8f0] sm:$0xff] %v2187
                  %v2189 = vld [vmem:[%s1613 + $0x23e0] sm:$0xff]
                  %2190 = vst [vmem:[%s1614 + $0x8f8] sm:$0xff] %v2189
                  %v2191 = vld [vmem:[%s1613 + $0x2400] sm:$0xff]
                  %2192 = vst [vmem:[%s1614 + $0x900] sm:$0xff] %v2191
                  %v2193 = vld [vmem:[%s1613 + $0x2420] sm:$0xff]
                  %2194 = vst [vmem:[%s1614 + $0x908] sm:$0xff] %v2193
                  %v2195 = vld [vmem:[%s1613 + $0x2440] sm:$0xff]
                  %2196 = vst [vmem:[%s1614 + $0x910] sm:$0xff] %v2195
                  %v2197 = vld [vmem:[%s1613 + $0x2460] sm:$0xff]
                  %2198 = vst [vmem:[%s1614 + $0x918] sm:$0xff] %v2197
                  %v2199 = vld [vmem:[%s1613 + $0x2480] sm:$0xff]
                  %2200 = vst [vmem:[%s1614 + $0x920] sm:$0xff] %v2199
                  %v2201 = vld [vmem:[%s1613 + $0x24a0] sm:$0xff]
                  %2202 = vst [vmem:[%s1614 + $0x928] sm:$0xff] %v2201
                  %v2203 = vld [vmem:[%s1613 + $0x24c0] sm:$0xff]
                  %2204 = vst [vmem:[%s1614 + $0x930] sm:$0xff] %v2203
                  %v2205 = vld [vmem:[%s1613 + $0x24e0] sm:$0xff]
                  %2206 = vst [vmem:[%s1614 + $0x938] sm:$0xff] %v2205
                  %v2207 = vld [vmem:[%s1613 + $0x2500] sm:$0xff]
                  %2208 = vst [vmem:[%s1614 + $0x940] sm:$0xff] %v2207
                  %v2209 = vld [vmem:[%s1613 + $0x2520] sm:$0xff]
                  %2210 = vst [vmem:[%s1614 + $0x948] sm:$0xff] %v2209
                  %v2211 = vld [vmem:[%s1613 + $0x2540] sm:$0xff]
                  %2212 = vst [vmem:[%s1614 + $0x950] sm:$0xff] %v2211
                  %v2213 = vld [vmem:[%s1613 + $0x2560] sm:$0xff]
                  %2214 = vst [vmem:[%s1614 + $0x958] sm:$0xff] %v2213
                  %v2215 = vld [vmem:[%s1613 + $0x2580] sm:$0xff]
                  %2216 = vst [vmem:[%s1614 + $0x960] sm:$0xff] %v2215
                  %v2217 = vld [vmem:[%s1613 + $0x25a0] sm:$0xff]
                  %2218 = vst [vmem:[%s1614 + $0x968] sm:$0xff] %v2217
                  %v2219 = vld [vmem:[%s1613 + $0x25c0] sm:$0xff]
                  %2220 = vst [vmem:[%s1614 + $0x970] sm:$0xff] %v2219
                  %v2221 = vld [vmem:[%s1613 + $0x25e0] sm:$0xff]
                  %2222 = vst [vmem:[%s1614 + $0x978] sm:$0xff] %v2221
                  %v2223 = vld [vmem:[%s1613 + $0x2600] sm:$0xff]
                  %2224 = vst [vmem:[%s1614 + $0x980] sm:$0xff] %v2223
                  %v2225 = vld [vmem:[%s1613 + $0x2620] sm:$0xff]
                  %2226 = vst [vmem:[%s1614 + $0x988] sm:$0xff] %v2225
                  %v2227 = vld [vmem:[%s1613 + $0x2640] sm:$0xff]
                  %2228 = vst [vmem:[%s1614 + $0x990] sm:$0xff] %v2227
                  %v2229 = vld [vmem:[%s1613 + $0x2660] sm:$0xff]
                  %2230 = vst [vmem:[%s1614 + $0x998] sm:$0xff] %v2229
                  %v2231 = vld [vmem:[%s1613 + $0x2680] sm:$0xff]
                  %2232 = vst [vmem:[%s1614 + $0x9a0] sm:$0xff] %v2231
                  %v2233 = vld [vmem:[%s1613 + $0x26a0] sm:$0xff]
                  %2234 = vst [vmem:[%s1614 + $0x9a8] sm:$0xff] %v2233
                  %v2235 = vld [vmem:[%s1613 + $0x26c0] sm:$0xff]
                  %2236 = vst [vmem:[%s1614 + $0x9b0] sm:$0xff] %v2235
                  %v2237 = vld [vmem:[%s1613 + $0x26e0] sm:$0xff]
                  %2238 = vst [vmem:[%s1614 + $0x9b8] sm:$0xff] %v2237
                  %v2239 = vld [vmem:[%s1613 + $0x2700] sm:$0xff]
                  %2240 = vst [vmem:[%s1614 + $0x9c0] sm:$0xff] %v2239
                  %v2241 = vld [vmem:[%s1613 + $0x2720] sm:$0xff]
                  %2242 = vst [vmem:[%s1614 + $0x9c8] sm:$0xff] %v2241
                  %v2243 = vld [vmem:[%s1613 + $0x2740] sm:$0xff]
                  %2244 = vst [vmem:[%s1614 + $0x9d0] sm:$0xff] %v2243
                  %v2245 = vld [vmem:[%s1613 + $0x2760] sm:$0xff]
                  %2246 = vst [vmem:[%s1614 + $0x9d8] sm:$0xff] %v2245
                  %v2247 = vld [vmem:[%s1613 + $0x2780] sm:$0xff]
                  %2248 = vst [vmem:[%s1614 + $0x9e0] sm:$0xff] %v2247
                  %v2249 = vld [vmem:[%s1613 + $0x27a0] sm:$0xff]
                  %2250 = vst [vmem:[%s1614 + $0x9e8] sm:$0xff] %v2249
                  %v2251 = vld [vmem:[%s1613 + $0x27c0] sm:$0xff]
                  %2252 = vst [vmem:[%s1614 + $0x9f0] sm:$0xff] %v2251
                  %v2253 = vld [vmem:[%s1613 + $0x27e0] sm:$0xff]
                  %2254 = vst [vmem:[%s1614 + $0x9f8] sm:$0xff] %v2253
                  %s2255 = sadd.s32 1, %s1612
                  %p2256 = scmp.ge.s32.totalorder %s2255, 1
                  %s2257 = scalar_select %p2256, 0, %s2255
                  %s2258 = smul.u32 %s2257, 8
                  %s2259 = smul.u32 %s2257, 8
                  %s2260 = scalar_lea.vmem %s287, %s2258
                  %s2261 = scalar_lea.vmem %s284, %s2259 [#allocation4]
                $region83: #{deep_q_network_forward.1} parent=77 // loop_footer
                  %s1611 = sadd.s32 1, %s1607
                $region84: #{deep_q_network_forward.1} parent=77 // loop_footer_branch
                  %1606 = sbr.rel target = $region80
                $region85: #{deep_q_network_forward.1} parent=77 // loop_exit
                  _
                %s2263 = ssub.s32 1, 1
                loop: start=0, step=1, limit=1
                $region86: #{deep_q_network_forward.1} parent=77 // loop_pre_header
                  _
                $region87: #{deep_q_network_forward.1} parent=77 // loop_header
                  %s2265 = sphi 0, %s2269
                  %p2266 = scmp.ge.s32.totalorder %s2265, 1
                  %s2270 = sphi %s1604, %s1604
                  %s2271 = sphi %s1605, %s1605
                $region88: #{deep_q_network_forward.1} parent=77 // loop_header_branch
                  %2268 = sbr.rel (%p2266) target = $region92
                $region89: #{deep_q_network_forward.1} parent=77 // loop_body
                  %v2272 = vld [vmem:[%s2270] sm:%s2263]
                  %2273 = vst [vmem:[%s2271] sm:%s2263] %v2272
                  %v2274 = vld [vmem:[%s2270 + $0x20] sm:%s2263]
                  %2275 = vst [vmem:[%s2271 + $0x8] sm:%s2263] %v2274
                  %v2276 = vld [vmem:[%s2270 + $0x40] sm:%s2263]
                  %2277 = vst [vmem:[%s2271 + $0x10] sm:%s2263] %v2276
                  %v2278 = vld [vmem:[%s2270 + $0x60] sm:%s2263]
                  %2279 = vst [vmem:[%s2271 + $0x18] sm:%s2263] %v2278
                  %v2280 = vld [vmem:[%s2270 + $0x80] sm:%s2263]
                  %2281 = vst [vmem:[%s2271 + $0x20] sm:%s2263] %v2280
                  %v2282 = vld [vmem:[%s2270 + $0xa0] sm:%s2263]
                  %2283 = vst [vmem:[%s2271 + $0x28] sm:%s2263] %v2282
                  %v2284 = vld [vmem:[%s2270 + $0xc0] sm:%s2263]
                  %2285 = vst [vmem:[%s2271 + $0x30] sm:%s2263] %v2284
                  %v2286 = vld [vmem:[%s2270 + $0xe0] sm:%s2263]
                  %2287 = vst [vmem:[%s2271 + $0x38] sm:%s2263] %v2286
                  %v2288 = vld [vmem:[%s2270 + $0x100] sm:%s2263]
                  %2289 = vst [vmem:[%s2271 + $0x40] sm:%s2263] %v2288
                  %v2290 = vld [vmem:[%s2270 + $0x120] sm:%s2263]
                  %2291 = vst [vmem:[%s2271 + $0x48] sm:%s2263] %v2290
                  %v2292 = vld [vmem:[%s2270 + $0x140] sm:%s2263]
                  %2293 = vst [vmem:[%s2271 + $0x50] sm:%s2263] %v2292
                  %v2294 = vld [vmem:[%s2270 + $0x160] sm:%s2263]
                  %2295 = vst [vmem:[%s2271 + $0x58] sm:%s2263] %v2294
                  %v2296 = vld [vmem:[%s2270 + $0x180] sm:%s2263]
                  %2297 = vst [vmem:[%s2271 + $0x60] sm:%s2263] %v2296
                  %v2298 = vld [vmem:[%s2270 + $0x1a0] sm:%s2263]
                  %2299 = vst [vmem:[%s2271 + $0x68] sm:%s2263] %v2298
                  %v2300 = vld [vmem:[%s2270 + $0x1c0] sm:%s2263]
                  %2301 = vst [vmem:[%s2271 + $0x70] sm:%s2263] %v2300
                  %v2302 = vld [vmem:[%s2270 + $0x1e0] sm:%s2263]
                  %2303 = vst [vmem:[%s2271 + $0x78] sm:%s2263] %v2302
                  %v2304 = vld [vmem:[%s2270 + $0x200] sm:%s2263]
                  %2305 = vst [vmem:[%s2271 + $0x80] sm:%s2263] %v2304
                  %v2306 = vld [vmem:[%s2270 + $0x220] sm:%s2263]
                  %2307 = vst [vmem:[%s2271 + $0x88] sm:%s2263] %v2306
                  %v2308 = vld [vmem:[%s2270 + $0x240] sm:%s2263]
                  %2309 = vst [vmem:[%s2271 + $0x90] sm:%s2263] %v2308
                  %v2310 = vld [vmem:[%s2270 + $0x260] sm:%s2263]
                  %2311 = vst [vmem:[%s2271 + $0x98] sm:%s2263] %v2310
                  %v2312 = vld [vmem:[%s2270 + $0x280] sm:%s2263]
                  %2313 = vst [vmem:[%s2271 + $0xa0] sm:%s2263] %v2312
                  %v2314 = vld [vmem:[%s2270 + $0x2a0] sm:%s2263]
                  %2315 = vst [vmem:[%s2271 + $0xa8] sm:%s2263] %v2314
                  %v2316 = vld [vmem:[%s2270 + $0x2c0] sm:%s2263]
                  %2317 = vst [vmem:[%s2271 + $0xb0] sm:%s2263] %v2316
                  %v2318 = vld [vmem:[%s2270 + $0x2e0] sm:%s2263]
                  %2319 = vst [vmem:[%s2271 + $0xb8] sm:%s2263] %v2318
                  %v2320 = vld [vmem:[%s2270 + $0x300] sm:%s2263]
                  %2321 = vst [vmem:[%s2271 + $0xc0] sm:%s2263] %v2320
                  %v2322 = vld [vmem:[%s2270 + $0x320] sm:%s2263]
                  %2323 = vst [vmem:[%s2271 + $0xc8] sm:%s2263] %v2322
                  %v2324 = vld [vmem:[%s2270 + $0x340] sm:%s2263]
                  %2325 = vst [vmem:[%s2271 + $0xd0] sm:%s2263] %v2324
                  %v2326 = vld [vmem:[%s2270 + $0x360] sm:%s2263]
                  %2327 = vst [vmem:[%s2271 + $0xd8] sm:%s2263] %v2326
                  %v2328 = vld [vmem:[%s2270 + $0x380] sm:%s2263]
                  %2329 = vst [vmem:[%s2271 + $0xe0] sm:%s2263] %v2328
                  %v2330 = vld [vmem:[%s2270 + $0x3a0] sm:%s2263]
                  %2331 = vst [vmem:[%s2271 + $0xe8] sm:%s2263] %v2330
                  %v2332 = vld [vmem:[%s2270 + $0x3c0] sm:%s2263]
                  %2333 = vst [vmem:[%s2271 + $0xf0] sm:%s2263] %v2332
                  %v2334 = vld [vmem:[%s2270 + $0x3e0] sm:%s2263]
                  %2335 = vst [vmem:[%s2271 + $0xf8] sm:%s2263] %v2334
                  %v2336 = vld [vmem:[%s2270 + $0x400] sm:%s2263]
                  %2337 = vst [vmem:[%s2271 + $0x100] sm:%s2263] %v2336
                  %v2338 = vld [vmem:[%s2270 + $0x420] sm:%s2263]
                  %2339 = vst [vmem:[%s2271 + $0x108] sm:%s2263] %v2338
                  %v2340 = vld [vmem:[%s2270 + $0x440] sm:%s2263]
                  %2341 = vst [vmem:[%s2271 + $0x110] sm:%s2263] %v2340
                  %v2342 = vld [vmem:[%s2270 + $0x460] sm:%s2263]
                  %2343 = vst [vmem:[%s2271 + $0x118] sm:%s2263] %v2342
                  %v2344 = vld [vmem:[%s2270 + $0x480] sm:%s2263]
                  %2345 = vst [vmem:[%s2271 + $0x120] sm:%s2263] %v2344
                  %v2346 = vld [vmem:[%s2270 + $0x4a0] sm:%s2263]
                  %2347 = vst [vmem:[%s2271 + $0x128] sm:%s2263] %v2346
                  %v2348 = vld [vmem:[%s2270 + $0x4c0] sm:%s2263]
                  %2349 = vst [vmem:[%s2271 + $0x130] sm:%s2263] %v2348
                  %v2350 = vld [vmem:[%s2270 + $0x4e0] sm:%s2263]
                  %2351 = vst [vmem:[%s2271 + $0x138] sm:%s2263] %v2350
                  %v2352 = vld [vmem:[%s2270 + $0x500] sm:%s2263]
                  %2353 = vst [vmem:[%s2271 + $0x140] sm:%s2263] %v2352
                  %v2354 = vld [vmem:[%s2270 + $0x520] sm:%s2263]
                  %2355 = vst [vmem:[%s2271 + $0x148] sm:%s2263] %v2354
                  %v2356 = vld [vmem:[%s2270 + $0x540] sm:%s2263]
                  %2357 = vst [vmem:[%s2271 + $0x150] sm:%s2263] %v2356
                  %v2358 = vld [vmem:[%s2270 + $0x560] sm:%s2263]
                  %2359 = vst [vmem:[%s2271 + $0x158] sm:%s2263] %v2358
                  %v2360 = vld [vmem:[%s2270 + $0x580] sm:%s2263]
                  %2361 = vst [vmem:[%s2271 + $0x160] sm:%s2263] %v2360
                  %v2362 = vld [vmem:[%s2270 + $0x5a0] sm:%s2263]
                  %2363 = vst [vmem:[%s2271 + $0x168] sm:%s2263] %v2362
                  %v2364 = vld [vmem:[%s2270 + $0x5c0] sm:%s2263]
                  %2365 = vst [vmem:[%s2271 + $0x170] sm:%s2263] %v2364
                  %v2366 = vld [vmem:[%s2270 + $0x5e0] sm:%s2263]
                  %2367 = vst [vmem:[%s2271 + $0x178] sm:%s2263] %v2366
                  %v2368 = vld [vmem:[%s2270 + $0x600] sm:%s2263]
                  %2369 = vst [vmem:[%s2271 + $0x180] sm:%s2263] %v2368
                  %v2370 = vld [vmem:[%s2270 + $0x620] sm:%s2263]
                  %2371 = vst [vmem:[%s2271 + $0x188] sm:%s2263] %v2370
                  %v2372 = vld [vmem:[%s2270 + $0x640] sm:%s2263]
                  %2373 = vst [vmem:[%s2271 + $0x190] sm:%s2263] %v2372
                  %v2374 = vld [vmem:[%s2270 + $0x660] sm:%s2263]
                  %2375 = vst [vmem:[%s2271 + $0x198] sm:%s2263] %v2374
                  %v2376 = vld [vmem:[%s2270 + $0x680] sm:%s2263]
                  %2377 = vst [vmem:[%s2271 + $0x1a0] sm:%s2263] %v2376
                  %v2378 = vld [vmem:[%s2270 + $0x6a0] sm:%s2263]
                  %2379 = vst [vmem:[%s2271 + $0x1a8] sm:%s2263] %v2378
                  %v2380 = vld [vmem:[%s2270 + $0x6c0] sm:%s2263]
                  %2381 = vst [vmem:[%s2271 + $0x1b0] sm:%s2263] %v2380
                  %v2382 = vld [vmem:[%s2270 + $0x6e0] sm:%s2263]
                  %2383 = vst [vmem:[%s2271 + $0x1b8] sm:%s2263] %v2382
                  %v2384 = vld [vmem:[%s2270 + $0x700] sm:%s2263]
                  %2385 = vst [vmem:[%s2271 + $0x1c0] sm:%s2263] %v2384
                  %v2386 = vld [vmem:[%s2270 + $0x720] sm:%s2263]
                  %2387 = vst [vmem:[%s2271 + $0x1c8] sm:%s2263] %v2386
                  %v2388 = vld [vmem:[%s2270 + $0x740] sm:%s2263]
                  %2389 = vst [vmem:[%s2271 + $0x1d0] sm:%s2263] %v2388
                  %v2390 = vld [vmem:[%s2270 + $0x760] sm:%s2263]
                  %2391 = vst [vmem:[%s2271 + $0x1d8] sm:%s2263] %v2390
                  %v2392 = vld [vmem:[%s2270 + $0x780] sm:%s2263]
                  %2393 = vst [vmem:[%s2271 + $0x1e0] sm:%s2263] %v2392
                  %v2394 = vld [vmem:[%s2270 + $0x7a0] sm:%s2263]
                  %2395 = vst [vmem:[%s2271 + $0x1e8] sm:%s2263] %v2394
                  %v2396 = vld [vmem:[%s2270 + $0x7c0] sm:%s2263]
                  %2397 = vst [vmem:[%s2271 + $0x1f0] sm:%s2263] %v2396
                  %v2398 = vld [vmem:[%s2270 + $0x7e0] sm:%s2263]
                  %2399 = vst [vmem:[%s2271 + $0x1f8] sm:%s2263] %v2398
                  %v2400 = vld [vmem:[%s2270 + $0x800] sm:%s2263]
                  %2401 = vst [vmem:[%s2271 + $0x200] sm:%s2263] %v2400
                  %v2402 = vld [vmem:[%s2270 + $0x820] sm:%s2263]
                  %2403 = vst [vmem:[%s2271 + $0x208] sm:%s2263] %v2402
                  %v2404 = vld [vmem:[%s2270 + $0x840] sm:%s2263]
                  %2405 = vst [vmem:[%s2271 + $0x210] sm:%s2263] %v2404
                  %v2406 = vld [vmem:[%s2270 + $0x860] sm:%s2263]
                  %2407 = vst [vmem:[%s2271 + $0x218] sm:%s2263] %v2406
                  %v2408 = vld [vmem:[%s2270 + $0x880] sm:%s2263]
                  %2409 = vst [vmem:[%s2271 + $0x220] sm:%s2263] %v2408
                  %v2410 = vld [vmem:[%s2270 + $0x8a0] sm:%s2263]
                  %2411 = vst [vmem:[%s2271 + $0x228] sm:%s2263] %v2410
                  %v2412 = vld [vmem:[%s2270 + $0x8c0] sm:%s2263]
                  %2413 = vst [vmem:[%s2271 + $0x230] sm:%s2263] %v2412
                  %v2414 = vld [vmem:[%s2270 + $0x8e0] sm:%s2263]
                  %2415 = vst [vmem:[%s2271 + $0x238] sm:%s2263] %v2414
                  %v2416 = vld [vmem:[%s2270 + $0x900] sm:%s2263]
                  %2417 = vst [vmem:[%s2271 + $0x240] sm:%s2263] %v2416
                  %v2418 = vld [vmem:[%s2270 + $0x920] sm:%s2263]
                  %2419 = vst [vmem:[%s2271 + $0x248] sm:%s2263] %v2418
                  %v2420 = vld [vmem:[%s2270 + $0x940] sm:%s2263]
                  %2421 = vst [vmem:[%s2271 + $0x250] sm:%s2263] %v2420
                  %v2422 = vld [vmem:[%s2270 + $0x960] sm:%s2263]
                  %2423 = vst [vmem:[%s2271 + $0x258] sm:%s2263] %v2422
                  %v2424 = vld [vmem:[%s2270 + $0x980] sm:%s2263]
                  %2425 = vst [vmem:[%s2271 + $0x260] sm:%s2263] %v2424
                  %v2426 = vld [vmem:[%s2270 + $0x9a0] sm:%s2263]
                  %2427 = vst [vmem:[%s2271 + $0x268] sm:%s2263] %v2426
                  %v2428 = vld [vmem:[%s2270 + $0x9c0] sm:%s2263]
                  %2429 = vst [vmem:[%s2271 + $0x270] sm:%s2263] %v2428
                  %v2430 = vld [vmem:[%s2270 + $0x9e0] sm:%s2263]
                  %2431 = vst [vmem:[%s2271 + $0x278] sm:%s2263] %v2430
                  %v2432 = vld [vmem:[%s2270 + $0xa00] sm:%s2263]
                  %2433 = vst [vmem:[%s2271 + $0x280] sm:%s2263] %v2432
                  %v2434 = vld [vmem:[%s2270 + $0xa20] sm:%s2263]
                  %2435 = vst [vmem:[%s2271 + $0x288] sm:%s2263] %v2434
                  %v2436 = vld [vmem:[%s2270 + $0xa40] sm:%s2263]
                  %2437 = vst [vmem:[%s2271 + $0x290] sm:%s2263] %v2436
                  %v2438 = vld [vmem:[%s2270 + $0xa60] sm:%s2263]
                  %2439 = vst [vmem:[%s2271 + $0x298] sm:%s2263] %v2438
                  %v2440 = vld [vmem:[%s2270 + $0xa80] sm:%s2263]
                  %2441 = vst [vmem:[%s2271 + $0x2a0] sm:%s2263] %v2440
                  %v2442 = vld [vmem:[%s2270 + $0xaa0] sm:%s2263]
                  %2443 = vst [vmem:[%s2271 + $0x2a8] sm:%s2263] %v2442
                  %v2444 = vld [vmem:[%s2270 + $0xac0] sm:%s2263]
                  %2445 = vst [vmem:[%s2271 + $0x2b0] sm:%s2263] %v2444
                  %v2446 = vld [vmem:[%s2270 + $0xae0] sm:%s2263]
                  %2447 = vst [vmem:[%s2271 + $0x2b8] sm:%s2263] %v2446
                  %v2448 = vld [vmem:[%s2270 + $0xb00] sm:%s2263]
                  %2449 = vst [vmem:[%s2271 + $0x2c0] sm:%s2263] %v2448
                  %v2450 = vld [vmem:[%s2270 + $0xb20] sm:%s2263]
                  %2451 = vst [vmem:[%s2271 + $0x2c8] sm:%s2263] %v2450
                  %v2452 = vld [vmem:[%s2270 + $0xb40] sm:%s2263]
                  %2453 = vst [vmem:[%s2271 + $0x2d0] sm:%s2263] %v2452
                  %v2454 = vld [vmem:[%s2270 + $0xb60] sm:%s2263]
                  %2455 = vst [vmem:[%s2271 + $0x2d8] sm:%s2263] %v2454
                  %v2456 = vld [vmem:[%s2270 + $0xb80] sm:%s2263]
                  %2457 = vst [vmem:[%s2271 + $0x2e0] sm:%s2263] %v2456
                  %v2458 = vld [vmem:[%s2270 + $0xba0] sm:%s2263]
                  %2459 = vst [vmem:[%s2271 + $0x2e8] sm:%s2263] %v2458
                  %v2460 = vld [vmem:[%s2270 + $0xbc0] sm:%s2263]
                  %2461 = vst [vmem:[%s2271 + $0x2f0] sm:%s2263] %v2460
                  %v2462 = vld [vmem:[%s2270 + $0xbe0] sm:%s2263]
                  %2463 = vst [vmem:[%s2271 + $0x2f8] sm:%s2263] %v2462
                  %v2464 = vld [vmem:[%s2270 + $0xc00] sm:%s2263]
                  %2465 = vst [vmem:[%s2271 + $0x300] sm:%s2263] %v2464
                  %v2466 = vld [vmem:[%s2270 + $0xc20] sm:%s2263]
                  %2467 = vst [vmem:[%s2271 + $0x308] sm:%s2263] %v2466
                  %v2468 = vld [vmem:[%s2270 + $0xc40] sm:%s2263]
                  %2469 = vst [vmem:[%s2271 + $0x310] sm:%s2263] %v2468
                  %v2470 = vld [vmem:[%s2270 + $0xc60] sm:%s2263]
                  %2471 = vst [vmem:[%s2271 + $0x318] sm:%s2263] %v2470
                  %v2472 = vld [vmem:[%s2270 + $0xc80] sm:%s2263]
                  %2473 = vst [vmem:[%s2271 + $0x320] sm:%s2263] %v2472
                  %v2474 = vld [vmem:[%s2270 + $0xca0] sm:%s2263]
                  %2475 = vst [vmem:[%s2271 + $0x328] sm:%s2263] %v2474
                  %v2476 = vld [vmem:[%s2270 + $0xcc0] sm:%s2263]
                  %2477 = vst [vmem:[%s2271 + $0x330] sm:%s2263] %v2476
                  %v2478 = vld [vmem:[%s2270 + $0xce0] sm:%s2263]
                  %2479 = vst [vmem:[%s2271 + $0x338] sm:%s2263] %v2478
                  %v2480 = vld [vmem:[%s2270 + $0xd00] sm:%s2263]
                  %2481 = vst [vmem:[%s2271 + $0x340] sm:%s2263] %v2480
                  %v2482 = vld [vmem:[%s2270 + $0xd20] sm:%s2263]
                  %2483 = vst [vmem:[%s2271 + $0x348] sm:%s2263] %v2482
                  %v2484 = vld [vmem:[%s2270 + $0xd40] sm:%s2263]
                  %2485 = vst [vmem:[%s2271 + $0x350] sm:%s2263] %v2484
                  %v2486 = vld [vmem:[%s2270 + $0xd60] sm:%s2263]
                  %2487 = vst [vmem:[%s2271 + $0x358] sm:%s2263] %v2486
                  %v2488 = vld [vmem:[%s2270 + $0xd80] sm:%s2263]
                  %2489 = vst [vmem:[%s2271 + $0x360] sm:%s2263] %v2488
                  %v2490 = vld [vmem:[%s2270 + $0xda0] sm:%s2263]
                  %2491 = vst [vmem:[%s2271 + $0x368] sm:%s2263] %v2490
                  %v2492 = vld [vmem:[%s2270 + $0xdc0] sm:%s2263]
                  %2493 = vst [vmem:[%s2271 + $0x370] sm:%s2263] %v2492
                  %v2494 = vld [vmem:[%s2270 + $0xde0] sm:%s2263]
                  %2495 = vst [vmem:[%s2271 + $0x378] sm:%s2263] %v2494
                  %v2496 = vld [vmem:[%s2270 + $0xe00] sm:%s2263]
                  %2497 = vst [vmem:[%s2271 + $0x380] sm:%s2263] %v2496
                  %v2498 = vld [vmem:[%s2270 + $0xe20] sm:%s2263]
                  %2499 = vst [vmem:[%s2271 + $0x388] sm:%s2263] %v2498
                  %v2500 = vld [vmem:[%s2270 + $0xe40] sm:%s2263]
                  %2501 = vst [vmem:[%s2271 + $0x390] sm:%s2263] %v2500
                  %v2502 = vld [vmem:[%s2270 + $0xe60] sm:%s2263]
                  %2503 = vst [vmem:[%s2271 + $0x398] sm:%s2263] %v2502
                  %v2504 = vld [vmem:[%s2270 + $0xe80] sm:%s2263]
                  %2505 = vst [vmem:[%s2271 + $0x3a0] sm:%s2263] %v2504
                  %v2506 = vld [vmem:[%s2270 + $0xea0] sm:%s2263]
                  %2507 = vst [vmem:[%s2271 + $0x3a8] sm:%s2263] %v2506
                  %v2508 = vld [vmem:[%s2270 + $0xec0] sm:%s2263]
                  %2509 = vst [vmem:[%s2271 + $0x3b0] sm:%s2263] %v2508
                  %v2510 = vld [vmem:[%s2270 + $0xee0] sm:%s2263]
                  %2511 = vst [vmem:[%s2271 + $0x3b8] sm:%s2263] %v2510
                  %v2512 = vld [vmem:[%s2270 + $0xf00] sm:%s2263]
                  %2513 = vst [vmem:[%s2271 + $0x3c0] sm:%s2263] %v2512
                  %v2514 = vld [vmem:[%s2270 + $0xf20] sm:%s2263]
                  %2515 = vst [vmem:[%s2271 + $0x3c8] sm:%s2263] %v2514
                  %v2516 = vld [vmem:[%s2270 + $0xf40] sm:%s2263]
                  %2517 = vst [vmem:[%s2271 + $0x3d0] sm:%s2263] %v2516
                  %v2518 = vld [vmem:[%s2270 + $0xf60] sm:%s2263]
                  %2519 = vst [vmem:[%s2271 + $0x3d8] sm:%s2263] %v2518
                  %v2520 = vld [vmem:[%s2270 + $0xf80] sm:%s2263]
                  %2521 = vst [vmem:[%s2271 + $0x3e0] sm:%s2263] %v2520
                  %v2522 = vld [vmem:[%s2270 + $0xfa0] sm:%s2263]
                  %2523 = vst [vmem:[%s2271 + $0x3e8] sm:%s2263] %v2522
                  %v2524 = vld [vmem:[%s2270 + $0xfc0] sm:%s2263]
                  %2525 = vst [vmem:[%s2271 + $0x3f0] sm:%s2263] %v2524
                  %v2526 = vld [vmem:[%s2270 + $0xfe0] sm:%s2263]
                  %2527 = vst [vmem:[%s2271 + $0x3f8] sm:%s2263] %v2526
                  %v2528 = vld [vmem:[%s2270 + $0x1000] sm:%s2263]
                  %2529 = vst [vmem:[%s2271 + $0x400] sm:%s2263] %v2528
                  %v2530 = vld [vmem:[%s2270 + $0x1020] sm:%s2263]
                  %2531 = vst [vmem:[%s2271 + $0x408] sm:%s2263] %v2530
                  %v2532 = vld [vmem:[%s2270 + $0x1040] sm:%s2263]
                  %2533 = vst [vmem:[%s2271 + $0x410] sm:%s2263] %v2532
                  %v2534 = vld [vmem:[%s2270 + $0x1060] sm:%s2263]
                  %2535 = vst [vmem:[%s2271 + $0x418] sm:%s2263] %v2534
                  %v2536 = vld [vmem:[%s2270 + $0x1080] sm:%s2263]
                  %2537 = vst [vmem:[%s2271 + $0x420] sm:%s2263] %v2536
                  %v2538 = vld [vmem:[%s2270 + $0x10a0] sm:%s2263]
                  %2539 = vst [vmem:[%s2271 + $0x428] sm:%s2263] %v2538
                  %v2540 = vld [vmem:[%s2270 + $0x10c0] sm:%s2263]
                  %2541 = vst [vmem:[%s2271 + $0x430] sm:%s2263] %v2540
                  %v2542 = vld [vmem:[%s2270 + $0x10e0] sm:%s2263]
                  %2543 = vst [vmem:[%s2271 + $0x438] sm:%s2263] %v2542
                  %v2544 = vld [vmem:[%s2270 + $0x1100] sm:%s2263]
                  %2545 = vst [vmem:[%s2271 + $0x440] sm:%s2263] %v2544
                  %v2546 = vld [vmem:[%s2270 + $0x1120] sm:%s2263]
                  %2547 = vst [vmem:[%s2271 + $0x448] sm:%s2263] %v2546
                  %v2548 = vld [vmem:[%s2270 + $0x1140] sm:%s2263]
                  %2549 = vst [vmem:[%s2271 + $0x450] sm:%s2263] %v2548
                  %v2550 = vld [vmem:[%s2270 + $0x1160] sm:%s2263]
                  %2551 = vst [vmem:[%s2271 + $0x458] sm:%s2263] %v2550
                  %v2552 = vld [vmem:[%s2270 + $0x1180] sm:%s2263]
                  %2553 = vst [vmem:[%s2271 + $0x460] sm:%s2263] %v2552
                  %v2554 = vld [vmem:[%s2270 + $0x11a0] sm:%s2263]
                  %2555 = vst [vmem:[%s2271 + $0x468] sm:%s2263] %v2554
                  %v2556 = vld [vmem:[%s2270 + $0x11c0] sm:%s2263]
                  %2557 = vst [vmem:[%s2271 + $0x470] sm:%s2263] %v2556
                  %v2558 = vld [vmem:[%s2270 + $0x11e0] sm:%s2263]
                  %2559 = vst [vmem:[%s2271 + $0x478] sm:%s2263] %v2558
                  %v2560 = vld [vmem:[%s2270 + $0x1200] sm:%s2263]
                  %2561 = vst [vmem:[%s2271 + $0x480] sm:%s2263] %v2560
                  %v2562 = vld [vmem:[%s2270 + $0x1220] sm:%s2263]
                  %2563 = vst [vmem:[%s2271 + $0x488] sm:%s2263] %v2562
                  %v2564 = vld [vmem:[%s2270 + $0x1240] sm:%s2263]
                  %2565 = vst [vmem:[%s2271 + $0x490] sm:%s2263] %v2564
                  %v2566 = vld [vmem:[%s2270 + $0x1260] sm:%s2263]
                  %2567 = vst [vmem:[%s2271 + $0x498] sm:%s2263] %v2566
                  %v2568 = vld [vmem:[%s2270 + $0x1280] sm:%s2263]
                  %2569 = vst [vmem:[%s2271 + $0x4a0] sm:%s2263] %v2568
                  %v2570 = vld [vmem:[%s2270 + $0x12a0] sm:%s2263]
                  %2571 = vst [vmem:[%s2271 + $0x4a8] sm:%s2263] %v2570
                  %v2572 = vld [vmem:[%s2270 + $0x12c0] sm:%s2263]
                  %2573 = vst [vmem:[%s2271 + $0x4b0] sm:%s2263] %v2572
                  %v2574 = vld [vmem:[%s2270 + $0x12e0] sm:%s2263]
                  %2575 = vst [vmem:[%s2271 + $0x4b8] sm:%s2263] %v2574
                  %v2576 = vld [vmem:[%s2270 + $0x1300] sm:%s2263]
                  %2577 = vst [vmem:[%s2271 + $0x4c0] sm:%s2263] %v2576
                  %v2578 = vld [vmem:[%s2270 + $0x1320] sm:%s2263]
                  %2579 = vst [vmem:[%s2271 + $0x4c8] sm:%s2263] %v2578
                  %v2580 = vld [vmem:[%s2270 + $0x1340] sm:%s2263]
                  %2581 = vst [vmem:[%s2271 + $0x4d0] sm:%s2263] %v2580
                  %v2582 = vld [vmem:[%s2270 + $0x1360] sm:%s2263]
                  %2583 = vst [vmem:[%s2271 + $0x4d8] sm:%s2263] %v2582
                  %v2584 = vld [vmem:[%s2270 + $0x1380] sm:%s2263]
                  %2585 = vst [vmem:[%s2271 + $0x4e0] sm:%s2263] %v2584
                  %v2586 = vld [vmem:[%s2270 + $0x13a0] sm:%s2263]
                  %2587 = vst [vmem:[%s2271 + $0x4e8] sm:%s2263] %v2586
                  %v2588 = vld [vmem:[%s2270 + $0x13c0] sm:%s2263]
                  %2589 = vst [vmem:[%s2271 + $0x4f0] sm:%s2263] %v2588
                  %v2590 = vld [vmem:[%s2270 + $0x13e0] sm:%s2263]
                  %2591 = vst [vmem:[%s2271 + $0x4f8] sm:%s2263] %v2590
                  %v2592 = vld [vmem:[%s2270 + $0x1400] sm:%s2263]
                  %2593 = vst [vmem:[%s2271 + $0x500] sm:%s2263] %v2592
                  %v2594 = vld [vmem:[%s2270 + $0x1420] sm:%s2263]
                  %2595 = vst [vmem:[%s2271 + $0x508] sm:%s2263] %v2594
                  %v2596 = vld [vmem:[%s2270 + $0x1440] sm:%s2263]
                  %2597 = vst [vmem:[%s2271 + $0x510] sm:%s2263] %v2596
                  %v2598 = vld [vmem:[%s2270 + $0x1460] sm:%s2263]
                  %2599 = vst [vmem:[%s2271 + $0x518] sm:%s2263] %v2598
                  %v2600 = vld [vmem:[%s2270 + $0x1480] sm:%s2263]
                  %2601 = vst [vmem:[%s2271 + $0x520] sm:%s2263] %v2600
                  %v2602 = vld [vmem:[%s2270 + $0x14a0] sm:%s2263]
                  %2603 = vst [vmem:[%s2271 + $0x528] sm:%s2263] %v2602
                  %v2604 = vld [vmem:[%s2270 + $0x14c0] sm:%s2263]
                  %2605 = vst [vmem:[%s2271 + $0x530] sm:%s2263] %v2604
                  %v2606 = vld [vmem:[%s2270 + $0x14e0] sm:%s2263]
                  %2607 = vst [vmem:[%s2271 + $0x538] sm:%s2263] %v2606
                  %v2608 = vld [vmem:[%s2270 + $0x1500] sm:%s2263]
                  %2609 = vst [vmem:[%s2271 + $0x540] sm:%s2263] %v2608
                  %v2610 = vld [vmem:[%s2270 + $0x1520] sm:%s2263]
                  %2611 = vst [vmem:[%s2271 + $0x548] sm:%s2263] %v2610
                  %v2612 = vld [vmem:[%s2270 + $0x1540] sm:%s2263]
                  %2613 = vst [vmem:[%s2271 + $0x550] sm:%s2263] %v2612
                  %v2614 = vld [vmem:[%s2270 + $0x1560] sm:%s2263]
                  %2615 = vst [vmem:[%s2271 + $0x558] sm:%s2263] %v2614
                  %v2616 = vld [vmem:[%s2270 + $0x1580] sm:%s2263]
                  %2617 = vst [vmem:[%s2271 + $0x560] sm:%s2263] %v2616
                  %v2618 = vld [vmem:[%s2270 + $0x15a0] sm:%s2263]
                  %2619 = vst [vmem:[%s2271 + $0x568] sm:%s2263] %v2618
                  %v2620 = vld [vmem:[%s2270 + $0x15c0] sm:%s2263]
                  %2621 = vst [vmem:[%s2271 + $0x570] sm:%s2263] %v2620
                  %v2622 = vld [vmem:[%s2270 + $0x15e0] sm:%s2263]
                  %2623 = vst [vmem:[%s2271 + $0x578] sm:%s2263] %v2622
                  %v2624 = vld [vmem:[%s2270 + $0x1600] sm:%s2263]
                  %2625 = vst [vmem:[%s2271 + $0x580] sm:%s2263] %v2624
                  %v2626 = vld [vmem:[%s2270 + $0x1620] sm:%s2263]
                  %2627 = vst [vmem:[%s2271 + $0x588] sm:%s2263] %v2626
                  %v2628 = vld [vmem:[%s2270 + $0x1640] sm:%s2263]
                  %2629 = vst [vmem:[%s2271 + $0x590] sm:%s2263] %v2628
                  %v2630 = vld [vmem:[%s2270 + $0x1660] sm:%s2263]
                  %2631 = vst [vmem:[%s2271 + $0x598] sm:%s2263] %v2630
                  %v2632 = vld [vmem:[%s2270 + $0x1680] sm:%s2263]
                  %2633 = vst [vmem:[%s2271 + $0x5a0] sm:%s2263] %v2632
                  %v2634 = vld [vmem:[%s2270 + $0x16a0] sm:%s2263]
                  %2635 = vst [vmem:[%s2271 + $0x5a8] sm:%s2263] %v2634
                  %v2636 = vld [vmem:[%s2270 + $0x16c0] sm:%s2263]
                  %2637 = vst [vmem:[%s2271 + $0x5b0] sm:%s2263] %v2636
                  %v2638 = vld [vmem:[%s2270 + $0x16e0] sm:%s2263]
                  %2639 = vst [vmem:[%s2271 + $0x5b8] sm:%s2263] %v2638
                  %v2640 = vld [vmem:[%s2270 + $0x1700] sm:%s2263]
                  %2641 = vst [vmem:[%s2271 + $0x5c0] sm:%s2263] %v2640
                  %v2642 = vld [vmem:[%s2270 + $0x1720] sm:%s2263]
                  %2643 = vst [vmem:[%s2271 + $0x5c8] sm:%s2263] %v2642
                  %v2644 = vld [vmem:[%s2270 + $0x1740] sm:%s2263]
                  %2645 = vst [vmem:[%s2271 + $0x5d0] sm:%s2263] %v2644
                  %v2646 = vld [vmem:[%s2270 + $0x1760] sm:%s2263]
                  %2647 = vst [vmem:[%s2271 + $0x5d8] sm:%s2263] %v2646
                  %v2648 = vld [vmem:[%s2270 + $0x1780] sm:%s2263]
                  %2649 = vst [vmem:[%s2271 + $0x5e0] sm:%s2263] %v2648
                  %v2650 = vld [vmem:[%s2270 + $0x17a0] sm:%s2263]
                  %2651 = vst [vmem:[%s2271 + $0x5e8] sm:%s2263] %v2650
                  %v2652 = vld [vmem:[%s2270 + $0x17c0] sm:%s2263]
                  %2653 = vst [vmem:[%s2271 + $0x5f0] sm:%s2263] %v2652
                  %v2654 = vld [vmem:[%s2270 + $0x17e0] sm:%s2263]
                  %2655 = vst [vmem:[%s2271 + $0x5f8] sm:%s2263] %v2654
                  %v2656 = vld [vmem:[%s2270 + $0x1800] sm:%s2263]
                  %2657 = vst [vmem:[%s2271 + $0x600] sm:%s2263] %v2656
                  %v2658 = vld [vmem:[%s2270 + $0x1820] sm:%s2263]
                  %2659 = vst [vmem:[%s2271 + $0x608] sm:%s2263] %v2658
                  %v2660 = vld [vmem:[%s2270 + $0x1840] sm:%s2263]
                  %2661 = vst [vmem:[%s2271 + $0x610] sm:%s2263] %v2660
                  %v2662 = vld [vmem:[%s2270 + $0x1860] sm:%s2263]
                  %2663 = vst [vmem:[%s2271 + $0x618] sm:%s2263] %v2662
                  %v2664 = vld [vmem:[%s2270 + $0x1880] sm:%s2263]
                  %2665 = vst [vmem:[%s2271 + $0x620] sm:%s2263] %v2664
                  %v2666 = vld [vmem:[%s2270 + $0x18a0] sm:%s2263]
                  %2667 = vst [vmem:[%s2271 + $0x628] sm:%s2263] %v2666
                  %v2668 = vld [vmem:[%s2270 + $0x18c0] sm:%s2263]
                  %2669 = vst [vmem:[%s2271 + $0x630] sm:%s2263] %v2668
                  %v2670 = vld [vmem:[%s2270 + $0x18e0] sm:%s2263]
                  %2671 = vst [vmem:[%s2271 + $0x638] sm:%s2263] %v2670
                  %v2672 = vld [vmem:[%s2270 + $0x1900] sm:%s2263]
                  %2673 = vst [vmem:[%s2271 + $0x640] sm:%s2263] %v2672
                  %v2674 = vld [vmem:[%s2270 + $0x1920] sm:%s2263]
                  %2675 = vst [vmem:[%s2271 + $0x648] sm:%s2263] %v2674
                  %v2676 = vld [vmem:[%s2270 + $0x1940] sm:%s2263]
                  %2677 = vst [vmem:[%s2271 + $0x650] sm:%s2263] %v2676
                  %v2678 = vld [vmem:[%s2270 + $0x1960] sm:%s2263]
                  %2679 = vst [vmem:[%s2271 + $0x658] sm:%s2263] %v2678
                  %v2680 = vld [vmem:[%s2270 + $0x1980] sm:%s2263]
                  %2681 = vst [vmem:[%s2271 + $0x660] sm:%s2263] %v2680
                  %v2682 = vld [vmem:[%s2270 + $0x19a0] sm:%s2263]
                  %2683 = vst [vmem:[%s2271 + $0x668] sm:%s2263] %v2682
                  %v2684 = vld [vmem:[%s2270 + $0x19c0] sm:%s2263]
                  %2685 = vst [vmem:[%s2271 + $0x670] sm:%s2263] %v2684
                  %v2686 = vld [vmem:[%s2270 + $0x19e0] sm:%s2263]
                  %2687 = vst [vmem:[%s2271 + $0x678] sm:%s2263] %v2686
                  %v2688 = vld [vmem:[%s2270 + $0x1a00] sm:%s2263]
                  %2689 = vst [vmem:[%s2271 + $0x680] sm:%s2263] %v2688
                  %v2690 = vld [vmem:[%s2270 + $0x1a20] sm:%s2263]
                  %2691 = vst [vmem:[%s2271 + $0x688] sm:%s2263] %v2690
                  %v2692 = vld [vmem:[%s2270 + $0x1a40] sm:%s2263]
                  %2693 = vst [vmem:[%s2271 + $0x690] sm:%s2263] %v2692
                  %v2694 = vld [vmem:[%s2270 + $0x1a60] sm:%s2263]
                  %2695 = vst [vmem:[%s2271 + $0x698] sm:%s2263] %v2694
                  %v2696 = vld [vmem:[%s2270 + $0x1a80] sm:%s2263]
                  %2697 = vst [vmem:[%s2271 + $0x6a0] sm:%s2263] %v2696
                  %v2698 = vld [vmem:[%s2270 + $0x1aa0] sm:%s2263]
                  %2699 = vst [vmem:[%s2271 + $0x6a8] sm:%s2263] %v2698
                  %v2700 = vld [vmem:[%s2270 + $0x1ac0] sm:%s2263]
                  %2701 = vst [vmem:[%s2271 + $0x6b0] sm:%s2263] %v2700
                  %v2702 = vld [vmem:[%s2270 + $0x1ae0] sm:%s2263]
                  %2703 = vst [vmem:[%s2271 + $0x6b8] sm:%s2263] %v2702
                  %v2704 = vld [vmem:[%s2270 + $0x1b00] sm:%s2263]
                  %2705 = vst [vmem:[%s2271 + $0x6c0] sm:%s2263] %v2704
                  %v2706 = vld [vmem:[%s2270 + $0x1b20] sm:%s2263]
                  %2707 = vst [vmem:[%s2271 + $0x6c8] sm:%s2263] %v2706
                  %v2708 = vld [vmem:[%s2270 + $0x1b40] sm:%s2263]
                  %2709 = vst [vmem:[%s2271 + $0x6d0] sm:%s2263] %v2708
                  %v2710 = vld [vmem:[%s2270 + $0x1b60] sm:%s2263]
                  %2711 = vst [vmem:[%s2271 + $0x6d8] sm:%s2263] %v2710
                  %v2712 = vld [vmem:[%s2270 + $0x1b80] sm:%s2263]
                  %2713 = vst [vmem:[%s2271 + $0x6e0] sm:%s2263] %v2712
                  %v2714 = vld [vmem:[%s2270 + $0x1ba0] sm:%s2263]
                  %2715 = vst [vmem:[%s2271 + $0x6e8] sm:%s2263] %v2714
                  %v2716 = vld [vmem:[%s2270 + $0x1bc0] sm:%s2263]
                  %2717 = vst [vmem:[%s2271 + $0x6f0] sm:%s2263] %v2716
                  %v2718 = vld [vmem:[%s2270 + $0x1be0] sm:%s2263]
                  %2719 = vst [vmem:[%s2271 + $0x6f8] sm:%s2263] %v2718
                  %v2720 = vld [vmem:[%s2270 + $0x1c00] sm:%s2263]
                  %2721 = vst [vmem:[%s2271 + $0x700] sm:%s2263] %v2720
                  %v2722 = vld [vmem:[%s2270 + $0x1c20] sm:%s2263]
                  %2723 = vst [vmem:[%s2271 + $0x708] sm:%s2263] %v2722
                  %v2724 = vld [vmem:[%s2270 + $0x1c40] sm:%s2263]
                  %2725 = vst [vmem:[%s2271 + $0x710] sm:%s2263] %v2724
                  %v2726 = vld [vmem:[%s2270 + $0x1c60] sm:%s2263]
                  %2727 = vst [vmem:[%s2271 + $0x718] sm:%s2263] %v2726
                  %v2728 = vld [vmem:[%s2270 + $0x1c80] sm:%s2263]
                  %2729 = vst [vmem:[%s2271 + $0x720] sm:%s2263] %v2728
                  %v2730 = vld [vmem:[%s2270 + $0x1ca0] sm:%s2263]
                  %2731 = vst [vmem:[%s2271 + $0x728] sm:%s2263] %v2730
                  %v2732 = vld [vmem:[%s2270 + $0x1cc0] sm:%s2263]
                  %2733 = vst [vmem:[%s2271 + $0x730] sm:%s2263] %v2732
                  %v2734 = vld [vmem:[%s2270 + $0x1ce0] sm:%s2263]
                  %2735 = vst [vmem:[%s2271 + $0x738] sm:%s2263] %v2734
                  %v2736 = vld [vmem:[%s2270 + $0x1d00] sm:%s2263]
                  %2737 = vst [vmem:[%s2271 + $0x740] sm:%s2263] %v2736
                  %v2738 = vld [vmem:[%s2270 + $0x1d20] sm:%s2263]
                  %2739 = vst [vmem:[%s2271 + $0x748] sm:%s2263] %v2738
                  %v2740 = vld [vmem:[%s2270 + $0x1d40] sm:%s2263]
                  %2741 = vst [vmem:[%s2271 + $0x750] sm:%s2263] %v2740
                  %v2742 = vld [vmem:[%s2270 + $0x1d60] sm:%s2263]
                  %2743 = vst [vmem:[%s2271 + $0x758] sm:%s2263] %v2742
                  %v2744 = vld [vmem:[%s2270 + $0x1d80] sm:%s2263]
                  %2745 = vst [vmem:[%s2271 + $0x760] sm:%s2263] %v2744
                  %v2746 = vld [vmem:[%s2270 + $0x1da0] sm:%s2263]
                  %2747 = vst [vmem:[%s2271 + $0x768] sm:%s2263] %v2746
                  %v2748 = vld [vmem:[%s2270 + $0x1dc0] sm:%s2263]
                  %2749 = vst [vmem:[%s2271 + $0x770] sm:%s2263] %v2748
                  %v2750 = vld [vmem:[%s2270 + $0x1de0] sm:%s2263]
                  %2751 = vst [vmem:[%s2271 + $0x778] sm:%s2263] %v2750
                  %v2752 = vld [vmem:[%s2270 + $0x1e00] sm:%s2263]
                  %2753 = vst [vmem:[%s2271 + $0x780] sm:%s2263] %v2752
                  %v2754 = vld [vmem:[%s2270 + $0x1e20] sm:%s2263]
                  %2755 = vst [vmem:[%s2271 + $0x788] sm:%s2263] %v2754
                  %v2756 = vld [vmem:[%s2270 + $0x1e40] sm:%s2263]
                  %2757 = vst [vmem:[%s2271 + $0x790] sm:%s2263] %v2756
                  %v2758 = vld [vmem:[%s2270 + $0x1e60] sm:%s2263]
                  %2759 = vst [vmem:[%s2271 + $0x798] sm:%s2263] %v2758
                  %v2760 = vld [vmem:[%s2270 + $0x1e80] sm:%s2263]
                  %2761 = vst [vmem:[%s2271 + $0x7a0] sm:%s2263] %v2760
                  %v2762 = vld [vmem:[%s2270 + $0x1ea0] sm:%s2263]
                  %2763 = vst [vmem:[%s2271 + $0x7a8] sm:%s2263] %v2762
                  %v2764 = vld [vmem:[%s2270 + $0x1ec0] sm:%s2263]
                  %2765 = vst [vmem:[%s2271 + $0x7b0] sm:%s2263] %v2764
                  %v2766 = vld [vmem:[%s2270 + $0x1ee0] sm:%s2263]
                  %2767 = vst [vmem:[%s2271 + $0x7b8] sm:%s2263] %v2766
                  %v2768 = vld [vmem:[%s2270 + $0x1f00] sm:%s2263]
                  %2769 = vst [vmem:[%s2271 + $0x7c0] sm:%s2263] %v2768
                  %v2770 = vld [vmem:[%s2270 + $0x1f20] sm:%s2263]
                  %2771 = vst [vmem:[%s2271 + $0x7c8] sm:%s2263] %v2770
                  %v2772 = vld [vmem:[%s2270 + $0x1f40] sm:%s2263]
                  %2773 = vst [vmem:[%s2271 + $0x7d0] sm:%s2263] %v2772
                  %v2774 = vld [vmem:[%s2270 + $0x1f60] sm:%s2263]
                  %2775 = vst [vmem:[%s2271 + $0x7d8] sm:%s2263] %v2774
                  %v2776 = vld [vmem:[%s2270 + $0x1f80] sm:%s2263]
                  %2777 = vst [vmem:[%s2271 + $0x7e0] sm:%s2263] %v2776
                  %v2778 = vld [vmem:[%s2270 + $0x1fa0] sm:%s2263]
                  %2779 = vst [vmem:[%s2271 + $0x7e8] sm:%s2263] %v2778
                  %v2780 = vld [vmem:[%s2270 + $0x1fc0] sm:%s2263]
                  %2781 = vst [vmem:[%s2271 + $0x7f0] sm:%s2263] %v2780
                  %v2782 = vld [vmem:[%s2270 + $0x1fe0] sm:%s2263]
                  %2783 = vst [vmem:[%s2271 + $0x7f8] sm:%s2263] %v2782
                  %v2784 = vld [vmem:[%s2270 + $0x2000] sm:%s2263]
                  %2785 = vst [vmem:[%s2271 + $0x800] sm:%s2263] %v2784
                  %v2786 = vld [vmem:[%s2270 + $0x2020] sm:%s2263]
                  %2787 = vst [vmem:[%s2271 + $0x808] sm:%s2263] %v2786
                  %v2788 = vld [vmem:[%s2270 + $0x2040] sm:%s2263]
                  %2789 = vst [vmem:[%s2271 + $0x810] sm:%s2263] %v2788
                  %v2790 = vld [vmem:[%s2270 + $0x2060] sm:%s2263]
                  %2791 = vst [vmem:[%s2271 + $0x818] sm:%s2263] %v2790
                  %v2792 = vld [vmem:[%s2270 + $0x2080] sm:%s2263]
                  %2793 = vst [vmem:[%s2271 + $0x820] sm:%s2263] %v2792
                  %v2794 = vld [vmem:[%s2270 + $0x20a0] sm:%s2263]
                  %2795 = vst [vmem:[%s2271 + $0x828] sm:%s2263] %v2794
                  %v2796 = vld [vmem:[%s2270 + $0x20c0] sm:%s2263]
                  %2797 = vst [vmem:[%s2271 + $0x830] sm:%s2263] %v2796
                  %v2798 = vld [vmem:[%s2270 + $0x20e0] sm:%s2263]
                  %2799 = vst [vmem:[%s2271 + $0x838] sm:%s2263] %v2798
                  %v2800 = vld [vmem:[%s2270 + $0x2100] sm:%s2263]
                  %2801 = vst [vmem:[%s2271 + $0x840] sm:%s2263] %v2800
                  %v2802 = vld [vmem:[%s2270 + $0x2120] sm:%s2263]
                  %2803 = vst [vmem:[%s2271 + $0x848] sm:%s2263] %v2802
                  %v2804 = vld [vmem:[%s2270 + $0x2140] sm:%s2263]
                  %2805 = vst [vmem:[%s2271 + $0x850] sm:%s2263] %v2804
                  %v2806 = vld [vmem:[%s2270 + $0x2160] sm:%s2263]
                  %2807 = vst [vmem:[%s2271 + $0x858] sm:%s2263] %v2806
                  %v2808 = vld [vmem:[%s2270 + $0x2180] sm:%s2263]
                  %2809 = vst [vmem:[%s2271 + $0x860] sm:%s2263] %v2808
                  %v2810 = vld [vmem:[%s2270 + $0x21a0] sm:%s2263]
                  %2811 = vst [vmem:[%s2271 + $0x868] sm:%s2263] %v2810
                  %v2812 = vld [vmem:[%s2270 + $0x21c0] sm:%s2263]
                  %2813 = vst [vmem:[%s2271 + $0x870] sm:%s2263] %v2812
                  %v2814 = vld [vmem:[%s2270 + $0x21e0] sm:%s2263]
                  %2815 = vst [vmem:[%s2271 + $0x878] sm:%s2263] %v2814
                  %v2816 = vld [vmem:[%s2270 + $0x2200] sm:%s2263]
                  %2817 = vst [vmem:[%s2271 + $0x880] sm:%s2263] %v2816
                  %v2818 = vld [vmem:[%s2270 + $0x2220] sm:%s2263]
                  %2819 = vst [vmem:[%s2271 + $0x888] sm:%s2263] %v2818
                  %v2820 = vld [vmem:[%s2270 + $0x2240] sm:%s2263]
                  %2821 = vst [vmem:[%s2271 + $0x890] sm:%s2263] %v2820
                  %v2822 = vld [vmem:[%s2270 + $0x2260] sm:%s2263]
                  %2823 = vst [vmem:[%s2271 + $0x898] sm:%s2263] %v2822
                  %v2824 = vld [vmem:[%s2270 + $0x2280] sm:%s2263]
                  %2825 = vst [vmem:[%s2271 + $0x8a0] sm:%s2263] %v2824
                  %v2826 = vld [vmem:[%s2270 + $0x22a0] sm:%s2263]
                  %2827 = vst [vmem:[%s2271 + $0x8a8] sm:%s2263] %v2826
                  %v2828 = vld [vmem:[%s2270 + $0x22c0] sm:%s2263]
                  %2829 = vst [vmem:[%s2271 + $0x8b0] sm:%s2263] %v2828
                  %v2830 = vld [vmem:[%s2270 + $0x22e0] sm:%s2263]
                  %2831 = vst [vmem:[%s2271 + $0x8b8] sm:%s2263] %v2830
                  %v2832 = vld [vmem:[%s2270 + $0x2300] sm:%s2263]
                  %2833 = vst [vmem:[%s2271 + $0x8c0] sm:%s2263] %v2832
                  %v2834 = vld [vmem:[%s2270 + $0x2320] sm:%s2263]
                  %2835 = vst [vmem:[%s2271 + $0x8c8] sm:%s2263] %v2834
                  %v2836 = vld [vmem:[%s2270 + $0x2340] sm:%s2263]
                  %2837 = vst [vmem:[%s2271 + $0x8d0] sm:%s2263] %v2836
                  %v2838 = vld [vmem:[%s2270 + $0x2360] sm:%s2263]
                  %2839 = vst [vmem:[%s2271 + $0x8d8] sm:%s2263] %v2838
                  %v2840 = vld [vmem:[%s2270 + $0x2380] sm:%s2263]
                  %2841 = vst [vmem:[%s2271 + $0x8e0] sm:%s2263] %v2840
                  %v2842 = vld [vmem:[%s2270 + $0x23a0] sm:%s2263]
                  %2843 = vst [vmem:[%s2271 + $0x8e8] sm:%s2263] %v2842
                  %v2844 = vld [vmem:[%s2270 + $0x23c0] sm:%s2263]
                  %2845 = vst [vmem:[%s2271 + $0x8f0] sm:%s2263] %v2844
                  %v2846 = vld [vmem:[%s2270 + $0x23e0] sm:%s2263]
                  %2847 = vst [vmem:[%s2271 + $0x8f8] sm:%s2263] %v2846
                  %v2848 = vld [vmem:[%s2270 + $0x2400] sm:%s2263]
                  %2849 = vst [vmem:[%s2271 + $0x900] sm:%s2263] %v2848
                  %v2850 = vld [vmem:[%s2270 + $0x2420] sm:%s2263]
                  %2851 = vst [vmem:[%s2271 + $0x908] sm:%s2263] %v2850
                  %v2852 = vld [vmem:[%s2270 + $0x2440] sm:%s2263]
                  %2853 = vst [vmem:[%s2271 + $0x910] sm:%s2263] %v2852
                  %v2854 = vld [vmem:[%s2270 + $0x2460] sm:%s2263]
                  %2855 = vst [vmem:[%s2271 + $0x918] sm:%s2263] %v2854
                  %v2856 = vld [vmem:[%s2270 + $0x2480] sm:%s2263]
                  %2857 = vst [vmem:[%s2271 + $0x920] sm:%s2263] %v2856
                  %v2858 = vld [vmem:[%s2270 + $0x24a0] sm:%s2263]
                  %2859 = vst [vmem:[%s2271 + $0x928] sm:%s2263] %v2858
                  %v2860 = vld [vmem:[%s2270 + $0x24c0] sm:%s2263]
                  %2861 = vst [vmem:[%s2271 + $0x930] sm:%s2263] %v2860
                  %v2862 = vld [vmem:[%s2270 + $0x24e0] sm:%s2263]
                  %2863 = vst [vmem:[%s2271 + $0x938] sm:%s2263] %v2862
                  %v2864 = vld [vmem:[%s2270 + $0x2500] sm:%s2263]
                  %2865 = vst [vmem:[%s2271 + $0x940] sm:%s2263] %v2864
                  %v2866 = vld [vmem:[%s2270 + $0x2520] sm:%s2263]
                  %2867 = vst [vmem:[%s2271 + $0x948] sm:%s2263] %v2866
                  %v2868 = vld [vmem:[%s2270 + $0x2540] sm:%s2263]
                  %2869 = vst [vmem:[%s2271 + $0x950] sm:%s2263] %v2868
                  %v2870 = vld [vmem:[%s2270 + $0x2560] sm:%s2263]
                  %2871 = vst [vmem:[%s2271 + $0x958] sm:%s2263] %v2870
                  %v2872 = vld [vmem:[%s2270 + $0x2580] sm:%s2263]
                  %2873 = vst [vmem:[%s2271 + $0x960] sm:%s2263] %v2872
                  %v2874 = vld [vmem:[%s2270 + $0x25a0] sm:%s2263]
                  %2875 = vst [vmem:[%s2271 + $0x968] sm:%s2263] %v2874
                  %v2876 = vld [vmem:[%s2270 + $0x25c0] sm:%s2263]
                  %2877 = vst [vmem:[%s2271 + $0x970] sm:%s2263] %v2876
                  %v2878 = vld [vmem:[%s2270 + $0x25e0] sm:%s2263]
                  %2879 = vst [vmem:[%s2271 + $0x978] sm:%s2263] %v2878
                  %v2880 = vld [vmem:[%s2270 + $0x2600] sm:%s2263]
                  %2881 = vst [vmem:[%s2271 + $0x980] sm:%s2263] %v2880
                  %v2882 = vld [vmem:[%s2270 + $0x2620] sm:%s2263]
                  %2883 = vst [vmem:[%s2271 + $0x988] sm:%s2263] %v2882
                  %v2884 = vld [vmem:[%s2270 + $0x2640] sm:%s2263]
                  %2885 = vst [vmem:[%s2271 + $0x990] sm:%s2263] %v2884
                  %v2886 = vld [vmem:[%s2270 + $0x2660] sm:%s2263]
                  %2887 = vst [vmem:[%s2271 + $0x998] sm:%s2263] %v2886
                  %v2888 = vld [vmem:[%s2270 + $0x2680] sm:%s2263]
                  %2889 = vst [vmem:[%s2271 + $0x9a0] sm:%s2263] %v2888
                  %v2890 = vld [vmem:[%s2270 + $0x26a0] sm:%s2263]
                  %2891 = vst [vmem:[%s2271 + $0x9a8] sm:%s2263] %v2890
                  %v2892 = vld [vmem:[%s2270 + $0x26c0] sm:%s2263]
                  %2893 = vst [vmem:[%s2271 + $0x9b0] sm:%s2263] %v2892
                  %v2894 = vld [vmem:[%s2270 + $0x26e0] sm:%s2263]
                  %2895 = vst [vmem:[%s2271 + $0x9b8] sm:%s2263] %v2894
                  %v2896 = vld [vmem:[%s2270 + $0x2700] sm:%s2263]
                  %2897 = vst [vmem:[%s2271 + $0x9c0] sm:%s2263] %v2896
                  %v2898 = vld [vmem:[%s2270 + $0x2720] sm:%s2263]
                  %2899 = vst [vmem:[%s2271 + $0x9c8] sm:%s2263] %v2898
                  %v2900 = vld [vmem:[%s2270 + $0x2740] sm:%s2263]
                  %2901 = vst [vmem:[%s2271 + $0x9d0] sm:%s2263] %v2900
                  %v2902 = vld [vmem:[%s2270 + $0x2760] sm:%s2263]
                  %2903 = vst [vmem:[%s2271 + $0x9d8] sm:%s2263] %v2902
                  %v2904 = vld [vmem:[%s2270 + $0x2780] sm:%s2263]
                  %2905 = vst [vmem:[%s2271 + $0x9e0] sm:%s2263] %v2904
                  %v2906 = vld [vmem:[%s2270 + $0x27a0] sm:%s2263]
                  %2907 = vst [vmem:[%s2271 + $0x9e8] sm:%s2263] %v2906
                  %v2908 = vld [vmem:[%s2270 + $0x27c0] sm:%s2263]
                  %2909 = vst [vmem:[%s2271 + $0x9f0] sm:%s2263] %v2908
                  %v2910 = vld [vmem:[%s2270 + $0x27e0] sm:%s2263]
                  %2911 = vst [vmem:[%s2271 + $0x9f8] sm:%s2263] %v2910
                $region90: #{deep_q_network_forward.1} parent=77 // loop_footer
                  %s2269 = sadd.s32 1, %s2265
                $region91: #{deep_q_network_forward.1} parent=77 // loop_footer_branch
                  %2264 = sbr.rel target = $region87
                $region92: #{deep_q_network_forward.1} parent=77 // loop_exit
                  _
              $region78: #{deep_q_network_forward.1} parent=51 // pred_fallthru
                _
            $region52: #{deep_q_network_forward.1} parent=47 // pred_fallthru
              _
            // Predicated region
            $region53: #{deep_q_network_forward.1} parent=47 // pred_check
              _
            $region54: #{deep_q_network_forward.1} parent=47 // pred_check_branch
              %293 = sbr.rel target = $region56
            $region55: #{deep_q_network_forward.1} parent=47 // pred_region
              %s295 = ssub.s32 256, 1
              loop: start=0, step=1, limit=1
              $region57: #{deep_q_network_forward.1} parent=55 // loop_pre_header
                _
              $region58: #{deep_q_network_forward.1} parent=55 // loop_header
                %s297 = sphi 0, %s301
                %p298 = scmp.ge.s32.totalorder %s297, 1
                %s302 = sphi %s287, %s287
                %s303 = sphi %s284, %s284
              $region59: #{deep_q_network_forward.1} parent=55 // loop_header_branch
                %300 = sbr.rel (%p298) target = $region63
              $region60: #{deep_q_network_forward.1} parent=55 // loop_body
                %v304 = vld [vmem:[%s302] sm:%s295]
                %305 = vst [vmem:[%s303] sm:%s295] %v304
                %v306 = vld [vmem:[%s302 + $0x20] sm:%s295]
                %307 = vst [vmem:[%s303 + $0x8] sm:%s295] %v306
                %v308 = vld [vmem:[%s302 + $0x40] sm:%s295]
                %309 = vst [vmem:[%s303 + $0x10] sm:%s295] %v308
                %v310 = vld [vmem:[%s302 + $0x60] sm:%s295]
                %311 = vst [vmem:[%s303 + $0x18] sm:%s295] %v310
                %v312 = vld [vmem:[%s302 + $0x80] sm:%s295]
                %313 = vst [vmem:[%s303 + $0x20] sm:%s295] %v312
                %v314 = vld [vmem:[%s302 + $0xa0] sm:%s295]
                %315 = vst [vmem:[%s303 + $0x28] sm:%s295] %v314
                %v316 = vld [vmem:[%s302 + $0xc0] sm:%s295]
                %317 = vst [vmem:[%s303 + $0x30] sm:%s295] %v316
                %v318 = vld [vmem:[%s302 + $0xe0] sm:%s295]
                %319 = vst [vmem:[%s303 + $0x38] sm:%s295] %v318
                %v320 = vld [vmem:[%s302 + $0x100] sm:%s295]
                %321 = vst [vmem:[%s303 + $0x40] sm:%s295] %v320
                %v322 = vld [vmem:[%s302 + $0x120] sm:%s295]
                %323 = vst [vmem:[%s303 + $0x48] sm:%s295] %v322
                %v324 = vld [vmem:[%s302 + $0x140] sm:%s295]
                %325 = vst [vmem:[%s303 + $0x50] sm:%s295] %v324
                %v326 = vld [vmem:[%s302 + $0x160] sm:%s295]
                %327 = vst [vmem:[%s303 + $0x58] sm:%s295] %v326
                %v328 = vld [vmem:[%s302 + $0x180] sm:%s295]
                %329 = vst [vmem:[%s303 + $0x60] sm:%s295] %v328
                %v330 = vld [vmem:[%s302 + $0x1a0] sm:%s295]
                %331 = vst [vmem:[%s303 + $0x68] sm:%s295] %v330
                %v332 = vld [vmem:[%s302 + $0x1c0] sm:%s295]
                %333 = vst [vmem:[%s303 + $0x70] sm:%s295] %v332
                %v334 = vld [vmem:[%s302 + $0x1e0] sm:%s295]
                %335 = vst [vmem:[%s303 + $0x78] sm:%s295] %v334
                %v336 = vld [vmem:[%s302 + $0x200] sm:%s295]
                %337 = vst [vmem:[%s303 + $0x80] sm:%s295] %v336
                %v338 = vld [vmem:[%s302 + $0x220] sm:%s295]
                %339 = vst [vmem:[%s303 + $0x88] sm:%s295] %v338
                %v340 = vld [vmem:[%s302 + $0x240] sm:%s295]
                %341 = vst [vmem:[%s303 + $0x90] sm:%s295] %v340
                %v342 = vld [vmem:[%s302 + $0x260] sm:%s295]
                %343 = vst [vmem:[%s303 + $0x98] sm:%s295] %v342
                %v344 = vld [vmem:[%s302 + $0x280] sm:%s295]
                %345 = vst [vmem:[%s303 + $0xa0] sm:%s295] %v344
                %v346 = vld [vmem:[%s302 + $0x2a0] sm:%s295]
                %347 = vst [vmem:[%s303 + $0xa8] sm:%s295] %v346
                %v348 = vld [vmem:[%s302 + $0x2c0] sm:%s295]
                %349 = vst [vmem:[%s303 + $0xb0] sm:%s295] %v348
                %v350 = vld [vmem:[%s302 + $0x2e0] sm:%s295]
                %351 = vst [vmem:[%s303 + $0xb8] sm:%s295] %v350
                %v352 = vld [vmem:[%s302 + $0x300] sm:%s295]
                %353 = vst [vmem:[%s303 + $0xc0] sm:%s295] %v352
                %v354 = vld [vmem:[%s302 + $0x320] sm:%s295]
                %355 = vst [vmem:[%s303 + $0xc8] sm:%s295] %v354
                %v356 = vld [vmem:[%s302 + $0x340] sm:%s295]
                %357 = vst [vmem:[%s303 + $0xd0] sm:%s295] %v356
                %v358 = vld [vmem:[%s302 + $0x360] sm:%s295]
                %359 = vst [vmem:[%s303 + $0xd8] sm:%s295] %v358
                %v360 = vld [vmem:[%s302 + $0x380] sm:%s295]
                %361 = vst [vmem:[%s303 + $0xe0] sm:%s295] %v360
                %v362 = vld [vmem:[%s302 + $0x3a0] sm:%s295]
                %363 = vst [vmem:[%s303 + $0xe8] sm:%s295] %v362
                %v364 = vld [vmem:[%s302 + $0x3c0] sm:%s295]
                %365 = vst [vmem:[%s303 + $0xf0] sm:%s295] %v364
                %v366 = vld [vmem:[%s302 + $0x3e0] sm:%s295]
                %367 = vst [vmem:[%s303 + $0xf8] sm:%s295] %v366
                %v368 = vld [vmem:[%s302 + $0x400] sm:%s295]
                %369 = vst [vmem:[%s303 + $0x100] sm:%s295] %v368
                %v370 = vld [vmem:[%s302 + $0x420] sm:%s295]
                %371 = vst [vmem:[%s303 + $0x108] sm:%s295] %v370
                %v372 = vld [vmem:[%s302 + $0x440] sm:%s295]
                %373 = vst [vmem:[%s303 + $0x110] sm:%s295] %v372
                %v374 = vld [vmem:[%s302 + $0x460] sm:%s295]
                %375 = vst [vmem:[%s303 + $0x118] sm:%s295] %v374
                %v376 = vld [vmem:[%s302 + $0x480] sm:%s295]
                %377 = vst [vmem:[%s303 + $0x120] sm:%s295] %v376
                %v378 = vld [vmem:[%s302 + $0x4a0] sm:%s295]
                %379 = vst [vmem:[%s303 + $0x128] sm:%s295] %v378
                %v380 = vld [vmem:[%s302 + $0x4c0] sm:%s295]
                %381 = vst [vmem:[%s303 + $0x130] sm:%s295] %v380
                %v382 = vld [vmem:[%s302 + $0x4e0] sm:%s295]
                %383 = vst [vmem:[%s303 + $0x138] sm:%s295] %v382
                %v384 = vld [vmem:[%s302 + $0x500] sm:%s295]
                %385 = vst [vmem:[%s303 + $0x140] sm:%s295] %v384
                %v386 = vld [vmem:[%s302 + $0x520] sm:%s295]
                %387 = vst [vmem:[%s303 + $0x148] sm:%s295] %v386
                %v388 = vld [vmem:[%s302 + $0x540] sm:%s295]
                %389 = vst [vmem:[%s303 + $0x150] sm:%s295] %v388
                %v390 = vld [vmem:[%s302 + $0x560] sm:%s295]
                %391 = vst [vmem:[%s303 + $0x158] sm:%s295] %v390
                %v392 = vld [vmem:[%s302 + $0x580] sm:%s295]
                %393 = vst [vmem:[%s303 + $0x160] sm:%s295] %v392
                %v394 = vld [vmem:[%s302 + $0x5a0] sm:%s295]
                %395 = vst [vmem:[%s303 + $0x168] sm:%s295] %v394
                %v396 = vld [vmem:[%s302 + $0x5c0] sm:%s295]
                %397 = vst [vmem:[%s303 + $0x170] sm:%s295] %v396
                %v398 = vld [vmem:[%s302 + $0x5e0] sm:%s295]
                %399 = vst [vmem:[%s303 + $0x178] sm:%s295] %v398
                %v400 = vld [vmem:[%s302 + $0x600] sm:%s295]
                %401 = vst [vmem:[%s303 + $0x180] sm:%s295] %v400
                %v402 = vld [vmem:[%s302 + $0x620] sm:%s295]
                %403 = vst [vmem:[%s303 + $0x188] sm:%s295] %v402
                %v404 = vld [vmem:[%s302 + $0x640] sm:%s295]
                %405 = vst [vmem:[%s303 + $0x190] sm:%s295] %v404
                %v406 = vld [vmem:[%s302 + $0x660] sm:%s295]
                %407 = vst [vmem:[%s303 + $0x198] sm:%s295] %v406
                %v408 = vld [vmem:[%s302 + $0x680] sm:%s295]
                %409 = vst [vmem:[%s303 + $0x1a0] sm:%s295] %v408
                %v410 = vld [vmem:[%s302 + $0x6a0] sm:%s295]
                %411 = vst [vmem:[%s303 + $0x1a8] sm:%s295] %v410
                %v412 = vld [vmem:[%s302 + $0x6c0] sm:%s295]
                %413 = vst [vmem:[%s303 + $0x1b0] sm:%s295] %v412
                %v414 = vld [vmem:[%s302 + $0x6e0] sm:%s295]
                %415 = vst [vmem:[%s303 + $0x1b8] sm:%s295] %v414
                %v416 = vld [vmem:[%s302 + $0x700] sm:%s295]
                %417 = vst [vmem:[%s303 + $0x1c0] sm:%s295] %v416
                %v418 = vld [vmem:[%s302 + $0x720] sm:%s295]
                %419 = vst [vmem:[%s303 + $0x1c8] sm:%s295] %v418
                %v420 = vld [vmem:[%s302 + $0x740] sm:%s295]
                %421 = vst [vmem:[%s303 + $0x1d0] sm:%s295] %v420
                %v422 = vld [vmem:[%s302 + $0x760] sm:%s295]
                %423 = vst [vmem:[%s303 + $0x1d8] sm:%s295] %v422
                %v424 = vld [vmem:[%s302 + $0x780] sm:%s295]
                %425 = vst [vmem:[%s303 + $0x1e0] sm:%s295] %v424
                %v426 = vld [vmem:[%s302 + $0x7a0] sm:%s295]
                %427 = vst [vmem:[%s303 + $0x1e8] sm:%s295] %v426
                %v428 = vld [vmem:[%s302 + $0x7c0] sm:%s295]
                %429 = vst [vmem:[%s303 + $0x1f0] sm:%s295] %v428
                %v430 = vld [vmem:[%s302 + $0x7e0] sm:%s295]
                %431 = vst [vmem:[%s303 + $0x1f8] sm:%s295] %v430
                %v432 = vld [vmem:[%s302 + $0x800] sm:%s295]
                %433 = vst [vmem:[%s303 + $0x200] sm:%s295] %v432
                %v434 = vld [vmem:[%s302 + $0x820] sm:%s295]
                %435 = vst [vmem:[%s303 + $0x208] sm:%s295] %v434
                %v436 = vld [vmem:[%s302 + $0x840] sm:%s295]
                %437 = vst [vmem:[%s303 + $0x210] sm:%s295] %v436
                %v438 = vld [vmem:[%s302 + $0x860] sm:%s295]
                %439 = vst [vmem:[%s303 + $0x218] sm:%s295] %v438
                %v440 = vld [vmem:[%s302 + $0x880] sm:%s295]
                %441 = vst [vmem:[%s303 + $0x220] sm:%s295] %v440
                %v442 = vld [vmem:[%s302 + $0x8a0] sm:%s295]
                %443 = vst [vmem:[%s303 + $0x228] sm:%s295] %v442
                %v444 = vld [vmem:[%s302 + $0x8c0] sm:%s295]
                %445 = vst [vmem:[%s303 + $0x230] sm:%s295] %v444
                %v446 = vld [vmem:[%s302 + $0x8e0] sm:%s295]
                %447 = vst [vmem:[%s303 + $0x238] sm:%s295] %v446
                %v448 = vld [vmem:[%s302 + $0x900] sm:%s295]
                %449 = vst [vmem:[%s303 + $0x240] sm:%s295] %v448
                %v450 = vld [vmem:[%s302 + $0x920] sm:%s295]
                %451 = vst [vmem:[%s303 + $0x248] sm:%s295] %v450
                %v452 = vld [vmem:[%s302 + $0x940] sm:%s295]
                %453 = vst [vmem:[%s303 + $0x250] sm:%s295] %v452
                %v454 = vld [vmem:[%s302 + $0x960] sm:%s295]
                %455 = vst [vmem:[%s303 + $0x258] sm:%s295] %v454
                %v456 = vld [vmem:[%s302 + $0x980] sm:%s295]
                %457 = vst [vmem:[%s303 + $0x260] sm:%s295] %v456
                %v458 = vld [vmem:[%s302 + $0x9a0] sm:%s295]
                %459 = vst [vmem:[%s303 + $0x268] sm:%s295] %v458
                %v460 = vld [vmem:[%s302 + $0x9c0] sm:%s295]
                %461 = vst [vmem:[%s303 + $0x270] sm:%s295] %v460
                %v462 = vld [vmem:[%s302 + $0x9e0] sm:%s295]
                %463 = vst [vmem:[%s303 + $0x278] sm:%s295] %v462
                %v464 = vld [vmem:[%s302 + $0xa00] sm:%s295]
                %465 = vst [vmem:[%s303 + $0x280] sm:%s295] %v464
                %v466 = vld [vmem:[%s302 + $0xa20] sm:%s295]
                %467 = vst [vmem:[%s303 + $0x288] sm:%s295] %v466
                %v468 = vld [vmem:[%s302 + $0xa40] sm:%s295]
                %469 = vst [vmem:[%s303 + $0x290] sm:%s295] %v468
                %v470 = vld [vmem:[%s302 + $0xa60] sm:%s295]
                %471 = vst [vmem:[%s303 + $0x298] sm:%s295] %v470
                %v472 = vld [vmem:[%s302 + $0xa80] sm:%s295]
                %473 = vst [vmem:[%s303 + $0x2a0] sm:%s295] %v472
                %v474 = vld [vmem:[%s302 + $0xaa0] sm:%s295]
                %475 = vst [vmem:[%s303 + $0x2a8] sm:%s295] %v474
                %v476 = vld [vmem:[%s302 + $0xac0] sm:%s295]
                %477 = vst [vmem:[%s303 + $0x2b0] sm:%s295] %v476
                %v478 = vld [vmem:[%s302 + $0xae0] sm:%s295]
                %479 = vst [vmem:[%s303 + $0x2b8] sm:%s295] %v478
                %v480 = vld [vmem:[%s302 + $0xb00] sm:%s295]
                %481 = vst [vmem:[%s303 + $0x2c0] sm:%s295] %v480
                %v482 = vld [vmem:[%s302 + $0xb20] sm:%s295]
                %483 = vst [vmem:[%s303 + $0x2c8] sm:%s295] %v482
                %v484 = vld [vmem:[%s302 + $0xb40] sm:%s295]
                %485 = vst [vmem:[%s303 + $0x2d0] sm:%s295] %v484
                %v486 = vld [vmem:[%s302 + $0xb60] sm:%s295]
                %487 = vst [vmem:[%s303 + $0x2d8] sm:%s295] %v486
                %v488 = vld [vmem:[%s302 + $0xb80] sm:%s295]
                %489 = vst [vmem:[%s303 + $0x2e0] sm:%s295] %v488
                %v490 = vld [vmem:[%s302 + $0xba0] sm:%s295]
                %491 = vst [vmem:[%s303 + $0x2e8] sm:%s295] %v490
                %v492 = vld [vmem:[%s302 + $0xbc0] sm:%s295]
                %493 = vst [vmem:[%s303 + $0x2f0] sm:%s295] %v492
                %v494 = vld [vmem:[%s302 + $0xbe0] sm:%s295]
                %495 = vst [vmem:[%s303 + $0x2f8] sm:%s295] %v494
                %v496 = vld [vmem:[%s302 + $0xc00] sm:%s295]
                %497 = vst [vmem:[%s303 + $0x300] sm:%s295] %v496
                %v498 = vld [vmem:[%s302 + $0xc20] sm:%s295]
                %499 = vst [vmem:[%s303 + $0x308] sm:%s295] %v498
                %v500 = vld [vmem:[%s302 + $0xc40] sm:%s295]
                %501 = vst [vmem:[%s303 + $0x310] sm:%s295] %v500
                %v502 = vld [vmem:[%s302 + $0xc60] sm:%s295]
                %503 = vst [vmem:[%s303 + $0x318] sm:%s295] %v502
                %v504 = vld [vmem:[%s302 + $0xc80] sm:%s295]
                %505 = vst [vmem:[%s303 + $0x320] sm:%s295] %v504
                %v506 = vld [vmem:[%s302 + $0xca0] sm:%s295]
                %507 = vst [vmem:[%s303 + $0x328] sm:%s295] %v506
                %v508 = vld [vmem:[%s302 + $0xcc0] sm:%s295]
                %509 = vst [vmem:[%s303 + $0x330] sm:%s295] %v508
                %v510 = vld [vmem:[%s302 + $0xce0] sm:%s295]
                %511 = vst [vmem:[%s303 + $0x338] sm:%s295] %v510
                %v512 = vld [vmem:[%s302 + $0xd00] sm:%s295]
                %513 = vst [vmem:[%s303 + $0x340] sm:%s295] %v512
                %v514 = vld [vmem:[%s302 + $0xd20] sm:%s295]
                %515 = vst [vmem:[%s303 + $0x348] sm:%s295] %v514
                %v516 = vld [vmem:[%s302 + $0xd40] sm:%s295]
                %517 = vst [vmem:[%s303 + $0x350] sm:%s295] %v516
                %v518 = vld [vmem:[%s302 + $0xd60] sm:%s295]
                %519 = vst [vmem:[%s303 + $0x358] sm:%s295] %v518
                %v520 = vld [vmem:[%s302 + $0xd80] sm:%s295]
                %521 = vst [vmem:[%s303 + $0x360] sm:%s295] %v520
                %v522 = vld [vmem:[%s302 + $0xda0] sm:%s295]
                %523 = vst [vmem:[%s303 + $0x368] sm:%s295] %v522
                %v524 = vld [vmem:[%s302 + $0xdc0] sm:%s295]
                %525 = vst [vmem:[%s303 + $0x370] sm:%s295] %v524
                %v526 = vld [vmem:[%s302 + $0xde0] sm:%s295]
                %527 = vst [vmem:[%s303 + $0x378] sm:%s295] %v526
                %v528 = vld [vmem:[%s302 + $0xe00] sm:%s295]
                %529 = vst [vmem:[%s303 + $0x380] sm:%s295] %v528
                %v530 = vld [vmem:[%s302 + $0xe20] sm:%s295]
                %531 = vst [vmem:[%s303 + $0x388] sm:%s295] %v530
                %v532 = vld [vmem:[%s302 + $0xe40] sm:%s295]
                %533 = vst [vmem:[%s303 + $0x390] sm:%s295] %v532
                %v534 = vld [vmem:[%s302 + $0xe60] sm:%s295]
                %535 = vst [vmem:[%s303 + $0x398] sm:%s295] %v534
                %v536 = vld [vmem:[%s302 + $0xe80] sm:%s295]
                %537 = vst [vmem:[%s303 + $0x3a0] sm:%s295] %v536
                %v538 = vld [vmem:[%s302 + $0xea0] sm:%s295]
                %539 = vst [vmem:[%s303 + $0x3a8] sm:%s295] %v538
                %v540 = vld [vmem:[%s302 + $0xec0] sm:%s295]
                %541 = vst [vmem:[%s303 + $0x3b0] sm:%s295] %v540
                %v542 = vld [vmem:[%s302 + $0xee0] sm:%s295]
                %543 = vst [vmem:[%s303 + $0x3b8] sm:%s295] %v542
                %v544 = vld [vmem:[%s302 + $0xf00] sm:%s295]
                %545 = vst [vmem:[%s303 + $0x3c0] sm:%s295] %v544
                %v546 = vld [vmem:[%s302 + $0xf20] sm:%s295]
                %547 = vst [vmem:[%s303 + $0x3c8] sm:%s295] %v546
                %v548 = vld [vmem:[%s302 + $0xf40] sm:%s295]
                %549 = vst [vmem:[%s303 + $0x3d0] sm:%s295] %v548
                %v550 = vld [vmem:[%s302 + $0xf60] sm:%s295]
                %551 = vst [vmem:[%s303 + $0x3d8] sm:%s295] %v550
                %v552 = vld [vmem:[%s302 + $0xf80] sm:%s295]
                %553 = vst [vmem:[%s303 + $0x3e0] sm:%s295] %v552
                %v554 = vld [vmem:[%s302 + $0xfa0] sm:%s295]
                %555 = vst [vmem:[%s303 + $0x3e8] sm:%s295] %v554
                %v556 = vld [vmem:[%s302 + $0xfc0] sm:%s295]
                %557 = vst [vmem:[%s303 + $0x3f0] sm:%s295] %v556
                %v558 = vld [vmem:[%s302 + $0xfe0] sm:%s295]
                %559 = vst [vmem:[%s303 + $0x3f8] sm:%s295] %v558
                %v560 = vld [vmem:[%s302 + $0x1000] sm:%s295]
                %561 = vst [vmem:[%s303 + $0x400] sm:%s295] %v560
                %v562 = vld [vmem:[%s302 + $0x1020] sm:%s295]
                %563 = vst [vmem:[%s303 + $0x408] sm:%s295] %v562
                %v564 = vld [vmem:[%s302 + $0x1040] sm:%s295]
                %565 = vst [vmem:[%s303 + $0x410] sm:%s295] %v564
                %v566 = vld [vmem:[%s302 + $0x1060] sm:%s295]
                %567 = vst [vmem:[%s303 + $0x418] sm:%s295] %v566
                %v568 = vld [vmem:[%s302 + $0x1080] sm:%s295]
                %569 = vst [vmem:[%s303 + $0x420] sm:%s295] %v568
                %v570 = vld [vmem:[%s302 + $0x10a0] sm:%s295]
                %571 = vst [vmem:[%s303 + $0x428] sm:%s295] %v570
                %v572 = vld [vmem:[%s302 + $0x10c0] sm:%s295]
                %573 = vst [vmem:[%s303 + $0x430] sm:%s295] %v572
                %v574 = vld [vmem:[%s302 + $0x10e0] sm:%s295]
                %575 = vst [vmem:[%s303 + $0x438] sm:%s295] %v574
                %v576 = vld [vmem:[%s302 + $0x1100] sm:%s295]
                %577 = vst [vmem:[%s303 + $0x440] sm:%s295] %v576
                %v578 = vld [vmem:[%s302 + $0x1120] sm:%s295]
                %579 = vst [vmem:[%s303 + $0x448] sm:%s295] %v578
                %v580 = vld [vmem:[%s302 + $0x1140] sm:%s295]
                %581 = vst [vmem:[%s303 + $0x450] sm:%s295] %v580
                %v582 = vld [vmem:[%s302 + $0x1160] sm:%s295]
                %583 = vst [vmem:[%s303 + $0x458] sm:%s295] %v582
                %v584 = vld [vmem:[%s302 + $0x1180] sm:%s295]
                %585 = vst [vmem:[%s303 + $0x460] sm:%s295] %v584
                %v586 = vld [vmem:[%s302 + $0x11a0] sm:%s295]
                %587 = vst [vmem:[%s303 + $0x468] sm:%s295] %v586
                %v588 = vld [vmem:[%s302 + $0x11c0] sm:%s295]
                %589 = vst [vmem:[%s303 + $0x470] sm:%s295] %v588
                %v590 = vld [vmem:[%s302 + $0x11e0] sm:%s295]
                %591 = vst [vmem:[%s303 + $0x478] sm:%s295] %v590
                %v592 = vld [vmem:[%s302 + $0x1200] sm:%s295]
                %593 = vst [vmem:[%s303 + $0x480] sm:%s295] %v592
                %v594 = vld [vmem:[%s302 + $0x1220] sm:%s295]
                %595 = vst [vmem:[%s303 + $0x488] sm:%s295] %v594
                %v596 = vld [vmem:[%s302 + $0x1240] sm:%s295]
                %597 = vst [vmem:[%s303 + $0x490] sm:%s295] %v596
                %v598 = vld [vmem:[%s302 + $0x1260] sm:%s295]
                %599 = vst [vmem:[%s303 + $0x498] sm:%s295] %v598
                %v600 = vld [vmem:[%s302 + $0x1280] sm:%s295]
                %601 = vst [vmem:[%s303 + $0x4a0] sm:%s295] %v600
                %v602 = vld [vmem:[%s302 + $0x12a0] sm:%s295]
                %603 = vst [vmem:[%s303 + $0x4a8] sm:%s295] %v602
                %v604 = vld [vmem:[%s302 + $0x12c0] sm:%s295]
                %605 = vst [vmem:[%s303 + $0x4b0] sm:%s295] %v604
                %v606 = vld [vmem:[%s302 + $0x12e0] sm:%s295]
                %607 = vst [vmem:[%s303 + $0x4b8] sm:%s295] %v606
                %v608 = vld [vmem:[%s302 + $0x1300] sm:%s295]
                %609 = vst [vmem:[%s303 + $0x4c0] sm:%s295] %v608
                %v610 = vld [vmem:[%s302 + $0x1320] sm:%s295]
                %611 = vst [vmem:[%s303 + $0x4c8] sm:%s295] %v610
                %v612 = vld [vmem:[%s302 + $0x1340] sm:%s295]
                %613 = vst [vmem:[%s303 + $0x4d0] sm:%s295] %v612
                %v614 = vld [vmem:[%s302 + $0x1360] sm:%s295]
                %615 = vst [vmem:[%s303 + $0x4d8] sm:%s295] %v614
                %v616 = vld [vmem:[%s302 + $0x1380] sm:%s295]
                %617 = vst [vmem:[%s303 + $0x4e0] sm:%s295] %v616
                %v618 = vld [vmem:[%s302 + $0x13a0] sm:%s295]
                %619 = vst [vmem:[%s303 + $0x4e8] sm:%s295] %v618
                %v620 = vld [vmem:[%s302 + $0x13c0] sm:%s295]
                %621 = vst [vmem:[%s303 + $0x4f0] sm:%s295] %v620
                %v622 = vld [vmem:[%s302 + $0x13e0] sm:%s295]
                %623 = vst [vmem:[%s303 + $0x4f8] sm:%s295] %v622
                %v624 = vld [vmem:[%s302 + $0x1400] sm:%s295]
                %625 = vst [vmem:[%s303 + $0x500] sm:%s295] %v624
                %v626 = vld [vmem:[%s302 + $0x1420] sm:%s295]
                %627 = vst [vmem:[%s303 + $0x508] sm:%s295] %v626
                %v628 = vld [vmem:[%s302 + $0x1440] sm:%s295]
                %629 = vst [vmem:[%s303 + $0x510] sm:%s295] %v628
                %v630 = vld [vmem:[%s302 + $0x1460] sm:%s295]
                %631 = vst [vmem:[%s303 + $0x518] sm:%s295] %v630
                %v632 = vld [vmem:[%s302 + $0x1480] sm:%s295]
                %633 = vst [vmem:[%s303 + $0x520] sm:%s295] %v632
                %v634 = vld [vmem:[%s302 + $0x14a0] sm:%s295]
                %635 = vst [vmem:[%s303 + $0x528] sm:%s295] %v634
                %v636 = vld [vmem:[%s302 + $0x14c0] sm:%s295]
                %637 = vst [vmem:[%s303 + $0x530] sm:%s295] %v636
                %v638 = vld [vmem:[%s302 + $0x14e0] sm:%s295]
                %639 = vst [vmem:[%s303 + $0x538] sm:%s295] %v638
                %v640 = vld [vmem:[%s302 + $0x1500] sm:%s295]
                %641 = vst [vmem:[%s303 + $0x540] sm:%s295] %v640
                %v642 = vld [vmem:[%s302 + $0x1520] sm:%s295]
                %643 = vst [vmem:[%s303 + $0x548] sm:%s295] %v642
                %v644 = vld [vmem:[%s302 + $0x1540] sm:%s295]
                %645 = vst [vmem:[%s303 + $0x550] sm:%s295] %v644
                %v646 = vld [vmem:[%s302 + $0x1560] sm:%s295]
                %647 = vst [vmem:[%s303 + $0x558] sm:%s295] %v646
                %v648 = vld [vmem:[%s302 + $0x1580] sm:%s295]
                %649 = vst [vmem:[%s303 + $0x560] sm:%s295] %v648
                %v650 = vld [vmem:[%s302 + $0x15a0] sm:%s295]
                %651 = vst [vmem:[%s303 + $0x568] sm:%s295] %v650
                %v652 = vld [vmem:[%s302 + $0x15c0] sm:%s295]
                %653 = vst [vmem:[%s303 + $0x570] sm:%s295] %v652
                %v654 = vld [vmem:[%s302 + $0x15e0] sm:%s295]
                %655 = vst [vmem:[%s303 + $0x578] sm:%s295] %v654
                %v656 = vld [vmem:[%s302 + $0x1600] sm:%s295]
                %657 = vst [vmem:[%s303 + $0x580] sm:%s295] %v656
                %v658 = vld [vmem:[%s302 + $0x1620] sm:%s295]
                %659 = vst [vmem:[%s303 + $0x588] sm:%s295] %v658
                %v660 = vld [vmem:[%s302 + $0x1640] sm:%s295]
                %661 = vst [vmem:[%s303 + $0x590] sm:%s295] %v660
                %v662 = vld [vmem:[%s302 + $0x1660] sm:%s295]
                %663 = vst [vmem:[%s303 + $0x598] sm:%s295] %v662
                %v664 = vld [vmem:[%s302 + $0x1680] sm:%s295]
                %665 = vst [vmem:[%s303 + $0x5a0] sm:%s295] %v664
                %v666 = vld [vmem:[%s302 + $0x16a0] sm:%s295]
                %667 = vst [vmem:[%s303 + $0x5a8] sm:%s295] %v666
                %v668 = vld [vmem:[%s302 + $0x16c0] sm:%s295]
                %669 = vst [vmem:[%s303 + $0x5b0] sm:%s295] %v668
                %v670 = vld [vmem:[%s302 + $0x16e0] sm:%s295]
                %671 = vst [vmem:[%s303 + $0x5b8] sm:%s295] %v670
                %v672 = vld [vmem:[%s302 + $0x1700] sm:%s295]
                %673 = vst [vmem:[%s303 + $0x5c0] sm:%s295] %v672
                %v674 = vld [vmem:[%s302 + $0x1720] sm:%s295]
                %675 = vst [vmem:[%s303 + $0x5c8] sm:%s295] %v674
                %v676 = vld [vmem:[%s302 + $0x1740] sm:%s295]
                %677 = vst [vmem:[%s303 + $0x5d0] sm:%s295] %v676
                %v678 = vld [vmem:[%s302 + $0x1760] sm:%s295]
                %679 = vst [vmem:[%s303 + $0x5d8] sm:%s295] %v678
                %v680 = vld [vmem:[%s302 + $0x1780] sm:%s295]
                %681 = vst [vmem:[%s303 + $0x5e0] sm:%s295] %v680
                %v682 = vld [vmem:[%s302 + $0x17a0] sm:%s295]
                %683 = vst [vmem:[%s303 + $0x5e8] sm:%s295] %v682
                %v684 = vld [vmem:[%s302 + $0x17c0] sm:%s295]
                %685 = vst [vmem:[%s303 + $0x5f0] sm:%s295] %v684
                %v686 = vld [vmem:[%s302 + $0x17e0] sm:%s295]
                %687 = vst [vmem:[%s303 + $0x5f8] sm:%s295] %v686
                %v688 = vld [vmem:[%s302 + $0x1800] sm:%s295]
                %689 = vst [vmem:[%s303 + $0x600] sm:%s295] %v688
                %v690 = vld [vmem:[%s302 + $0x1820] sm:%s295]
                %691 = vst [vmem:[%s303 + $0x608] sm:%s295] %v690
                %v692 = vld [vmem:[%s302 + $0x1840] sm:%s295]
                %693 = vst [vmem:[%s303 + $0x610] sm:%s295] %v692
                %v694 = vld [vmem:[%s302 + $0x1860] sm:%s295]
                %695 = vst [vmem:[%s303 + $0x618] sm:%s295] %v694
                %v696 = vld [vmem:[%s302 + $0x1880] sm:%s295]
                %697 = vst [vmem:[%s303 + $0x620] sm:%s295] %v696
                %v698 = vld [vmem:[%s302 + $0x18a0] sm:%s295]
                %699 = vst [vmem:[%s303 + $0x628] sm:%s295] %v698
                %v700 = vld [vmem:[%s302 + $0x18c0] sm:%s295]
                %701 = vst [vmem:[%s303 + $0x630] sm:%s295] %v700
                %v702 = vld [vmem:[%s302 + $0x18e0] sm:%s295]
                %703 = vst [vmem:[%s303 + $0x638] sm:%s295] %v702
                %v704 = vld [vmem:[%s302 + $0x1900] sm:%s295]
                %705 = vst [vmem:[%s303 + $0x640] sm:%s295] %v704
                %v706 = vld [vmem:[%s302 + $0x1920] sm:%s295]
                %707 = vst [vmem:[%s303 + $0x648] sm:%s295] %v706
                %v708 = vld [vmem:[%s302 + $0x1940] sm:%s295]
                %709 = vst [vmem:[%s303 + $0x650] sm:%s295] %v708
                %v710 = vld [vmem:[%s302 + $0x1960] sm:%s295]
                %711 = vst [vmem:[%s303 + $0x658] sm:%s295] %v710
                %v712 = vld [vmem:[%s302 + $0x1980] sm:%s295]
                %713 = vst [vmem:[%s303 + $0x660] sm:%s295] %v712
                %v714 = vld [vmem:[%s302 + $0x19a0] sm:%s295]
                %715 = vst [vmem:[%s303 + $0x668] sm:%s295] %v714
                %v716 = vld [vmem:[%s302 + $0x19c0] sm:%s295]
                %717 = vst [vmem:[%s303 + $0x670] sm:%s295] %v716
                %v718 = vld [vmem:[%s302 + $0x19e0] sm:%s295]
                %719 = vst [vmem:[%s303 + $0x678] sm:%s295] %v718
                %v720 = vld [vmem:[%s302 + $0x1a00] sm:%s295]
                %721 = vst [vmem:[%s303 + $0x680] sm:%s295] %v720
                %v722 = vld [vmem:[%s302 + $0x1a20] sm:%s295]
                %723 = vst [vmem:[%s303 + $0x688] sm:%s295] %v722
                %v724 = vld [vmem:[%s302 + $0x1a40] sm:%s295]
                %725 = vst [vmem:[%s303 + $0x690] sm:%s295] %v724
                %v726 = vld [vmem:[%s302 + $0x1a60] sm:%s295]
                %727 = vst [vmem:[%s303 + $0x698] sm:%s295] %v726
                %v728 = vld [vmem:[%s302 + $0x1a80] sm:%s295]
                %729 = vst [vmem:[%s303 + $0x6a0] sm:%s295] %v728
                %v730 = vld [vmem:[%s302 + $0x1aa0] sm:%s295]
                %731 = vst [vmem:[%s303 + $0x6a8] sm:%s295] %v730
                %v732 = vld [vmem:[%s302 + $0x1ac0] sm:%s295]
                %733 = vst [vmem:[%s303 + $0x6b0] sm:%s295] %v732
                %v734 = vld [vmem:[%s302 + $0x1ae0] sm:%s295]
                %735 = vst [vmem:[%s303 + $0x6b8] sm:%s295] %v734
                %v736 = vld [vmem:[%s302 + $0x1b00] sm:%s295]
                %737 = vst [vmem:[%s303 + $0x6c0] sm:%s295] %v736
                %v738 = vld [vmem:[%s302 + $0x1b20] sm:%s295]
                %739 = vst [vmem:[%s303 + $0x6c8] sm:%s295] %v738
                %v740 = vld [vmem:[%s302 + $0x1b40] sm:%s295]
                %741 = vst [vmem:[%s303 + $0x6d0] sm:%s295] %v740
                %v742 = vld [vmem:[%s302 + $0x1b60] sm:%s295]
                %743 = vst [vmem:[%s303 + $0x6d8] sm:%s295] %v742
                %v744 = vld [vmem:[%s302 + $0x1b80] sm:%s295]
                %745 = vst [vmem:[%s303 + $0x6e0] sm:%s295] %v744
                %v746 = vld [vmem:[%s302 + $0x1ba0] sm:%s295]
                %747 = vst [vmem:[%s303 + $0x6e8] sm:%s295] %v746
                %v748 = vld [vmem:[%s302 + $0x1bc0] sm:%s295]
                %749 = vst [vmem:[%s303 + $0x6f0] sm:%s295] %v748
                %v750 = vld [vmem:[%s302 + $0x1be0] sm:%s295]
                %751 = vst [vmem:[%s303 + $0x6f8] sm:%s295] %v750
                %v752 = vld [vmem:[%s302 + $0x1c00] sm:%s295]
                %753 = vst [vmem:[%s303 + $0x700] sm:%s295] %v752
                %v754 = vld [vmem:[%s302 + $0x1c20] sm:%s295]
                %755 = vst [vmem:[%s303 + $0x708] sm:%s295] %v754
                %v756 = vld [vmem:[%s302 + $0x1c40] sm:%s295]
                %757 = vst [vmem:[%s303 + $0x710] sm:%s295] %v756
                %v758 = vld [vmem:[%s302 + $0x1c60] sm:%s295]
                %759 = vst [vmem:[%s303 + $0x718] sm:%s295] %v758
                %v760 = vld [vmem:[%s302 + $0x1c80] sm:%s295]
                %761 = vst [vmem:[%s303 + $0x720] sm:%s295] %v760
                %v762 = vld [vmem:[%s302 + $0x1ca0] sm:%s295]
                %763 = vst [vmem:[%s303 + $0x728] sm:%s295] %v762
                %v764 = vld [vmem:[%s302 + $0x1cc0] sm:%s295]
                %765 = vst [vmem:[%s303 + $0x730] sm:%s295] %v764
                %v766 = vld [vmem:[%s302 + $0x1ce0] sm:%s295]
                %767 = vst [vmem:[%s303 + $0x738] sm:%s295] %v766
                %v768 = vld [vmem:[%s302 + $0x1d00] sm:%s295]
                %769 = vst [vmem:[%s303 + $0x740] sm:%s295] %v768
                %v770 = vld [vmem:[%s302 + $0x1d20] sm:%s295]
                %771 = vst [vmem:[%s303 + $0x748] sm:%s295] %v770
                %v772 = vld [vmem:[%s302 + $0x1d40] sm:%s295]
                %773 = vst [vmem:[%s303 + $0x750] sm:%s295] %v772
                %v774 = vld [vmem:[%s302 + $0x1d60] sm:%s295]
                %775 = vst [vmem:[%s303 + $0x758] sm:%s295] %v774
                %v776 = vld [vmem:[%s302 + $0x1d80] sm:%s295]
                %777 = vst [vmem:[%s303 + $0x760] sm:%s295] %v776
                %v778 = vld [vmem:[%s302 + $0x1da0] sm:%s295]
                %779 = vst [vmem:[%s303 + $0x768] sm:%s295] %v778
                %v780 = vld [vmem:[%s302 + $0x1dc0] sm:%s295]
                %781 = vst [vmem:[%s303 + $0x770] sm:%s295] %v780
                %v782 = vld [vmem:[%s302 + $0x1de0] sm:%s295]
                %783 = vst [vmem:[%s303 + $0x778] sm:%s295] %v782
                %v784 = vld [vmem:[%s302 + $0x1e00] sm:%s295]
                %785 = vst [vmem:[%s303 + $0x780] sm:%s295] %v784
                %v786 = vld [vmem:[%s302 + $0x1e20] sm:%s295]
                %787 = vst [vmem:[%s303 + $0x788] sm:%s295] %v786
                %v788 = vld [vmem:[%s302 + $0x1e40] sm:%s295]
                %789 = vst [vmem:[%s303 + $0x790] sm:%s295] %v788
                %v790 = vld [vmem:[%s302 + $0x1e60] sm:%s295]
                %791 = vst [vmem:[%s303 + $0x798] sm:%s295] %v790
                %v792 = vld [vmem:[%s302 + $0x1e80] sm:%s295]
                %793 = vst [vmem:[%s303 + $0x7a0] sm:%s295] %v792
                %v794 = vld [vmem:[%s302 + $0x1ea0] sm:%s295]
                %795 = vst [vmem:[%s303 + $0x7a8] sm:%s295] %v794
                %v796 = vld [vmem:[%s302 + $0x1ec0] sm:%s295]
                %797 = vst [vmem:[%s303 + $0x7b0] sm:%s295] %v796
                %v798 = vld [vmem:[%s302 + $0x1ee0] sm:%s295]
                %799 = vst [vmem:[%s303 + $0x7b8] sm:%s295] %v798
                %v800 = vld [vmem:[%s302 + $0x1f00] sm:%s295]
                %801 = vst [vmem:[%s303 + $0x7c0] sm:%s295] %v800
                %v802 = vld [vmem:[%s302 + $0x1f20] sm:%s295]
                %803 = vst [vmem:[%s303 + $0x7c8] sm:%s295] %v802
                %v804 = vld [vmem:[%s302 + $0x1f40] sm:%s295]
                %805 = vst [vmem:[%s303 + $0x7d0] sm:%s295] %v804
                %v806 = vld [vmem:[%s302 + $0x1f60] sm:%s295]
                %807 = vst [vmem:[%s303 + $0x7d8] sm:%s295] %v806
                %v808 = vld [vmem:[%s302 + $0x1f80] sm:%s295]
                %809 = vst [vmem:[%s303 + $0x7e0] sm:%s295] %v808
                %v810 = vld [vmem:[%s302 + $0x1fa0] sm:%s295]
                %811 = vst [vmem:[%s303 + $0x7e8] sm:%s295] %v810
                %v812 = vld [vmem:[%s302 + $0x1fc0] sm:%s295]
                %813 = vst [vmem:[%s303 + $0x7f0] sm:%s295] %v812
                %v814 = vld [vmem:[%s302 + $0x1fe0] sm:%s295]
                %815 = vst [vmem:[%s303 + $0x7f8] sm:%s295] %v814
                %v816 = vld [vmem:[%s302 + $0x2000] sm:%s295]
                %817 = vst [vmem:[%s303 + $0x800] sm:%s295] %v816
                %v818 = vld [vmem:[%s302 + $0x2020] sm:%s295]
                %819 = vst [vmem:[%s303 + $0x808] sm:%s295] %v818
                %v820 = vld [vmem:[%s302 + $0x2040] sm:%s295]
                %821 = vst [vmem:[%s303 + $0x810] sm:%s295] %v820
                %v822 = vld [vmem:[%s302 + $0x2060] sm:%s295]
                %823 = vst [vmem:[%s303 + $0x818] sm:%s295] %v822
                %v824 = vld [vmem:[%s302 + $0x2080] sm:%s295]
                %825 = vst [vmem:[%s303 + $0x820] sm:%s295] %v824
                %v826 = vld [vmem:[%s302 + $0x20a0] sm:%s295]
                %827 = vst [vmem:[%s303 + $0x828] sm:%s295] %v826
                %v828 = vld [vmem:[%s302 + $0x20c0] sm:%s295]
                %829 = vst [vmem:[%s303 + $0x830] sm:%s295] %v828
                %v830 = vld [vmem:[%s302 + $0x20e0] sm:%s295]
                %831 = vst [vmem:[%s303 + $0x838] sm:%s295] %v830
                %v832 = vld [vmem:[%s302 + $0x2100] sm:%s295]
                %833 = vst [vmem:[%s303 + $0x840] sm:%s295] %v832
                %v834 = vld [vmem:[%s302 + $0x2120] sm:%s295]
                %835 = vst [vmem:[%s303 + $0x848] sm:%s295] %v834
                %v836 = vld [vmem:[%s302 + $0x2140] sm:%s295]
                %837 = vst [vmem:[%s303 + $0x850] sm:%s295] %v836
                %v838 = vld [vmem:[%s302 + $0x2160] sm:%s295]
                %839 = vst [vmem:[%s303 + $0x858] sm:%s295] %v838
                %v840 = vld [vmem:[%s302 + $0x2180] sm:%s295]
                %841 = vst [vmem:[%s303 + $0x860] sm:%s295] %v840
                %v842 = vld [vmem:[%s302 + $0x21a0] sm:%s295]
                %843 = vst [vmem:[%s303 + $0x868] sm:%s295] %v842
                %v844 = vld [vmem:[%s302 + $0x21c0] sm:%s295]
                %845 = vst [vmem:[%s303 + $0x870] sm:%s295] %v844
                %v846 = vld [vmem:[%s302 + $0x21e0] sm:%s295]
                %847 = vst [vmem:[%s303 + $0x878] sm:%s295] %v846
                %v848 = vld [vmem:[%s302 + $0x2200] sm:%s295]
                %849 = vst [vmem:[%s303 + $0x880] sm:%s295] %v848
                %v850 = vld [vmem:[%s302 + $0x2220] sm:%s295]
                %851 = vst [vmem:[%s303 + $0x888] sm:%s295] %v850
                %v852 = vld [vmem:[%s302 + $0x2240] sm:%s295]
                %853 = vst [vmem:[%s303 + $0x890] sm:%s295] %v852
                %v854 = vld [vmem:[%s302 + $0x2260] sm:%s295]
                %855 = vst [vmem:[%s303 + $0x898] sm:%s295] %v854
                %v856 = vld [vmem:[%s302 + $0x2280] sm:%s295]
                %857 = vst [vmem:[%s303 + $0x8a0] sm:%s295] %v856
                %v858 = vld [vmem:[%s302 + $0x22a0] sm:%s295]
                %859 = vst [vmem:[%s303 + $0x8a8] sm:%s295] %v858
                %v860 = vld [vmem:[%s302 + $0x22c0] sm:%s295]
                %861 = vst [vmem:[%s303 + $0x8b0] sm:%s295] %v860
                %v862 = vld [vmem:[%s302 + $0x22e0] sm:%s295]
                %863 = vst [vmem:[%s303 + $0x8b8] sm:%s295] %v862
                %v864 = vld [vmem:[%s302 + $0x2300] sm:%s295]
                %865 = vst [vmem:[%s303 + $0x8c0] sm:%s295] %v864
                %v866 = vld [vmem:[%s302 + $0x2320] sm:%s295]
                %867 = vst [vmem:[%s303 + $0x8c8] sm:%s295] %v866
                %v868 = vld [vmem:[%s302 + $0x2340] sm:%s295]
                %869 = vst [vmem:[%s303 + $0x8d0] sm:%s295] %v868
                %v870 = vld [vmem:[%s302 + $0x2360] sm:%s295]
                %871 = vst [vmem:[%s303 + $0x8d8] sm:%s295] %v870
                %v872 = vld [vmem:[%s302 + $0x2380] sm:%s295]
                %873 = vst [vmem:[%s303 + $0x8e0] sm:%s295] %v872
                %v874 = vld [vmem:[%s302 + $0x23a0] sm:%s295]
                %875 = vst [vmem:[%s303 + $0x8e8] sm:%s295] %v874
                %v876 = vld [vmem:[%s302 + $0x23c0] sm:%s295]
                %877 = vst [vmem:[%s303 + $0x8f0] sm:%s295] %v876
                %v878 = vld [vmem:[%s302 + $0x23e0] sm:%s295]
                %879 = vst [vmem:[%s303 + $0x8f8] sm:%s295] %v878
                %v880 = vld [vmem:[%s302 + $0x2400] sm:%s295]
                %881 = vst [vmem:[%s303 + $0x900] sm:%s295] %v880
                %v882 = vld [vmem:[%s302 + $0x2420] sm:%s295]
                %883 = vst [vmem:[%s303 + $0x908] sm:%s295] %v882
                %v884 = vld [vmem:[%s302 + $0x2440] sm:%s295]
                %885 = vst [vmem:[%s303 + $0x910] sm:%s295] %v884
                %v886 = vld [vmem:[%s302 + $0x2460] sm:%s295]
                %887 = vst [vmem:[%s303 + $0x918] sm:%s295] %v886
                %v888 = vld [vmem:[%s302 + $0x2480] sm:%s295]
                %889 = vst [vmem:[%s303 + $0x920] sm:%s295] %v888
                %v890 = vld [vmem:[%s302 + $0x24a0] sm:%s295]
                %891 = vst [vmem:[%s303 + $0x928] sm:%s295] %v890
                %v892 = vld [vmem:[%s302 + $0x24c0] sm:%s295]
                %893 = vst [vmem:[%s303 + $0x930] sm:%s295] %v892
                %v894 = vld [vmem:[%s302 + $0x24e0] sm:%s295]
                %895 = vst [vmem:[%s303 + $0x938] sm:%s295] %v894
                %v896 = vld [vmem:[%s302 + $0x2500] sm:%s295]
                %897 = vst [vmem:[%s303 + $0x940] sm:%s295] %v896
                %v898 = vld [vmem:[%s302 + $0x2520] sm:%s295]
                %899 = vst [vmem:[%s303 + $0x948] sm:%s295] %v898
                %v900 = vld [vmem:[%s302 + $0x2540] sm:%s295]
                %901 = vst [vmem:[%s303 + $0x950] sm:%s295] %v900
                %v902 = vld [vmem:[%s302 + $0x2560] sm:%s295]
                %903 = vst [vmem:[%s303 + $0x958] sm:%s295] %v902
                %v904 = vld [vmem:[%s302 + $0x2580] sm:%s295]
                %905 = vst [vmem:[%s303 + $0x960] sm:%s295] %v904
                %v906 = vld [vmem:[%s302 + $0x25a0] sm:%s295]
                %907 = vst [vmem:[%s303 + $0x968] sm:%s295] %v906
                %v908 = vld [vmem:[%s302 + $0x25c0] sm:%s295]
                %909 = vst [vmem:[%s303 + $0x970] sm:%s295] %v908
                %v910 = vld [vmem:[%s302 + $0x25e0] sm:%s295]
                %911 = vst [vmem:[%s303 + $0x978] sm:%s295] %v910
                %v912 = vld [vmem:[%s302 + $0x2600] sm:%s295]
                %913 = vst [vmem:[%s303 + $0x980] sm:%s295] %v912
                %v914 = vld [vmem:[%s302 + $0x2620] sm:%s295]
                %915 = vst [vmem:[%s303 + $0x988] sm:%s295] %v914
                %v916 = vld [vmem:[%s302 + $0x2640] sm:%s295]
                %917 = vst [vmem:[%s303 + $0x990] sm:%s295] %v916
                %v918 = vld [vmem:[%s302 + $0x2660] sm:%s295]
                %919 = vst [vmem:[%s303 + $0x998] sm:%s295] %v918
                %v920 = vld [vmem:[%s302 + $0x2680] sm:%s295]
                %921 = vst [vmem:[%s303 + $0x9a0] sm:%s295] %v920
                %v922 = vld [vmem:[%s302 + $0x26a0] sm:%s295]
                %923 = vst [vmem:[%s303 + $0x9a8] sm:%s295] %v922
                %v924 = vld [vmem:[%s302 + $0x26c0] sm:%s295]
                %925 = vst [vmem:[%s303 + $0x9b0] sm:%s295] %v924
                %v926 = vld [vmem:[%s302 + $0x26e0] sm:%s295]
                %927 = vst [vmem:[%s303 + $0x9b8] sm:%s295] %v926
                %v928 = vld [vmem:[%s302 + $0x2700] sm:%s295]
                %929 = vst [vmem:[%s303 + $0x9c0] sm:%s295] %v928
                %v930 = vld [vmem:[%s302 + $0x2720] sm:%s295]
                %931 = vst [vmem:[%s303 + $0x9c8] sm:%s295] %v930
                %v932 = vld [vmem:[%s302 + $0x2740] sm:%s295]
                %933 = vst [vmem:[%s303 + $0x9d0] sm:%s295] %v932
                %v934 = vld [vmem:[%s302 + $0x2760] sm:%s295]
                %935 = vst [vmem:[%s303 + $0x9d8] sm:%s295] %v934
                %v936 = vld [vmem:[%s302 + $0x2780] sm:%s295]
                %937 = vst [vmem:[%s303 + $0x9e0] sm:%s295] %v936
                %v938 = vld [vmem:[%s302 + $0x27a0] sm:%s295]
                %939 = vst [vmem:[%s303 + $0x9e8] sm:%s295] %v938
                %v940 = vld [vmem:[%s302 + $0x27c0] sm:%s295]
                %941 = vst [vmem:[%s303 + $0x9f0] sm:%s295] %v940
                %v942 = vld [vmem:[%s302 + $0x27e0] sm:%s295]
                %943 = vst [vmem:[%s303 + $0x9f8] sm:%s295] %v942
              $region61: #{deep_q_network_forward.1} parent=55 // loop_footer
                %s301 = sadd.s32 1, %s297
              $region62: #{deep_q_network_forward.1} parent=55 // loop_footer_branch
                %296 = sbr.rel target = $region58
              $region63: #{deep_q_network_forward.1} parent=55 // loop_exit
                _
            $region56: #{deep_q_network_forward.1} parent=47 // pred_fallthru
              _
          $region48: #{deep_q_network_forward.1} parent=43 // pred_fallthru
            _
          %2912 = vnop
        $region44: #{deep_q_network_forward.1} parent=39 // pred_fallthru
          _
        // Predicated region
        $region93: #{deep_q_network_forward.1} parent=39 // pred_check
          %p2913 = pneg %p125
        $region94: #{deep_q_network_forward.1} parent=39 // pred_check_branch
          %2915 = sbr.rel (%p2913) target = $region96
        $region95: #{deep_q_network_forward.1} parent=39 // pred_region
          %s2916 = smul.u32 2, %s16
          %p2917 = scmp.lt.s32.totalorder %s2916, 7
          %s2918 = scalar_select %p2917, %s2916, 7
          %s2919 = scalar_lea.vmem %s4, %s2918
          %s2920 = smul.u32 2, %s16
        $region96: #{deep_q_network_forward.1} parent=39 // pred_fallthru
          _
        // Predicated region
        $region97: #{deep_q_network_forward.1} parent=39 // pred_check
          %p2921 = pneg %p151
        $region98: #{deep_q_network_forward.1} parent=39 // pred_check_branch
          %2923 = sbr.rel (%p2921) target = $region100
        $region99: #{deep_q_network_forward.1} parent=39 // pred_region
          %s2924 = smul.u32 32, %s16
          %p2925 = scmp.lt.s32.totalorder %s2924, 127
          %s2926 = scalar_select %p2925, %s2924, 127
          %s2927 = smul.addr %s2926, 8
          %s2928 = smul.addr %s2927, 4
          %s2929 = scalar_lea.vmem %s5, %s2928
          %s2930 = smul.u32 32, %s16
        $region100: #{deep_q_network_forward.1} parent=39 // pred_fallthru
          _
      $region40: #{deep_q_network_forward.1} parent=5 // pred_fallthru
        _
      %p2931 = scmp.le.s32.totalorder 1, %s16
      %p2932 = scmp.lt.s32.totalorder %s16, 5
      %p2933 = pnand %p2931, %p2932
      %p2934 = pneg %p2933
      // Predicated region
      $region101: #{deep_q_network_forward.1} parent=5 // pred_check
        _
      $region102: #{deep_q_network_forward.1} parent=5 // pred_check_branch
        %2936 = sbr.rel (%p2933) target = $region104
      $region103: #{deep_q_network_forward.1} parent=5 // pred_region
        %s2937 = ssub.s32 %s16, 1
        %s2938 = sand.u32 %s92, 1
        %s2939 = sand.u32 %s92, 1
        %s2940 = smul.addr %s2939, 2560
        %s2941 = scalar_lea.vmem [#allocation4], %s2940
        // Predicated region
        $region105: #{deep_q_network_forward.1} parent=103 // pred_check
          %p2942 = pneg %p105
        $region106: #{deep_q_network_forward.1} parent=103 // pred_check_branch
          %2944 = sbr.rel (%p2942) target = $region108
        $region107: #{deep_q_network_forward.1} parent=103 // pred_region
          _
        $region108: #{deep_q_network_forward.1} parent=103 // pred_fallthru
          _
        %p2945 = pneg %p37
        %p2946 = pneg %p34
        %p2947 = pneg %p58
        %p2948 = pneg %p55
        %p2949 = pneg %p79
        %p2950 = pneg %p76
        %s2951 = sand.u32 %s92, 1
        %s2952 = sand.u32 %s92, 1
        %s2953 = smul.addr %s2952, 2560
        %s2954 = scalar_lea.vmem [#allocation4], %s2953
        %p2955 = pneg %p105
        %p2956 = pneg %p102
        %s2957 = smul.u32 2, %s21
        %p2958 = scmp.lt.s32.totalorder %s2957, 7
        %s2959 = scalar_select %p2958, %s2957, 7
        %s2960 = scalar_lea.vmem %s4, %s2959
        %p2961 = pneg %p131
        %p2962 = pneg %p128
        %s2963 = smul.u32 32, %s21
        %p2964 = scmp.lt.s32.totalorder %s2963, 127
        %s2965 = scalar_select %p2964, %s2963, 127
        %s2966 = smul.addr %s2965, 8
        %s2967 = smul.addr %s2966, 4
        %s2968 = scalar_lea.vmem %s5, %s2967
        %p2969 = pneg %p157
        %p2970 = pneg %p154
        %p2971 = pneg %p178
        %p2972 = pneg %p175
        %p2973 = pneg %p199
        %p2974 = pneg %p196
        %p2975 = pneg %p220
        %p2976 = pneg %p217
        %p2977 = pneg %p241
        %p2978 = pneg %p238
        %s2979 = smul.u32 2, %s21
        %s2980 = smul.u32 2, %s21
        %p2981 = scmp.lt.s32.totalorder %s2980, 7
        %s2982 = scalar_select %p2981, %s2980, 7
        %s2983 = scalar_lea.vmem %s4, %s2982
        %s2984 = smul.u32 2, %s21
        %s2985 = smul.u32 32, %s21
        %p2986 = scmp.lt.s32.totalorder %s2985, 127
        %s2987 = scalar_select %p2986, %s2985, 127
        %s2988 = smul.addr %s2987, 8
        %s2989 = smul.addr %s2988, 4
        %s2990 = scalar_lea.vmem %s5, %s2989
        %s2991 = smul.u32 32, %s21
        %p2993 = scmp.eq.s32.totalorder %s21, 0
        // Predicated region
        $region109: #{deep_q_network_forward.1} parent=103 // pred_check
          %p2994 = pneg %p2993
        $region110: #{deep_q_network_forward.1} parent=103 // pred_check_branch
          %2996 = sbr.rel (%p2994) target = $region112
        $region111: #{deep_q_network_forward.1} parent=103 // pred_region
          %v2997 = vld [vmem:[%s1] sm:$0xf]
          %v2998 = vld [vmem:[%s2] sm:$0xff]
          %v2999 = vld [vmem:[%s0] sm:$0xff]
          %v3000 = vld [vmem:[%s0 + $0x8] sm:$0xf]
          %v3001 = vld [vmem:[%s0 + $0xc] sm:$0xff]
          %v3002 = vld [vmem:[%s0 + $0x14] sm:$0xf]
          %v3003 = vld [vmem:[%s0 + $0x18] sm:$0xff]
          %v3004 = vld [vmem:[%s0 + $0x20] sm:$0xf]
          %v3005 = vld [vmem:[%s0 + $0x24] sm:$0xff]
          %v3006 = vld [vmem:[%s0 + $0x2c] sm:$0xf]
          %v3007 = vld [vmem:[%s0 + $0x30] sm:$0xff]
          %v3008 = vld [vmem:[%s0 + $0x38] sm:$0xf]
          %v3009 = vld [vmem:[%s0 + $0x3c] sm:$0xff]
          %v3010 = vld [vmem:[%s0 + $0x44] sm:$0xf]
          %v3011 = vld [vmem:[%s0 + $0x48] sm:$0xff]
          %v3012 = vld [vmem:[%s0 + $0x50] sm:$0xf]
          %v3013 = vld [vmem:[%s0 + $0x54] sm:$0xff]
          %v3014 = vld [vmem:[%s0 + $0x5c] sm:$0xf]
          %v3015 = vld [vmem:[%s0 + $0x60] sm:$0xff]
          %v3016 = vld [vmem:[%s0 + $0x68] sm:$0xf]
          %v3017 = vld [vmem:[%s0 + $0x6c] sm:$0x33]
          %v3018 = vld [vmem:[%s0 + $0x74] sm:$0x3]
          %3020 = vset.pattern.permute.xlu0 0
          %3021 = vperm.xlu0 %3020, %v2998
          %v3022 = vpop.permute.xlu0 %3021
          %v3044 = vunpack.c.l.b16 %v2999
          %v3045 = vunpack.c.h.b16 %v2999
          %v3046 = vunpack.c.l.b16 %v3000
          %v3047 = vunpack.c.l.b16 %v3001
          %v3048 = vunpack.c.h.b16 %v3001
          %v3049 = vunpack.c.l.b16 %v3002
          %v3050 = vunpack.c.l.b16 %v3003
          %v3051 = vunpack.c.h.b16 %v3003
          %v3052 = vunpack.c.l.b16 %v3004
          %v3053 = vunpack.c.l.b16 %v3005
          %v3054 = vunpack.c.h.b16 %v3005
          %v3055 = vunpack.c.l.b16 %v3006
          %v3056 = vunpack.c.l.b16 %v3007
          %v3057 = vunpack.c.h.b16 %v3007
          %v3058 = vunpack.c.l.b16 %v3008
          %v3059 = vunpack.c.l.b16 %v3009
          %v3060 = vunpack.c.h.b16 %v3009
          %v3061 = vunpack.c.l.b16 %v3010
          %v3062 = vunpack.c.l.b16 %v3011
          %v3063 = vunpack.c.h.b16 %v3011
          %v3064 = vunpack.c.l.b16 %v3012
          %v3065 = vunpack.c.l.b16 %v3013
          %v3066 = vunpack.c.h.b16 %v3013
          %v3067 = vunpack.c.l.b16 %v3014
          %v3068 = vunpack.c.l.b16 %v3015
          %v3069 = vunpack.c.h.b16 %v3015
          %v3070 = vunpack.c.l.b16 %v3016
          %v3071 = vunpack.c.l.b16 %v3017
          %v3072 = vunpack.c.h.b16 %v3017
          %v3073 = vunpack.c.l.b16 %v3018
          %v3074 = vpack.c.b16 %v3047, %v3044
          %v3075 = vpack.c.b16 %v3048, %v3045
          %v3076 = vpack.c.b16 %v3049, %v3046
          %v3077 = vpack.c.b16 %v3053, %v3050
          %v3078 = vpack.c.b16 %v3054, %v3051
          %v3079 = vpack.c.b16 %v3055, %v3052
          %v3080 = vpack.c.b16 %v3059, %v3056
          %v3081 = vpack.c.b16 %v3060, %v3057
          %v3082 = vpack.c.b16 %v3061, %v3058
          %v3083 = vpack.c.b16 %v3065, %v3062
          %v3084 = vpack.c.b16 %v3066, %v3063
          %v3085 = vpack.c.b16 %v3067, %v3064
          %v3086 = vpack.c.b16 %v3071, %v3068
          %v3087 = vpack.c.b16 %v3072, %v3069
          %v3088 = vpack.c.b16 %v3073, %v3070
          %vm3101 = vcmask 613376
          %v3103 = vsel %vm3101, %v2997, 0
          %vm3105 = vcmask 1044480
          %vm3106 = vcmask 1045504
          %v3107 = vsel %vm3105, 4294967295, 65535
          %v3108 = vsel %vm3106, %v3107, 0
          %v3110 = vand.u32 %v3086, %v3108
          %v3113 = vand.u32 %v3087, %v3108
          %v3116 = vand.u32 %v3088, %v3108
          %3118 = vmatpush.bf16.msra.mxu0 0
          %3119 = vmatpush.bf16.msra.mxu0 0
          %3120 = vmatpush.bf16.msra.mxu0 0
          %3121 = vmatpush.bf16.msra.mxu0 %v3110
          %3122 = vmatpush.bf16.msra.mxu0 %v3083
          %3123 = vmatpush.bf16.msra.mxu0 %v3080
          %3124 = vmatpush.bf16.msra.mxu0 %v3077
          %3125 = vmatpush.bf16.msra.mxu0 %v3074
          %3126 = vmatmul.bf16.gmra.mxu0 %v3103
          %v3127 = vpop.f32.mrf.mxu0
          %v3128 = vadd.f32 %v3022, %v3127
          %v3129 = vpop.f32.mrf.mxu0
          %3130 = vdwg.mxu0
          %3131 = vmatpush.bf16.msra.mxu0 0
          %3132 = vmatpush.bf16.msra.mxu0 0
          %3133 = vmatpush.bf16.msra.mxu0 0
          %3134 = vmatpush.bf16.msra.mxu0 %v3113
          %3135 = vmatpush.bf16.msra.mxu0 %v3084
          %3136 = vmatpush.bf16.msra.mxu0 %v3081
          %3137 = vmatpush.bf16.msra.mxu0 %v3078
          %3138 = vmatpush.bf16.msra.mxu0 %v3075
          %3139 = vmatmul.bf16.gmra.mxu0 %v3103
          %v3140 = vpop.f32.mrf.mxu0
          %v3141 = vadd.f32 %v3022, %v3140
          %v3142 = vpop.f32.mrf.mxu0
          %3143 = vdwg.mxu0
          %3144 = vmatpush.bf16.msra.mxu0 0
          %3145 = vmatpush.bf16.msra.mxu0 0
          %3146 = vmatpush.bf16.msra.mxu0 0
          %3147 = vmatpush.bf16.msra.mxu0 %v3116
          %3148 = vmatpush.bf16.msra.mxu0 %v3085
          %3149 = vmatpush.bf16.msra.mxu0 %v3082
          %3150 = vmatpush.bf16.msra.mxu0 %v3079
          %3151 = vmatpush.bf16.msra.mxu0 %v3076
          %3152 = vmatmul.bf16.gmra.mxu0 %v3103
          %v3153 = vpop.f32.mrf.mxu0
          %v3154 = vadd.f32 %v3022, %v3153
          %v3155 = vpop.f32.mrf.mxu0
          %3156 = vdwg.mxu0
          %v3157 = vmax.f32 %v3128, 0.0
          %v3158 = vmax.f32 %v3141, 0.0
          %v3159 = vmax.f32 %v3154, 0.0
          %v3160 = vpack.c.bf16 %v3158, %v3157
          %v3161 = vpack.c.bf16 %v3159, %v3159
          %s3162 = scalar_lea.vmem %s0, 120
          %v3163 = vld [vmem:[%s3162] sm:$0xff]
          %v3164 = vld [vmem:[%s3162 + $0x8] sm:$0xf]
          %v3165 = vld [vmem:[%s3162 + $0xc] sm:$0xff]
          %v3166 = vld [vmem:[%s3162 + $0x14] sm:$0xf]
          %v3167 = vld [vmem:[%s3162 + $0x18] sm:$0xff]
          %v3168 = vld [vmem:[%s3162 + $0x20] sm:$0xf]
          %v3169 = vld [vmem:[%s3162 + $0x24] sm:$0xff]
          %v3170 = vld [vmem:[%s3162 + $0x2c] sm:$0xf]
          %v3171 = vld [vmem:[%s3162 + $0x30] sm:$0xff]
          %v3172 = vld [vmem:[%s3162 + $0x38] sm:$0xf]
          %v3173 = vld [vmem:[%s3162 + $0x3c] sm:$0xff]
          %v3174 = vld [vmem:[%s3162 + $0x44] sm:$0xf]
          %v3175 = vld [vmem:[%s3162 + $0x48] sm:$0xff]
          %v3176 = vld [vmem:[%s3162 + $0x50] sm:$0xf]
          %v3177 = vld [vmem:[%s3162 + $0x54] sm:$0xff]
          %v3178 = vld [vmem:[%s3162 + $0x5c] sm:$0xf]
          %v3179 = vld [vmem:[%s3162 + $0x60] sm:$0xff]
          %v3180 = vld [vmem:[%s3162 + $0x68] sm:$0xf]
          %v3181 = vld [vmem:[%s3162 + $0x6c] sm:$0x33]
          %v3182 = vld [vmem:[%s3162 + $0x74] sm:$0x3]
          %v3203 = vunpack.c.l.b16 %v3163
          %v3204 = vunpack.c.h.b16 %v3163
          %v3205 = vunpack.c.l.b16 %v3164
          %v3206 = vunpack.c.l.b16 %v3165
          %v3207 = vunpack.c.h.b16 %v3165
          %v3208 = vunpack.c.l.b16 %v3166
          %v3209 = vunpack.c.l.b16 %v3167
          %v3210 = vunpack.c.h.b16 %v3167
          %v3211 = vunpack.c.l.b16 %v3168
          %v3212 = vunpack.c.l.b16 %v3169
          %v3213 = vunpack.c.h.b16 %v3169
          %v3214 = vunpack.c.l.b16 %v3170
          %v3215 = vunpack.c.l.b16 %v3171
          %v3216 = vunpack.c.h.b16 %v3171
          %v3217 = vunpack.c.l.b16 %v3172
          %v3218 = vunpack.c.l.b16 %v3173
          %v3219 = vunpack.c.h.b16 %v3173
          %v3220 = vunpack.c.l.b16 %v3174
          %v3221 = vunpack.c.l.b16 %v3175
          %v3222 = vunpack.c.h.b16 %v3175
          %v3223 = vunpack.c.l.b16 %v3176
          %v3224 = vunpack.c.l.b16 %v3177
          %v3225 = vunpack.c.h.b16 %v3177
          %v3226 = vunpack.c.l.b16 %v3178
          %v3227 = vunpack.c.l.b16 %v3179
          %v3228 = vunpack.c.h.b16 %v3179
          %v3229 = vunpack.c.l.b16 %v3180
          %v3230 = vunpack.c.l.b16 %v3181
          %v3231 = vunpack.c.h.b16 %v3181
          %v3232 = vunpack.c.l.b16 %v3182
          %v3233 = vpack.c.b16 %v3206, %v3203
          %v3234 = vpack.c.b16 %v3207, %v3204
          %v3235 = vpack.c.b16 %v3208, %v3205
          %v3236 = vpack.c.b16 %v3212, %v3209
          %v3237 = vpack.c.b16 %v3213, %v3210
          %v3238 = vpack.c.b16 %v3214, %v3211
          %v3239 = vpack.c.b16 %v3218, %v3215
          %v3240 = vpack.c.b16 %v3219, %v3216
          %v3241 = vpack.c.b16 %v3220, %v3217
          %v3242 = vpack.c.b16 %v3224, %v3221
          %v3243 = vpack.c.b16 %v3225, %v3222
          %v3244 = vpack.c.b16 %v3226, %v3223
          %v3245 = vpack.c.b16 %v3230, %v3227
          %v3246 = vpack.c.b16 %v3231, %v3228
          %v3247 = vpack.c.b16 %v3232, %v3229
          %v3261 = vand.u32 %v3245, %v3108
          %v3264 = vand.u32 %v3246, %v3108
          %v3267 = vand.u32 %v3247, %v3108
          %3269 = vmatpush.bf16.msra.mxu0 0
          %3270 = vmatpush.bf16.msra.mxu0 0
          %3271 = vmatpush.bf16.msra.mxu0 0
          %3272 = vmatpush.bf16.msra.mxu0 %v3261
          %3273 = vmatpush.bf16.msra.mxu0 %v3242
          %3274 = vmatpush.bf16.msra.mxu0 %v3239
          %3275 = vmatpush.bf16.msra.mxu0 %v3236
          %3276 = vmatpush.bf16.msra.mxu0 %v3233
          %3277 = vmatmul.bf16.gmra.mxu0 %v3103
          %v3278 = vpop.f32.mrf.mxu0
          %v3279 = vadd.f32 %v3022, %v3278
          %v3280 = vpop.f32.mrf.mxu0
          %3281 = vdwg.mxu0
          %3282 = vmatpush.bf16.msra.mxu0 0
          %3283 = vmatpush.bf16.msra.mxu0 0
          %3284 = vmatpush.bf16.msra.mxu0 0
          %3285 = vmatpush.bf16.msra.mxu0 %v3264
          %3286 = vmatpush.bf16.msra.mxu0 %v3243
          %3287 = vmatpush.bf16.msra.mxu0 %v3240
          %3288 = vmatpush.bf16.msra.mxu0 %v3237
          %3289 = vmatpush.bf16.msra.mxu0 %v3234
          %3290 = vmatmul.bf16.gmra.mxu0 %v3103
          %v3291 = vpop.f32.mrf.mxu0
          %v3292 = vadd.f32 %v3022, %v3291
          %v3293 = vpop.f32.mrf.mxu0
          %3294 = vdwg.mxu0
          %3295 = vmatpush.bf16.msra.mxu0 0
          %3296 = vmatpush.bf16.msra.mxu0 0
          %3297 = vmatpush.bf16.msra.mxu0 0
          %3298 = vmatpush.bf16.msra.mxu0 %v3267
          %3299 = vmatpush.bf16.msra.mxu0 %v3244
          %3300 = vmatpush.bf16.msra.mxu0 %v3241
          %3301 = vmatpush.bf16.msra.mxu0 %v3238
          %3302 = vmatpush.bf16.msra.mxu0 %v3235
          %3303 = vmatmul.bf16.gmra.mxu0 %v3103
          %v3304 = vpop.f32.mrf.mxu0
          %v3305 = vadd.f32 %v3022, %v3304
          %v3306 = vpop.f32.mrf.mxu0
          %3307 = vdwg.mxu0
          %v3308 = vmax.f32 %v3279, 0.0
          %v3309 = vmax.f32 %v3292, 0.0
          %v3310 = vmax.f32 %v3305, 0.0
          %v3311 = vpack.c.bf16 %v3309, %v3308
          %v3312 = vpack.c.bf16 %v3310, %v3310
          %v3315 = vunpack.c.l.b16 %v3160
          %v3316 = vunpack.c.h.b16 %v3160
          %v3317 = vunpack.c.l.b16 %v3161
          %v3318 = vpack.c.b16 %v3315, %v3315
          %v3319 = vpack.c.b16 %v3316, %v3316
          %v3320 = vpack.c.b16 %v3317, %v3317
          %v3326 = vunpack.c.l.b16 %v3311
          %v3327 = vunpack.c.h.b16 %v3311
          %v3328 = vunpack.c.l.b16 %v3312
          %v3329 = vpack.c.b16 %v3326, %v3326
          %v3330 = vpack.c.b16 %v3327, %v3327
          %v3331 = vpack.c.b16 %v3328, %v3328
          %v3333 = vshll.u32 %v3329, 16
          %v3336 = vshll.u32 %v3330, 16
          %v3339 = vshll.u32 %v3331, 16
          %vm3344 = vcmask 1040384
          %vm3345 = vsmask.f32 256
          %vm3346 = vmand %vm3344, %vm3345
          %v3347 = vsel %vm3346, %v3318, %v3333
          %v3348 = vsel %vm3346, %v3319, %v3336
          %v3349 = vsel %vm3346, %v3320, %v3339
          %v3352 = vrot.slane %v3348, 7
          %v3353 = vrot.slane %v3349, 6
          %vm3354 = vcmask 1040384
          %v3357 = vsel %vm3354, %v3347, %v3352
          %vm3358 = vcmask 1041408
          %v3360 = vsel %vm3358, %v3357, %v3353
          %vm3362 = vcmask 1041409
          %vm3363 = vmor %vm3362, %vm3354
          %vm3364 = vcmask 477186
          %vm3365 = vmor %vm3364, %vm3363
          %3366 = vst.msk [vmem:[#allocation2] sm:$0x7] %vm3365, %v3360
          %v3368 = vshrl.u32 %v3318, 16
          %v3371 = vshrl.u32 %v3319, 16
          %v3374 = vshrl.u32 %v3320, 16
          %v3382 = vsel %vm3346, %v3368, %v3329
          %v3383 = vsel %vm3346, %v3371, %v3330
          %v3384 = vsel %vm3346, %v3374, %v3331
          %v3387 = vrot.slane %v3383, 7
          %v3388 = vrot.slane %v3384, 6
          %v3391 = vsel %vm3354, %v3382, %v3387
          %v3393 = vsel %vm3358, %v3391, %v3388
          %s3395 = scalar_lea.vmem [#allocation2], 3
          %3396 = vst.msk [vmem:[%s3395] sm:$0x7] %vm3365, %v3393
          %v3397 = vrot.slane %v3318, 1
          %v3398 = vrot.slane %v3319, 1
          %v3399 = vrot.slane %v3320, 1
          %v3403 = vrot.slane %v3333, 1
          %v3404 = vrot.slane %v3336, 1
          %v3405 = vrot.slane %v3339, 1
          %v3409 = vsel %vm3346, %v3397, %v3403
          %v3410 = vsel %vm3346, %v3398, %v3404
          %v3411 = vsel %vm3346, %v3399, %v3405
          %v3414 = vrot.slane %v3410, 7
          %v3415 = vrot.slane %v3411, 6
          %v3418 = vsel %vm3354, %v3409, %v3414
          %v3420 = vsel %vm3358, %v3418, %v3415
          %s3422 = scalar_lea.vmem [#allocation2], 6
          %3423 = vst.msk [vmem:[%s3422] sm:$0x7] %vm3365, %v3420
          %v3424 = vrot.slane %v3368, 1
          %v3425 = vrot.slane %v3371, 1
          %v3426 = vrot.slane %v3374, 1
          %v3430 = vrot.slane %v3329, 1
          %v3431 = vrot.slane %v3330, 1
          %v3432 = vrot.slane %v3331, 1
          %v3436 = vsel %vm3346, %v3424, %v3430
          %v3437 = vsel %vm3346, %v3425, %v3431
          %v3438 = vsel %vm3346, %v3426, %v3432
          %v3441 = vrot.slane %v3437, 7
          %v3442 = vrot.slane %v3438, 6
          %v3445 = vsel %vm3354, %v3436, %v3441
          %v3447 = vsel %vm3358, %v3445, %v3442
          %s3449 = scalar_lea.vmem [#allocation2], 9
          %3450 = vst.msk [vmem:[%s3449] sm:$0x7] %vm3365, %v3447
          %v3451 = vrot.slane %v3318, 2
          %v3452 = vrot.slane %v3319, 2
          %v3453 = vrot.slane %v3320, 2
          %v3457 = vrot.slane %v3333, 2
          %v3458 = vrot.slane %v3336, 2
          %v3459 = vrot.slane %v3339, 2
          %v3463 = vsel %vm3346, %v3451, %v3457
          %v3464 = vsel %vm3346, %v3452, %v3458
          %v3465 = vsel %vm3346, %v3453, %v3459
          %v3468 = vrot.slane %v3464, 7
          %v3469 = vrot.slane %v3465, 6
          %v3472 = vsel %vm3354, %v3463, %v3468
          %v3474 = vsel %vm3358, %v3472, %v3469
          %s3476 = scalar_lea.vmem [#allocation2], 12
          %3477 = vst.msk [vmem:[%s3476] sm:$0x7] %vm3365, %v3474
          %v3478 = vrot.slane %v3368, 2
          %v3479 = vrot.slane %v3371, 2
          %v3480 = vrot.slane %v3374, 2
          %v3484 = vrot.slane %v3329, 2
          %v3485 = vrot.slane %v3330, 2
          %v3486 = vrot.slane %v3331, 2
          %v3490 = vsel %vm3346, %v3478, %v3484
          %v3491 = vsel %vm3346, %v3479, %v3485
          %v3492 = vsel %vm3346, %v3480, %v3486
          %v3495 = vrot.slane %v3491, 7
          %v3496 = vrot.slane %v3492, 6
          %v3499 = vsel %vm3354, %v3490, %v3495
          %v3501 = vsel %vm3358, %v3499, %v3496
          %s3503 = scalar_lea.vmem [#allocation2], 15
          %3504 = vst.msk [vmem:[%s3503] sm:$0x7] %vm3365, %v3501
          %v3505 = vrot.slane %v3318, 3
          %v3506 = vrot.slane %v3319, 3
          %v3507 = vrot.slane %v3320, 3
          %v3511 = vrot.slane %v3333, 3
          %v3512 = vrot.slane %v3336, 3
          %v3513 = vrot.slane %v3339, 3
          %v3517 = vsel %vm3346, %v3505, %v3511
          %v3518 = vsel %vm3346, %v3506, %v3512
          %v3519 = vsel %vm3346, %v3507, %v3513
          %v3522 = vrot.slane %v3518, 7
          %v3523 = vrot.slane %v3519, 6
          %v3526 = vsel %vm3354, %v3517, %v3522
          %v3528 = vsel %vm3358, %v3526, %v3523
          %s3530 = scalar_lea.vmem [#allocation2], 18
          %3531 = vst.msk [vmem:[%s3530] sm:$0x7] %vm3365, %v3528
          %v3532 = vrot.slane %v3368, 3
          %v3533 = vrot.slane %v3371, 3
          %v3534 = vrot.slane %v3374, 3
          %v3538 = vrot.slane %v3329, 3
          %v3539 = vrot.slane %v3330, 3
          %v3540 = vrot.slane %v3331, 3
          %v3544 = vsel %vm3346, %v3532, %v3538
          %v3545 = vsel %vm3346, %v3533, %v3539
          %v3546 = vsel %vm3346, %v3534, %v3540
          %v3549 = vrot.slane %v3545, 7
          %v3550 = vrot.slane %v3546, 6
          %v3553 = vsel %vm3354, %v3544, %v3549
          %v3555 = vsel %vm3358, %v3553, %v3550
          %s3557 = scalar_lea.vmem [#allocation2], 21
          %3558 = vst.msk [vmem:[%s3557] sm:$0x7] %vm3365, %v3555
          %3559 = vst [vmem:[#allocation3] sm:$0xff] 0.0
          %3560 = vst [vmem:[#allocation3 + $0x8] sm:$0xff] 0.0
        $region112: #{deep_q_network_forward.1} parent=103 // pred_fallthru
          _
        %v3561 = vld [vmem:[#allocation2] sm:$0x7]
        %v3562 = vld [vmem:[%s2941] sm:$0xff]
        %v3563 = vld [vmem:[%s2941 + $0x8] sm:$0xff]
        %v3564 = vld [vmem:[%s2941 + $0x10] sm:$0xff]
        %v3565 = vld [vmem:[%s2941 + $0x18] sm:$0xff]
        %v3566 = vld [vmem:[%s2941 + $0x20] sm:$0xff]
        %v3567 = vld [vmem:[%s2941 + $0x28] sm:$0xff]
        %v3568 = vld [vmem:[%s2941 + $0x30] sm:$0xff]
        %v3569 = vld [vmem:[%s2941 + $0x38] sm:$0xff]
        %v3570 = vld [vmem:[%s2941 + $0x40] sm:$0xff]
        %v3571 = vld [vmem:[%s2941 + $0x48] sm:$0xff]
        %v3572 = vld [vmem:[%s2941 + $0x50] sm:$0xff]
        %v3573 = vld [vmem:[%s2941 + $0x58] sm:$0xff]
        %v3574 = vld [vmem:[%s2941 + $0x60] sm:$0xff]
        %v3575 = vld [vmem:[%s2941 + $0x68] sm:$0xff]
        %v3576 = vld [vmem:[%s2941 + $0x70] sm:$0xff]
        %v3577 = vld [vmem:[%s2941 + $0x78] sm:$0xff]
        %v3578 = vld [vmem:[%s2941 + $0x80] sm:$0xff]
        %v3579 = vld [vmem:[%s2941 + $0x88] sm:$0xff]
        %v3580 = vld [vmem:[%s2941 + $0x90] sm:$0xff]
        %v3581 = vld [vmem:[%s2941 + $0x98] sm:$0xff]
        %v3582 = vld [vmem:[%s2941 + $0xa0] sm:$0xff]
        %v3583 = vld [vmem:[%s2941 + $0xa8] sm:$0xff]
        %v3584 = vld [vmem:[%s2941 + $0xb0] sm:$0xff]
        %v3585 = vld [vmem:[%s2941 + $0xb8] sm:$0xff]
        %v3586 = vld [vmem:[%s2941 + $0xc0] sm:$0xff]
        %v3587 = vld [vmem:[%s2941 + $0xc8] sm:$0xff]
        %v3588 = vld [vmem:[%s2941 + $0xd0] sm:$0xff]
        %v3589 = vld [vmem:[%s2941 + $0xd8] sm:$0xff]
        %v3590 = vld [vmem:[%s2941 + $0xe0] sm:$0xff]
        %v3591 = vld [vmem:[%s2941 + $0xe8] sm:$0xff]
        %v3592 = vld [vmem:[%s2941 + $0xf0] sm:$0xff]
        %v3593 = vld [vmem:[%s2941 + $0xf8] sm:$0xff]
        %v3594 = vld [vmem:[%s2941 + $0x100] sm:$0xff]
        %v3595 = vld [vmem:[%s2941 + $0x108] sm:$0xff]
        %v3596 = vld [vmem:[%s2941 + $0x110] sm:$0xff]
        %v3597 = vld [vmem:[%s2941 + $0x118] sm:$0xff]
        %v3598 = vld [vmem:[%s2941 + $0x120] sm:$0xff]
        %v3599 = vld [vmem:[%s2941 + $0x128] sm:$0xff]
        %v3600 = vld [vmem:[%s2941 + $0x130] sm:$0xff]
        %v3601 = vld [vmem:[%s2941 + $0x138] sm:$0x33]
        %s3602 = scalar_lea.vmem [#allocation2], 3
        %v3603 = vld [vmem:[%s3602] sm:$0x7]
        %s3604 = scalar_lea.vmem %s2941, 320 [#allocation4]
        %v3605 = vld [vmem:[%s3604] sm:$0xff]
        %v3606 = vld [vmem:[%s3604 + $0x8] sm:$0xff]
        %v3607 = vld [vmem:[%s3604 + $0x10] sm:$0xff]
        %v3608 = vld [vmem:[%s3604 + $0x18] sm:$0xff]
        %v3609 = vld [vmem:[%s3604 + $0x20] sm:$0xff]
        %v3610 = vld [vmem:[%s3604 + $0x28] sm:$0xff]
        %v3611 = vld [vmem:[%s3604 + $0x30] sm:$0xff]
        %v3612 = vld [vmem:[%s3604 + $0x38] sm:$0xff]
        %v3613 = vld [vmem:[%s3604 + $0x40] sm:$0xff]
        %v3614 = vld [vmem:[%s3604 + $0x48] sm:$0xff]
        %v3615 = vld [vmem:[%s3604 + $0x50] sm:$0xff]
        %v3616 = vld [vmem:[%s3604 + $0x58] sm:$0xff]
        %v3617 = vld [vmem:[%s3604 + $0x60] sm:$0xff]
        %v3618 = vld [vmem:[%s3604 + $0x68] sm:$0xff]
        %v3619 = vld [vmem:[%s3604 + $0x70] sm:$0xff]
        %v3620 = vld [vmem:[%s3604 + $0x78] sm:$0xff]
        %v3621 = vld [vmem:[%s3604 + $0x80] sm:$0xff]
        %v3622 = vld [vmem:[%s3604 + $0x88] sm:$0xff]
        %v3623 = vld [vmem:[%s3604 + $0x90] sm:$0xff]
        %v3624 = vld [vmem:[%s3604 + $0x98] sm:$0xff]
        %v3625 = vld [vmem:[%s3604 + $0xa0] sm:$0xff]
        %v3626 = vld [vmem:[%s3604 + $0xa8] sm:$0xff]
        %v3627 = vld [vmem:[%s3604 + $0xb0] sm:$0xff]
        %v3628 = vld [vmem:[%s3604 + $0xb8] sm:$0xff]
        %v3629 = vld [vmem:[%s3604 + $0xc0] sm:$0xff]
        %v3630 = vld [vmem:[%s3604 + $0xc8] sm:$0xff]
        %v3631 = vld [vmem:[%s3604 + $0xd0] sm:$0xff]
        %v3632 = vld [vmem:[%s3604 + $0xd8] sm:$0xff]
        %v3633 = vld [vmem:[%s3604 + $0xe0] sm:$0xff]
        %v3634 = vld [vmem:[%s3604 + $0xe8] sm:$0xff]
        %v3635 = vld [vmem:[%s3604 + $0xf0] sm:$0xff]
        %v3636 = vld [vmem:[%s3604 + $0xf8] sm:$0xff]
        %v3637 = vld [vmem:[%s3604 + $0x100] sm:$0xff]
        %v3638 = vld [vmem:[%s3604 + $0x108] sm:$0xff]
        %v3639 = vld [vmem:[%s3604 + $0x110] sm:$0xff]
        %v3640 = vld [vmem:[%s3604 + $0x118] sm:$0xff]
        %v3641 = vld [vmem:[%s3604 + $0x120] sm:$0xff]
        %v3642 = vld [vmem:[%s3604 + $0x128] sm:$0xff]
        %v3643 = vld [vmem:[%s3604 + $0x130] sm:$0xff]
        %v3644 = vld [vmem:[%s3604 + $0x138] sm:$0x33]
        %3646 = vst [vmem:[#allocation1] ss:$9 sm:$0xff] %v3603
        %v3647 = vld [vmem:[#allocation1] sm:$0xff]
        %v3648 = vld [vmem:[#allocation1 + $0x9] sm:$0xff]
        %v3649 = vld [vmem:[#allocation1 + $0x12] sm:$0xff]
        %v3692 = vunpack.c.l.b16 %v3605
        %v3693 = vunpack.c.h.b16 %v3605
        %v3694 = vunpack.c.l.b16 %v3606
        %v3695 = vunpack.c.h.b16 %v3606
        %v3696 = vunpack.c.l.b16 %v3607
        %v3697 = vunpack.c.h.b16 %v3607
        %v3698 = vunpack.c.l.b16 %v3608
        %v3699 = vunpack.c.h.b16 %v3608
        %v3700 = vunpack.c.l.b16 %v3609
        %v3701 = vunpack.c.h.b16 %v3609
        %v3702 = vunpack.c.l.b16 %v3610
        %v3703 = vunpack.c.h.b16 %v3610
        %v3704 = vunpack.c.l.b16 %v3611
        %v3705 = vunpack.c.h.b16 %v3611
        %v3706 = vunpack.c.l.b16 %v3612
        %v3707 = vunpack.c.h.b16 %v3612
        %v3708 = vunpack.c.l.b16 %v3613
        %v3709 = vunpack.c.h.b16 %v3613
        %v3710 = vunpack.c.l.b16 %v3614
        %v3711 = vunpack.c.h.b16 %v3614
        %v3712 = vunpack.c.l.b16 %v3615
        %v3713 = vunpack.c.h.b16 %v3615
        %v3714 = vunpack.c.l.b16 %v3616
        %v3715 = vunpack.c.h.b16 %v3616
        %v3716 = vunpack.c.l.b16 %v3617
        %v3717 = vunpack.c.h.b16 %v3617
        %v3718 = vunpack.c.l.b16 %v3618
        %v3719 = vunpack.c.h.b16 %v3618
        %v3720 = vunpack.c.l.b16 %v3619
        %v3721 = vunpack.c.h.b16 %v3619
        %v3722 = vunpack.c.l.b16 %v3620
        %v3723 = vunpack.c.h.b16 %v3620
        %v3724 = vunpack.c.l.b16 %v3621
        %v3725 = vunpack.c.h.b16 %v3621
        %v3726 = vunpack.c.l.b16 %v3622
        %v3727 = vunpack.c.h.b16 %v3622
        %v3728 = vunpack.c.l.b16 %v3623
        %v3729 = vunpack.c.h.b16 %v3623
        %v3730 = vunpack.c.l.b16 %v3624
        %v3731 = vunpack.c.h.b16 %v3624
        %v3732 = vunpack.c.l.b16 %v3625
        %v3733 = vunpack.c.h.b16 %v3625
        %v3734 = vunpack.c.l.b16 %v3626
        %v3735 = vunpack.c.h.b16 %v3626
        %v3736 = vunpack.c.l.b16 %v3627
        %v3737 = vunpack.c.h.b16 %v3627
        %v3738 = vunpack.c.l.b16 %v3628
        %v3739 = vunpack.c.h.b16 %v3628
        %v3740 = vunpack.c.l.b16 %v3629
        %v3741 = vunpack.c.h.b16 %v3629
        %v3742 = vunpack.c.l.b16 %v3630
        %v3743 = vunpack.c.h.b16 %v3630
        %v3744 = vunpack.c.l.b16 %v3631
        %v3745 = vunpack.c.h.b16 %v3631
        %v3746 = vunpack.c.l.b16 %v3632
        %v3747 = vunpack.c.h.b16 %v3632
        %v3748 = vunpack.c.l.b16 %v3633
        %v3749 = vunpack.c.h.b16 %v3633
        %v3750 = vunpack.c.l.b16 %v3634
        %v3751 = vunpack.c.h.b16 %v3634
        %v3752 = vunpack.c.l.b16 %v3635
        %v3753 = vunpack.c.h.b16 %v3635
        %v3754 = vunpack.c.l.b16 %v3636
        %v3755 = vunpack.c.h.b16 %v3636
        %v3756 = vunpack.c.l.b16 %v3637
        %v3757 = vunpack.c.h.b16 %v3637
        %v3758 = vunpack.c.l.b16 %v3638
        %v3759 = vunpack.c.h.b16 %v3638
        %v3760 = vunpack.c.l.b16 %v3639
        %v3761 = vunpack.c.h.b16 %v3639
        %v3762 = vunpack.c.l.b16 %v3640
        %v3763 = vunpack.c.h.b16 %v3640
        %v3764 = vunpack.c.l.b16 %v3641
        %v3765 = vunpack.c.h.b16 %v3641
        %v3766 = vunpack.c.l.b16 %v3642
        %v3767 = vunpack.c.h.b16 %v3642
        %v3768 = vunpack.c.l.b16 %v3643
        %v3769 = vunpack.c.h.b16 %v3643
        %v3770 = vunpack.c.l.b16 %v3644
        %v3771 = vunpack.c.h.b16 %v3644
        %v3772 = vpack.c.b16 %v3694, %v3692
        %v3773 = vpack.c.b16 %v3695, %v3693
        %v3774 = vpack.c.b16 %v3698, %v3696
        %v3775 = vpack.c.b16 %v3699, %v3697
        %v3776 = vpack.c.b16 %v3702, %v3700
        %v3777 = vpack.c.b16 %v3703, %v3701
        %v3778 = vpack.c.b16 %v3706, %v3704
        %v3779 = vpack.c.b16 %v3707, %v3705
        %v3780 = vpack.c.b16 %v3710, %v3708
        %v3781 = vpack.c.b16 %v3711, %v3709
        %v3782 = vpack.c.b16 %v3714, %v3712
        %v3783 = vpack.c.b16 %v3715, %v3713
        %v3784 = vpack.c.b16 %v3718, %v3716
        %v3785 = vpack.c.b16 %v3719, %v3717
        %v3786 = vpack.c.b16 %v3722, %v3720
        %v3787 = vpack.c.b16 %v3723, %v3721
        %v3788 = vpack.c.b16 %v3726, %v3724
        %v3789 = vpack.c.b16 %v3727, %v3725
        %v3790 = vpack.c.b16 %v3730, %v3728
        %v3791 = vpack.c.b16 %v3731, %v3729
        %v3792 = vpack.c.b16 %v3734, %v3732
        %v3793 = vpack.c.b16 %v3735, %v3733
        %v3794 = vpack.c.b16 %v3738, %v3736
        %v3795 = vpack.c.b16 %v3739, %v3737
        %v3796 = vpack.c.b16 %v3742, %v3740
        %v3797 = vpack.c.b16 %v3743, %v3741
        %v3798 = vpack.c.b16 %v3746, %v3744
        %v3799 = vpack.c.b16 %v3747, %v3745
        %v3800 = vpack.c.b16 %v3750, %v3748
        %v3801 = vpack.c.b16 %v3751, %v3749
        %v3802 = vpack.c.b16 %v3754, %v3752
        %v3803 = vpack.c.b16 %v3755, %v3753
        %v3804 = vpack.c.b16 %v3758, %v3756
        %v3805 = vpack.c.b16 %v3759, %v3757
        %v3806 = vpack.c.b16 %v3762, %v3760
        %v3807 = vpack.c.b16 %v3763, %v3761
        %v3808 = vpack.c.b16 %v3766, %v3764
        %v3809 = vpack.c.b16 %v3767, %v3765
        %v3810 = vpack.c.b16 %v3770, %v3768
        %v3811 = vpack.c.b16 %v3771, %v3769
        %vm3850 = vcmask 482304
        %v3851 = vsel %vm3850, %v3649, 0
        %vm3853 = vcmask 1044480
        %vm3854 = vcmask 1045504
        %v3855 = vsel %vm3853, 4294967295, 65535
        %v3856 = vsel %vm3854, %v3855, 0
        %v3858 = vand.u32 %v3810, %v3856
        %v3861 = vand.u32 %v3811, %v3856
        %3863 = vmatpush.bf16.msra.mxu0 %v3786
        %3864 = vmatpush.bf16.msra.mxu0 %v3784
        %3865 = vmatpush.bf16.msra.mxu0 %v3782
        %3866 = vmatpush.bf16.msra.mxu0 %v3780
        %3867 = vmatpush.bf16.msra.mxu0 %v3778
        %3868 = vmatpush.bf16.msra.mxu0 %v3776
        %3869 = vmatpush.bf16.msra.mxu0 %v3774
        %3870 = vmatpush.bf16.msra.mxu0 %v3772
        %3871 = vmatmul.bf16.gmra.mxu0 %v3647
        %v3872 = vpop.f32.mrf.mxu0
        %v3873 = vadd.f32 0.0, %v3872
        %v3874 = vpop.f32.mrf.mxu0
        %3875 = vdwg.mxu0
        %3876 = vmatpush.bf16.msra.mxu0 %v3802
        %3877 = vmatpush.bf16.msra.mxu0 %v3800
        %3878 = vmatpush.bf16.msra.mxu0 %v3798
        %3879 = vmatpush.bf16.msra.mxu0 %v3796
        %3880 = vmatpush.bf16.msra.mxu0 %v3794
        %3881 = vmatpush.bf16.msra.mxu0 %v3792
        %3882 = vmatpush.bf16.msra.mxu0 %v3790
        %3883 = vmatpush.bf16.msra.mxu0 %v3788
        %3884 = vmatmul.bf16.gmra.mxu0 %v3648
        %v3885 = vpop.f32.mrf.mxu0
        %v3886 = vadd.f32 %v3873, %v3885
        %v3887 = vpop.f32.mrf.mxu0
        %3888 = vdwg.mxu0
        %3889 = vmatpush.bf16.msra.mxu0 0
        %3890 = vmatpush.bf16.msra.mxu0 0
        %3891 = vmatpush.bf16.msra.mxu0 0
        %3892 = vmatpush.bf16.msra.mxu0 0
        %3893 = vmatpush.bf16.msra.mxu0 %v3858
        %3894 = vmatpush.bf16.msra.mxu0 %v3808
        %3895 = vmatpush.bf16.msra.mxu0 %v3806
        %3896 = vmatpush.bf16.msra.mxu0 %v3804
        %3897 = vmatmul.bf16.gmra.mxu0 %v3851
        %v3898 = vpop.f32.mrf.mxu0
        %v3899 = vadd.f32 %v3886, %v3898
        %v3900 = vpop.f32.mrf.mxu0
        %3901 = vdwg.mxu0
        %3902 = vmatpush.bf16.msra.mxu0 %v3787
        %3903 = vmatpush.bf16.msra.mxu0 %v3785
        %3904 = vmatpush.bf16.msra.mxu0 %v3783
        %3905 = vmatpush.bf16.msra.mxu0 %v3781
        %3906 = vmatpush.bf16.msra.mxu0 %v3779
        %3907 = vmatpush.bf16.msra.mxu0 %v3777
        %3908 = vmatpush.bf16.msra.mxu0 %v3775
        %3909 = vmatpush.bf16.msra.mxu0 %v3773
        %3910 = vmatmul.bf16.gmra.mxu0 %v3647
        %v3911 = vpop.f32.mrf.mxu0
        %v3912 = vadd.f32 0.0, %v3911
        %v3913 = vpop.f32.mrf.mxu0
        %3914 = vdwg.mxu0
        %3915 = vmatpush.bf16.msra.mxu0 %v3803
        %3916 = vmatpush.bf16.msra.mxu0 %v3801
        %3917 = vmatpush.bf16.msra.mxu0 %v3799
        %3918 = vmatpush.bf16.msra.mxu0 %v3797
        %3919 = vmatpush.bf16.msra.mxu0 %v3795
        %3920 = vmatpush.bf16.msra.mxu0 %v3793
        %3921 = vmatpush.bf16.msra.mxu0 %v3791
        %3922 = vmatpush.bf16.msra.mxu0 %v3789
        %3923 = vmatmul.bf16.gmra.mxu0 %v3648
        %v3924 = vpop.f32.mrf.mxu0
        %v3925 = vadd.f32 %v3912, %v3924
        %v3926 = vpop.f32.mrf.mxu0
        %3927 = vdwg.mxu0
        %3928 = vmatpush.bf16.msra.mxu0 0
        %3929 = vmatpush.bf16.msra.mxu0 0
        %3930 = vmatpush.bf16.msra.mxu0 0
        %3931 = vmatpush.bf16.msra.mxu0 0
        %3932 = vmatpush.bf16.msra.mxu0 %v3861
        %3933 = vmatpush.bf16.msra.mxu0 %v3809
        %3934 = vmatpush.bf16.msra.mxu0 %v3807
        %3935 = vmatpush.bf16.msra.mxu0 %v3805
        %3936 = vmatmul.bf16.gmra.mxu0 %v3851
        %v3937 = vpop.f32.mrf.mxu0
        %v3938 = vadd.f32 %v3925, %v3937
        %v3939 = vpop.f32.mrf.mxu0
        %3940 = vdwg.mxu0
        %3942 = vst [vmem:[#allocation1] ss:$9 sm:$0xff] %v3561
        %v3943 = vld [vmem:[#allocation1] sm:$0xff]
        %v3944 = vld [vmem:[#allocation1 + $0x9] sm:$0xff]
        %v3945 = vld [vmem:[#allocation1 + $0x12] sm:$0xff]
        %v3988 = vunpack.c.l.b16 %v3562
        %v3989 = vunpack.c.h.b16 %v3562
        %v3990 = vunpack.c.l.b16 %v3563
        %v3991 = vunpack.c.h.b16 %v3563
        %v3992 = vunpack.c.l.b16 %v3564
        %v3993 = vunpack.c.h.b16 %v3564
        %v3994 = vunpack.c.l.b16 %v3565
        %v3995 = vunpack.c.h.b16 %v3565
        %v3996 = vunpack.c.l.b16 %v3566
        %v3997 = vunpack.c.h.b16 %v3566
        %v3998 = vunpack.c.l.b16 %v3567
        %v3999 = vunpack.c.h.b16 %v3567
        %v4000 = vunpack.c.l.b16 %v3568
        %v4001 = vunpack.c.h.b16 %v3568
        %v4002 = vunpack.c.l.b16 %v3569
        %v4003 = vunpack.c.h.b16 %v3569
        %v4004 = vunpack.c.l.b16 %v3570
        %v4005 = vunpack.c.h.b16 %v3570
        %v4006 = vunpack.c.l.b16 %v3571
        %v4007 = vunpack.c.h.b16 %v3571
        %v4008 = vunpack.c.l.b16 %v3572
        %v4009 = vunpack.c.h.b16 %v3572
        %v4010 = vunpack.c.l.b16 %v3573
        %v4011 = vunpack.c.h.b16 %v3573
        %v4012 = vunpack.c.l.b16 %v3574
        %v4013 = vunpack.c.h.b16 %v3574
        %v4014 = vunpack.c.l.b16 %v3575
        %v4015 = vunpack.c.h.b16 %v3575
        %v4016 = vunpack.c.l.b16 %v3576
        %v4017 = vunpack.c.h.b16 %v3576
        %v4018 = vunpack.c.l.b16 %v3577
        %v4019 = vunpack.c.h.b16 %v3577
        %v4020 = vunpack.c.l.b16 %v3578
        %v4021 = vunpack.c.h.b16 %v3578
        %v4022 = vunpack.c.l.b16 %v3579
        %v4023 = vunpack.c.h.b16 %v3579
        %v4024 = vunpack.c.l.b16 %v3580
        %v4025 = vunpack.c.h.b16 %v3580
        %v4026 = vunpack.c.l.b16 %v3581
        %v4027 = vunpack.c.h.b16 %v3581
        %v4028 = vunpack.c.l.b16 %v3582
        %v4029 = vunpack.c.h.b16 %v3582
        %v4030 = vunpack.c.l.b16 %v3583
        %v4031 = vunpack.c.h.b16 %v3583
        %v4032 = vunpack.c.l.b16 %v3584
        %v4033 = vunpack.c.h.b16 %v3584
        %v4034 = vunpack.c.l.b16 %v3585
        %v4035 = vunpack.c.h.b16 %v3585
        %v4036 = vunpack.c.l.b16 %v3586
        %v4037 = vunpack.c.h.b16 %v3586
        %v4038 = vunpack.c.l.b16 %v3587
        %v4039 = vunpack.c.h.b16 %v3587
        %v4040 = vunpack.c.l.b16 %v3588
        %v4041 = vunpack.c.h.b16 %v3588
        %v4042 = vunpack.c.l.b16 %v3589
        %v4043 = vunpack.c.h.b16 %v3589
        %v4044 = vunpack.c.l.b16 %v3590
        %v4045 = vunpack.c.h.b16 %v3590
        %v4046 = vunpack.c.l.b16 %v3591
        %v4047 = vunpack.c.h.b16 %v3591
        %v4048 = vunpack.c.l.b16 %v3592
        %v4049 = vunpack.c.h.b16 %v3592
        %v4050 = vunpack.c.l.b16 %v3593
        %v4051 = vunpack.c.h.b16 %v3593
        %v4052 = vunpack.c.l.b16 %v3594
        %v4053 = vunpack.c.h.b16 %v3594
        %v4054 = vunpack.c.l.b16 %v3595
        %v4055 = vunpack.c.h.b16 %v3595
        %v4056 = vunpack.c.l.b16 %v3596
        %v4057 = vunpack.c.h.b16 %v3596
        %v4058 = vunpack.c.l.b16 %v3597
        %v4059 = vunpack.c.h.b16 %v3597
        %v4060 = vunpack.c.l.b16 %v3598
        %v4061 = vunpack.c.h.b16 %v3598
        %v4062 = vunpack.c.l.b16 %v3599
        %v4063 = vunpack.c.h.b16 %v3599
        %v4064 = vunpack.c.l.b16 %v3600
        %v4065 = vunpack.c.h.b16 %v3600
        %v4066 = vunpack.c.l.b16 %v3601
        %v4067 = vunpack.c.h.b16 %v3601
        %v4068 = vpack.c.b16 %v3990, %v3988
        %v4069 = vpack.c.b16 %v3991, %v3989
        %v4070 = vpack.c.b16 %v3994, %v3992
        %v4071 = vpack.c.b16 %v3995, %v3993
        %v4072 = vpack.c.b16 %v3998, %v3996
        %v4073 = vpack.c.b16 %v3999, %v3997
        %v4074 = vpack.c.b16 %v4002, %v4000
        %v4075 = vpack.c.b16 %v4003, %v4001
        %v4076 = vpack.c.b16 %v4006, %v4004
        %v4077 = vpack.c.b16 %v4007, %v4005
        %v4078 = vpack.c.b16 %v4010, %v4008
        %v4079 = vpack.c.b16 %v4011, %v4009
        %v4080 = vpack.c.b16 %v4014, %v4012
        %v4081 = vpack.c.b16 %v4015, %v4013
        %v4082 = vpack.c.b16 %v4018, %v4016
        %v4083 = vpack.c.b16 %v4019, %v4017
        %v4084 = vpack.c.b16 %v4022, %v4020
        %v4085 = vpack.c.b16 %v4023, %v4021
        %v4086 = vpack.c.b16 %v4026, %v4024
        %v4087 = vpack.c.b16 %v4027, %v4025
        %v4088 = vpack.c.b16 %v4030, %v4028
        %v4089 = vpack.c.b16 %v4031, %v4029
        %v4090 = vpack.c.b16 %v4034, %v4032
        %v4091 = vpack.c.b16 %v4035, %v4033
        %v4092 = vpack.c.b16 %v4038, %v4036
        %v4093 = vpack.c.b16 %v4039, %v4037
        %v4094 = vpack.c.b16 %v4042, %v4040
        %v4095 = vpack.c.b16 %v4043, %v4041
        %v4096 = vpack.c.b16 %v4046, %v4044
        %v4097 = vpack.c.b16 %v4047, %v4045
        %v4098 = vpack.c.b16 %v4050, %v4048
        %v4099 = vpack.c.b16 %v4051, %v4049
        %v4100 = vpack.c.b16 %v4054, %v4052
        %v4101 = vpack.c.b16 %v4055, %v4053
        %v4102 = vpack.c.b16 %v4058, %v4056
        %v4103 = vpack.c.b16 %v4059, %v4057
        %v4104 = vpack.c.b16 %v4062, %v4060
        %v4105 = vpack.c.b16 %v4063, %v4061
        %v4106 = vpack.c.b16 %v4066, %v4064
        %v4107 = vpack.c.b16 %v4067, %v4065
        %v4146 = vsel %vm3850, %v3945, 0
        %v4149 = vand.u32 %v4106, %v3856
        %v4152 = vand.u32 %v4107, %v3856
        %4154 = vmatpush.bf16.msra.mxu0 %v4082
        %4155 = vmatpush.bf16.msra.mxu0 %v4080
        %4156 = vmatpush.bf16.msra.mxu0 %v4078
        %4157 = vmatpush.bf16.msra.mxu0 %v4076
        %4158 = vmatpush.bf16.msra.mxu0 %v4074
        %4159 = vmatpush.bf16.msra.mxu0 %v4072
        %4160 = vmatpush.bf16.msra.mxu0 %v4070
        %4161 = vmatpush.bf16.msra.mxu0 %v4068
        %4162 = vmatmul.bf16.gmra.mxu0 %v3943
        %v4163 = vpop.f32.mrf.mxu0
        %v4164 = vadd.f32 %v3899, %v4163
        %v4165 = vpop.f32.mrf.mxu0
        %4166 = vdwg.mxu0
        %4167 = vmatpush.bf16.msra.mxu0 %v4098
        %4168 = vmatpush.bf16.msra.mxu0 %v4096
        %4169 = vmatpush.bf16.msra.mxu0 %v4094
        %4170 = vmatpush.bf16.msra.mxu0 %v4092
        %4171 = vmatpush.bf16.msra.mxu0 %v4090
        %4172 = vmatpush.bf16.msra.mxu0 %v4088
        %4173 = vmatpush.bf16.msra.mxu0 %v4086
        %4174 = vmatpush.bf16.msra.mxu0 %v4084
        %4175 = vmatmul.bf16.gmra.mxu0 %v3944
        %v4176 = vpop.f32.mrf.mxu0
        %v4177 = vadd.f32 %v4164, %v4176
        %v4178 = vpop.f32.mrf.mxu0
        %4179 = vdwg.mxu0
        %4180 = vmatpush.bf16.msra.mxu0 0
        %4181 = vmatpush.bf16.msra.mxu0 0
        %4182 = vmatpush.bf16.msra.mxu0 0
        %4183 = vmatpush.bf16.msra.mxu0 0
        %4184 = vmatpush.bf16.msra.mxu0 %v4149
        %4185 = vmatpush.bf16.msra.mxu0 %v4104
        %4186 = vmatpush.bf16.msra.mxu0 %v4102
        %4187 = vmatpush.bf16.msra.mxu0 %v4100
        %4188 = vmatmul.bf16.gmra.mxu0 %v4146
        %v4189 = vpop.f32.mrf.mxu0
        %v4190 = vadd.f32 %v4177, %v4189
        %v4191 = vpop.f32.mrf.mxu0
        %4192 = vdwg.mxu0
        %4193 = vmatpush.bf16.msra.mxu0 %v4083
        %4194 = vmatpush.bf16.msra.mxu0 %v4081
        %4195 = vmatpush.bf16.msra.mxu0 %v4079
        %4196 = vmatpush.bf16.msra.mxu0 %v4077
        %4197 = vmatpush.bf16.msra.mxu0 %v4075
        %4198 = vmatpush.bf16.msra.mxu0 %v4073
        %4199 = vmatpush.bf16.msra.mxu0 %v4071
        %4200 = vmatpush.bf16.msra.mxu0 %v4069
        %4201 = vmatmul.bf16.gmra.mxu0 %v3943
        %v4202 = vpop.f32.mrf.mxu0
        %v4203 = vadd.f32 %v3938, %v4202
        %v4204 = vpop.f32.mrf.mxu0
        %4205 = vdwg.mxu0
        %4206 = vmatpush.bf16.msra.mxu0 %v4099
        %4207 = vmatpush.bf16.msra.mxu0 %v4097
        %4208 = vmatpush.bf16.msra.mxu0 %v4095
        %4209 = vmatpush.bf16.msra.mxu0 %v4093
        %4210 = vmatpush.bf16.msra.mxu0 %v4091
        %4211 = vmatpush.bf16.msra.mxu0 %v4089
        %4212 = vmatpush.bf16.msra.mxu0 %v4087
        %4213 = vmatpush.bf16.msra.mxu0 %v4085
        %4214 = vmatmul.bf16.gmra.mxu0 %v3944
        %v4215 = vpop.f32.mrf.mxu0
        %v4216 = vadd.f32 %v4203, %v4215
        %v4217 = vpop.f32.mrf.mxu0
        %4218 = vdwg.mxu0
        %4219 = vmatpush.bf16.msra.mxu0 0
        %4220 = vmatpush.bf16.msra.mxu0 0
        %4221 = vmatpush.bf16.msra.mxu0 0
        %4222 = vmatpush.bf16.msra.mxu0 0
        %4223 = vmatpush.bf16.msra.mxu0 %v4152
        %4224 = vmatpush.bf16.msra.mxu0 %v4105
        %4225 = vmatpush.bf16.msra.mxu0 %v4103
        %4226 = vmatpush.bf16.msra.mxu0 %v4101
        %4227 = vmatmul.bf16.gmra.mxu0 %v4146
        %v4228 = vpop.f32.mrf.mxu0
        %v4229 = vadd.f32 %v4216, %v4228
        %v4230 = vpop.f32.mrf.mxu0
        %4231 = vdwg.mxu0
        %s4232 = scalar_lea.vmem [#allocation2], 6
        %v4233 = vld [vmem:[%s4232] sm:$0x7]
        %s4234 = scalar_lea.vmem %s2941, 640 [#allocation4]
        %v4235 = vld [vmem:[%s4234] sm:$0xff]
        %v4236 = vld [vmem:[%s4234 + $0x8] sm:$0xff]
        %v4237 = vld [vmem:[%s4234 + $0x10] sm:$0xff]
        %v4238 = vld [vmem:[%s4234 + $0x18] sm:$0xff]
        %v4239 = vld [vmem:[%s4234 + $0x20] sm:$0xff]
        %v4240 = vld [vmem:[%s4234 + $0x28] sm:$0xff]
        %v4241 = vld [vmem:[%s4234 + $0x30] sm:$0xff]
        %v4242 = vld [vmem:[%s4234 + $0x38] sm:$0xff]
        %v4243 = vld [vmem:[%s4234 + $0x40] sm:$0xff]
        %v4244 = vld [vmem:[%s4234 + $0x48] sm:$0xff]
        %v4245 = vld [vmem:[%s4234 + $0x50] sm:$0xff]
        %v4246 = vld [vmem:[%s4234 + $0x58] sm:$0xff]
        %v4247 = vld [vmem:[%s4234 + $0x60] sm:$0xff]
        %v4248 = vld [vmem:[%s4234 + $0x68] sm:$0xff]
        %v4249 = vld [vmem:[%s4234 + $0x70] sm:$0xff]
        %v4250 = vld [vmem:[%s4234 + $0x78] sm:$0xff]
        %v4251 = vld [vmem:[%s4234 + $0x80] sm:$0xff]
        %v4252 = vld [vmem:[%s4234 + $0x88] sm:$0xff]
        %v4253 = vld [vmem:[%s4234 + $0x90] sm:$0xff]
        %v4254 = vld [vmem:[%s4234 + $0x98] sm:$0xff]
        %v4255 = vld [vmem:[%s4234 + $0xa0] sm:$0xff]
        %v4256 = vld [vmem:[%s4234 + $0xa8] sm:$0xff]
        %v4257 = vld [vmem:[%s4234 + $0xb0] sm:$0xff]
        %v4258 = vld [vmem:[%s4234 + $0xb8] sm:$0xff]
        %v4259 = vld [vmem:[%s4234 + $0xc0] sm:$0xff]
        %v4260 = vld [vmem:[%s4234 + $0xc8] sm:$0xff]
        %v4261 = vld [vmem:[%s4234 + $0xd0] sm:$0xff]
        %v4262 = vld [vmem:[%s4234 + $0xd8] sm:$0xff]
        %v4263 = vld [vmem:[%s4234 + $0xe0] sm:$0xff]
        %v4264 = vld [vmem:[%s4234 + $0xe8] sm:$0xff]
        %v4265 = vld [vmem:[%s4234 + $0xf0] sm:$0xff]
        %v4266 = vld [vmem:[%s4234 + $0xf8] sm:$0xff]
        %v4267 = vld [vmem:[%s4234 + $0x100] sm:$0xff]
        %v4268 = vld [vmem:[%s4234 + $0x108] sm:$0xff]
        %v4269 = vld [vmem:[%s4234 + $0x110] sm:$0xff]
        %v4270 = vld [vmem:[%s4234 + $0x118] sm:$0xff]
        %v4271 = vld [vmem:[%s4234 + $0x120] sm:$0xff]
        %v4272 = vld [vmem:[%s4234 + $0x128] sm:$0xff]
        %v4273 = vld [vmem:[%s4234 + $0x130] sm:$0xff]
        %v4274 = vld [vmem:[%s4234 + $0x138] sm:$0x33]
        %4276 = vst [vmem:[#allocation1] ss:$9 sm:$0xff] %v4233
        %v4277 = vld [vmem:[#allocation1] sm:$0xff]
        %v4278 = vld [vmem:[#allocation1 + $0x9] sm:$0xff]
        %v4279 = vld [vmem:[#allocation1 + $0x12] sm:$0xff]
        %v4322 = vunpack.c.l.b16 %v4235
        %v4323 = vunpack.c.h.b16 %v4235
        %v4324 = vunpack.c.l.b16 %v4236
        %v4325 = vunpack.c.h.b16 %v4236
        %v4326 = vunpack.c.l.b16 %v4237
        %v4327 = vunpack.c.h.b16 %v4237
        %v4328 = vunpack.c.l.b16 %v4238
        %v4329 = vunpack.c.h.b16 %v4238
        %v4330 = vunpack.c.l.b16 %v4239
        %v4331 = vunpack.c.h.b16 %v4239
        %v4332 = vunpack.c.l.b16 %v4240
        %v4333 = vunpack.c.h.b16 %v4240
        %v4334 = vunpack.c.l.b16 %v4241
        %v4335 = vunpack.c.h.b16 %v4241
        %v4336 = vunpack.c.l.b16 %v4242
        %v4337 = vunpack.c.h.b16 %v4242
        %v4338 = vunpack.c.l.b16 %v4243
        %v4339 = vunpack.c.h.b16 %v4243
        %v4340 = vunpack.c.l.b16 %v4244
        %v4341 = vunpack.c.h.b16 %v4244
        %v4342 = vunpack.c.l.b16 %v4245
        %v4343 = vunpack.c.h.b16 %v4245
        %v4344 = vunpack.c.l.b16 %v4246
        %v4345 = vunpack.c.h.b16 %v4246
        %v4346 = vunpack.c.l.b16 %v4247
        %v4347 = vunpack.c.h.b16 %v4247
        %v4348 = vunpack.c.l.b16 %v4248
        %v4349 = vunpack.c.h.b16 %v4248
        %v4350 = vunpack.c.l.b16 %v4249
        %v4351 = vunpack.c.h.b16 %v4249
        %v4352 = vunpack.c.l.b16 %v4250
        %v4353 = vunpack.c.h.b16 %v4250
        %v4354 = vunpack.c.l.b16 %v4251
        %v4355 = vunpack.c.h.b16 %v4251
        %v4356 = vunpack.c.l.b16 %v4252
        %v4357 = vunpack.c.h.b16 %v4252
        %v4358 = vunpack.c.l.b16 %v4253
        %v4359 = vunpack.c.h.b16 %v4253
        %v4360 = vunpack.c.l.b16 %v4254
        %v4361 = vunpack.c.h.b16 %v4254
        %v4362 = vunpack.c.l.b16 %v4255
        %v4363 = vunpack.c.h.b16 %v4255
        %v4364 = vunpack.c.l.b16 %v4256
        %v4365 = vunpack.c.h.b16 %v4256
        %v4366 = vunpack.c.l.b16 %v4257
        %v4367 = vunpack.c.h.b16 %v4257
        %v4368 = vunpack.c.l.b16 %v4258
        %v4369 = vunpack.c.h.b16 %v4258
        %v4370 = vunpack.c.l.b16 %v4259
        %v4371 = vunpack.c.h.b16 %v4259
        %v4372 = vunpack.c.l.b16 %v4260
        %v4373 = vunpack.c.h.b16 %v4260
        %v4374 = vunpack.c.l.b16 %v4261
        %v4375 = vunpack.c.h.b16 %v4261
        %v4376 = vunpack.c.l.b16 %v4262
        %v4377 = vunpack.c.h.b16 %v4262
        %v4378 = vunpack.c.l.b16 %v4263
        %v4379 = vunpack.c.h.b16 %v4263
        %v4380 = vunpack.c.l.b16 %v4264
        %v4381 = vunpack.c.h.b16 %v4264
        %v4382 = vunpack.c.l.b16 %v4265
        %v4383 = vunpack.c.h.b16 %v4265
        %v4384 = vunpack.c.l.b16 %v4266
        %v4385 = vunpack.c.h.b16 %v4266
        %v4386 = vunpack.c.l.b16 %v4267
        %v4387 = vunpack.c.h.b16 %v4267
        %v4388 = vunpack.c.l.b16 %v4268
        %v4389 = vunpack.c.h.b16 %v4268
        %v4390 = vunpack.c.l.b16 %v4269
        %v4391 = vunpack.c.h.b16 %v4269
        %v4392 = vunpack.c.l.b16 %v4270
        %v4393 = vunpack.c.h.b16 %v4270
        %v4394 = vunpack.c.l.b16 %v4271
        %v4395 = vunpack.c.h.b16 %v4271
        %v4396 = vunpack.c.l.b16 %v4272
        %v4397 = vunpack.c.h.b16 %v4272
        %v4398 = vunpack.c.l.b16 %v4273
        %v4399 = vunpack.c.h.b16 %v4273
        %v4400 = vunpack.c.l.b16 %v4274
        %v4401 = vunpack.c.h.b16 %v4274
        %v4402 = vpack.c.b16 %v4324, %v4322
        %v4403 = vpack.c.b16 %v4325, %v4323
        %v4404 = vpack.c.b16 %v4328, %v4326
        %v4405 = vpack.c.b16 %v4329, %v4327
        %v4406 = vpack.c.b16 %v4332, %v4330
        %v4407 = vpack.c.b16 %v4333, %v4331
        %v4408 = vpack.c.b16 %v4336, %v4334
        %v4409 = vpack.c.b16 %v4337, %v4335
        %v4410 = vpack.c.b16 %v4340, %v4338
        %v4411 = vpack.c.b16 %v4341, %v4339
        %v4412 = vpack.c.b16 %v4344, %v4342
        %v4413 = vpack.c.b16 %v4345, %v4343
        %v4414 = vpack.c.b16 %v4348, %v4346
        %v4415 = vpack.c.b16 %v4349, %v4347
        %v4416 = vpack.c.b16 %v4352, %v4350
        %v4417 = vpack.c.b16 %v4353, %v4351
        %v4418 = vpack.c.b16 %v4356, %v4354
        %v4419 = vpack.c.b16 %v4357, %v4355
        %v4420 = vpack.c.b16 %v4360, %v4358
        %v4421 = vpack.c.b16 %v4361, %v4359
        %v4422 = vpack.c.b16 %v4364, %v4362
        %v4423 = vpack.c.b16 %v4365, %v4363
        %v4424 = vpack.c.b16 %v4368, %v4366
        %v4425 = vpack.c.b16 %v4369, %v4367
        %v4426 = vpack.c.b16 %v4372, %v4370
        %v4427 = vpack.c.b16 %v4373, %v4371
        %v4428 = vpack.c.b16 %v4376, %v4374
        %v4429 = vpack.c.b16 %v4377, %v4375
        %v4430 = vpack.c.b16 %v4380, %v4378
        %v4431 = vpack.c.b16 %v4381, %v4379
        %v4432 = vpack.c.b16 %v4384, %v4382
        %v4433 = vpack.c.b16 %v4385, %v4383
        %v4434 = vpack.c.b16 %v4388, %v4386
        %v4435 = vpack.c.b16 %v4389, %v4387
        %v4436 = vpack.c.b16 %v4392, %v4390
        %v4437 = vpack.c.b16 %v4393, %v4391
        %v4438 = vpack.c.b16 %v4396, %v4394
        %v4439 = vpack.c.b16 %v4397, %v4395
        %v4440 = vpack.c.b16 %v4400, %v4398
        %v4441 = vpack.c.b16 %v4401, %v4399
        %v4480 = vsel %vm3850, %v4279, 0
        %v4483 = vand.u32 %v4440, %v3856
        %v4486 = vand.u32 %v4441, %v3856
        %4488 = vmatpush.bf16.msra.mxu0 %v4416
        %4489 = vmatpush.bf16.msra.mxu0 %v4414
        %4490 = vmatpush.bf16.msra.mxu0 %v4412
        %4491 = vmatpush.bf16.msra.mxu0 %v4410
        %4492 = vmatpush.bf16.msra.mxu0 %v4408
        %4493 = vmatpush.bf16.msra.mxu0 %v4406
        %4494 = vmatpush.bf16.msra.mxu0 %v4404
        %4495 = vmatpush.bf16.msra.mxu0 %v4402
        %4496 = vmatmul.bf16.gmra.mxu0 %v4277
        %v4497 = vpop.f32.mrf.mxu0
        %v4498 = vadd.f32 0.0, %v4497
        %v4499 = vpop.f32.mrf.mxu0
        %4500 = vdwg.mxu0
        %4501 = vmatpush.bf16.msra.mxu0 %v4432
        %4502 = vmatpush.bf16.msra.mxu0 %v4430
        %4503 = vmatpush.bf16.msra.mxu0 %v4428
        %4504 = vmatpush.bf16.msra.mxu0 %v4426
        %4505 = vmatpush.bf16.msra.mxu0 %v4424
        %4506 = vmatpush.bf16.msra.mxu0 %v4422
        %4507 = vmatpush.bf16.msra.mxu0 %v4420
        %4508 = vmatpush.bf16.msra.mxu0 %v4418
        %4509 = vmatmul.bf16.gmra.mxu0 %v4278
        %v4510 = vpop.f32.mrf.mxu0
        %v4511 = vadd.f32 %v4498, %v4510
        %v4512 = vpop.f32.mrf.mxu0
        %4513 = vdwg.mxu0
        %4514 = vmatpush.bf16.msra.mxu0 0
        %4515 = vmatpush.bf16.msra.mxu0 0
        %4516 = vmatpush.bf16.msra.mxu0 0
        %4517 = vmatpush.bf16.msra.mxu0 0
        %4518 = vmatpush.bf16.msra.mxu0 %v4483
        %4519 = vmatpush.bf16.msra.mxu0 %v4438
        %4520 = vmatpush.bf16.msra.mxu0 %v4436
        %4521 = vmatpush.bf16.msra.mxu0 %v4434
        %4522 = vmatmul.bf16.gmra.mxu0 %v4480
        %v4523 = vpop.f32.mrf.mxu0
        %v4524 = vadd.f32 %v4511, %v4523
        %v4525 = vpop.f32.mrf.mxu0
        %4526 = vdwg.mxu0
        %4527 = vmatpush.bf16.msra.mxu0 %v4417
        %4528 = vmatpush.bf16.msra.mxu0 %v4415
        %4529 = vmatpush.bf16.msra.mxu0 %v4413
        %4530 = vmatpush.bf16.msra.mxu0 %v4411
        %4531 = vmatpush.bf16.msra.mxu0 %v4409
        %4532 = vmatpush.bf16.msra.mxu0 %v4407
        %4533 = vmatpush.bf16.msra.mxu0 %v4405
        %4534 = vmatpush.bf16.msra.mxu0 %v4403
        %4535 = vmatmul.bf16.gmra.mxu0 %v4277
        %v4536 = vpop.f32.mrf.mxu0
        %v4537 = vadd.f32 0.0, %v4536
        %v4538 = vpop.f32.mrf.mxu0
        %4539 = vdwg.mxu0
        %4540 = vmatpush.bf16.msra.mxu0 %v4433
        %4541 = vmatpush.bf16.msra.mxu0 %v4431
        %4542 = vmatpush.bf16.msra.mxu0 %v4429
        %4543 = vmatpush.bf16.msra.mxu0 %v4427
        %4544 = vmatpush.bf16.msra.mxu0 %v4425
        %4545 = vmatpush.bf16.msra.mxu0 %v4423
        %4546 = vmatpush.bf16.msra.mxu0 %v4421
        %4547 = vmatpush.bf16.msra.mxu0 %v4419
        %4548 = vmatmul.bf16.gmra.mxu0 %v4278
        %v4549 = vpop.f32.mrf.mxu0
        %v4550 = vadd.f32 %v4537, %v4549
        %v4551 = vpop.f32.mrf.mxu0
        %4552 = vdwg.mxu0
        %4553 = vmatpush.bf16.msra.mxu0 0
        %4554 = vmatpush.bf16.msra.mxu0 0
        %4555 = vmatpush.bf16.msra.mxu0 0
        %4556 = vmatpush.bf16.msra.mxu0 0
        %4557 = vmatpush.bf16.msra.mxu0 %v4486
        %4558 = vmatpush.bf16.msra.mxu0 %v4439
        %4559 = vmatpush.bf16.msra.mxu0 %v4437
        %4560 = vmatpush.bf16.msra.mxu0 %v4435
        %4561 = vmatmul.bf16.gmra.mxu0 %v4480
        %v4562 = vpop.f32.mrf.mxu0
        %v4563 = vadd.f32 %v4550, %v4562
        %v4564 = vpop.f32.mrf.mxu0
        %4565 = vdwg.mxu0
        %v4566 = vadd.f32 %v4190, %v4524
        %v4567 = vadd.f32 %v4229, %v4563
        %s4568 = scalar_lea.vmem [#allocation2], 9
        %v4569 = vld [vmem:[%s4568] sm:$0x7]
        %s4570 = scalar_lea.vmem %s2941, 960 [#allocation4]
        %v4571 = vld [vmem:[%s4570] sm:$0xff]
        %v4572 = vld [vmem:[%s4570 + $0x8] sm:$0xff]
        %v4573 = vld [vmem:[%s4570 + $0x10] sm:$0xff]
        %v4574 = vld [vmem:[%s4570 + $0x18] sm:$0xff]
        %v4575 = vld [vmem:[%s4570 + $0x20] sm:$0xff]
        %v4576 = vld [vmem:[%s4570 + $0x28] sm:$0xff]
        %v4577 = vld [vmem:[%s4570 + $0x30] sm:$0xff]
        %v4578 = vld [vmem:[%s4570 + $0x38] sm:$0xff]
        %v4579 = vld [vmem:[%s4570 + $0x40] sm:$0xff]
        %v4580 = vld [vmem:[%s4570 + $0x48] sm:$0xff]
        %v4581 = vld [vmem:[%s4570 + $0x50] sm:$0xff]
        %v4582 = vld [vmem:[%s4570 + $0x58] sm:$0xff]
        %v4583 = vld [vmem:[%s4570 + $0x60] sm:$0xff]
        %v4584 = vld [vmem:[%s4570 + $0x68] sm:$0xff]
        %v4585 = vld [vmem:[%s4570 + $0x70] sm:$0xff]
        %v4586 = vld [vmem:[%s4570 + $0x78] sm:$0xff]
        %v4587 = vld [vmem:[%s4570 + $0x80] sm:$0xff]
        %v4588 = vld [vmem:[%s4570 + $0x88] sm:$0xff]
        %v4589 = vld [vmem:[%s4570 + $0x90] sm:$0xff]
        %v4590 = vld [vmem:[%s4570 + $0x98] sm:$0xff]
        %v4591 = vld [vmem:[%s4570 + $0xa0] sm:$0xff]
        %v4592 = vld [vmem:[%s4570 + $0xa8] sm:$0xff]
        %v4593 = vld [vmem:[%s4570 + $0xb0] sm:$0xff]
        %v4594 = vld [vmem:[%s4570 + $0xb8] sm:$0xff]
        %v4595 = vld [vmem:[%s4570 + $0xc0] sm:$0xff]
        %v4596 = vld [vmem:[%s4570 + $0xc8] sm:$0xff]
        %v4597 = vld [vmem:[%s4570 + $0xd0] sm:$0xff]
        %v4598 = vld [vmem:[%s4570 + $0xd8] sm:$0xff]
        %v4599 = vld [vmem:[%s4570 + $0xe0] sm:$0xff]
        %v4600 = vld [vmem:[%s4570 + $0xe8] sm:$0xff]
        %v4601 = vld [vmem:[%s4570 + $0xf0] sm:$0xff]
        %v4602 = vld [vmem:[%s4570 + $0xf8] sm:$0xff]
        %v4603 = vld [vmem:[%s4570 + $0x100] sm:$0xff]
        %v4604 = vld [vmem:[%s4570 + $0x108] sm:$0xff]
        %v4605 = vld [vmem:[%s4570 + $0x110] sm:$0xff]
        %v4606 = vld [vmem:[%s4570 + $0x118] sm:$0xff]
        %v4607 = vld [vmem:[%s4570 + $0x120] sm:$0xff]
        %v4608 = vld [vmem:[%s4570 + $0x128] sm:$0xff]
        %v4609 = vld [vmem:[%s4570 + $0x130] sm:$0xff]
        %v4610 = vld [vmem:[%s4570 + $0x138] sm:$0x33]
        %4612 = vst [vmem:[#allocation1] ss:$9 sm:$0xff] %v4569
        %v4613 = vld [vmem:[#allocation1] sm:$0xff]
        %v4614 = vld [vmem:[#allocation1 + $0x9] sm:$0xff]
        %v4615 = vld [vmem:[#allocation1 + $0x12] sm:$0xff]
        %v4658 = vunpack.c.l.b16 %v4571
        %v4659 = vunpack.c.h.b16 %v4571
        %v4660 = vunpack.c.l.b16 %v4572
        %v4661 = vunpack.c.h.b16 %v4572
        %v4662 = vunpack.c.l.b16 %v4573
        %v4663 = vunpack.c.h.b16 %v4573
        %v4664 = vunpack.c.l.b16 %v4574
        %v4665 = vunpack.c.h.b16 %v4574
        %v4666 = vunpack.c.l.b16 %v4575
        %v4667 = vunpack.c.h.b16 %v4575
        %v4668 = vunpack.c.l.b16 %v4576
        %v4669 = vunpack.c.h.b16 %v4576
        %v4670 = vunpack.c.l.b16 %v4577
        %v4671 = vunpack.c.h.b16 %v4577
        %v4672 = vunpack.c.l.b16 %v4578
        %v4673 = vunpack.c.h.b16 %v4578
        %v4674 = vunpack.c.l.b16 %v4579
        %v4675 = vunpack.c.h.b16 %v4579
        %v4676 = vunpack.c.l.b16 %v4580
        %v4677 = vunpack.c.h.b16 %v4580
        %v4678 = vunpack.c.l.b16 %v4581
        %v4679 = vunpack.c.h.b16 %v4581
        %v4680 = vunpack.c.l.b16 %v4582
        %v4681 = vunpack.c.h.b16 %v4582
        %v4682 = vunpack.c.l.b16 %v4583
        %v4683 = vunpack.c.h.b16 %v4583
        %v4684 = vunpack.c.l.b16 %v4584
        %v4685 = vunpack.c.h.b16 %v4584
        %v4686 = vunpack.c.l.b16 %v4585
        %v4687 = vunpack.c.h.b16 %v4585
        %v4688 = vunpack.c.l.b16 %v4586
        %v4689 = vunpack.c.h.b16 %v4586
        %v4690 = vunpack.c.l.b16 %v4587
        %v4691 = vunpack.c.h.b16 %v4587
        %v4692 = vunpack.c.l.b16 %v4588
        %v4693 = vunpack.c.h.b16 %v4588
        %v4694 = vunpack.c.l.b16 %v4589
        %v4695 = vunpack.c.h.b16 %v4589
        %v4696 = vunpack.c.l.b16 %v4590
        %v4697 = vunpack.c.h.b16 %v4590
        %v4698 = vunpack.c.l.b16 %v4591
        %v4699 = vunpack.c.h.b16 %v4591
        %v4700 = vunpack.c.l.b16 %v4592
        %v4701 = vunpack.c.h.b16 %v4592
        %v4702 = vunpack.c.l.b16 %v4593
        %v4703 = vunpack.c.h.b16 %v4593
        %v4704 = vunpack.c.l.b16 %v4594
        %v4705 = vunpack.c.h.b16 %v4594
        %v4706 = vunpack.c.l.b16 %v4595
        %v4707 = vunpack.c.h.b16 %v4595
        %v4708 = vunpack.c.l.b16 %v4596
        %v4709 = vunpack.c.h.b16 %v4596
        %v4710 = vunpack.c.l.b16 %v4597
        %v4711 = vunpack.c.h.b16 %v4597
        %v4712 = vunpack.c.l.b16 %v4598
        %v4713 = vunpack.c.h.b16 %v4598
        %v4714 = vunpack.c.l.b16 %v4599
        %v4715 = vunpack.c.h.b16 %v4599
        %v4716 = vunpack.c.l.b16 %v4600
        %v4717 = vunpack.c.h.b16 %v4600
        %v4718 = vunpack.c.l.b16 %v4601
        %v4719 = vunpack.c.h.b16 %v4601
        %v4720 = vunpack.c.l.b16 %v4602
        %v4721 = vunpack.c.h.b16 %v4602
        %v4722 = vunpack.c.l.b16 %v4603
        %v4723 = vunpack.c.h.b16 %v4603
        %v4724 = vunpack.c.l.b16 %v4604
        %v4725 = vunpack.c.h.b16 %v4604
        %v4726 = vunpack.c.l.b16 %v4605
        %v4727 = vunpack.c.h.b16 %v4605
        %v4728 = vunpack.c.l.b16 %v4606
        %v4729 = vunpack.c.h.b16 %v4606
        %v4730 = vunpack.c.l.b16 %v4607
        %v4731 = vunpack.c.h.b16 %v4607
        %v4732 = vunpack.c.l.b16 %v4608
        %v4733 = vunpack.c.h.b16 %v4608
        %v4734 = vunpack.c.l.b16 %v4609
        %v4735 = vunpack.c.h.b16 %v4609
        %v4736 = vunpack.c.l.b16 %v4610
        %v4737 = vunpack.c.h.b16 %v4610
        %v4738 = vpack.c.b16 %v4660, %v4658
        %v4739 = vpack.c.b16 %v4661, %v4659
        %v4740 = vpack.c.b16 %v4664, %v4662
        %v4741 = vpack.c.b16 %v4665, %v4663
        %v4742 = vpack.c.b16 %v4668, %v4666
        %v4743 = vpack.c.b16 %v4669, %v4667
        %v4744 = vpack.c.b16 %v4672, %v4670
        %v4745 = vpack.c.b16 %v4673, %v4671
        %v4746 = vpack.c.b16 %v4676, %v4674
        %v4747 = vpack.c.b16 %v4677, %v4675
        %v4748 = vpack.c.b16 %v4680, %v4678
        %v4749 = vpack.c.b16 %v4681, %v4679
        %v4750 = vpack.c.b16 %v4684, %v4682
        %v4751 = vpack.c.b16 %v4685, %v4683
        %v4752 = vpack.c.b16 %v4688, %v4686
        %v4753 = vpack.c.b16 %v4689, %v4687
        %v4754 = vpack.c.b16 %v4692, %v4690
        %v4755 = vpack.c.b16 %v4693, %v4691
        %v4756 = vpack.c.b16 %v4696, %v4694
        %v4757 = vpack.c.b16 %v4697, %v4695
        %v4758 = vpack.c.b16 %v4700, %v4698
        %v4759 = vpack.c.b16 %v4701, %v4699
        %v4760 = vpack.c.b16 %v4704, %v4702
        %v4761 = vpack.c.b16 %v4705, %v4703
        %v4762 = vpack.c.b16 %v4708, %v4706
        %v4763 = vpack.c.b16 %v4709, %v4707
        %v4764 = vpack.c.b16 %v4712, %v4710
        %v4765 = vpack.c.b16 %v4713, %v4711
        %v4766 = vpack.c.b16 %v4716, %v4714
        %v4767 = vpack.c.b16 %v4717, %v4715
        %v4768 = vpack.c.b16 %v4720, %v4718
        %v4769 = vpack.c.b16 %v4721, %v4719
        %v4770 = vpack.c.b16 %v4724, %v4722
        %v4771 = vpack.c.b16 %v4725, %v4723
        %v4772 = vpack.c.b16 %v4728, %v4726
        %v4773 = vpack.c.b16 %v4729, %v4727
        %v4774 = vpack.c.b16 %v4732, %v4730
        %v4775 = vpack.c.b16 %v4733, %v4731
        %v4776 = vpack.c.b16 %v4736, %v4734
        %v4777 = vpack.c.b16 %v4737, %v4735
        %v4816 = vsel %vm3850, %v4615, 0
        %v4819 = vand.u32 %v4776, %v3856
        %v4822 = vand.u32 %v4777, %v3856
        %4824 = vmatpush.bf16.msra.mxu0 %v4752
        %4825 = vmatpush.bf16.msra.mxu0 %v4750
        %4826 = vmatpush.bf16.msra.mxu0 %v4748
        %4827 = vmatpush.bf16.msra.mxu0 %v4746
        %4828 = vmatpush.bf16.msra.mxu0 %v4744
        %4829 = vmatpush.bf16.msra.mxu0 %v4742
        %4830 = vmatpush.bf16.msra.mxu0 %v4740
        %4831 = vmatpush.bf16.msra.mxu0 %v4738
        %4832 = vmatmul.bf16.gmra.mxu0 %v4613
        %v4833 = vpop.f32.mrf.mxu0
        %v4834 = vadd.f32 0.0, %v4833
        %v4835 = vpop.f32.mrf.mxu0
        %4836 = vdwg.mxu0
        %4837 = vmatpush.bf16.msra.mxu0 %v4768
        %4838 = vmatpush.bf16.msra.mxu0 %v4766
        %4839 = vmatpush.bf16.msra.mxu0 %v4764
        %4840 = vmatpush.bf16.msra.mxu0 %v4762
        %4841 = vmatpush.bf16.msra.mxu0 %v4760
        %4842 = vmatpush.bf16.msra.mxu0 %v4758
        %4843 = vmatpush.bf16.msra.mxu0 %v4756
        %4844 = vmatpush.bf16.msra.mxu0 %v4754
        %4845 = vmatmul.bf16.gmra.mxu0 %v4614
        %v4846 = vpop.f32.mrf.mxu0
        %v4847 = vadd.f32 %v4834, %v4846
        %v4848 = vpop.f32.mrf.mxu0
        %4849 = vdwg.mxu0
        %4850 = vmatpush.bf16.msra.mxu0 0
        %4851 = vmatpush.bf16.msra.mxu0 0
        %4852 = vmatpush.bf16.msra.mxu0 0
        %4853 = vmatpush.bf16.msra.mxu0 0
        %4854 = vmatpush.bf16.msra.mxu0 %v4819
        %4855 = vmatpush.bf16.msra.mxu0 %v4774
        %4856 = vmatpush.bf16.msra.mxu0 %v4772
        %4857 = vmatpush.bf16.msra.mxu0 %v4770
        %4858 = vmatmul.bf16.gmra.mxu0 %v4816
        %v4859 = vpop.f32.mrf.mxu0
        %v4860 = vadd.f32 %v4847, %v4859
        %v4861 = vpop.f32.mrf.mxu0
        %4862 = vdwg.mxu0
        %4863 = vmatpush.bf16.msra.mxu0 %v4753
        %4864 = vmatpush.bf16.msra.mxu0 %v4751
        %4865 = vmatpush.bf16.msra.mxu0 %v4749
        %4866 = vmatpush.bf16.msra.mxu0 %v4747
        %4867 = vmatpush.bf16.msra.mxu0 %v4745
        %4868 = vmatpush.bf16.msra.mxu0 %v4743
        %4869 = vmatpush.bf16.msra.mxu0 %v4741
        %4870 = vmatpush.bf16.msra.mxu0 %v4739
        %4871 = vmatmul.bf16.gmra.mxu0 %v4613
        %v4872 = vpop.f32.mrf.mxu0
        %v4873 = vadd.f32 0.0, %v4872
        %v4874 = vpop.f32.mrf.mxu0
        %4875 = vdwg.mxu0
        %4876 = vmatpush.bf16.msra.mxu0 %v4769
        %4877 = vmatpush.bf16.msra.mxu0 %v4767
        %4878 = vmatpush.bf16.msra.mxu0 %v4765
        %4879 = vmatpush.bf16.msra.mxu0 %v4763
        %4880 = vmatpush.bf16.msra.mxu0 %v4761
        %4881 = vmatpush.bf16.msra.mxu0 %v4759
        %4882 = vmatpush.bf16.msra.mxu0 %v4757
        %4883 = vmatpush.bf16.msra.mxu0 %v4755
        %4884 = vmatmul.bf16.gmra.mxu0 %v4614
        %v4885 = vpop.f32.mrf.mxu0
        %v4886 = vadd.f32 %v4873, %v4885
        %v4887 = vpop.f32.mrf.mxu0
        %4888 = vdwg.mxu0
        %4889 = vmatpush.bf16.msra.mxu0 0
        %4890 = vmatpush.bf16.msra.mxu0 0
        %4891 = vmatpush.bf16.msra.mxu0 0
        %4892 = vmatpush.bf16.msra.mxu0 0
        %4893 = vmatpush.bf16.msra.mxu0 %v4822
        %4894 = vmatpush.bf16.msra.mxu0 %v4775
        %4895 = vmatpush.bf16.msra.mxu0 %v4773
        %4896 = vmatpush.bf16.msra.mxu0 %v4771
        %4897 = vmatmul.bf16.gmra.mxu0 %v4816
        %v4898 = vpop.f32.mrf.mxu0
        %v4899 = vadd.f32 %v4886, %v4898
        %v4900 = vpop.f32.mrf.mxu0
        %4901 = vdwg.mxu0
        %v4902 = vadd.f32 %v4566, %v4860
        %v4903 = vadd.f32 %v4567, %v4899
        %s4904 = scalar_lea.vmem [#allocation2], 12
        %v4905 = vld [vmem:[%s4904] sm:$0x7]
        %s4906 = scalar_lea.vmem %s2941, 1280 [#allocation4]
        %v4907 = vld [vmem:[%s4906] sm:$0xff]
        %v4908 = vld [vmem:[%s4906 + $0x8] sm:$0xff]
        %v4909 = vld [vmem:[%s4906 + $0x10] sm:$0xff]
        %v4910 = vld [vmem:[%s4906 + $0x18] sm:$0xff]
        %v4911 = vld [vmem:[%s4906 + $0x20] sm:$0xff]
        %v4912 = vld [vmem:[%s4906 + $0x28] sm:$0xff]
        %v4913 = vld [vmem:[%s4906 + $0x30] sm:$0xff]
        %v4914 = vld [vmem:[%s4906 + $0x38] sm:$0xff]
        %v4915 = vld [vmem:[%s4906 + $0x40] sm:$0xff]
        %v4916 = vld [vmem:[%s4906 + $0x48] sm:$0xff]
        %v4917 = vld [vmem:[%s4906 + $0x50] sm:$0xff]
        %v4918 = vld [vmem:[%s4906 + $0x58] sm:$0xff]
        %v4919 = vld [vmem:[%s4906 + $0x60] sm:$0xff]
        %v4920 = vld [vmem:[%s4906 + $0x68] sm:$0xff]
        %v4921 = vld [vmem:[%s4906 + $0x70] sm:$0xff]
        %v4922 = vld [vmem:[%s4906 + $0x78] sm:$0xff]
        %v4923 = vld [vmem:[%s4906 + $0x80] sm:$0xff]
        %v4924 = vld [vmem:[%s4906 + $0x88] sm:$0xff]
        %v4925 = vld [vmem:[%s4906 + $0x90] sm:$0xff]
        %v4926 = vld [vmem:[%s4906 + $0x98] sm:$0xff]
        %v4927 = vld [vmem:[%s4906 + $0xa0] sm:$0xff]
        %v4928 = vld [vmem:[%s4906 + $0xa8] sm:$0xff]
        %v4929 = vld [vmem:[%s4906 + $0xb0] sm:$0xff]
        %v4930 = vld [vmem:[%s4906 + $0xb8] sm:$0xff]
        %v4931 = vld [vmem:[%s4906 + $0xc0] sm:$0xff]
        %v4932 = vld [vmem:[%s4906 + $0xc8] sm:$0xff]
        %v4933 = vld [vmem:[%s4906 + $0xd0] sm:$0xff]
        %v4934 = vld [vmem:[%s4906 + $0xd8] sm:$0xff]
        %v4935 = vld [vmem:[%s4906 + $0xe0] sm:$0xff]
        %v4936 = vld [vmem:[%s4906 + $0xe8] sm:$0xff]
        %v4937 = vld [vmem:[%s4906 + $0xf0] sm:$0xff]
        %v4938 = vld [vmem:[%s4906 + $0xf8] sm:$0xff]
        %v4939 = vld [vmem:[%s4906 + $0x100] sm:$0xff]
        %v4940 = vld [vmem:[%s4906 + $0x108] sm:$0xff]
        %v4941 = vld [vmem:[%s4906 + $0x110] sm:$0xff]
        %v4942 = vld [vmem:[%s4906 + $0x118] sm:$0xff]
        %v4943 = vld [vmem:[%s4906 + $0x120] sm:$0xff]
        %v4944 = vld [vmem:[%s4906 + $0x128] sm:$0xff]
        %v4945 = vld [vmem:[%s4906 + $0x130] sm:$0xff]
        %v4946 = vld [vmem:[%s4906 + $0x138] sm:$0x33]
        %4948 = vst [vmem:[#allocation1] ss:$9 sm:$0xff] %v4905
        %v4949 = vld [vmem:[#allocation1] sm:$0xff]
        %v4950 = vld [vmem:[#allocation1 + $0x9] sm:$0xff]
        %v4951 = vld [vmem:[#allocation1 + $0x12] sm:$0xff]
        %v4994 = vunpack.c.l.b16 %v4907
        %v4995 = vunpack.c.h.b16 %v4907
        %v4996 = vunpack.c.l.b16 %v4908
        %v4997 = vunpack.c.h.b16 %v4908
        %v4998 = vunpack.c.l.b16 %v4909
        %v4999 = vunpack.c.h.b16 %v4909
        %v5000 = vunpack.c.l.b16 %v4910
        %v5001 = vunpack.c.h.b16 %v4910
        %v5002 = vunpack.c.l.b16 %v4911
        %v5003 = vunpack.c.h.b16 %v4911
        %v5004 = vunpack.c.l.b16 %v4912
        %v5005 = vunpack.c.h.b16 %v4912
        %v5006 = vunpack.c.l.b16 %v4913
        %v5007 = vunpack.c.h.b16 %v4913
        %v5008 = vunpack.c.l.b16 %v4914
        %v5009 = vunpack.c.h.b16 %v4914
        %v5010 = vunpack.c.l.b16 %v4915
        %v5011 = vunpack.c.h.b16 %v4915
        %v5012 = vunpack.c.l.b16 %v4916
        %v5013 = vunpack.c.h.b16 %v4916
        %v5014 = vunpack.c.l.b16 %v4917
        %v5015 = vunpack.c.h.b16 %v4917
        %v5016 = vunpack.c.l.b16 %v4918
        %v5017 = vunpack.c.h.b16 %v4918
        %v5018 = vunpack.c.l.b16 %v4919
        %v5019 = vunpack.c.h.b16 %v4919
        %v5020 = vunpack.c.l.b16 %v4920
        %v5021 = vunpack.c.h.b16 %v4920
        %v5022 = vunpack.c.l.b16 %v4921
        %v5023 = vunpack.c.h.b16 %v4921
        %v5024 = vunpack.c.l.b16 %v4922
        %v5025 = vunpack.c.h.b16 %v4922
        %v5026 = vunpack.c.l.b16 %v4923
        %v5027 = vunpack.c.h.b16 %v4923
        %v5028 = vunpack.c.l.b16 %v4924
        %v5029 = vunpack.c.h.b16 %v4924
        %v5030 = vunpack.c.l.b16 %v4925
        %v5031 = vunpack.c.h.b16 %v4925
        %v5032 = vunpack.c.l.b16 %v4926
        %v5033 = vunpack.c.h.b16 %v4926
        %v5034 = vunpack.c.l.b16 %v4927
        %v5035 = vunpack.c.h.b16 %v4927
        %v5036 = vunpack.c.l.b16 %v4928
        %v5037 = vunpack.c.h.b16 %v4928
        %v5038 = vunpack.c.l.b16 %v4929
        %v5039 = vunpack.c.h.b16 %v4929
        %v5040 = vunpack.c.l.b16 %v4930
        %v5041 = vunpack.c.h.b16 %v4930
        %v5042 = vunpack.c.l.b16 %v4931
        %v5043 = vunpack.c.h.b16 %v4931
        %v5044 = vunpack.c.l.b16 %v4932
        %v5045 = vunpack.c.h.b16 %v4932
        %v5046 = vunpack.c.l.b16 %v4933
        %v5047 = vunpack.c.h.b16 %v4933
        %v5048 = vunpack.c.l.b16 %v4934
        %v5049 = vunpack.c.h.b16 %v4934
        %v5050 = vunpack.c.l.b16 %v4935
        %v5051 = vunpack.c.h.b16 %v4935
        %v5052 = vunpack.c.l.b16 %v4936
        %v5053 = vunpack.c.h.b16 %v4936
        %v5054 = vunpack.c.l.b16 %v4937
        %v5055 = vunpack.c.h.b16 %v4937
        %v5056 = vunpack.c.l.b16 %v4938
        %v5057 = vunpack.c.h.b16 %v4938
        %v5058 = vunpack.c.l.b16 %v4939
        %v5059 = vunpack.c.h.b16 %v4939
        %v5060 = vunpack.c.l.b16 %v4940
        %v5061 = vunpack.c.h.b16 %v4940
        %v5062 = vunpack.c.l.b16 %v4941
        %v5063 = vunpack.c.h.b16 %v4941
        %v5064 = vunpack.c.l.b16 %v4942
        %v5065 = vunpack.c.h.b16 %v4942
        %v5066 = vunpack.c.l.b16 %v4943
        %v5067 = vunpack.c.h.b16 %v4943
        %v5068 = vunpack.c.l.b16 %v4944
        %v5069 = vunpack.c.h.b16 %v4944
        %v5070 = vunpack.c.l.b16 %v4945
        %v5071 = vunpack.c.h.b16 %v4945
        %v5072 = vunpack.c.l.b16 %v4946
        %v5073 = vunpack.c.h.b16 %v4946
        %v5074 = vpack.c.b16 %v4996, %v4994
        %v5075 = vpack.c.b16 %v4997, %v4995
        %v5076 = vpack.c.b16 %v5000, %v4998
        %v5077 = vpack.c.b16 %v5001, %v4999
        %v5078 = vpack.c.b16 %v5004, %v5002
        %v5079 = vpack.c.b16 %v5005, %v5003
        %v5080 = vpack.c.b16 %v5008, %v5006
        %v5081 = vpack.c.b16 %v5009, %v5007
        %v5082 = vpack.c.b16 %v5012, %v5010
        %v5083 = vpack.c.b16 %v5013, %v5011
        %v5084 = vpack.c.b16 %v5016, %v5014
        %v5085 = vpack.c.b16 %v5017, %v5015
        %v5086 = vpack.c.b16 %v5020, %v5018
        %v5087 = vpack.c.b16 %v5021, %v5019
        %v5088 = vpack.c.b16 %v5024, %v5022
        %v5089 = vpack.c.b16 %v5025, %v5023
        %v5090 = vpack.c.b16 %v5028, %v5026
        %v5091 = vpack.c.b16 %v5029, %v5027
        %v5092 = vpack.c.b16 %v5032, %v5030
        %v5093 = vpack.c.b16 %v5033, %v5031
        %v5094 = vpack.c.b16 %v5036, %v5034
        %v5095 = vpack.c.b16 %v5037, %v5035
        %v5096 = vpack.c.b16 %v5040, %v5038
        %v5097 = vpack.c.b16 %v5041, %v5039
        %v5098 = vpack.c.b16 %v5044, %v5042
        %v5099 = vpack.c.b16 %v5045, %v5043
        %v5100 = vpack.c.b16 %v5048, %v5046
        %v5101 = vpack.c.b16 %v5049, %v5047
        %v5102 = vpack.c.b16 %v5052, %v5050
        %v5103 = vpack.c.b16 %v5053, %v5051
        %v5104 = vpack.c.b16 %v5056, %v5054
        %v5105 = vpack.c.b16 %v5057, %v5055
        %v5106 = vpack.c.b16 %v5060, %v5058
        %v5107 = vpack.c.b16 %v5061, %v5059
        %v5108 = vpack.c.b16 %v5064, %v5062
        %v5109 = vpack.c.b16 %v5065, %v5063
        %v5110 = vpack.c.b16 %v5068, %v5066
        %v5111 = vpack.c.b16 %v5069, %v5067
        %v5112 = vpack.c.b16 %v5072, %v5070
        %v5113 = vpack.c.b16 %v5073, %v5071
        %v5152 = vsel %vm3850, %v4951, 0
        %v5155 = vand.u32 %v5112, %v3856
        %v5158 = vand.u32 %v5113, %v3856
        %5160 = vmatpush.bf16.msra.mxu0 %v5088
        %5161 = vmatpush.bf16.msra.mxu0 %v5086
        %5162 = vmatpush.bf16.msra.mxu0 %v5084
        %5163 = vmatpush.bf16.msra.mxu0 %v5082
        %5164 = vmatpush.bf16.msra.mxu0 %v5080
        %5165 = vmatpush.bf16.msra.mxu0 %v5078
        %5166 = vmatpush.bf16.msra.mxu0 %v5076
        %5167 = vmatpush.bf16.msra.mxu0 %v5074
        %5168 = vmatmul.bf16.gmra.mxu0 %v4949
        %v5169 = vpop.f32.mrf.mxu0
        %v5170 = vadd.f32 0.0, %v5169
        %v5171 = vpop.f32.mrf.mxu0
        %5172 = vdwg.mxu0
        %5173 = vmatpush.bf16.msra.mxu0 %v5104
        %5174 = vmatpush.bf16.msra.mxu0 %v5102
        %5175 = vmatpush.bf16.msra.mxu0 %v5100
        %5176 = vmatpush.bf16.msra.mxu0 %v5098
        %5177 = vmatpush.bf16.msra.mxu0 %v5096
        %5178 = vmatpush.bf16.msra.mxu0 %v5094
        %5179 = vmatpush.bf16.msra.mxu0 %v5092
        %5180 = vmatpush.bf16.msra.mxu0 %v5090
        %5181 = vmatmul.bf16.gmra.mxu0 %v4950
        %v5182 = vpop.f32.mrf.mxu0
        %v5183 = vadd.f32 %v5170, %v5182
        %v5184 = vpop.f32.mrf.mxu0
        %5185 = vdwg.mxu0
        %5186 = vmatpush.bf16.msra.mxu0 0
        %5187 = vmatpush.bf16.msra.mxu0 0
        %5188 = vmatpush.bf16.msra.mxu0 0
        %5189 = vmatpush.bf16.msra.mxu0 0
        %5190 = vmatpush.bf16.msra.mxu0 %v5155
        %5191 = vmatpush.bf16.msra.mxu0 %v5110
        %5192 = vmatpush.bf16.msra.mxu0 %v5108
        %5193 = vmatpush.bf16.msra.mxu0 %v5106
        %5194 = vmatmul.bf16.gmra.mxu0 %v5152
        %v5195 = vpop.f32.mrf.mxu0
        %v5196 = vadd.f32 %v5183, %v5195
        %v5197 = vpop.f32.mrf.mxu0
        %5198 = vdwg.mxu0
        %5199 = vmatpush.bf16.msra.mxu0 %v5089
        %5200 = vmatpush.bf16.msra.mxu0 %v5087
        %5201 = vmatpush.bf16.msra.mxu0 %v5085
        %5202 = vmatpush.bf16.msra.mxu0 %v5083
        %5203 = vmatpush.bf16.msra.mxu0 %v5081
        %5204 = vmatpush.bf16.msra.mxu0 %v5079
        %5205 = vmatpush.bf16.msra.mxu0 %v5077
        %5206 = vmatpush.bf16.msra.mxu0 %v5075
        %5207 = vmatmul.bf16.gmra.mxu0 %v4949
        %v5208 = vpop.f32.mrf.mxu0
        %v5209 = vadd.f32 0.0, %v5208
        %v5210 = vpop.f32.mrf.mxu0
        %5211 = vdwg.mxu0
        %5212 = vmatpush.bf16.msra.mxu0 %v5105
        %5213 = vmatpush.bf16.msra.mxu0 %v5103
        %5214 = vmatpush.bf16.msra.mxu0 %v5101
        %5215 = vmatpush.bf16.msra.mxu0 %v5099
        %5216 = vmatpush.bf16.msra.mxu0 %v5097
        %5217 = vmatpush.bf16.msra.mxu0 %v5095
        %5218 = vmatpush.bf16.msra.mxu0 %v5093
        %5219 = vmatpush.bf16.msra.mxu0 %v5091
        %5220 = vmatmul.bf16.gmra.mxu0 %v4950
        %v5221 = vpop.f32.mrf.mxu0
        %v5222 = vadd.f32 %v5209, %v5221
        %v5223 = vpop.f32.mrf.mxu0
        %5224 = vdwg.mxu0
        %5225 = vmatpush.bf16.msra.mxu0 0
        %5226 = vmatpush.bf16.msra.mxu0 0
        %5227 = vmatpush.bf16.msra.mxu0 0
        %5228 = vmatpush.bf16.msra.mxu0 0
        %5229 = vmatpush.bf16.msra.mxu0 %v5158
        %5230 = vmatpush.bf16.msra.mxu0 %v5111
        %5231 = vmatpush.bf16.msra.mxu0 %v5109
        %5232 = vmatpush.bf16.msra.mxu0 %v5107
        %5233 = vmatmul.bf16.gmra.mxu0 %v5152
        %v5234 = vpop.f32.mrf.mxu0
        %v5235 = vadd.f32 %v5222, %v5234
        %v5236 = vpop.f32.mrf.mxu0
        %5237 = vdwg.mxu0
        %v5238 = vadd.f32 %v4902, %v5196
        %v5239 = vadd.f32 %v4903, %v5235
        %s5240 = scalar_lea.vmem [#allocation2], 15
        %v5241 = vld [vmem:[%s5240] sm:$0x7]
        %s5242 = scalar_lea.vmem %s2941, 1600 [#allocation4]
        %v5243 = vld [vmem:[%s5242] sm:$0xff]
        %v5244 = vld [vmem:[%s5242 + $0x8] sm:$0xff]
        %v5245 = vld [vmem:[%s5242 + $0x10] sm:$0xff]
        %v5246 = vld [vmem:[%s5242 + $0x18] sm:$0xff]
        %v5247 = vld [vmem:[%s5242 + $0x20] sm:$0xff]
        %v5248 = vld [vmem:[%s5242 + $0x28] sm:$0xff]
        %v5249 = vld [vmem:[%s5242 + $0x30] sm:$0xff]
        %v5250 = vld [vmem:[%s5242 + $0x38] sm:$0xff]
        %v5251 = vld [vmem:[%s5242 + $0x40] sm:$0xff]
        %v5252 = vld [vmem:[%s5242 + $0x48] sm:$0xff]
        %v5253 = vld [vmem:[%s5242 + $0x50] sm:$0xff]
        %v5254 = vld [vmem:[%s5242 + $0x58] sm:$0xff]
        %v5255 = vld [vmem:[%s5242 + $0x60] sm:$0xff]
        %v5256 = vld [vmem:[%s5242 + $0x68] sm:$0xff]
        %v5257 = vld [vmem:[%s5242 + $0x70] sm:$0xff]
        %v5258 = vld [vmem:[%s5242 + $0x78] sm:$0xff]
        %v5259 = vld [vmem:[%s5242 + $0x80] sm:$0xff]
        %v5260 = vld [vmem:[%s5242 + $0x88] sm:$0xff]
        %v5261 = vld [vmem:[%s5242 + $0x90] sm:$0xff]
        %v5262 = vld [vmem:[%s5242 + $0x98] sm:$0xff]
        %v5263 = vld [vmem:[%s5242 + $0xa0] sm:$0xff]
        %v5264 = vld [vmem:[%s5242 + $0xa8] sm:$0xff]
        %v5265 = vld [vmem:[%s5242 + $0xb0] sm:$0xff]
        %v5266 = vld [vmem:[%s5242 + $0xb8] sm:$0xff]
        %v5267 = vld [vmem:[%s5242 + $0xc0] sm:$0xff]
        %v5268 = vld [vmem:[%s5242 + $0xc8] sm:$0xff]
        %v5269 = vld [vmem:[%s5242 + $0xd0] sm:$0xff]
        %v5270 = vld [vmem:[%s5242 + $0xd8] sm:$0xff]
        %v5271 = vld [vmem:[%s5242 + $0xe0] sm:$0xff]
        %v5272 = vld [vmem:[%s5242 + $0xe8] sm:$0xff]
        %v5273 = vld [vmem:[%s5242 + $0xf0] sm:$0xff]
        %v5274 = vld [vmem:[%s5242 + $0xf8] sm:$0xff]
        %v5275 = vld [vmem:[%s5242 + $0x100] sm:$0xff]
        %v5276 = vld [vmem:[%s5242 + $0x108] sm:$0xff]
        %v5277 = vld [vmem:[%s5242 + $0x110] sm:$0xff]
        %v5278 = vld [vmem:[%s5242 + $0x118] sm:$0xff]
        %v5279 = vld [vmem:[%s5242 + $0x120] sm:$0xff]
        %v5280 = vld [vmem:[%s5242 + $0x128] sm:$0xff]
        %v5281 = vld [vmem:[%s5242 + $0x130] sm:$0xff]
        %v5282 = vld [vmem:[%s5242 + $0x138] sm:$0x33]
        %5284 = vst [vmem:[#allocation1] ss:$9 sm:$0xff] %v5241
        %v5285 = vld [vmem:[#allocation1] sm:$0xff]
        %v5286 = vld [vmem:[#allocation1 + $0x9] sm:$0xff]
        %v5287 = vld [vmem:[#allocation1 + $0x12] sm:$0xff]
        %v5330 = vunpack.c.l.b16 %v5243
        %v5331 = vunpack.c.h.b16 %v5243
        %v5332 = vunpack.c.l.b16 %v5244
        %v5333 = vunpack.c.h.b16 %v5244
        %v5334 = vunpack.c.l.b16 %v5245
        %v5335 = vunpack.c.h.b16 %v5245
        %v5336 = vunpack.c.l.b16 %v5246
        %v5337 = vunpack.c.h.b16 %v5246
        %v5338 = vunpack.c.l.b16 %v5247
        %v5339 = vunpack.c.h.b16 %v5247
        %v5340 = vunpack.c.l.b16 %v5248
        %v5341 = vunpack.c.h.b16 %v5248
        %v5342 = vunpack.c.l.b16 %v5249
        %v5343 = vunpack.c.h.b16 %v5249
        %v5344 = vunpack.c.l.b16 %v5250
        %v5345 = vunpack.c.h.b16 %v5250
        %v5346 = vunpack.c.l.b16 %v5251
        %v5347 = vunpack.c.h.b16 %v5251
        %v5348 = vunpack.c.l.b16 %v5252
        %v5349 = vunpack.c.h.b16 %v5252
        %v5350 = vunpack.c.l.b16 %v5253
        %v5351 = vunpack.c.h.b16 %v5253
        %v5352 = vunpack.c.l.b16 %v5254
        %v5353 = vunpack.c.h.b16 %v5254
        %v5354 = vunpack.c.l.b16 %v5255
        %v5355 = vunpack.c.h.b16 %v5255
        %v5356 = vunpack.c.l.b16 %v5256
        %v5357 = vunpack.c.h.b16 %v5256
        %v5358 = vunpack.c.l.b16 %v5257
        %v5359 = vunpack.c.h.b16 %v5257
        %v5360 = vunpack.c.l.b16 %v5258
        %v5361 = vunpack.c.h.b16 %v5258
        %v5362 = vunpack.c.l.b16 %v5259
        %v5363 = vunpack.c.h.b16 %v5259
        %v5364 = vunpack.c.l.b16 %v5260
        %v5365 = vunpack.c.h.b16 %v5260
        %v5366 = vunpack.c.l.b16 %v5261
        %v5367 = vunpack.c.h.b16 %v5261
        %v5368 = vunpack.c.l.b16 %v5262
        %v5369 = vunpack.c.h.b16 %v5262
        %v5370 = vunpack.c.l.b16 %v5263
        %v5371 = vunpack.c.h.b16 %v5263
        %v5372 = vunpack.c.l.b16 %v5264
        %v5373 = vunpack.c.h.b16 %v5264
        %v5374 = vunpack.c.l.b16 %v5265
        %v5375 = vunpack.c.h.b16 %v5265
        %v5376 = vunpack.c.l.b16 %v5266
        %v5377 = vunpack.c.h.b16 %v5266
        %v5378 = vunpack.c.l.b16 %v5267
        %v5379 = vunpack.c.h.b16 %v5267
        %v5380 = vunpack.c.l.b16 %v5268
        %v5381 = vunpack.c.h.b16 %v5268
        %v5382 = vunpack.c.l.b16 %v5269
        %v5383 = vunpack.c.h.b16 %v5269
        %v5384 = vunpack.c.l.b16 %v5270
        %v5385 = vunpack.c.h.b16 %v5270
        %v5386 = vunpack.c.l.b16 %v5271
        %v5387 = vunpack.c.h.b16 %v5271
        %v5388 = vunpack.c.l.b16 %v5272
        %v5389 = vunpack.c.h.b16 %v5272
        %v5390 = vunpack.c.l.b16 %v5273
        %v5391 = vunpack.c.h.b16 %v5273
        %v5392 = vunpack.c.l.b16 %v5274
        %v5393 = vunpack.c.h.b16 %v5274
        %v5394 = vunpack.c.l.b16 %v5275
        %v5395 = vunpack.c.h.b16 %v5275
        %v5396 = vunpack.c.l.b16 %v5276
        %v5397 = vunpack.c.h.b16 %v5276
        %v5398 = vunpack.c.l.b16 %v5277
        %v5399 = vunpack.c.h.b16 %v5277
        %v5400 = vunpack.c.l.b16 %v5278
        %v5401 = vunpack.c.h.b16 %v5278
        %v5402 = vunpack.c.l.b16 %v5279
        %v5403 = vunpack.c.h.b16 %v5279
        %v5404 = vunpack.c.l.b16 %v5280
        %v5405 = vunpack.c.h.b16 %v5280
        %v5406 = vunpack.c.l.b16 %v5281
        %v5407 = vunpack.c.h.b16 %v5281
        %v5408 = vunpack.c.l.b16 %v5282
        %v5409 = vunpack.c.h.b16 %v5282
        %v5410 = vpack.c.b16 %v5332, %v5330
        %v5411 = vpack.c.b16 %v5333, %v5331
        %v5412 = vpack.c.b16 %v5336, %v5334
        %v5413 = vpack.c.b16 %v5337, %v5335
        %v5414 = vpack.c.b16 %v5340, %v5338
        %v5415 = vpack.c.b16 %v5341, %v5339
        %v5416 = vpack.c.b16 %v5344, %v5342
        %v5417 = vpack.c.b16 %v5345, %v5343
        %v5418 = vpack.c.b16 %v5348, %v5346
        %v5419 = vpack.c.b16 %v5349, %v5347
        %v5420 = vpack.c.b16 %v5352, %v5350
        %v5421 = vpack.c.b16 %v5353, %v5351
        %v5422 = vpack.c.b16 %v5356, %v5354
        %v5423 = vpack.c.b16 %v5357, %v5355
        %v5424 = vpack.c.b16 %v5360, %v5358
        %v5425 = vpack.c.b16 %v5361, %v5359
        %v5426 = vpack.c.b16 %v5364, %v5362
        %v5427 = vpack.c.b16 %v5365, %v5363
        %v5428 = vpack.c.b16 %v5368, %v5366
        %v5429 = vpack.c.b16 %v5369, %v5367
        %v5430 = vpack.c.b16 %v5372, %v5370
        %v5431 = vpack.c.b16 %v5373, %v5371
        %v5432 = vpack.c.b16 %v5376, %v5374
        %v5433 = vpack.c.b16 %v5377, %v5375
        %v5434 = vpack.c.b16 %v5380, %v5378
        %v5435 = vpack.c.b16 %v5381, %v5379
        %v5436 = vpack.c.b16 %v5384, %v5382
        %v5437 = vpack.c.b16 %v5385, %v5383
        %v5438 = vpack.c.b16 %v5388, %v5386
        %v5439 = vpack.c.b16 %v5389, %v5387
        %v5440 = vpack.c.b16 %v5392, %v5390
        %v5441 = vpack.c.b16 %v5393, %v5391
        %v5442 = vpack.c.b16 %v5396, %v5394
        %v5443 = vpack.c.b16 %v5397, %v5395
        %v5444 = vpack.c.b16 %v5400, %v5398
        %v5445 = vpack.c.b16 %v5401, %v5399
        %v5446 = vpack.c.b16 %v5404, %v5402
        %v5447 = vpack.c.b16 %v5405, %v5403
        %v5448 = vpack.c.b16 %v5408, %v5406
        %v5449 = vpack.c.b16 %v5409, %v5407
        %v5488 = vsel %vm3850, %v5287, 0
        %v5491 = vand.u32 %v5448, %v3856
        %v5494 = vand.u32 %v5449, %v3856
        %5496 = vmatpush.bf16.msra.mxu0 %v5424
        %5497 = vmatpush.bf16.msra.mxu0 %v5422
        %5498 = vmatpush.bf16.msra.mxu0 %v5420
        %5499 = vmatpush.bf16.msra.mxu0 %v5418
        %5500 = vmatpush.bf16.msra.mxu0 %v5416
        %5501 = vmatpush.bf16.msra.mxu0 %v5414
        %5502 = vmatpush.bf16.msra.mxu0 %v5412
        %5503 = vmatpush.bf16.msra.mxu0 %v5410
        %5504 = vmatmul.bf16.gmra.mxu0 %v5285
        %v5505 = vpop.f32.mrf.mxu0
        %v5506 = vadd.f32 0.0, %v5505
        %v5507 = vpop.f32.mrf.mxu0
        %5508 = vdwg.mxu0
        %5509 = vmatpush.bf16.msra.mxu0 %v5440
        %5510 = vmatpush.bf16.msra.mxu0 %v5438
        %5511 = vmatpush.bf16.msra.mxu0 %v5436
        %5512 = vmatpush.bf16.msra.mxu0 %v5434
        %5513 = vmatpush.bf16.msra.mxu0 %v5432
        %5514 = vmatpush.bf16.msra.mxu0 %v5430
        %5515 = vmatpush.bf16.msra.mxu0 %v5428
        %5516 = vmatpush.bf16.msra.mxu0 %v5426
        %5517 = vmatmul.bf16.gmra.mxu0 %v5286
        %v5518 = vpop.f32.mrf.mxu0
        %v5519 = vadd.f32 %v5506, %v5518
        %v5520 = vpop.f32.mrf.mxu0
        %5521 = vdwg.mxu0
        %5522 = vmatpush.bf16.msra.mxu0 0
        %5523 = vmatpush.bf16.msra.mxu0 0
        %5524 = vmatpush.bf16.msra.mxu0 0
        %5525 = vmatpush.bf16.msra.mxu0 0
        %5526 = vmatpush.bf16.msra.mxu0 %v5491
        %5527 = vmatpush.bf16.msra.mxu0 %v5446
        %5528 = vmatpush.bf16.msra.mxu0 %v5444
        %5529 = vmatpush.bf16.msra.mxu0 %v5442
        %5530 = vmatmul.bf16.gmra.mxu0 %v5488
        %v5531 = vpop.f32.mrf.mxu0
        %v5532 = vadd.f32 %v5519, %v5531
        %v5533 = vpop.f32.mrf.mxu0
        %5534 = vdwg.mxu0
        %5535 = vmatpush.bf16.msra.mxu0 %v5425
        %5536 = vmatpush.bf16.msra.mxu0 %v5423
        %5537 = vmatpush.bf16.msra.mxu0 %v5421
        %5538 = vmatpush.bf16.msra.mxu0 %v5419
        %5539 = vmatpush.bf16.msra.mxu0 %v5417
        %5540 = vmatpush.bf16.msra.mxu0 %v5415
        %5541 = vmatpush.bf16.msra.mxu0 %v5413
        %5542 = vmatpush.bf16.msra.mxu0 %v5411
        %5543 = vmatmul.bf16.gmra.mxu0 %v5285
        %v5544 = vpop.f32.mrf.mxu0
        %v5545 = vadd.f32 0.0, %v5544
        %v5546 = vpop.f32.mrf.mxu0
        %5547 = vdwg.mxu0
        %5548 = vmatpush.bf16.msra.mxu0 %v5441
        %5549 = vmatpush.bf16.msra.mxu0 %v5439
        %5550 = vmatpush.bf16.msra.mxu0 %v5437
        %5551 = vmatpush.bf16.msra.mxu0 %v5435
        %5552 = vmatpush.bf16.msra.mxu0 %v5433
        %5553 = vmatpush.bf16.msra.mxu0 %v5431
        %5554 = vmatpush.bf16.msra.mxu0 %v5429
        %5555 = vmatpush.bf16.msra.mxu0 %v5427
        %5556 = vmatmul.bf16.gmra.mxu0 %v5286
        %v5557 = vpop.f32.mrf.mxu0
        %v5558 = vadd.f32 %v5545, %v5557
        %v5559 = vpop.f32.mrf.mxu0
        %5560 = vdwg.mxu0
        %5561 = vmatpush.bf16.msra.mxu0 0
        %5562 = vmatpush.bf16.msra.mxu0 0
        %5563 = vmatpush.bf16.msra.mxu0 0
        %5564 = vmatpush.bf16.msra.mxu0 0
        %5565 = vmatpush.bf16.msra.mxu0 %v5494
        %5566 = vmatpush.bf16.msra.mxu0 %v5447
        %5567 = vmatpush.bf16.msra.mxu0 %v5445
        %5568 = vmatpush.bf16.msra.mxu0 %v5443
        %5569 = vmatmul.bf16.gmra.mxu0 %v5488
        %v5570 = vpop.f32.mrf.mxu0
        %v5571 = vadd.f32 %v5558, %v5570
        %v5572 = vpop.f32.mrf.mxu0
        %5573 = vdwg.mxu0
        %v5574 = vadd.f32 %v5238, %v5532
        %v5575 = vadd.f32 %v5239, %v5571
        %s5576 = scalar_lea.vmem [#allocation2], 18
        %v5577 = vld [vmem:[%s5576] sm:$0x7]
        %s5578 = scalar_lea.vmem %s2941, 1920 [#allocation4]
        %v5579 = vld [vmem:[%s5578] sm:$0xff]
        %v5580 = vld [vmem:[%s5578 + $0x8] sm:$0xff]
        %v5581 = vld [vmem:[%s5578 + $0x10] sm:$0xff]
        %v5582 = vld [vmem:[%s5578 + $0x18] sm:$0xff]
        %v5583 = vld [vmem:[%s5578 + $0x20] sm:$0xff]
        %v5584 = vld [vmem:[%s5578 + $0x28] sm:$0xff]
        %v5585 = vld [vmem:[%s5578 + $0x30] sm:$0xff]
        %v5586 = vld [vmem:[%s5578 + $0x38] sm:$0xff]
        %v5587 = vld [vmem:[%s5578 + $0x40] sm:$0xff]
        %v5588 = vld [vmem:[%s5578 + $0x48] sm:$0xff]
        %v5589 = vld [vmem:[%s5578 + $0x50] sm:$0xff]
        %v5590 = vld [vmem:[%s5578 + $0x58] sm:$0xff]
        %v5591 = vld [vmem:[%s5578 + $0x60] sm:$0xff]
        %v5592 = vld [vmem:[%s5578 + $0x68] sm:$0xff]
        %v5593 = vld [vmem:[%s5578 + $0x70] sm:$0xff]
        %v5594 = vld [vmem:[%s5578 + $0x78] sm:$0xff]
        %v5595 = vld [vmem:[%s5578 + $0x80] sm:$0xff]
        %v5596 = vld [vmem:[%s5578 + $0x88] sm:$0xff]
        %v5597 = vld [vmem:[%s5578 + $0x90] sm:$0xff]
        %v5598 = vld [vmem:[%s5578 + $0x98] sm:$0xff]
        %v5599 = vld [vmem:[%s5578 + $0xa0] sm:$0xff]
        %v5600 = vld [vmem:[%s5578 + $0xa8] sm:$0xff]
        %v5601 = vld [vmem:[%s5578 + $0xb0] sm:$0xff]
        %v5602 = vld [vmem:[%s5578 + $0xb8] sm:$0xff]
        %v5603 = vld [vmem:[%s5578 + $0xc0] sm:$0xff]
        %v5604 = vld [vmem:[%s5578 + $0xc8] sm:$0xff]
        %v5605 = vld [vmem:[%s5578 + $0xd0] sm:$0xff]
        %v5606 = vld [vmem:[%s5578 + $0xd8] sm:$0xff]
        %v5607 = vld [vmem:[%s5578 + $0xe0] sm:$0xff]
        %v5608 = vld [vmem:[%s5578 + $0xe8] sm:$0xff]
        %v5609 = vld [vmem:[%s5578 + $0xf0] sm:$0xff]
        %v5610 = vld [vmem:[%s5578 + $0xf8] sm:$0xff]
        %v5611 = vld [vmem:[%s5578 + $0x100] sm:$0xff]
        %v5612 = vld [vmem:[%s5578 + $0x108] sm:$0xff]
        %v5613 = vld [vmem:[%s5578 + $0x110] sm:$0xff]
        %v5614 = vld [vmem:[%s5578 + $0x118] sm:$0xff]
        %v5615 = vld [vmem:[%s5578 + $0x120] sm:$0xff]
        %v5616 = vld [vmem:[%s5578 + $0x128] sm:$0xff]
        %v5617 = vld [vmem:[%s5578 + $0x130] sm:$0xff]
        %v5618 = vld [vmem:[%s5578 + $0x138] sm:$0x33]
        %5620 = vst [vmem:[#allocation1] ss:$9 sm:$0xff] %v5577
        %v5621 = vld [vmem:[#allocation1] sm:$0xff]
        %v5622 = vld [vmem:[#allocation1 + $0x9] sm:$0xff]
        %v5623 = vld [vmem:[#allocation1 + $0x12] sm:$0xff]
        %v5666 = vunpack.c.l.b16 %v5579
        %v5667 = vunpack.c.h.b16 %v5579
        %v5668 = vunpack.c.l.b16 %v5580
        %v5669 = vunpack.c.h.b16 %v5580
        %v5670 = vunpack.c.l.b16 %v5581
        %v5671 = vunpack.c.h.b16 %v5581
        %v5672 = vunpack.c.l.b16 %v5582
        %v5673 = vunpack.c.h.b16 %v5582
        %v5674 = vunpack.c.l.b16 %v5583
        %v5675 = vunpack.c.h.b16 %v5583
        %v5676 = vunpack.c.l.b16 %v5584
        %v5677 = vunpack.c.h.b16 %v5584
        %v5678 = vunpack.c.l.b16 %v5585
        %v5679 = vunpack.c.h.b16 %v5585
        %v5680 = vunpack.c.l.b16 %v5586
        %v5681 = vunpack.c.h.b16 %v5586
        %v5682 = vunpack.c.l.b16 %v5587
        %v5683 = vunpack.c.h.b16 %v5587
        %v5684 = vunpack.c.l.b16 %v5588
        %v5685 = vunpack.c.h.b16 %v5588
        %v5686 = vunpack.c.l.b16 %v5589
        %v5687 = vunpack.c.h.b16 %v5589
        %v5688 = vunpack.c.l.b16 %v5590
        %v5689 = vunpack.c.h.b16 %v5590
        %v5690 = vunpack.c.l.b16 %v5591
        %v5691 = vunpack.c.h.b16 %v5591
        %v5692 = vunpack.c.l.b16 %v5592
        %v5693 = vunpack.c.h.b16 %v5592
        %v5694 = vunpack.c.l.b16 %v5593
        %v5695 = vunpack.c.h.b16 %v5593
        %v5696 = vunpack.c.l.b16 %v5594
        %v5697 = vunpack.c.h.b16 %v5594
        %v5698 = vunpack.c.l.b16 %v5595
        %v5699 = vunpack.c.h.b16 %v5595
        %v5700 = vunpack.c.l.b16 %v5596
        %v5701 = vunpack.c.h.b16 %v5596
        %v5702 = vunpack.c.l.b16 %v5597
        %v5703 = vunpack.c.h.b16 %v5597
        %v5704 = vunpack.c.l.b16 %v5598
        %v5705 = vunpack.c.h.b16 %v5598
        %v5706 = vunpack.c.l.b16 %v5599
        %v5707 = vunpack.c.h.b16 %v5599
        %v5708 = vunpack.c.l.b16 %v5600
        %v5709 = vunpack.c.h.b16 %v5600
        %v5710 = vunpack.c.l.b16 %v5601
        %v5711 = vunpack.c.h.b16 %v5601
        %v5712 = vunpack.c.l.b16 %v5602
        %v5713 = vunpack.c.h.b16 %v5602
        %v5714 = vunpack.c.l.b16 %v5603
        %v5715 = vunpack.c.h.b16 %v5603
        %v5716 = vunpack.c.l.b16 %v5604
        %v5717 = vunpack.c.h.b16 %v5604
        %v5718 = vunpack.c.l.b16 %v5605
        %v5719 = vunpack.c.h.b16 %v5605
        %v5720 = vunpack.c.l.b16 %v5606
        %v5721 = vunpack.c.h.b16 %v5606
        %v5722 = vunpack.c.l.b16 %v5607
        %v5723 = vunpack.c.h.b16 %v5607
        %v5724 = vunpack.c.l.b16 %v5608
        %v5725 = vunpack.c.h.b16 %v5608
        %v5726 = vunpack.c.l.b16 %v5609
        %v5727 = vunpack.c.h.b16 %v5609
        %v5728 = vunpack.c.l.b16 %v5610
        %v5729 = vunpack.c.h.b16 %v5610
        %v5730 = vunpack.c.l.b16 %v5611
        %v5731 = vunpack.c.h.b16 %v5611
        %v5732 = vunpack.c.l.b16 %v5612
        %v5733 = vunpack.c.h.b16 %v5612
        %v5734 = vunpack.c.l.b16 %v5613
        %v5735 = vunpack.c.h.b16 %v5613
        %v5736 = vunpack.c.l.b16 %v5614
        %v5737 = vunpack.c.h.b16 %v5614
        %v5738 = vunpack.c.l.b16 %v5615
        %v5739 = vunpack.c.h.b16 %v5615
        %v5740 = vunpack.c.l.b16 %v5616
        %v5741 = vunpack.c.h.b16 %v5616
        %v5742 = vunpack.c.l.b16 %v5617
        %v5743 = vunpack.c.h.b16 %v5617
        %v5744 = vunpack.c.l.b16 %v5618
        %v5745 = vunpack.c.h.b16 %v5618
        %v5746 = vpack.c.b16 %v5668, %v5666
        %v5747 = vpack.c.b16 %v5669, %v5667
        %v5748 = vpack.c.b16 %v5672, %v5670
        %v5749 = vpack.c.b16 %v5673, %v5671
        %v5750 = vpack.c.b16 %v5676, %v5674
        %v5751 = vpack.c.b16 %v5677, %v5675
        %v5752 = vpack.c.b16 %v5680, %v5678
        %v5753 = vpack.c.b16 %v5681, %v5679
        %v5754 = vpack.c.b16 %v5684, %v5682
        %v5755 = vpack.c.b16 %v5685, %v5683
        %v5756 = vpack.c.b16 %v5688, %v5686
        %v5757 = vpack.c.b16 %v5689, %v5687
        %v5758 = vpack.c.b16 %v5692, %v5690
        %v5759 = vpack.c.b16 %v5693, %v5691
        %v5760 = vpack.c.b16 %v5696, %v5694
        %v5761 = vpack.c.b16 %v5697, %v5695
        %v5762 = vpack.c.b16 %v5700, %v5698
        %v5763 = vpack.c.b16 %v5701, %v5699
        %v5764 = vpack.c.b16 %v5704, %v5702
        %v5765 = vpack.c.b16 %v5705, %v5703
        %v5766 = vpack.c.b16 %v5708, %v5706
        %v5767 = vpack.c.b16 %v5709, %v5707
        %v5768 = vpack.c.b16 %v5712, %v5710
        %v5769 = vpack.c.b16 %v5713, %v5711
        %v5770 = vpack.c.b16 %v5716, %v5714
        %v5771 = vpack.c.b16 %v5717, %v5715
        %v5772 = vpack.c.b16 %v5720, %v5718
        %v5773 = vpack.c.b16 %v5721, %v5719
        %v5774 = vpack.c.b16 %v5724, %v5722
        %v5775 = vpack.c.b16 %v5725, %v5723
        %v5776 = vpack.c.b16 %v5728, %v5726
        %v5777 = vpack.c.b16 %v5729, %v5727
        %v5778 = vpack.c.b16 %v5732, %v5730
        %v5779 = vpack.c.b16 %v5733, %v5731
        %v5780 = vpack.c.b16 %v5736, %v5734
        %v5781 = vpack.c.b16 %v5737, %v5735
        %v5782 = vpack.c.b16 %v5740, %v5738
        %v5783 = vpack.c.b16 %v5741, %v5739
        %v5784 = vpack.c.b16 %v5744, %v5742
        %v5785 = vpack.c.b16 %v5745, %v5743
        %v5824 = vsel %vm3850, %v5623, 0
        %v5827 = vand.u32 %v5784, %v3856
        %v5830 = vand.u32 %v5785, %v3856
        %5832 = vmatpush.bf16.msra.mxu0 %v5760
        %5833 = vmatpush.bf16.msra.mxu0 %v5758
        %5834 = vmatpush.bf16.msra.mxu0 %v5756
        %5835 = vmatpush.bf16.msra.mxu0 %v5754
        %5836 = vmatpush.bf16.msra.mxu0 %v5752
        %5837 = vmatpush.bf16.msra.mxu0 %v5750
        %5838 = vmatpush.bf16.msra.mxu0 %v5748
        %5839 = vmatpush.bf16.msra.mxu0 %v5746
        %5840 = vmatmul.bf16.gmra.mxu0 %v5621
        %v5841 = vpop.f32.mrf.mxu0
        %v5842 = vadd.f32 0.0, %v5841
        %v5843 = vpop.f32.mrf.mxu0
        %5844 = vdwg.mxu0
        %5845 = vmatpush.bf16.msra.mxu0 %v5776
        %5846 = vmatpush.bf16.msra.mxu0 %v5774
        %5847 = vmatpush.bf16.msra.mxu0 %v5772
        %5848 = vmatpush.bf16.msra.mxu0 %v5770
        %5849 = vmatpush.bf16.msra.mxu0 %v5768
        %5850 = vmatpush.bf16.msra.mxu0 %v5766
        %5851 = vmatpush.bf16.msra.mxu0 %v5764
        %5852 = vmatpush.bf16.msra.mxu0 %v5762
        %5853 = vmatmul.bf16.gmra.mxu0 %v5622
        %v5854 = vpop.f32.mrf.mxu0
        %v5855 = vadd.f32 %v5842, %v5854
        %v5856 = vpop.f32.mrf.mxu0
        %5857 = vdwg.mxu0
        %5858 = vmatpush.bf16.msra.mxu0 0
        %5859 = vmatpush.bf16.msra.mxu0 0
        %5860 = vmatpush.bf16.msra.mxu0 0
        %5861 = vmatpush.bf16.msra.mxu0 0
        %5862 = vmatpush.bf16.msra.mxu0 %v5827
        %5863 = vmatpush.bf16.msra.mxu0 %v5782
        %5864 = vmatpush.bf16.msra.mxu0 %v5780
        %5865 = vmatpush.bf16.msra.mxu0 %v5778
        %5866 = vmatmul.bf16.gmra.mxu0 %v5824
        %v5867 = vpop.f32.mrf.mxu0
        %v5868 = vadd.f32 %v5855, %v5867
        %v5869 = vpop.f32.mrf.mxu0
        %5870 = vdwg.mxu0
        %5871 = vmatpush.bf16.msra.mxu0 %v5761
        %5872 = vmatpush.bf16.msra.mxu0 %v5759
        %5873 = vmatpush.bf16.msra.mxu0 %v5757
        %5874 = vmatpush.bf16.msra.mxu0 %v5755
        %5875 = vmatpush.bf16.msra.mxu0 %v5753
        %5876 = vmatpush.bf16.msra.mxu0 %v5751
        %5877 = vmatpush.bf16.msra.mxu0 %v5749
        %5878 = vmatpush.bf16.msra.mxu0 %v5747
        %5879 = vmatmul.bf16.gmra.mxu0 %v5621
        %v5880 = vpop.f32.mrf.mxu0
        %v5881 = vadd.f32 0.0, %v5880
        %v5882 = vpop.f32.mrf.mxu0
        %5883 = vdwg.mxu0
        %5884 = vmatpush.bf16.msra.mxu0 %v5777
        %5885 = vmatpush.bf16.msra.mxu0 %v5775
        %5886 = vmatpush.bf16.msra.mxu0 %v5773
        %5887 = vmatpush.bf16.msra.mxu0 %v5771
        %5888 = vmatpush.bf16.msra.mxu0 %v5769
        %5889 = vmatpush.bf16.msra.mxu0 %v5767
        %5890 = vmatpush.bf16.msra.mxu0 %v5765
        %5891 = vmatpush.bf16.msra.mxu0 %v5763
        %5892 = vmatmul.bf16.gmra.mxu0 %v5622
        %v5893 = vpop.f32.mrf.mxu0
        %v5894 = vadd.f32 %v5881, %v5893
        %v5895 = vpop.f32.mrf.mxu0
        %5896 = vdwg.mxu0
        %5897 = vmatpush.bf16.msra.mxu0 0
        %5898 = vmatpush.bf16.msra.mxu0 0
        %5899 = vmatpush.bf16.msra.mxu0 0
        %5900 = vmatpush.bf16.msra.mxu0 0
        %5901 = vmatpush.bf16.msra.mxu0 %v5830
        %5902 = vmatpush.bf16.msra.mxu0 %v5783
        %5903 = vmatpush.bf16.msra.mxu0 %v5781
        %5904 = vmatpush.bf16.msra.mxu0 %v5779
        %5905 = vmatmul.bf16.gmra.mxu0 %v5824
        %v5906 = vpop.f32.mrf.mxu0
        %v5907 = vadd.f32 %v5894, %v5906
        %v5908 = vpop.f32.mrf.mxu0
        %5909 = vdwg.mxu0
        %v5910 = vadd.f32 %v5574, %v5868
        %v5911 = vadd.f32 %v5575, %v5907
        %s5912 = scalar_lea.vmem [#allocation2], 21
        %v5913 = vld [vmem:[%s5912] sm:$0x7]
        %s5914 = scalar_lea.vmem %s2941, 2240 [#allocation4]
        %v5915 = vld [vmem:[%s5914] sm:$0xff]
        %v5916 = vld [vmem:[%s5914 + $0x8] sm:$0xff]
        %v5917 = vld [vmem:[%s5914 + $0x10] sm:$0xff]
        %v5918 = vld [vmem:[%s5914 + $0x18] sm:$0xff]
        %v5919 = vld [vmem:[%s5914 + $0x20] sm:$0xff]
        %v5920 = vld [vmem:[%s5914 + $0x28] sm:$0xff]
        %v5921 = vld [vmem:[%s5914 + $0x30] sm:$0xff]
        %v5922 = vld [vmem:[%s5914 + $0x38] sm:$0xff]
        %v5923 = vld [vmem:[%s5914 + $0x40] sm:$0xff]
        %v5924 = vld [vmem:[%s5914 + $0x48] sm:$0xff]
        %v5925 = vld [vmem:[%s5914 + $0x50] sm:$0xff]
        %v5926 = vld [vmem:[%s5914 + $0x58] sm:$0xff]
        %v5927 = vld [vmem:[%s5914 + $0x60] sm:$0xff]
        %v5928 = vld [vmem:[%s5914 + $0x68] sm:$0xff]
        %v5929 = vld [vmem:[%s5914 + $0x70] sm:$0xff]
        %v5930 = vld [vmem:[%s5914 + $0x78] sm:$0xff]
        %v5931 = vld [vmem:[%s5914 + $0x80] sm:$0xff]
        %v5932 = vld [vmem:[%s5914 + $0x88] sm:$0xff]
        %v5933 = vld [vmem:[%s5914 + $0x90] sm:$0xff]
        %v5934 = vld [vmem:[%s5914 + $0x98] sm:$0xff]
        %v5935 = vld [vmem:[%s5914 + $0xa0] sm:$0xff]
        %v5936 = vld [vmem:[%s5914 + $0xa8] sm:$0xff]
        %v5937 = vld [vmem:[%s5914 + $0xb0] sm:$0xff]
        %v5938 = vld [vmem:[%s5914 + $0xb8] sm:$0xff]
        %v5939 = vld [vmem:[%s5914 + $0xc0] sm:$0xff]
        %v5940 = vld [vmem:[%s5914 + $0xc8] sm:$0xff]
        %v5941 = vld [vmem:[%s5914 + $0xd0] sm:$0xff]
        %v5942 = vld [vmem:[%s5914 + $0xd8] sm:$0xff]
        %v5943 = vld [vmem:[%s5914 + $0xe0] sm:$0xff]
        %v5944 = vld [vmem:[%s5914 + $0xe8] sm:$0xff]
        %v5945 = vld [vmem:[%s5914 + $0xf0] sm:$0xff]
        %v5946 = vld [vmem:[%s5914 + $0xf8] sm:$0xff]
        %v5947 = vld [vmem:[%s5914 + $0x100] sm:$0xff]
        %v5948 = vld [vmem:[%s5914 + $0x108] sm:$0xff]
        %v5949 = vld [vmem:[%s5914 + $0x110] sm:$0xff]
        %v5950 = vld [vmem:[%s5914 + $0x118] sm:$0xff]
        %v5951 = vld [vmem:[%s5914 + $0x120] sm:$0xff]
        %v5952 = vld [vmem:[%s5914 + $0x128] sm:$0xff]
        %v5953 = vld [vmem:[%s5914 + $0x130] sm:$0xff]
        %v5954 = vld [vmem:[%s5914 + $0x138] sm:$0x33]
        %5956 = vst [vmem:[#allocation1] ss:$9 sm:$0xff] %v5913
        %v5957 = vld [vmem:[#allocation1] sm:$0xff]
        %v5958 = vld [vmem:[#allocation1 + $0x9] sm:$0xff]
        %v5959 = vld [vmem:[#allocation1 + $0x12] sm:$0xff]
        %v6002 = vunpack.c.l.b16 %v5915
        %v6003 = vunpack.c.h.b16 %v5915
        %v6004 = vunpack.c.l.b16 %v5916
        %v6005 = vunpack.c.h.b16 %v5916
        %v6006 = vunpack.c.l.b16 %v5917
        %v6007 = vunpack.c.h.b16 %v5917
        %v6008 = vunpack.c.l.b16 %v5918
        %v6009 = vunpack.c.h.b16 %v5918
        %v6010 = vunpack.c.l.b16 %v5919
        %v6011 = vunpack.c.h.b16 %v5919
        %v6012 = vunpack.c.l.b16 %v5920
        %v6013 = vunpack.c.h.b16 %v5920
        %v6014 = vunpack.c.l.b16 %v5921
        %v6015 = vunpack.c.h.b16 %v5921
        %v6016 = vunpack.c.l.b16 %v5922
        %v6017 = vunpack.c.h.b16 %v5922
        %v6018 = vunpack.c.l.b16 %v5923
        %v6019 = vunpack.c.h.b16 %v5923
        %v6020 = vunpack.c.l.b16 %v5924
        %v6021 = vunpack.c.h.b16 %v5924
        %v6022 = vunpack.c.l.b16 %v5925
        %v6023 = vunpack.c.h.b16 %v5925
        %v6024 = vunpack.c.l.b16 %v5926
        %v6025 = vunpack.c.h.b16 %v5926
        %v6026 = vunpack.c.l.b16 %v5927
        %v6027 = vunpack.c.h.b16 %v5927
        %v6028 = vunpack.c.l.b16 %v5928
        %v6029 = vunpack.c.h.b16 %v5928
        %v6030 = vunpack.c.l.b16 %v5929
        %v6031 = vunpack.c.h.b16 %v5929
        %v6032 = vunpack.c.l.b16 %v5930
        %v6033 = vunpack.c.h.b16 %v5930
        %v6034 = vunpack.c.l.b16 %v5931
        %v6035 = vunpack.c.h.b16 %v5931
        %v6036 = vunpack.c.l.b16 %v5932
        %v6037 = vunpack.c.h.b16 %v5932
        %v6038 = vunpack.c.l.b16 %v5933
        %v6039 = vunpack.c.h.b16 %v5933
        %v6040 = vunpack.c.l.b16 %v5934
        %v6041 = vunpack.c.h.b16 %v5934
        %v6042 = vunpack.c.l.b16 %v5935
        %v6043 = vunpack.c.h.b16 %v5935
        %v6044 = vunpack.c.l.b16 %v5936
        %v6045 = vunpack.c.h.b16 %v5936
        %v6046 = vunpack.c.l.b16 %v5937
        %v6047 = vunpack.c.h.b16 %v5937
        %v6048 = vunpack.c.l.b16 %v5938
        %v6049 = vunpack.c.h.b16 %v5938
        %v6050 = vunpack.c.l.b16 %v5939
        %v6051 = vunpack.c.h.b16 %v5939
        %v6052 = vunpack.c.l.b16 %v5940
        %v6053 = vunpack.c.h.b16 %v5940
        %v6054 = vunpack.c.l.b16 %v5941
        %v6055 = vunpack.c.h.b16 %v5941
        %v6056 = vunpack.c.l.b16 %v5942
        %v6057 = vunpack.c.h.b16 %v5942
        %v6058 = vunpack.c.l.b16 %v5943
        %v6059 = vunpack.c.h.b16 %v5943
        %v6060 = vunpack.c.l.b16 %v5944
        %v6061 = vunpack.c.h.b16 %v5944
        %v6062 = vunpack.c.l.b16 %v5945
        %v6063 = vunpack.c.h.b16 %v5945
        %v6064 = vunpack.c.l.b16 %v5946
        %v6065 = vunpack.c.h.b16 %v5946
        %v6066 = vunpack.c.l.b16 %v5947
        %v6067 = vunpack.c.h.b16 %v5947
        %v6068 = vunpack.c.l.b16 %v5948
        %v6069 = vunpack.c.h.b16 %v5948
        %v6070 = vunpack.c.l.b16 %v5949
        %v6071 = vunpack.c.h.b16 %v5949
        %v6072 = vunpack.c.l.b16 %v5950
        %v6073 = vunpack.c.h.b16 %v5950
        %v6074 = vunpack.c.l.b16 %v5951
        %v6075 = vunpack.c.h.b16 %v5951
        %v6076 = vunpack.c.l.b16 %v5952
        %v6077 = vunpack.c.h.b16 %v5952
        %v6078 = vunpack.c.l.b16 %v5953
        %v6079 = vunpack.c.h.b16 %v5953
        %v6080 = vunpack.c.l.b16 %v5954
        %v6081 = vunpack.c.h.b16 %v5954
        %v6082 = vpack.c.b16 %v6004, %v6002
        %v6083 = vpack.c.b16 %v6005, %v6003
        %v6084 = vpack.c.b16 %v6008, %v6006
        %v6085 = vpack.c.b16 %v6009, %v6007
        %v6086 = vpack.c.b16 %v6012, %v6010
        %v6087 = vpack.c.b16 %v6013, %v6011
        %v6088 = vpack.c.b16 %v6016, %v6014
        %v6089 = vpack.c.b16 %v6017, %v6015
        %v6090 = vpack.c.b16 %v6020, %v6018
        %v6091 = vpack.c.b16 %v6021, %v6019
        %v6092 = vpack.c.b16 %v6024, %v6022
        %v6093 = vpack.c.b16 %v6025, %v6023
        %v6094 = vpack.c.b16 %v6028, %v6026
        %v6095 = vpack.c.b16 %v6029, %v6027
        %v6096 = vpack.c.b16 %v6032, %v6030
        %v6097 = vpack.c.b16 %v6033, %v6031
        %v6098 = vpack.c.b16 %v6036, %v6034
        %v6099 = vpack.c.b16 %v6037, %v6035
        %v6100 = vpack.c.b16 %v6040, %v6038
        %v6101 = vpack.c.b16 %v6041, %v6039
        %v6102 = vpack.c.b16 %v6044, %v6042
        %v6103 = vpack.c.b16 %v6045, %v6043
        %v6104 = vpack.c.b16 %v6048, %v6046
        %v6105 = vpack.c.b16 %v6049, %v6047
        %v6106 = vpack.c.b16 %v6052, %v6050
        %v6107 = vpack.c.b16 %v6053, %v6051
        %v6108 = vpack.c.b16 %v6056, %v6054
        %v6109 = vpack.c.b16 %v6057, %v6055
        %v6110 = vpack.c.b16 %v6060, %v6058
        %v6111 = vpack.c.b16 %v6061, %v6059
        %v6112 = vpack.c.b16 %v6064, %v6062
        %v6113 = vpack.c.b16 %v6065, %v6063
        %v6114 = vpack.c.b16 %v6068, %v6066
        %v6115 = vpack.c.b16 %v6069, %v6067
        %v6116 = vpack.c.b16 %v6072, %v6070
        %v6117 = vpack.c.b16 %v6073, %v6071
        %v6118 = vpack.c.b16 %v6076, %v6074
        %v6119 = vpack.c.b16 %v6077, %v6075
        %v6120 = vpack.c.b16 %v6080, %v6078
        %v6121 = vpack.c.b16 %v6081, %v6079
        %v6160 = vsel %vm3850, %v5959, 0
        %v6163 = vand.u32 %v6120, %v3856
        %v6166 = vand.u32 %v6121, %v3856
        %6168 = vmatpush.bf16.msra.mxu0 %v6096
        %6169 = vmatpush.bf16.msra.mxu0 %v6094
        %6170 = vmatpush.bf16.msra.mxu0 %v6092
        %6171 = vmatpush.bf16.msra.mxu0 %v6090
        %6172 = vmatpush.bf16.msra.mxu0 %v6088
        %6173 = vmatpush.bf16.msra.mxu0 %v6086
        %6174 = vmatpush.bf16.msra.mxu0 %v6084
        %6175 = vmatpush.bf16.msra.mxu0 %v6082
        %6176 = vmatmul.bf16.gmra.mxu0 %v5957
        %v6177 = vpop.f32.mrf.mxu0
        %v6178 = vadd.f32 0.0, %v6177
        %v6179 = vpop.f32.mrf.mxu0
        %6180 = vdwg.mxu0
        %6181 = vmatpush.bf16.msra.mxu0 %v6112
        %6182 = vmatpush.bf16.msra.mxu0 %v6110
        %6183 = vmatpush.bf16.msra.mxu0 %v6108
        %6184 = vmatpush.bf16.msra.mxu0 %v6106
        %6185 = vmatpush.bf16.msra.mxu0 %v6104
        %6186 = vmatpush.bf16.msra.mxu0 %v6102
        %6187 = vmatpush.bf16.msra.mxu0 %v6100
        %6188 = vmatpush.bf16.msra.mxu0 %v6098
        %6189 = vmatmul.bf16.gmra.mxu0 %v5958
        %v6190 = vpop.f32.mrf.mxu0
        %v6191 = vadd.f32 %v6178, %v6190
        %v6192 = vpop.f32.mrf.mxu0
        %6193 = vdwg.mxu0
        %6194 = vmatpush.bf16.msra.mxu0 0
        %6195 = vmatpush.bf16.msra.mxu0 0
        %6196 = vmatpush.bf16.msra.mxu0 0
        %6197 = vmatpush.bf16.msra.mxu0 0
        %6198 = vmatpush.bf16.msra.mxu0 %v6163
        %6199 = vmatpush.bf16.msra.mxu0 %v6118
        %6200 = vmatpush.bf16.msra.mxu0 %v6116
        %6201 = vmatpush.bf16.msra.mxu0 %v6114
        %6202 = vmatmul.bf16.gmra.mxu0 %v6160
        %v6203 = vpop.f32.mrf.mxu0
        %v6204 = vadd.f32 %v6191, %v6203
        %v6205 = vpop.f32.mrf.mxu0
        %6206 = vdwg.mxu0
        %6207 = vmatpush.bf16.msra.mxu0 %v6097
        %6208 = vmatpush.bf16.msra.mxu0 %v6095
        %6209 = vmatpush.bf16.msra.mxu0 %v6093
        %6210 = vmatpush.bf16.msra.mxu0 %v6091
        %6211 = vmatpush.bf16.msra.mxu0 %v6089
        %6212 = vmatpush.bf16.msra.mxu0 %v6087
        %6213 = vmatpush.bf16.msra.mxu0 %v6085
        %6214 = vmatpush.bf16.msra.mxu0 %v6083
        %6215 = vmatmul.bf16.gmra.mxu0 %v5957
        %v6216 = vpop.f32.mrf.mxu0
        %v6217 = vadd.f32 0.0, %v6216
        %v6218 = vpop.f32.mrf.mxu0
        %6219 = vdwg.mxu0
        %6220 = vmatpush.bf16.msra.mxu0 %v6113
        %6221 = vmatpush.bf16.msra.mxu0 %v6111
        %6222 = vmatpush.bf16.msra.mxu0 %v6109
        %6223 = vmatpush.bf16.msra.mxu0 %v6107
        %6224 = vmatpush.bf16.msra.mxu0 %v6105
        %6225 = vmatpush.bf16.msra.mxu0 %v6103
        %6226 = vmatpush.bf16.msra.mxu0 %v6101
        %6227 = vmatpush.bf16.msra.mxu0 %v6099
        %6228 = vmatmul.bf16.gmra.mxu0 %v5958
        %v6229 = vpop.f32.mrf.mxu0
        %v6230 = vadd.f32 %v6217, %v6229
        %v6231 = vpop.f32.mrf.mxu0
        %6232 = vdwg.mxu0
        %6233 = vmatpush.bf16.msra.mxu0 0
        %6234 = vmatpush.bf16.msra.mxu0 0
        %6235 = vmatpush.bf16.msra.mxu0 0
        %6236 = vmatpush.bf16.msra.mxu0 0
        %6237 = vmatpush.bf16.msra.mxu0 %v6166
        %6238 = vmatpush.bf16.msra.mxu0 %v6119
        %6239 = vmatpush.bf16.msra.mxu0 %v6117
        %6240 = vmatpush.bf16.msra.mxu0 %v6115
        %6241 = vmatmul.bf16.gmra.mxu0 %v6160
        %v6242 = vpop.f32.mrf.mxu0
        %v6243 = vadd.f32 %v6230, %v6242
        %v6244 = vpop.f32.mrf.mxu0
        %6245 = vdwg.mxu0
        %v6246 = vadd.f32 %v5910, %v6204
        %v6247 = vadd.f32 %v5911, %v6243
        %v6248 = vld [vmem:[%s2983] sm:$0x3]
        %v6250 = vperm.slane %v6248, 0
        %v6251 = vperm.slane %v6248, 1
        %v6254 = vadd.f32 %v6246, %v6250
        %v6255 = vadd.f32 %v6247, %v6251
        %v6256 = vmax.f32 %v6254, 0.0
        %v6257 = vmax.f32 %v6255, 0.0
        %v6258 = vpack.c.bf16 %v6256, %v6256
        %v6259 = vpack.c.bf16 %v6257, %v6257
        %v6260 = vld [vmem:[#allocation3] sm:$0xff]
        %v6261 = vld [vmem:[#allocation3 + $0x8] sm:$0xff]
        %v6262 = vld [vmem:[%s2990] sm:$0xff]
        %v6263 = vld [vmem:[%s2990 + $0x8] sm:$0xff]
        %v6264 = vld [vmem:[%s2990 + $0x10] sm:$0xff]
        %v6265 = vld [vmem:[%s2990 + $0x18] sm:$0xff]
        %v6266 = vld [vmem:[%s2990 + $0x20] sm:$0xff]
        %v6267 = vld [vmem:[%s2990 + $0x28] sm:$0xff]
        %v6268 = vld [vmem:[%s2990 + $0x30] sm:$0xff]
        %v6269 = vld [vmem:[%s2990 + $0x38] sm:$0xff]
        %v6270 = vld [vmem:[%s2990 + $0x40] sm:$0xff]
        %v6271 = vld [vmem:[%s2990 + $0x48] sm:$0xff]
        %v6272 = vld [vmem:[%s2990 + $0x50] sm:$0xff]
        %v6273 = vld [vmem:[%s2990 + $0x58] sm:$0xff]
        %v6274 = vld [vmem:[%s2990 + $0x60] sm:$0xff]
        %v6275 = vld [vmem:[%s2990 + $0x68] sm:$0xff]
        %v6276 = vld [vmem:[%s2990 + $0x70] sm:$0xff]
        %v6277 = vld [vmem:[%s2990 + $0x78] sm:$0xff]
        %v6278 = vld [vmem:[%s2990 + $0x80] sm:$0xff]
        %v6279 = vld [vmem:[%s2990 + $0x88] sm:$0xff]
        %v6280 = vld [vmem:[%s2990 + $0x90] sm:$0xff]
        %v6281 = vld [vmem:[%s2990 + $0x98] sm:$0xff]
        %v6282 = vld [vmem:[%s2990 + $0xa0] sm:$0xff]
        %v6283 = vld [vmem:[%s2990 + $0xa8] sm:$0xff]
        %v6284 = vld [vmem:[%s2990 + $0xb0] sm:$0xff]
        %v6285 = vld [vmem:[%s2990 + $0xb8] sm:$0xff]
        %v6286 = vld [vmem:[%s2990 + $0xc0] sm:$0xff]
        %v6287 = vld [vmem:[%s2990 + $0xc8] sm:$0xff]
        %v6288 = vld [vmem:[%s2990 + $0xd0] sm:$0xff]
        %v6289 = vld [vmem:[%s2990 + $0xd8] sm:$0xff]
        %v6290 = vld [vmem:[%s2990 + $0xe0] sm:$0xff]
        %v6291 = vld [vmem:[%s2990 + $0xe8] sm:$0xff]
        %v6292 = vld [vmem:[%s2990 + $0xf0] sm:$0xff]
        %v6293 = vld [vmem:[%s2990 + $0xf8] sm:$0xff]
        %v6294 = vld [vmem:[%s2990 + $0x100] sm:$0xff]
        %v6295 = vld [vmem:[%s2990 + $0x108] sm:$0xff]
        %v6296 = vld [vmem:[%s2990 + $0x110] sm:$0xff]
        %v6297 = vld [vmem:[%s2990 + $0x118] sm:$0xff]
        %v6298 = vld [vmem:[%s2990 + $0x120] sm:$0xff]
        %v6299 = vld [vmem:[%s2990 + $0x128] sm:$0xff]
        %v6300 = vld [vmem:[%s2990 + $0x130] sm:$0xff]
        %v6301 = vld [vmem:[%s2990 + $0x138] sm:$0xff]
        %v6302 = vld [vmem:[%s2990 + $0x140] sm:$0xff]
        %v6303 = vld [vmem:[%s2990 + $0x148] sm:$0xff]
        %v6304 = vld [vmem:[%s2990 + $0x150] sm:$0xff]
        %v6305 = vld [vmem:[%s2990 + $0x158] sm:$0xff]
        %v6306 = vld [vmem:[%s2990 + $0x160] sm:$0xff]
        %v6307 = vld [vmem:[%s2990 + $0x168] sm:$0xff]
        %v6308 = vld [vmem:[%s2990 + $0x170] sm:$0xff]
        %v6309 = vld [vmem:[%s2990 + $0x178] sm:$0xff]
        %v6310 = vld [vmem:[%s2990 + $0x180] sm:$0xff]
        %v6311 = vld [vmem:[%s2990 + $0x188] sm:$0xff]
        %v6312 = vld [vmem:[%s2990 + $0x190] sm:$0xff]
        %v6313 = vld [vmem:[%s2990 + $0x198] sm:$0xff]
        %v6314 = vld [vmem:[%s2990 + $0x1a0] sm:$0xff]
        %v6315 = vld [vmem:[%s2990 + $0x1a8] sm:$0xff]
        %v6316 = vld [vmem:[%s2990 + $0x1b0] sm:$0xff]
        %v6317 = vld [vmem:[%s2990 + $0x1b8] sm:$0xff]
        %v6318 = vld [vmem:[%s2990 + $0x1c0] sm:$0xff]
        %v6319 = vld [vmem:[%s2990 + $0x1c8] sm:$0xff]
        %v6320 = vld [vmem:[%s2990 + $0x1d0] sm:$0xff]
        %v6321 = vld [vmem:[%s2990 + $0x1d8] sm:$0xff]
        %v6322 = vld [vmem:[%s2990 + $0x1e0] sm:$0xff]
        %v6323 = vld [vmem:[%s2990 + $0x1e8] sm:$0xff]
        %v6324 = vld [vmem:[%s2990 + $0x1f0] sm:$0xff]
        %v6325 = vld [vmem:[%s2990 + $0x1f8] sm:$0xff]
        %v6326 = vld [vmem:[%s2990 + $0x200] sm:$0xff]
        %v6327 = vld [vmem:[%s2990 + $0x208] sm:$0xff]
        %v6328 = vld [vmem:[%s2990 + $0x210] sm:$0xff]
        %v6329 = vld [vmem:[%s2990 + $0x218] sm:$0xff]
        %v6330 = vld [vmem:[%s2990 + $0x220] sm:$0xff]
        %v6331 = vld [vmem:[%s2990 + $0x228] sm:$0xff]
        %v6332 = vld [vmem:[%s2990 + $0x230] sm:$0xff]
        %v6333 = vld [vmem:[%s2990 + $0x238] sm:$0xff]
        %v6334 = vld [vmem:[%s2990 + $0x240] sm:$0xff]
        %v6335 = vld [vmem:[%s2990 + $0x248] sm:$0xff]
        %v6336 = vld [vmem:[%s2990 + $0x250] sm:$0xff]
        %v6337 = vld [vmem:[%s2990 + $0x258] sm:$0xff]
        %v6338 = vld [vmem:[%s2990 + $0x260] sm:$0xff]
        %v6339 = vld [vmem:[%s2990 + $0x268] sm:$0xff]
        %v6340 = vld [vmem:[%s2990 + $0x270] sm:$0xff]
        %v6341 = vld [vmem:[%s2990 + $0x278] sm:$0xff]
        %v6342 = vld [vmem:[%s2990 + $0x280] sm:$0xff]
        %v6343 = vld [vmem:[%s2990 + $0x288] sm:$0xff]
        %v6344 = vld [vmem:[%s2990 + $0x290] sm:$0xff]
        %v6345 = vld [vmem:[%s2990 + $0x298] sm:$0xff]
        %v6346 = vld [vmem:[%s2990 + $0x2a0] sm:$0xff]
        %v6347 = vld [vmem:[%s2990 + $0x2a8] sm:$0xff]
        %v6348 = vld [vmem:[%s2990 + $0x2b0] sm:$0xff]
        %v6349 = vld [vmem:[%s2990 + $0x2b8] sm:$0xff]
        %v6350 = vld [vmem:[%s2990 + $0x2c0] sm:$0xff]
        %v6351 = vld [vmem:[%s2990 + $0x2c8] sm:$0xff]
        %v6352 = vld [vmem:[%s2990 + $0x2d0] sm:$0xff]
        %v6353 = vld [vmem:[%s2990 + $0x2d8] sm:$0xff]
        %v6354 = vld [vmem:[%s2990 + $0x2e0] sm:$0xff]
        %v6355 = vld [vmem:[%s2990 + $0x2e8] sm:$0xff]
        %v6356 = vld [vmem:[%s2990 + $0x2f0] sm:$0xff]
        %v6357 = vld [vmem:[%s2990 + $0x2f8] sm:$0xff]
        %v6358 = vld [vmem:[%s2990 + $0x300] sm:$0xff]
        %v6359 = vld [vmem:[%s2990 + $0x308] sm:$0xff]
        %v6360 = vld [vmem:[%s2990 + $0x310] sm:$0xff]
        %v6361 = vld [vmem:[%s2990 + $0x318] sm:$0xff]
        %v6362 = vld [vmem:[%s2990 + $0x320] sm:$0xff]
        %v6363 = vld [vmem:[%s2990 + $0x328] sm:$0xff]
        %v6364 = vld [vmem:[%s2990 + $0x330] sm:$0xff]
        %v6365 = vld [vmem:[%s2990 + $0x338] sm:$0xff]
        %v6366 = vld [vmem:[%s2990 + $0x340] sm:$0xff]
        %v6367 = vld [vmem:[%s2990 + $0x348] sm:$0xff]
        %v6368 = vld [vmem:[%s2990 + $0x350] sm:$0xff]
        %v6369 = vld [vmem:[%s2990 + $0x358] sm:$0xff]
        %v6370 = vld [vmem:[%s2990 + $0x360] sm:$0xff]
        %v6371 = vld [vmem:[%s2990 + $0x368] sm:$0xff]
        %v6372 = vld [vmem:[%s2990 + $0x370] sm:$0xff]
        %v6373 = vld [vmem:[%s2990 + $0x378] sm:$0xff]
        %v6374 = vld [vmem:[%s2990 + $0x380] sm:$0xff]
        %v6375 = vld [vmem:[%s2990 + $0x388] sm:$0xff]
        %v6376 = vld [vmem:[%s2990 + $0x390] sm:$0xff]
        %v6377 = vld [vmem:[%s2990 + $0x398] sm:$0xff]
        %v6378 = vld [vmem:[%s2990 + $0x3a0] sm:$0xff]
        %v6379 = vld [vmem:[%s2990 + $0x3a8] sm:$0xff]
        %v6380 = vld [vmem:[%s2990 + $0x3b0] sm:$0xff]
        %v6381 = vld [vmem:[%s2990 + $0x3b8] sm:$0xff]
        %v6382 = vld [vmem:[%s2990 + $0x3c0] sm:$0xff]
        %v6383 = vld [vmem:[%s2990 + $0x3c8] sm:$0xff]
        %v6384 = vld [vmem:[%s2990 + $0x3d0] sm:$0xff]
        %v6385 = vld [vmem:[%s2990 + $0x3d8] sm:$0xff]
        %v6386 = vld [vmem:[%s2990 + $0x3e0] sm:$0xff]
        %v6387 = vld [vmem:[%s2990 + $0x3e8] sm:$0xff]
        %v6388 = vld [vmem:[%s2990 + $0x3f0] sm:$0xff]
        %v6389 = vld [vmem:[%s2990 + $0x3f8] sm:$0xff]
        %v6518 = vunpack.c.l.b16 %v6262
        %v6519 = vunpack.c.h.b16 %v6262
        %v6520 = vunpack.c.l.b16 %v6263
        %v6521 = vunpack.c.h.b16 %v6263
        %v6522 = vunpack.c.l.b16 %v6264
        %v6523 = vunpack.c.h.b16 %v6264
        %v6524 = vunpack.c.l.b16 %v6265
        %v6525 = vunpack.c.h.b16 %v6265
        %v6526 = vunpack.c.l.b16 %v6266
        %v6527 = vunpack.c.h.b16 %v6266
        %v6528 = vunpack.c.l.b16 %v6267
        %v6529 = vunpack.c.h.b16 %v6267
        %v6530 = vunpack.c.l.b16 %v6268
        %v6531 = vunpack.c.h.b16 %v6268
        %v6532 = vunpack.c.l.b16 %v6269
        %v6533 = vunpack.c.h.b16 %v6269
        %v6534 = vunpack.c.l.b16 %v6270
        %v6535 = vunpack.c.h.b16 %v6270
        %v6536 = vunpack.c.l.b16 %v6271
        %v6537 = vunpack.c.h.b16 %v6271
        %v6538 = vunpack.c.l.b16 %v6272
        %v6539 = vunpack.c.h.b16 %v6272
        %v6540 = vunpack.c.l.b16 %v6273
        %v6541 = vunpack.c.h.b16 %v6273
        %v6542 = vunpack.c.l.b16 %v6274
        %v6543 = vunpack.c.h.b16 %v6274
        %v6544 = vunpack.c.l.b16 %v6275
        %v6545 = vunpack.c.h.b16 %v6275
        %v6546 = vunpack.c.l.b16 %v6276
        %v6547 = vunpack.c.h.b16 %v6276
        %v6548 = vunpack.c.l.b16 %v6277
        %v6549 = vunpack.c.h.b16 %v6277
        %v6550 = vunpack.c.l.b16 %v6278
        %v6551 = vunpack.c.h.b16 %v6278
        %v6552 = vunpack.c.l.b16 %v6279
        %v6553 = vunpack.c.h.b16 %v6279
        %v6554 = vunpack.c.l.b16 %v6280
        %v6555 = vunpack.c.h.b16 %v6280
        %v6556 = vunpack.c.l.b16 %v6281
        %v6557 = vunpack.c.h.b16 %v6281
        %v6558 = vunpack.c.l.b16 %v6282
        %v6559 = vunpack.c.h.b16 %v6282
        %v6560 = vunpack.c.l.b16 %v6283
        %v6561 = vunpack.c.h.b16 %v6283
        %v6562 = vunpack.c.l.b16 %v6284
        %v6563 = vunpack.c.h.b16 %v6284
        %v6564 = vunpack.c.l.b16 %v6285
        %v6565 = vunpack.c.h.b16 %v6285
        %v6566 = vunpack.c.l.b16 %v6286
        %v6567 = vunpack.c.h.b16 %v6286
        %v6568 = vunpack.c.l.b16 %v6287
        %v6569 = vunpack.c.h.b16 %v6287
        %v6570 = vunpack.c.l.b16 %v6288
        %v6571 = vunpack.c.h.b16 %v6288
        %v6572 = vunpack.c.l.b16 %v6289
        %v6573 = vunpack.c.h.b16 %v6289
        %v6574 = vunpack.c.l.b16 %v6290
        %v6575 = vunpack.c.h.b16 %v6290
        %v6576 = vunpack.c.l.b16 %v6291
        %v6577 = vunpack.c.h.b16 %v6291
        %v6578 = vunpack.c.l.b16 %v6292
        %v6579 = vunpack.c.h.b16 %v6292
        %v6580 = vunpack.c.l.b16 %v6293
        %v6581 = vunpack.c.h.b16 %v6293
        %v6582 = vunpack.c.l.b16 %v6294
        %v6583 = vunpack.c.h.b16 %v6294
        %v6584 = vunpack.c.l.b16 %v6295
        %v6585 = vunpack.c.h.b16 %v6295
        %v6586 = vunpack.c.l.b16 %v6296
        %v6587 = vunpack.c.h.b16 %v6296
        %v6588 = vunpack.c.l.b16 %v6297
        %v6589 = vunpack.c.h.b16 %v6297
        %v6590 = vunpack.c.l.b16 %v6298
        %v6591 = vunpack.c.h.b16 %v6298
        %v6592 = vunpack.c.l.b16 %v6299
        %v6593 = vunpack.c.h.b16 %v6299
        %v6594 = vunpack.c.l.b16 %v6300
        %v6595 = vunpack.c.h.b16 %v6300
        %v6596 = vunpack.c.l.b16 %v6301
        %v6597 = vunpack.c.h.b16 %v6301
        %v6598 = vunpack.c.l.b16 %v6302
        %v6599 = vunpack.c.h.b16 %v6302
        %v6600 = vunpack.c.l.b16 %v6303
        %v6601 = vunpack.c.h.b16 %v6303
        %v6602 = vunpack.c.l.b16 %v6304
        %v6603 = vunpack.c.h.b16 %v6304
        %v6604 = vunpack.c.l.b16 %v6305
        %v6605 = vunpack.c.h.b16 %v6305
        %v6606 = vunpack.c.l.b16 %v6306
        %v6607 = vunpack.c.h.b16 %v6306
        %v6608 = vunpack.c.l.b16 %v6307
        %v6609 = vunpack.c.h.b16 %v6307
        %v6610 = vunpack.c.l.b16 %v6308
        %v6611 = vunpack.c.h.b16 %v6308
        %v6612 = vunpack.c.l.b16 %v6309
        %v6613 = vunpack.c.h.b16 %v6309
        %v6614 = vunpack.c.l.b16 %v6310
        %v6615 = vunpack.c.h.b16 %v6310
        %v6616 = vunpack.c.l.b16 %v6311
        %v6617 = vunpack.c.h.b16 %v6311
        %v6618 = vunpack.c.l.b16 %v6312
        %v6619 = vunpack.c.h.b16 %v6312
        %v6620 = vunpack.c.l.b16 %v6313
        %v6621 = vunpack.c.h.b16 %v6313
        %v6622 = vunpack.c.l.b16 %v6314
        %v6623 = vunpack.c.h.b16 %v6314
        %v6624 = vunpack.c.l.b16 %v6315
        %v6625 = vunpack.c.h.b16 %v6315
        %v6626 = vunpack.c.l.b16 %v6316
        %v6627 = vunpack.c.h.b16 %v6316
        %v6628 = vunpack.c.l.b16 %v6317
        %v6629 = vunpack.c.h.b16 %v6317
        %v6630 = vunpack.c.l.b16 %v6318
        %v6631 = vunpack.c.h.b16 %v6318
        %v6632 = vunpack.c.l.b16 %v6319
        %v6633 = vunpack.c.h.b16 %v6319
        %v6634 = vunpack.c.l.b16 %v6320
        %v6635 = vunpack.c.h.b16 %v6320
        %v6636 = vunpack.c.l.b16 %v6321
        %v6637 = vunpack.c.h.b16 %v6321
        %v6638 = vunpack.c.l.b16 %v6322
        %v6639 = vunpack.c.h.b16 %v6322
        %v6640 = vunpack.c.l.b16 %v6323
        %v6641 = vunpack.c.h.b16 %v6323
        %v6642 = vunpack.c.l.b16 %v6324
        %v6643 = vunpack.c.h.b16 %v6324
        %v6644 = vunpack.c.l.b16 %v6325
        %v6645 = vunpack.c.h.b16 %v6325
        %v6646 = vunpack.c.l.b16 %v6326
        %v6647 = vunpack.c.h.b16 %v6326
        %v6648 = vunpack.c.l.b16 %v6327
        %v6649 = vunpack.c.h.b16 %v6327
        %v6650 = vunpack.c.l.b16 %v6328
        %v6651 = vunpack.c.h.b16 %v6328
        %v6652 = vunpack.c.l.b16 %v6329
        %v6653 = vunpack.c.h.b16 %v6329
        %v6654 = vunpack.c.l.b16 %v6330
        %v6655 = vunpack.c.h.b16 %v6330
        %v6656 = vunpack.c.l.b16 %v6331
        %v6657 = vunpack.c.h.b16 %v6331
        %v6658 = vunpack.c.l.b16 %v6332
        %v6659 = vunpack.c.h.b16 %v6332
        %v6660 = vunpack.c.l.b16 %v6333
        %v6661 = vunpack.c.h.b16 %v6333
        %v6662 = vunpack.c.l.b16 %v6334
        %v6663 = vunpack.c.h.b16 %v6334
        %v6664 = vunpack.c.l.b16 %v6335
        %v6665 = vunpack.c.h.b16 %v6335
        %v6666 = vunpack.c.l.b16 %v6336
        %v6667 = vunpack.c.h.b16 %v6336
        %v6668 = vunpack.c.l.b16 %v6337
        %v6669 = vunpack.c.h.b16 %v6337
        %v6670 = vunpack.c.l.b16 %v6338
        %v6671 = vunpack.c.h.b16 %v6338
        %v6672 = vunpack.c.l.b16 %v6339
        %v6673 = vunpack.c.h.b16 %v6339
        %v6674 = vunpack.c.l.b16 %v6340
        %v6675 = vunpack.c.h.b16 %v6340
        %v6676 = vunpack.c.l.b16 %v6341
        %v6677 = vunpack.c.h.b16 %v6341
        %v6678 = vunpack.c.l.b16 %v6342
        %v6679 = vunpack.c.h.b16 %v6342
        %v6680 = vunpack.c.l.b16 %v6343
        %v6681 = vunpack.c.h.b16 %v6343
        %v6682 = vunpack.c.l.b16 %v6344
        %v6683 = vunpack.c.h.b16 %v6344
        %v6684 = vunpack.c.l.b16 %v6345
        %v6685 = vunpack.c.h.b16 %v6345
        %v6686 = vunpack.c.l.b16 %v6346
        %v6687 = vunpack.c.h.b16 %v6346
        %v6688 = vunpack.c.l.b16 %v6347
        %v6689 = vunpack.c.h.b16 %v6347
        %v6690 = vunpack.c.l.b16 %v6348
        %v6691 = vunpack.c.h.b16 %v6348
        %v6692 = vunpack.c.l.b16 %v6349
        %v6693 = vunpack.c.h.b16 %v6349
        %v6694 = vunpack.c.l.b16 %v6350
        %v6695 = vunpack.c.h.b16 %v6350
        %v6696 = vunpack.c.l.b16 %v6351
        %v6697 = vunpack.c.h.b16 %v6351
        %v6698 = vunpack.c.l.b16 %v6352
        %v6699 = vunpack.c.h.b16 %v6352
        %v6700 = vunpack.c.l.b16 %v6353
        %v6701 = vunpack.c.h.b16 %v6353
        %v6702 = vunpack.c.l.b16 %v6354
        %v6703 = vunpack.c.h.b16 %v6354
        %v6704 = vunpack.c.l.b16 %v6355
        %v6705 = vunpack.c.h.b16 %v6355
        %v6706 = vunpack.c.l.b16 %v6356
        %v6707 = vunpack.c.h.b16 %v6356
        %v6708 = vunpack.c.l.b16 %v6357
        %v6709 = vunpack.c.h.b16 %v6357
        %v6710 = vunpack.c.l.b16 %v6358
        %v6711 = vunpack.c.h.b16 %v6358
        %v6712 = vunpack.c.l.b16 %v6359
        %v6713 = vunpack.c.h.b16 %v6359
        %v6714 = vunpack.c.l.b16 %v6360
        %v6715 = vunpack.c.h.b16 %v6360
        %v6716 = vunpack.c.l.b16 %v6361
        %v6717 = vunpack.c.h.b16 %v6361
        %v6718 = vunpack.c.l.b16 %v6362
        %v6719 = vunpack.c.h.b16 %v6362
        %v6720 = vunpack.c.l.b16 %v6363
        %v6721 = vunpack.c.h.b16 %v6363
        %v6722 = vunpack.c.l.b16 %v6364
        %v6723 = vunpack.c.h.b16 %v6364
        %v6724 = vunpack.c.l.b16 %v6365
        %v6725 = vunpack.c.h.b16 %v6365
        %v6726 = vunpack.c.l.b16 %v6366
        %v6727 = vunpack.c.h.b16 %v6366
        %v6728 = vunpack.c.l.b16 %v6367
        %v6729 = vunpack.c.h.b16 %v6367
        %v6730 = vunpack.c.l.b16 %v6368
        %v6731 = vunpack.c.h.b16 %v6368
        %v6732 = vunpack.c.l.b16 %v6369
        %v6733 = vunpack.c.h.b16 %v6369
        %v6734 = vunpack.c.l.b16 %v6370
        %v6735 = vunpack.c.h.b16 %v6370
        %v6736 = vunpack.c.l.b16 %v6371
        %v6737 = vunpack.c.h.b16 %v6371
        %v6738 = vunpack.c.l.b16 %v6372
        %v6739 = vunpack.c.h.b16 %v6372
        %v6740 = vunpack.c.l.b16 %v6373
        %v6741 = vunpack.c.h.b16 %v6373
        %v6742 = vunpack.c.l.b16 %v6374
        %v6743 = vunpack.c.h.b16 %v6374
        %v6744 = vunpack.c.l.b16 %v6375
        %v6745 = vunpack.c.h.b16 %v6375
        %v6746 = vunpack.c.l.b16 %v6376
        %v6747 = vunpack.c.h.b16 %v6376
        %v6748 = vunpack.c.l.b16 %v6377
        %v6749 = vunpack.c.h.b16 %v6377
        %v6750 = vunpack.c.l.b16 %v6378
        %v6751 = vunpack.c.h.b16 %v6378
        %v6752 = vunpack.c.l.b16 %v6379
        %v6753 = vunpack.c.h.b16 %v6379
        %v6754 = vunpack.c.l.b16 %v6380
        %v6755 = vunpack.c.h.b16 %v6380
        %v6756 = vunpack.c.l.b16 %v6381
        %v6757 = vunpack.c.h.b16 %v6381
        %v6758 = vunpack.c.l.b16 %v6382
        %v6759 = vunpack.c.h.b16 %v6382
        %v6760 = vunpack.c.l.b16 %v6383
        %v6761 = vunpack.c.h.b16 %v6383
        %v6762 = vunpack.c.l.b16 %v6384
        %v6763 = vunpack.c.h.b16 %v6384
        %v6764 = vunpack.c.l.b16 %v6385
        %v6765 = vunpack.c.h.b16 %v6385
        %v6766 = vunpack.c.l.b16 %v6386
        %v6767 = vunpack.c.h.b16 %v6386
        %v6768 = vunpack.c.l.b16 %v6387
        %v6769 = vunpack.c.h.b16 %v6387
        %v6770 = vunpack.c.l.b16 %v6388
        %v6771 = vunpack.c.h.b16 %v6388
        %v6772 = vunpack.c.l.b16 %v6389
        %v6773 = vunpack.c.h.b16 %v6389
        %v6774 = vpack.c.b16 %v6526, %v6518
        %v6775 = vpack.c.b16 %v6527, %v6519
        %v6776 = vpack.c.b16 %v6528, %v6520
        %v6777 = vpack.c.b16 %v6529, %v6521
        %v6778 = vpack.c.b16 %v6530, %v6522
        %v6779 = vpack.c.b16 %v6531, %v6523
        %v6780 = vpack.c.b16 %v6532, %v6524
        %v6781 = vpack.c.b16 %v6533, %v6525
        %v6782 = vpack.c.b16 %v6542, %v6534
        %v6783 = vpack.c.b16 %v6543, %v6535
        %v6784 = vpack.c.b16 %v6544, %v6536
        %v6785 = vpack.c.b16 %v6545, %v6537
        %v6786 = vpack.c.b16 %v6546, %v6538
        %v6787 = vpack.c.b16 %v6547, %v6539
        %v6788 = vpack.c.b16 %v6548, %v6540
        %v6789 = vpack.c.b16 %v6549, %v6541
        %v6790 = vpack.c.b16 %v6558, %v6550
        %v6791 = vpack.c.b16 %v6559, %v6551
        %v6792 = vpack.c.b16 %v6560, %v6552
        %v6793 = vpack.c.b16 %v6561, %v6553
        %v6794 = vpack.c.b16 %v6562, %v6554
        %v6795 = vpack.c.b16 %v6563, %v6555
        %v6796 = vpack.c.b16 %v6564, %v6556
        %v6797 = vpack.c.b16 %v6565, %v6557
        %v6798 = vpack.c.b16 %v6574, %v6566
        %v6799 = vpack.c.b16 %v6575, %v6567
        %v6800 = vpack.c.b16 %v6576, %v6568
        %v6801 = vpack.c.b16 %v6577, %v6569
        %v6802 = vpack.c.b16 %v6578, %v6570
        %v6803 = vpack.c.b16 %v6579, %v6571
        %v6804 = vpack.c.b16 %v6580, %v6572
        %v6805 = vpack.c.b16 %v6581, %v6573
        %v6806 = vpack.c.b16 %v6590, %v6582
        %v6807 = vpack.c.b16 %v6591, %v6583
        %v6808 = vpack.c.b16 %v6592, %v6584
        %v6809 = vpack.c.b16 %v6593, %v6585
        %v6810 = vpack.c.b16 %v6594, %v6586
        %v6811 = vpack.c.b16 %v6595, %v6587
        %v6812 = vpack.c.b16 %v6596, %v6588
        %v6813 = vpack.c.b16 %v6597, %v6589
        %v6814 = vpack.c.b16 %v6606, %v6598
        %v6815 = vpack.c.b16 %v6607, %v6599
        %v6816 = vpack.c.b16 %v6608, %v6600
        %v6817 = vpack.c.b16 %v6609, %v6601
        %v6818 = vpack.c.b16 %v6610, %v6602
        %v6819 = vpack.c.b16 %v6611, %v6603
        %v6820 = vpack.c.b16 %v6612, %v6604
        %v6821 = vpack.c.b16 %v6613, %v6605
        %v6822 = vpack.c.b16 %v6622, %v6614
        %v6823 = vpack.c.b16 %v6623, %v6615
        %v6824 = vpack.c.b16 %v6624, %v6616
        %v6825 = vpack.c.b16 %v6625, %v6617
        %v6826 = vpack.c.b16 %v6626, %v6618
        %v6827 = vpack.c.b16 %v6627, %v6619
        %v6828 = vpack.c.b16 %v6628, %v6620
        %v6829 = vpack.c.b16 %v6629, %v6621
        %v6830 = vpack.c.b16 %v6638, %v6630
        %v6831 = vpack.c.b16 %v6639, %v6631
        %v6832 = vpack.c.b16 %v6640, %v6632
        %v6833 = vpack.c.b16 %v6641, %v6633
        %v6834 = vpack.c.b16 %v6642, %v6634
        %v6835 = vpack.c.b16 %v6643, %v6635
        %v6836 = vpack.c.b16 %v6644, %v6636
        %v6837 = vpack.c.b16 %v6645, %v6637
        %v6838 = vpack.c.b16 %v6654, %v6646
        %v6839 = vpack.c.b16 %v6655, %v6647
        %v6840 = vpack.c.b16 %v6656, %v6648
        %v6841 = vpack.c.b16 %v6657, %v6649
        %v6842 = vpack.c.b16 %v6658, %v6650
        %v6843 = vpack.c.b16 %v6659, %v6651
        %v6844 = vpack.c.b16 %v6660, %v6652
        %v6845 = vpack.c.b16 %v6661, %v6653
        %v6846 = vpack.c.b16 %v6670, %v6662
        %v6847 = vpack.c.b16 %v6671, %v6663
        %v6848 = vpack.c.b16 %v6672, %v6664
        %v6849 = vpack.c.b16 %v6673, %v6665
        %v6850 = vpack.c.b16 %v6674, %v6666
        %v6851 = vpack.c.b16 %v6675, %v6667
        %v6852 = vpack.c.b16 %v6676, %v6668
        %v6853 = vpack.c.b16 %v6677, %v6669
        %v6854 = vpack.c.b16 %v6686, %v6678
        %v6855 = vpack.c.b16 %v6687, %v6679
        %v6856 = vpack.c.b16 %v6688, %v6680
        %v6857 = vpack.c.b16 %v6689, %v6681
        %v6858 = vpack.c.b16 %v6690, %v6682
        %v6859 = vpack.c.b16 %v6691, %v6683
        %v6860 = vpack.c.b16 %v6692, %v6684
        %v6861 = vpack.c.b16 %v6693, %v6685
        %v6862 = vpack.c.b16 %v6702, %v6694
        %v6863 = vpack.c.b16 %v6703, %v6695
        %v6864 = vpack.c.b16 %v6704, %v6696
        %v6865 = vpack.c.b16 %v6705, %v6697
        %v6866 = vpack.c.b16 %v6706, %v6698
        %v6867 = vpack.c.b16 %v6707, %v6699
        %v6868 = vpack.c.b16 %v6708, %v6700
        %v6869 = vpack.c.b16 %v6709, %v6701
        %v6870 = vpack.c.b16 %v6718, %v6710
        %v6871 = vpack.c.b16 %v6719, %v6711
        %v6872 = vpack.c.b16 %v6720, %v6712
        %v6873 = vpack.c.b16 %v6721, %v6713
        %v6874 = vpack.c.b16 %v6722, %v6714
        %v6875 = vpack.c.b16 %v6723, %v6715
        %v6876 = vpack.c.b16 %v6724, %v6716
        %v6877 = vpack.c.b16 %v6725, %v6717
        %v6878 = vpack.c.b16 %v6734, %v6726
        %v6879 = vpack.c.b16 %v6735, %v6727
        %v6880 = vpack.c.b16 %v6736, %v6728
        %v6881 = vpack.c.b16 %v6737, %v6729
        %v6882 = vpack.c.b16 %v6738, %v6730
        %v6883 = vpack.c.b16 %v6739, %v6731
        %v6884 = vpack.c.b16 %v6740, %v6732
        %v6885 = vpack.c.b16 %v6741, %v6733
        %v6886 = vpack.c.b16 %v6750, %v6742
        %v6887 = vpack.c.b16 %v6751, %v6743
        %v6888 = vpack.c.b16 %v6752, %v6744
        %v6889 = vpack.c.b16 %v6753, %v6745
        %v6890 = vpack.c.b16 %v6754, %v6746
        %v6891 = vpack.c.b16 %v6755, %v6747
        %v6892 = vpack.c.b16 %v6756, %v6748
        %v6893 = vpack.c.b16 %v6757, %v6749
        %v6894 = vpack.c.b16 %v6766, %v6758
        %v6895 = vpack.c.b16 %v6767, %v6759
        %v6896 = vpack.c.b16 %v6768, %v6760
        %v6897 = vpack.c.b16 %v6769, %v6761
        %v6898 = vpack.c.b16 %v6770, %v6762
        %v6899 = vpack.c.b16 %v6771, %v6763
        %v6900 = vpack.c.b16 %v6772, %v6764
        %v6901 = vpack.c.b16 %v6773, %v6765
        %7030 = vmatpush.bf16.msra.mxu0 %v6830
        %7031 = vmatpush.bf16.msra.mxu0 %v6822
        %7032 = vmatpush.bf16.msra.mxu0 %v6814
        %7033 = vmatpush.bf16.msra.mxu0 %v6806
        %7034 = vmatpush.bf16.msra.mxu0 %v6798
        %7035 = vmatpush.bf16.msra.mxu0 %v6790
        %7036 = vmatpush.bf16.msra.mxu0 %v6782
        %7037 = vmatpush.bf16.msra.mxu0 %v6774
        %7038 = vmatmul.bf16.gmra.mxu0 %v6258
        %v7039 = vpop.f32.mrf.mxu0
        %v7040 = vadd.f32 0.0, %v7039
        %v7041 = vpop.f32.mrf.mxu0
        %7042 = vdwg.mxu0
        %7043 = vmatpush.bf16.msra.mxu0 %v6894
        %7044 = vmatpush.bf16.msra.mxu0 %v6886
        %7045 = vmatpush.bf16.msra.mxu0 %v6878
        %7046 = vmatpush.bf16.msra.mxu0 %v6870
        %7047 = vmatpush.bf16.msra.mxu0 %v6862
        %7048 = vmatpush.bf16.msra.mxu0 %v6854
        %7049 = vmatpush.bf16.msra.mxu0 %v6846
        %7050 = vmatpush.bf16.msra.mxu0 %v6838
        %7051 = vmatmul.bf16.gmra.mxu0 %v6259
        %v7052 = vpop.f32.mrf.mxu0
        %v7053 = vadd.f32 %v7040, %v7052
        %v7054 = vpop.f32.mrf.mxu0
        %7055 = vdwg.mxu0
        %7056 = vmatpush.bf16.msra.mxu0 %v6831
        %7057 = vmatpush.bf16.msra.mxu0 %v6823
        %7058 = vmatpush.bf16.msra.mxu0 %v6815
        %7059 = vmatpush.bf16.msra.mxu0 %v6807
        %7060 = vmatpush.bf16.msra.mxu0 %v6799
        %7061 = vmatpush.bf16.msra.mxu0 %v6791
        %7062 = vmatpush.bf16.msra.mxu0 %v6783
        %7063 = vmatpush.bf16.msra.mxu0 %v6775
        %7064 = vmatmul.bf16.gmra.mxu0 %v6258
        %v7065 = vpop.f32.mrf.mxu0
        %v7066 = vadd.f32 0.0, %v7065
        %v7067 = vpop.f32.mrf.mxu0
        %7068 = vdwg.mxu0
        %7069 = vmatpush.bf16.msra.mxu0 %v6895
        %7070 = vmatpush.bf16.msra.mxu0 %v6887
        %7071 = vmatpush.bf16.msra.mxu0 %v6879
        %7072 = vmatpush.bf16.msra.mxu0 %v6871
        %7073 = vmatpush.bf16.msra.mxu0 %v6863
        %7074 = vmatpush.bf16.msra.mxu0 %v6855
        %7075 = vmatpush.bf16.msra.mxu0 %v6847
        %7076 = vmatpush.bf16.msra.mxu0 %v6839
        %7077 = vmatmul.bf16.gmra.mxu0 %v6259
        %v7078 = vpop.f32.mrf.mxu0
        %v7079 = vadd.f32 %v7066, %v7078
        %v7080 = vpop.f32.mrf.mxu0
        %7081 = vdwg.mxu0
        %7082 = vmatpush.bf16.msra.mxu0 %v6832
        %7083 = vmatpush.bf16.msra.mxu0 %v6824
        %7084 = vmatpush.bf16.msra.mxu0 %v6816
        %7085 = vmatpush.bf16.msra.mxu0 %v6808
        %7086 = vmatpush.bf16.msra.mxu0 %v6800
        %7087 = vmatpush.bf16.msra.mxu0 %v6792
        %7088 = vmatpush.bf16.msra.mxu0 %v6784
        %7089 = vmatpush.bf16.msra.mxu0 %v6776
        %7090 = vmatmul.bf16.gmra.mxu0 %v6258
        %v7091 = vpop.f32.mrf.mxu0
        %v7092 = vadd.f32 0.0, %v7091
        %v7093 = vpop.f32.mrf.mxu0
        %7094 = vdwg.mxu0
        %7095 = vmatpush.bf16.msra.mxu0 %v6896
        %7096 = vmatpush.bf16.msra.mxu0 %v6888
        %7097 = vmatpush.bf16.msra.mxu0 %v6880
        %7098 = vmatpush.bf16.msra.mxu0 %v6872
        %7099 = vmatpush.bf16.msra.mxu0 %v6864
        %7100 = vmatpush.bf16.msra.mxu0 %v6856
        %7101 = vmatpush.bf16.msra.mxu0 %v6848
        %7102 = vmatpush.bf16.msra.mxu0 %v6840
        %7103 = vmatmul.bf16.gmra.mxu0 %v6259
        %v7104 = vpop.f32.mrf.mxu0
        %v7105 = vadd.f32 %v7092, %v7104
        %v7106 = vpop.f32.mrf.mxu0
        %7107 = vdwg.mxu0
        %7108 = vmatpush.bf16.msra.mxu0 %v6833
        %7109 = vmatpush.bf16.msra.mxu0 %v6825
        %7110 = vmatpush.bf16.msra.mxu0 %v6817
        %7111 = vmatpush.bf16.msra.mxu0 %v6809
        %7112 = vmatpush.bf16.msra.mxu0 %v6801
        %7113 = vmatpush.bf16.msra.mxu0 %v6793
        %7114 = vmatpush.bf16.msra.mxu0 %v6785
        %7115 = vmatpush.bf16.msra.mxu0 %v6777
        %7116 = vmatmul.bf16.gmra.mxu0 %v6258
        %v7117 = vpop.f32.mrf.mxu0
        %v7118 = vadd.f32 0.0, %v7117
        %v7119 = vpop.f32.mrf.mxu0
        %7120 = vdwg.mxu0
        %7121 = vmatpush.bf16.msra.mxu0 %v6897
        %7122 = vmatpush.bf16.msra.mxu0 %v6889
        %7123 = vmatpush.bf16.msra.mxu0 %v6881
        %7124 = vmatpush.bf16.msra.mxu0 %v6873
        %7125 = vmatpush.bf16.msra.mxu0 %v6865
        %7126 = vmatpush.bf16.msra.mxu0 %v6857
        %7127 = vmatpush.bf16.msra.mxu0 %v6849
        %7128 = vmatpush.bf16.msra.mxu0 %v6841
        %7129 = vmatmul.bf16.gmra.mxu0 %v6259
        %v7130 = vpop.f32.mrf.mxu0
        %v7131 = vadd.f32 %v7118, %v7130
        %v7132 = vpop.f32.mrf.mxu0
        %7133 = vdwg.mxu0
        %7134 = vmatpush.bf16.msra.mxu0 %v6834
        %7135 = vmatpush.bf16.msra.mxu0 %v6826
        %7136 = vmatpush.bf16.msra.mxu0 %v6818
        %7137 = vmatpush.bf16.msra.mxu0 %v6810
        %7138 = vmatpush.bf16.msra.mxu0 %v6802
        %7139 = vmatpush.bf16.msra.mxu0 %v6794
        %7140 = vmatpush.bf16.msra.mxu0 %v6786
        %7141 = vmatpush.bf16.msra.mxu0 %v6778
        %7142 = vmatmul.bf16.gmra.mxu0 %v6258
        %v7143 = vpop.f32.mrf.mxu0
        %v7144 = vadd.f32 0.0, %v7143
        %v7145 = vpop.f32.mrf.mxu0
        %7146 = vdwg.mxu0
        %7147 = vmatpush.bf16.msra.mxu0 %v6898
        %7148 = vmatpush.bf16.msra.mxu0 %v6890
        %7149 = vmatpush.bf16.msra.mxu0 %v6882
        %7150 = vmatpush.bf16.msra.mxu0 %v6874
        %7151 = vmatpush.bf16.msra.mxu0 %v6866
        %7152 = vmatpush.bf16.msra.mxu0 %v6858
        %7153 = vmatpush.bf16.msra.mxu0 %v6850
        %7154 = vmatpush.bf16.msra.mxu0 %v6842
        %7155 = vmatmul.bf16.gmra.mxu0 %v6259
        %v7156 = vpop.f32.mrf.mxu0
        %v7157 = vadd.f32 %v7144, %v7156
        %v7158 = vpop.f32.mrf.mxu0
        %7159 = vdwg.mxu0
        %7160 = vmatpush.bf16.msra.mxu0 %v6835
        %7161 = vmatpush.bf16.msra.mxu0 %v6827
        %7162 = vmatpush.bf16.msra.mxu0 %v6819
        %7163 = vmatpush.bf16.msra.mxu0 %v6811
        %7164 = vmatpush.bf16.msra.mxu0 %v6803
        %7165 = vmatpush.bf16.msra.mxu0 %v6795
        %7166 = vmatpush.bf16.msra.mxu0 %v6787
        %7167 = vmatpush.bf16.msra.mxu0 %v6779
        %7168 = vmatmul.bf16.gmra.mxu0 %v6258
        %v7169 = vpop.f32.mrf.mxu0
        %v7170 = vadd.f32 0.0, %v7169
        %v7171 = vpop.f32.mrf.mxu0
        %7172 = vdwg.mxu0
        %7173 = vmatpush.bf16.msra.mxu0 %v6899
        %7174 = vmatpush.bf16.msra.mxu0 %v6891
        %7175 = vmatpush.bf16.msra.mxu0 %v6883
        %7176 = vmatpush.bf16.msra.mxu0 %v6875
        %7177 = vmatpush.bf16.msra.mxu0 %v6867
        %7178 = vmatpush.bf16.msra.mxu0 %v6859
        %7179 = vmatpush.bf16.msra.mxu0 %v6851
        %7180 = vmatpush.bf16.msra.mxu0 %v6843
        %7181 = vmatmul.bf16.gmra.mxu0 %v6259
        %v7182 = vpop.f32.mrf.mxu0
        %v7183 = vadd.f32 %v7170, %v7182
        %v7184 = vpop.f32.mrf.mxu0
        %7185 = vdwg.mxu0
        %7186 = vmatpush.bf16.msra.mxu0 %v6836
        %7187 = vmatpush.bf16.msra.mxu0 %v6828
        %7188 = vmatpush.bf16.msra.mxu0 %v6820
        %7189 = vmatpush.bf16.msra.mxu0 %v6812
        %7190 = vmatpush.bf16.msra.mxu0 %v6804
        %7191 = vmatpush.bf16.msra.mxu0 %v6796
        %7192 = vmatpush.bf16.msra.mxu0 %v6788
        %7193 = vmatpush.bf16.msra.mxu0 %v6780
        %7194 = vmatmul.bf16.gmra.mxu0 %v6258
        %v7195 = vpop.f32.mrf.mxu0
        %v7196 = vadd.f32 0.0, %v7195
        %v7197 = vpop.f32.mrf.mxu0
        %7198 = vdwg.mxu0
        %7199 = vmatpush.bf16.msra.mxu0 %v6900
        %7200 = vmatpush.bf16.msra.mxu0 %v6892
        %7201 = vmatpush.bf16.msra.mxu0 %v6884
        %7202 = vmatpush.bf16.msra.mxu0 %v6876
        %7203 = vmatpush.bf16.msra.mxu0 %v6868
        %7204 = vmatpush.bf16.msra.mxu0 %v6860
        %7205 = vmatpush.bf16.msra.mxu0 %v6852
        %7206 = vmatpush.bf16.msra.mxu0 %v6844
        %7207 = vmatmul.bf16.gmra.mxu0 %v6259
        %v7208 = vpop.f32.mrf.mxu0
        %v7209 = vadd.f32 %v7196, %v7208
        %v7210 = vpop.f32.mrf.mxu0
        %7211 = vdwg.mxu0
        %7212 = vmatpush.bf16.msra.mxu0 %v6837
        %7213 = vmatpush.bf16.msra.mxu0 %v6829
        %7214 = vmatpush.bf16.msra.mxu0 %v6821
        %7215 = vmatpush.bf16.msra.mxu0 %v6813
        %7216 = vmatpush.bf16.msra.mxu0 %v6805
        %7217 = vmatpush.bf16.msra.mxu0 %v6797
        %7218 = vmatpush.bf16.msra.mxu0 %v6789
        %7219 = vmatpush.bf16.msra.mxu0 %v6781
        %7220 = vmatmul.bf16.gmra.mxu0 %v6258
        %v7221 = vpop.f32.mrf.mxu0
        %v7222 = vadd.f32 0.0, %v7221
        %v7223 = vpop.f32.mrf.mxu0
        %7224 = vdwg.mxu0
        %7225 = vmatpush.bf16.msra.mxu0 %v6901
        %7226 = vmatpush.bf16.msra.mxu0 %v6893
        %7227 = vmatpush.bf16.msra.mxu0 %v6885
        %7228 = vmatpush.bf16.msra.mxu0 %v6877
        %7229 = vmatpush.bf16.msra.mxu0 %v6869
        %7230 = vmatpush.bf16.msra.mxu0 %v6861
        %7231 = vmatpush.bf16.msra.mxu0 %v6853
        %7232 = vmatpush.bf16.msra.mxu0 %v6845
        %7233 = vmatmul.bf16.gmra.mxu0 %v6259
        %v7234 = vpop.f32.mrf.mxu0
        %v7235 = vadd.f32 %v7222, %v7234
        %v7236 = vpop.f32.mrf.mxu0
        %7237 = vdwg.mxu0
        %v7246 = vrot.slane %v7079, 6
        %v7247 = vrot.slane %v7105, 4
        %v7248 = vrot.slane %v7131, 2
        %v7249 = vrot.slane %v7183, 6
        %v7250 = vrot.slane %v7209, 4
        %v7251 = vrot.slane %v7235, 2
        %vm7252 = vcmask 1041408
        %v7253 = vsel %vm7252, %v7053, %v7246
        %vm7254 = vcmask 1045508
        %v7255 = vsel %vm7254, %v7247, %v7248
        %vm7256 = vcmask 1043456
        %v7257 = vsel %vm7256, %v7253, %v7255
        %v7258 = vsel %vm7252, %v7157, %v7249
        %v7259 = vsel %vm7254, %v7250, %v7251
        %v7260 = vsel %vm7256, %v7258, %v7259
        %v7263 = vadd.f32 %v6260, %v7257
        %v7264 = vadd.f32 %v6261, %v7260
        %7265 = vst [vmem:[#allocation3] sm:$0xff] %v7263
        %7266 = vst [vmem:[#allocation3 + $0x8] sm:$0xff] %v7264
        %p7267 = scmp.eq.s32.totalorder %s21, 3
        // Predicated region
        $region113: #{deep_q_network_forward.1} parent=103 // pred_check
          %p7268 = pneg %p7267
        $region114: #{deep_q_network_forward.1} parent=103 // pred_check_branch
          %7270 = sbr.rel (%p7268) target = $region116
        $region115: #{deep_q_network_forward.1} parent=103 // pred_region
          %v7271 = vld [vmem:[#allocation3] sm:$0xff]
          %v7272 = vld [vmem:[#allocation3 + $0x8] sm:$0xff]
          %v7273 = vld [vmem:[%s6] sm:$0xff]
          %v7275 = vperm.slane %v7273, 0
          %v7276 = vperm.slane %v7273, 1
          %v7277 = vperm.slane %v7273, 2
          %v7278 = vperm.slane %v7273, 3
          %v7279 = vperm.slane %v7273, 4
          %v7280 = vperm.slane %v7273, 5
          %v7281 = vperm.slane %v7273, 6
          %v7282 = vperm.slane %v7273, 7
          %v7283 = vrot.slane %v7276, 6
          %v7284 = vrot.slane %v7277, 4
          %v7285 = vrot.slane %v7278, 2
          %v7286 = vrot.slane %v7280, 6
          %v7287 = vrot.slane %v7281, 4
          %v7288 = vrot.slane %v7282, 2
          %v7289 = vsel %vm7252, %v7275, %v7283
          %v7290 = vsel %vm7254, %v7284, %v7285
          %v7291 = vsel %vm7256, %v7289, %v7290
          %v7292 = vsel %vm7252, %v7279, %v7286
          %v7293 = vsel %vm7254, %v7287, %v7288
          %v7294 = vsel %vm7256, %v7292, %v7293
          %v7297 = vadd.f32 %v7271, %v7291
          %v7298 = vadd.f32 %v7272, %v7294
          %v7299 = vmax.f32 %v7297, 0.0
          %v7300 = vmax.f32 %v7298, 0.0
          %7303 = vst [vmem:[#allocation1] ss:$4 sm:$0xff] %v7299
          %s7304 = scalar_lea.vmem [#allocation1], 32
          %7305 = vst [vmem:[%s7304] ss:$4 sm:$0xff] %v7300
          %v7306 = vld.sshfl [vmem:[#allocation1] sm:$0xff pattern:$0x73625140]
          %v7307 = vld.sshfl [vmem:[#allocation1 + $0x8] sm:$0xff pattern:$0x73625140]
          %v7308 = vld.sshfl [vmem:[#allocation1 + $0x10] sm:$0xff pattern:$0x73625140]
          %v7309 = vld.sshfl [vmem:[#allocation1 + $0x18] sm:$0xff pattern:$0x73625140]
          %v7310 = vld.sshfl [vmem:[#allocation1 + $0x20] sm:$0xff pattern:$0x73625140]
          %v7311 = vld.sshfl [vmem:[#allocation1 + $0x28] sm:$0xff pattern:$0x73625140]
          %v7312 = vld.sshfl [vmem:[#allocation1 + $0x30] sm:$0xff pattern:$0x73625140]
          %v7313 = vld.sshfl [vmem:[#allocation1 + $0x38] sm:$0xff pattern:$0x73625140]
          %v7322 = vpack.c.bf16 %v7306, %v7306
          %v7323 = vpack.c.bf16 %v7307, %v7307
          %v7324 = vpack.c.bf16 %v7308, %v7308
          %v7325 = vpack.c.bf16 %v7309, %v7309
          %v7326 = vpack.c.bf16 %v7310, %v7310
          %v7327 = vpack.c.bf16 %v7311, %v7311
          %v7328 = vpack.c.bf16 %v7312, %v7312
          %v7329 = vpack.c.bf16 %v7313, %v7313
          %v7330 = vld [vmem:[%s7] sm:$0xf]
          %v7331 = vld [vmem:[%s7 + $0x4] sm:$0xf]
          %v7332 = vld [vmem:[%s7 + $0x8] sm:$0xf]
          %v7333 = vld [vmem:[%s7 + $0xc] sm:$0xf]
          %v7334 = vld [vmem:[%s7 + $0x10] sm:$0xf]
          %v7335 = vld [vmem:[%s7 + $0x14] sm:$0xf]
          %v7336 = vld [vmem:[%s7 + $0x18] sm:$0xf]
          %v7337 = vld [vmem:[%s7 + $0x1c] sm:$0xf]
          %v7338 = vld [vmem:[%s7 + $0x20] sm:$0xf]
          %v7339 = vld [vmem:[%s7 + $0x24] sm:$0xf]
          %v7340 = vld [vmem:[%s7 + $0x28] sm:$0xf]
          %v7341 = vld [vmem:[%s7 + $0x2c] sm:$0xf]
          %v7342 = vld [vmem:[%s7 + $0x30] sm:$0xf]
          %v7343 = vld [vmem:[%s7 + $0x34] sm:$0xf]
          %v7344 = vld [vmem:[%s7 + $0x38] sm:$0xf]
          %v7345 = vld [vmem:[%s7 + $0x3c] sm:$0xf]
          %v7346 = vld [vmem:[%s7 + $0x40] sm:$0xf]
          %v7347 = vld [vmem:[%s7 + $0x44] sm:$0xf]
          %v7348 = vld [vmem:[%s7 + $0x48] sm:$0xf]
          %v7349 = vld [vmem:[%s7 + $0x4c] sm:$0xf]
          %v7350 = vld [vmem:[%s7 + $0x50] sm:$0xf]
          %v7351 = vld [vmem:[%s7 + $0x54] sm:$0xf]
          %v7352 = vld [vmem:[%s7 + $0x58] sm:$0xf]
          %v7353 = vld [vmem:[%s7 + $0x5c] sm:$0xf]
          %v7354 = vld [vmem:[%s7 + $0x60] sm:$0xf]
          %v7355 = vld [vmem:[%s7 + $0x64] sm:$0xf]
          %v7356 = vld [vmem:[%s7 + $0x68] sm:$0xf]
          %v7357 = vld [vmem:[%s7 + $0x6c] sm:$0xf]
          %v7358 = vld [vmem:[%s7 + $0x70] sm:$0xf]
          %v7359 = vld [vmem:[%s7 + $0x74] sm:$0xf]
          %v7360 = vld [vmem:[%s7 + $0x78] sm:$0xf]
          %v7361 = vld [vmem:[%s7 + $0x7c] sm:$0xf]
          %v7362 = vld [vmem:[%s7 + $0x80] sm:$0xf]
          %v7363 = vld [vmem:[%s7 + $0x84] sm:$0xf]
          %v7364 = vld [vmem:[%s7 + $0x88] sm:$0xf]
          %v7365 = vld [vmem:[%s7 + $0x8c] sm:$0xf]
          %v7366 = vld [vmem:[%s7 + $0x90] sm:$0xf]
          %v7367 = vld [vmem:[%s7 + $0x94] sm:$0xf]
          %v7368 = vld [vmem:[%s7 + $0x98] sm:$0xf]
          %v7369 = vld [vmem:[%s7 + $0x9c] sm:$0xf]
          %v7370 = vld [vmem:[%s7 + $0xa0] sm:$0xf]
          %v7371 = vld [vmem:[%s7 + $0xa4] sm:$0xf]
          %v7372 = vld [vmem:[%s7 + $0xa8] sm:$0xf]
          %v7373 = vld [vmem:[%s7 + $0xac] sm:$0xf]
          %v7374 = vld [vmem:[%s7 + $0xb0] sm:$0xf]
          %v7375 = vld [vmem:[%s7 + $0xb4] sm:$0xf]
          %v7376 = vld [vmem:[%s7 + $0xb8] sm:$0xf]
          %v7377 = vld [vmem:[%s7 + $0xbc] sm:$0xf]
          %v7378 = vld [vmem:[%s7 + $0xc0] sm:$0xf]
          %v7379 = vld [vmem:[%s7 + $0xc4] sm:$0xf]
          %v7380 = vld [vmem:[%s7 + $0xc8] sm:$0xf]
          %v7381 = vld [vmem:[%s7 + $0xcc] sm:$0xf]
          %v7382 = vld [vmem:[%s7 + $0xd0] sm:$0xf]
          %v7383 = vld [vmem:[%s7 + $0xd4] sm:$0xf]
          %v7384 = vld [vmem:[%s7 + $0xd8] sm:$0xf]
          %v7385 = vld [vmem:[%s7 + $0xdc] sm:$0xf]
          %v7386 = vld [vmem:[%s7 + $0xe0] sm:$0xf]
          %v7387 = vld [vmem:[%s7 + $0xe4] sm:$0xf]
          %v7388 = vld [vmem:[%s7 + $0xe8] sm:$0xf]
          %v7389 = vld [vmem:[%s7 + $0xec] sm:$0xf]
          %v7390 = vld [vmem:[%s7 + $0xf0] sm:$0xf]
          %v7391 = vld [vmem:[%s7 + $0xf4] sm:$0xf]
          %v7392 = vld [vmem:[%s7 + $0xf8] sm:$0xf]
          %v7393 = vld [vmem:[%s7 + $0xfc] sm:$0xf]
          %v7394 = vld [vmem:[%s7 + $0x100] sm:$0xf]
          %v7395 = vld [vmem:[%s7 + $0x104] sm:$0xf]
          %v7396 = vld [vmem:[%s7 + $0x108] sm:$0xf]
          %v7397 = vld [vmem:[%s7 + $0x10c] sm:$0xf]
          %v7398 = vld [vmem:[%s7 + $0x110] sm:$0xf]
          %v7399 = vld [vmem:[%s7 + $0x114] sm:$0xf]
          %v7400 = vld [vmem:[%s7 + $0x118] sm:$0xf]
          %v7401 = vld [vmem:[%s7 + $0x11c] sm:$0xf]
          %v7402 = vld [vmem:[%s7 + $0x120] sm:$0xf]
          %v7403 = vld [vmem:[%s7 + $0x124] sm:$0xf]
          %v7404 = vld [vmem:[%s7 + $0x128] sm:$0xf]
          %v7405 = vld [vmem:[%s7 + $0x12c] sm:$0xf]
          %v7406 = vld [vmem:[%s7 + $0x130] sm:$0xf]
          %v7407 = vld [vmem:[%s7 + $0x134] sm:$0xf]
          %v7408 = vld [vmem:[%s7 + $0x138] sm:$0xf]
          %v7409 = vld [vmem:[%s7 + $0x13c] sm:$0xf]
          %v7410 = vld [vmem:[%s7 + $0x140] sm:$0xf]
          %v7411 = vld [vmem:[%s7 + $0x144] sm:$0xf]
          %v7412 = vld [vmem:[%s7 + $0x148] sm:$0xf]
          %v7413 = vld [vmem:[%s7 + $0x14c] sm:$0xf]
          %v7414 = vld [vmem:[%s7 + $0x150] sm:$0xf]
          %v7415 = vld [vmem:[%s7 + $0x154] sm:$0xf]
          %v7416 = vld [vmem:[%s7 + $0x158] sm:$0xf]
          %v7417 = vld [vmem:[%s7 + $0x15c] sm:$0xf]
          %v7418 = vld [vmem:[%s7 + $0x160] sm:$0xf]
          %v7419 = vld [vmem:[%s7 + $0x164] sm:$0xf]
          %v7420 = vld [vmem:[%s7 + $0x168] sm:$0xf]
          %v7421 = vld [vmem:[%s7 + $0x16c] sm:$0xf]
          %v7422 = vld [vmem:[%s7 + $0x170] sm:$0xf]
          %v7423 = vld [vmem:[%s7 + $0x174] sm:$0xf]
          %v7424 = vld [vmem:[%s7 + $0x178] sm:$0xf]
          %v7425 = vld [vmem:[%s7 + $0x17c] sm:$0xf]
          %v7426 = vld [vmem:[%s7 + $0x180] sm:$0xf]
          %v7427 = vld [vmem:[%s7 + $0x184] sm:$0xf]
          %v7428 = vld [vmem:[%s7 + $0x188] sm:$0xf]
          %v7429 = vld [vmem:[%s7 + $0x18c] sm:$0xf]
          %v7430 = vld [vmem:[%s7 + $0x190] sm:$0xf]
          %v7431 = vld [vmem:[%s7 + $0x194] sm:$0xf]
          %v7432 = vld [vmem:[%s7 + $0x198] sm:$0xf]
          %v7433 = vld [vmem:[%s7 + $0x19c] sm:$0xf]
          %v7434 = vld [vmem:[%s7 + $0x1a0] sm:$0xf]
          %v7435 = vld [vmem:[%s7 + $0x1a4] sm:$0xf]
          %v7436 = vld [vmem:[%s7 + $0x1a8] sm:$0xf]
          %v7437 = vld [vmem:[%s7 + $0x1ac] sm:$0xf]
          %v7438 = vld [vmem:[%s7 + $0x1b0] sm:$0xf]
          %v7439 = vld [vmem:[%s7 + $0x1b4] sm:$0xf]
          %v7440 = vld [vmem:[%s7 + $0x1b8] sm:$0xf]
          %v7441 = vld [vmem:[%s7 + $0x1bc] sm:$0xf]
          %v7442 = vld [vmem:[%s7 + $0x1c0] sm:$0xf]
          %v7443 = vld [vmem:[%s7 + $0x1c4] sm:$0xf]
          %v7444 = vld [vmem:[%s7 + $0x1c8] sm:$0xf]
          %v7445 = vld [vmem:[%s7 + $0x1cc] sm:$0xf]
          %v7446 = vld [vmem:[%s7 + $0x1d0] sm:$0xf]
          %v7447 = vld [vmem:[%s7 + $0x1d4] sm:$0xf]
          %v7448 = vld [vmem:[%s7 + $0x1d8] sm:$0xf]
          %v7449 = vld [vmem:[%s7 + $0x1dc] sm:$0xf]
          %v7450 = vld [vmem:[%s7 + $0x1e0] sm:$0xf]
          %v7451 = vld [vmem:[%s7 + $0x1e4] sm:$0xf]
          %v7452 = vld [vmem:[%s7 + $0x1e8] sm:$0xf]
          %v7453 = vld [vmem:[%s7 + $0x1ec] sm:$0xf]
          %v7454 = vld [vmem:[%s7 + $0x1f0] sm:$0xf]
          %v7455 = vld [vmem:[%s7 + $0x1f4] sm:$0xf]
          %v7456 = vld [vmem:[%s7 + $0x1f8] sm:$0xf]
          %v7457 = vld [vmem:[%s7 + $0x1fc] sm:$0xf]
          %v7458 = vld [vmem:[%s8] sm:$0x1]
          %v7460 = vperm.slane %v7458, 0
          %v7590 = vunpack.c.l.b16 %v7330
          %v7591 = vunpack.c.l.b16 %v7331
          %v7592 = vunpack.c.l.b16 %v7332
          %v7593 = vunpack.c.l.b16 %v7333
          %v7594 = vunpack.c.l.b16 %v7334
          %v7595 = vunpack.c.l.b16 %v7335
          %v7596 = vunpack.c.l.b16 %v7336
          %v7597 = vunpack.c.l.b16 %v7337
          %v7598 = vunpack.c.l.b16 %v7338
          %v7599 = vunpack.c.l.b16 %v7339
          %v7600 = vunpack.c.l.b16 %v7340
          %v7601 = vunpack.c.l.b16 %v7341
          %v7602 = vunpack.c.l.b16 %v7342
          %v7603 = vunpack.c.l.b16 %v7343
          %v7604 = vunpack.c.l.b16 %v7344
          %v7605 = vunpack.c.l.b16 %v7345
          %v7606 = vunpack.c.l.b16 %v7346
          %v7607 = vunpack.c.l.b16 %v7347
          %v7608 = vunpack.c.l.b16 %v7348
          %v7609 = vunpack.c.l.b16 %v7349
          %v7610 = vunpack.c.l.b16 %v7350
          %v7611 = vunpack.c.l.b16 %v7351
          %v7612 = vunpack.c.l.b16 %v7352
          %v7613 = vunpack.c.l.b16 %v7353
          %v7614 = vunpack.c.l.b16 %v7354
          %v7615 = vunpack.c.l.b16 %v7355
          %v7616 = vunpack.c.l.b16 %v7356
          %v7617 = vunpack.c.l.b16 %v7357
          %v7618 = vunpack.c.l.b16 %v7358
          %v7619 = vunpack.c.l.b16 %v7359
          %v7620 = vunpack.c.l.b16 %v7360
          %v7621 = vunpack.c.l.b16 %v7361
          %v7622 = vunpack.c.l.b16 %v7362
          %v7623 = vunpack.c.l.b16 %v7363
          %v7624 = vunpack.c.l.b16 %v7364
          %v7625 = vunpack.c.l.b16 %v7365
          %v7626 = vunpack.c.l.b16 %v7366
          %v7627 = vunpack.c.l.b16 %v7367
          %v7628 = vunpack.c.l.b16 %v7368
          %v7629 = vunpack.c.l.b16 %v7369
          %v7630 = vunpack.c.l.b16 %v7370
          %v7631 = vunpack.c.l.b16 %v7371
          %v7632 = vunpack.c.l.b16 %v7372
          %v7633 = vunpack.c.l.b16 %v7373
          %v7634 = vunpack.c.l.b16 %v7374
          %v7635 = vunpack.c.l.b16 %v7375
          %v7636 = vunpack.c.l.b16 %v7376
          %v7637 = vunpack.c.l.b16 %v7377
          %v7638 = vunpack.c.l.b16 %v7378
          %v7639 = vunpack.c.l.b16 %v7379
          %v7640 = vunpack.c.l.b16 %v7380
          %v7641 = vunpack.c.l.b16 %v7381
          %v7642 = vunpack.c.l.b16 %v7382
          %v7643 = vunpack.c.l.b16 %v7383
          %v7644 = vunpack.c.l.b16 %v7384
          %v7645 = vunpack.c.l.b16 %v7385
          %v7646 = vunpack.c.l.b16 %v7386
          %v7647 = vunpack.c.l.b16 %v7387
          %v7648 = vunpack.c.l.b16 %v7388
          %v7649 = vunpack.c.l.b16 %v7389
          %v7650 = vunpack.c.l.b16 %v7390
          %v7651 = vunpack.c.l.b16 %v7391
          %v7652 = vunpack.c.l.b16 %v7392
          %v7653 = vunpack.c.l.b16 %v7393
          %v7654 = vunpack.c.l.b16 %v7394
          %v7655 = vunpack.c.l.b16 %v7395
          %v7656 = vunpack.c.l.b16 %v7396
          %v7657 = vunpack.c.l.b16 %v7397
          %v7658 = vunpack.c.l.b16 %v7398
          %v7659 = vunpack.c.l.b16 %v7399
          %v7660 = vunpack.c.l.b16 %v7400
          %v7661 = vunpack.c.l.b16 %v7401
          %v7662 = vunpack.c.l.b16 %v7402
          %v7663 = vunpack.c.l.b16 %v7403
          %v7664 = vunpack.c.l.b16 %v7404
          %v7665 = vunpack.c.l.b16 %v7405
          %v7666 = vunpack.c.l.b16 %v7406
          %v7667 = vunpack.c.l.b16 %v7407
          %v7668 = vunpack.c.l.b16 %v7408
          %v7669 = vunpack.c.l.b16 %v7409
          %v7670 = vunpack.c.l.b16 %v7410
          %v7671 = vunpack.c.l.b16 %v7411
          %v7672 = vunpack.c.l.b16 %v7412
          %v7673 = vunpack.c.l.b16 %v7413
          %v7674 = vunpack.c.l.b16 %v7414
          %v7675 = vunpack.c.l.b16 %v7415
          %v7676 = vunpack.c.l.b16 %v7416
          %v7677 = vunpack.c.l.b16 %v7417
          %v7678 = vunpack.c.l.b16 %v7418
          %v7679 = vunpack.c.l.b16 %v7419
          %v7680 = vunpack.c.l.b16 %v7420
          %v7681 = vunpack.c.l.b16 %v7421
          %v7682 = vunpack.c.l.b16 %v7422
          %v7683 = vunpack.c.l.b16 %v7423
          %v7684 = vunpack.c.l.b16 %v7424
          %v7685 = vunpack.c.l.b16 %v7425
          %v7686 = vunpack.c.l.b16 %v7426
          %v7687 = vunpack.c.l.b16 %v7427
          %v7688 = vunpack.c.l.b16 %v7428
          %v7689 = vunpack.c.l.b16 %v7429
          %v7690 = vunpack.c.l.b16 %v7430
          %v7691 = vunpack.c.l.b16 %v7431
          %v7692 = vunpack.c.l.b16 %v7432
          %v7693 = vunpack.c.l.b16 %v7433
          %v7694 = vunpack.c.l.b16 %v7434
          %v7695 = vunpack.c.l.b16 %v7435
          %v7696 = vunpack.c.l.b16 %v7436
          %v7697 = vunpack.c.l.b16 %v7437
          %v7698 = vunpack.c.l.b16 %v7438
          %v7699 = vunpack.c.l.b16 %v7439
          %v7700 = vunpack.c.l.b16 %v7440
          %v7701 = vunpack.c.l.b16 %v7441
          %v7702 = vunpack.c.l.b16 %v7442
          %v7703 = vunpack.c.l.b16 %v7443
          %v7704 = vunpack.c.l.b16 %v7444
          %v7705 = vunpack.c.l.b16 %v7445
          %v7706 = vunpack.c.l.b16 %v7446
          %v7707 = vunpack.c.l.b16 %v7447
          %v7708 = vunpack.c.l.b16 %v7448
          %v7709 = vunpack.c.l.b16 %v7449
          %v7710 = vunpack.c.l.b16 %v7450
          %v7711 = vunpack.c.l.b16 %v7451
          %v7712 = vunpack.c.l.b16 %v7452
          %v7713 = vunpack.c.l.b16 %v7453
          %v7714 = vunpack.c.l.b16 %v7454
          %v7715 = vunpack.c.l.b16 %v7455
          %v7716 = vunpack.c.l.b16 %v7456
          %v7717 = vunpack.c.l.b16 %v7457
          %v7718 = vpack.c.b16 %v7591, %v7590
          %v7719 = vpack.c.b16 %v7593, %v7592
          %v7720 = vpack.c.b16 %v7595, %v7594
          %v7721 = vpack.c.b16 %v7597, %v7596
          %v7722 = vpack.c.b16 %v7599, %v7598
          %v7723 = vpack.c.b16 %v7601, %v7600
          %v7724 = vpack.c.b16 %v7603, %v7602
          %v7725 = vpack.c.b16 %v7605, %v7604
          %v7726 = vpack.c.b16 %v7607, %v7606
          %v7727 = vpack.c.b16 %v7609, %v7608
          %v7728 = vpack.c.b16 %v7611, %v7610
          %v7729 = vpack.c.b16 %v7613, %v7612
          %v7730 = vpack.c.b16 %v7615, %v7614
          %v7731 = vpack.c.b16 %v7617, %v7616
          %v7732 = vpack.c.b16 %v7619, %v7618
          %v7733 = vpack.c.b16 %v7621, %v7620
          %v7734 = vpack.c.b16 %v7623, %v7622
          %v7735 = vpack.c.b16 %v7625, %v7624
          %v7736 = vpack.c.b16 %v7627, %v7626
          %v7737 = vpack.c.b16 %v7629, %v7628
          %v7738 = vpack.c.b16 %v7631, %v7630
          %v7739 = vpack.c.b16 %v7633, %v7632
          %v7740 = vpack.c.b16 %v7635, %v7634
          %v7741 = vpack.c.b16 %v7637, %v7636
          %v7742 = vpack.c.b16 %v7639, %v7638
          %v7743 = vpack.c.b16 %v7641, %v7640
          %v7744 = vpack.c.b16 %v7643, %v7642
          %v7745 = vpack.c.b16 %v7645, %v7644
          %v7746 = vpack.c.b16 %v7647, %v7646
          %v7747 = vpack.c.b16 %v7649, %v7648
          %v7748 = vpack.c.b16 %v7651, %v7650
          %v7749 = vpack.c.b16 %v7653, %v7652
          %v7750 = vpack.c.b16 %v7655, %v7654
          %v7751 = vpack.c.b16 %v7657, %v7656
          %v7752 = vpack.c.b16 %v7659, %v7658
          %v7753 = vpack.c.b16 %v7661, %v7660
          %v7754 = vpack.c.b16 %v7663, %v7662
          %v7755 = vpack.c.b16 %v7665, %v7664
          %v7756 = vpack.c.b16 %v7667, %v7666
          %v7757 = vpack.c.b16 %v7669, %v7668
          %v7758 = vpack.c.b16 %v7671, %v7670
          %v7759 = vpack.c.b16 %v7673, %v7672
          %v7760 = vpack.c.b16 %v7675, %v7674
          %v7761 = vpack.c.b16 %v7677, %v7676
          %v7762 = vpack.c.b16 %v7679, %v7678
          %v7763 = vpack.c.b16 %v7681, %v7680
          %v7764 = vpack.c.b16 %v7683, %v7682
          %v7765 = vpack.c.b16 %v7685, %v7684
          %v7766 = vpack.c.b16 %v7687, %v7686
          %v7767 = vpack.c.b16 %v7689, %v7688
          %v7768 = vpack.c.b16 %v7691, %v7690
          %v7769 = vpack.c.b16 %v7693, %v7692
          %v7770 = vpack.c.b16 %v7695, %v7694
          %v7771 = vpack.c.b16 %v7697, %v7696
          %v7772 = vpack.c.b16 %v7699, %v7698
          %v7773 = vpack.c.b16 %v7701, %v7700
          %v7774 = vpack.c.b16 %v7703, %v7702
          %v7775 = vpack.c.b16 %v7705, %v7704
          %v7776 = vpack.c.b16 %v7707, %v7706
          %v7777 = vpack.c.b16 %v7709, %v7708
          %v7778 = vpack.c.b16 %v7711, %v7710
          %v7779 = vpack.c.b16 %v7713, %v7712
          %v7780 = vpack.c.b16 %v7715, %v7714
          %v7781 = vpack.c.b16 %v7717, %v7716
          %7846 = vmatpush.bf16.msra.mxu0 %v7725
          %7847 = vmatpush.bf16.msra.mxu0 %v7724
          %7848 = vmatpush.bf16.msra.mxu0 %v7723
          %7849 = vmatpush.bf16.msra.mxu0 %v7722
          %7850 = vmatpush.bf16.msra.mxu0 %v7721
          %7851 = vmatpush.bf16.msra.mxu0 %v7720
          %7852 = vmatpush.bf16.msra.mxu0 %v7719
          %7853 = vmatpush.bf16.msra.mxu0 %v7718
          %7854 = vmatmul.bf16.gmra.mxu0 %v7322
          %v7855 = vpop.f32.mrf.mxu0
          %v7856 = vadd.f32 %v7460, %v7855
          %v7857 = vpop.f32.mrf.mxu0
          %7858 = vdwg.mxu0
          %7859 = vmatpush.bf16.msra.mxu0 %v7733
          %7860 = vmatpush.bf16.msra.mxu0 %v7732
          %7861 = vmatpush.bf16.msra.mxu0 %v7731
          %7862 = vmatpush.bf16.msra.mxu0 %v7730
          %7863 = vmatpush.bf16.msra.mxu0 %v7729
          %7864 = vmatpush.bf16.msra.mxu0 %v7728
          %7865 = vmatpush.bf16.msra.mxu0 %v7727
          %7866 = vmatpush.bf16.msra.mxu0 %v7726
          %7867 = vmatmul.bf16.gmra.mxu0 %v7323
          %v7868 = vpop.f32.mrf.mxu0
          %v7869 = vadd.f32 %v7856, %v7868
          %v7870 = vpop.f32.mrf.mxu0
          %7871 = vdwg.mxu0
          %7872 = vmatpush.bf16.msra.mxu0 %v7741
          %7873 = vmatpush.bf16.msra.mxu0 %v7740
          %7874 = vmatpush.bf16.msra.mxu0 %v7739
          %7875 = vmatpush.bf16.msra.mxu0 %v7738
          %7876 = vmatpush.bf16.msra.mxu0 %v7737
          %7877 = vmatpush.bf16.msra.mxu0 %v7736
          %7878 = vmatpush.bf16.msra.mxu0 %v7735
          %7879 = vmatpush.bf16.msra.mxu0 %v7734
          %7880 = vmatmul.bf16.gmra.mxu0 %v7324
          %v7881 = vpop.f32.mrf.mxu0
          %v7882 = vadd.f32 %v7869, %v7881
          %v7883 = vpop.f32.mrf.mxu0
          %7884 = vdwg.mxu0
          %7885 = vmatpush.bf16.msra.mxu0 %v7749
          %7886 = vmatpush.bf16.msra.mxu0 %v7748
          %7887 = vmatpush.bf16.msra.mxu0 %v7747
          %7888 = vmatpush.bf16.msra.mxu0 %v7746
          %7889 = vmatpush.bf16.msra.mxu0 %v7745
          %7890 = vmatpush.bf16.msra.mxu0 %v7744
          %7891 = vmatpush.bf16.msra.mxu0 %v7743
          %7892 = vmatpush.bf16.msra.mxu0 %v7742
          %7893 = vmatmul.bf16.gmra.mxu0 %v7325
          %v7894 = vpop.f32.mrf.mxu0
          %v7895 = vadd.f32 %v7882, %v7894
          %v7896 = vpop.f32.mrf.mxu0
          %7897 = vdwg.mxu0
          %7898 = vmatpush.bf16.msra.mxu0 %v7757
          %7899 = vmatpush.bf16.msra.mxu0 %v7756
          %7900 = vmatpush.bf16.msra.mxu0 %v7755
          %7901 = vmatpush.bf16.msra.mxu0 %v7754
          %7902 = vmatpush.bf16.msra.mxu0 %v7753
          %7903 = vmatpush.bf16.msra.mxu0 %v7752
          %7904 = vmatpush.bf16.msra.mxu0 %v7751
          %7905 = vmatpush.bf16.msra.mxu0 %v7750
          %7906 = vmatmul.bf16.gmra.mxu0 %v7326
          %v7907 = vpop.f32.mrf.mxu0
          %v7908 = vadd.f32 %v7895, %v7907
          %v7909 = vpop.f32.mrf.mxu0
          %7910 = vdwg.mxu0
          %7911 = vmatpush.bf16.msra.mxu0 %v7765
          %7912 = vmatpush.bf16.msra.mxu0 %v7764
          %7913 = vmatpush.bf16.msra.mxu0 %v7763
          %7914 = vmatpush.bf16.msra.mxu0 %v7762
          %7915 = vmatpush.bf16.msra.mxu0 %v7761
          %7916 = vmatpush.bf16.msra.mxu0 %v7760
          %7917 = vmatpush.bf16.msra.mxu0 %v7759
          %7918 = vmatpush.bf16.msra.mxu0 %v7758
          %7919 = vmatmul.bf16.gmra.mxu0 %v7327
          %v7920 = vpop.f32.mrf.mxu0
          %v7921 = vadd.f32 %v7908, %v7920
          %v7922 = vpop.f32.mrf.mxu0
          %7923 = vdwg.mxu0
          %7924 = vmatpush.bf16.msra.mxu0 %v7773
          %7925 = vmatpush.bf16.msra.mxu0 %v7772
          %7926 = vmatpush.bf16.msra.mxu0 %v7771
          %7927 = vmatpush.bf16.msra.mxu0 %v7770
          %7928 = vmatpush.bf16.msra.mxu0 %v7769
          %7929 = vmatpush.bf16.msra.mxu0 %v7768
          %7930 = vmatpush.bf16.msra.mxu0 %v7767
          %7931 = vmatpush.bf16.msra.mxu0 %v7766
          %7932 = vmatmul.bf16.gmra.mxu0 %v7328
          %v7933 = vpop.f32.mrf.mxu0
          %v7934 = vadd.f32 %v7921, %v7933
          %v7935 = vpop.f32.mrf.mxu0
          %7936 = vdwg.mxu0
          %7937 = vmatpush.bf16.msra.mxu0 %v7781
          %7938 = vmatpush.bf16.msra.mxu0 %v7780
          %7939 = vmatpush.bf16.msra.mxu0 %v7779
          %7940 = vmatpush.bf16.msra.mxu0 %v7778
          %7941 = vmatpush.bf16.msra.mxu0 %v7777
          %7942 = vmatpush.bf16.msra.mxu0 %v7776
          %7943 = vmatpush.bf16.msra.mxu0 %v7775
          %7944 = vmatpush.bf16.msra.mxu0 %v7774
          %7945 = vmatmul.bf16.gmra.mxu0 %v7329
          %v7946 = vpop.f32.mrf.mxu0
          %v7947 = vadd.f32 %v7934, %v7946
          %v7948 = vpop.f32.mrf.mxu0
          %7949 = vdwg.mxu0
          %v7950 = vmax.f32 %v7947, 0.0
          %vm7951 = vcmask 58368
          %7952 = vst.msk [vmem:[#allocation5] sm:$0x3] %vm7951, %v7950
        $region116: #{deep_q_network_forward.1} parent=103 // pred_fallthru
          _
        // Predicated region
        $region117: #{deep_q_network_forward.1} parent=103 // pred_check
          %p7953 = pneg %p238
        $region118: #{deep_q_network_forward.1} parent=103 // pred_check_branch
          %7955 = sbr.rel (%p7953) target = $region120
        $region119: #{deep_q_network_forward.1} parent=103 // pred_region
          %7957 = vsyncadd [#allocation6], 0
          %s7959 = sshll.u32 [#allocation5], 4
          %s7960 = int_to_ptr.vmem [resolvable:$true] %s7959
          %s7961 = sshll.u32 %s9, 4
          %s7962 = int_to_ptr.hbm [resolvable:$true] %s7961
          %7964 = dma.vmem_to_hbm [thread:$0]  %s7960, 32, %s7962, [#allocation6]
        $region120: #{deep_q_network_forward.1} parent=103 // pred_fallthru
          _
        // Predicated region
        $region121: #{deep_q_network_forward.1} parent=103 // pred_check
          %p7965 = pneg %p238
        $region122: #{deep_q_network_forward.1} parent=103 // pred_check_branch
          %7967 = sbr.rel (%p7965) target = $region124
        $region123: #{deep_q_network_forward.1} parent=103 // pred_region
          %7969 = dma.done [#allocation6], 32
        $region124: #{deep_q_network_forward.1} parent=103 // pred_fallthru
          _
      $region104: #{deep_q_network_forward.1} parent=5 // pred_fallthru
        _
      %p7970 = scmp.le.s32.totalorder 2, %s16
      // Predicated region
      $region125: #{deep_q_network_forward.1} parent=5 // pred_check
        %p7971 = pneg %p7970
      $region126: #{deep_q_network_forward.1} parent=5 // pred_check_branch
        %7973 = sbr.rel (%p7971) target = $region128
      $region127: #{deep_q_network_forward.1} parent=5 // pred_region
        %s7974 = ssub.s32 %s16, 2
      $region128: #{deep_q_network_forward.1} parent=5 // pred_fallthru
        _
    $region6: #{deep_q_network_forward.1} parent=1 // loop_footer
      %s20 = sadd.s32 1, %s16
    $region7: #{deep_q_network_forward.1} parent=1 // loop_footer_branch
      %15 = sbr.rel target = $region3
    $region8: #{deep_q_network_forward.1} parent=1 // loop_exit
      _
    %7975 = vsyncpa [#allocation6], 1
    %s7976 = scalar_lea.sflag [#allocation6], 1
    %7977 = vsyncpa %s7976, 1

</llo_original>
